<compile_context>
chip_gen: v7x
topology: tpu7x:2x2x1
jax: 0.10.0
libtpu: 0.0.40
codegen_flags: <defaults>
</compile_context>

<pallas_src>
import functools
import math

import jax
import jax.numpy as jnp
from jax.experimental import pallas as pl
from jax.experimental.pallas import tpu as pltpu

_LANE = 128


def _fused_mlp_kernel(x_ref,
                      w1_ref, b1_ref, w2_ref, b2_ref, w3_ref, b3_ref,
                      w4_ref, b4_ref, w5_ref, b5_ref,
                      o_ref, *, negative_slope: float):
    """All five Linear layers fused; intermediates live entirely in VMEM/vregs.

    x_ref: (tb, K0)   w*_ref: (K, N) bf16   b*_ref: (1, N) f32   o_ref: (tb, Npad)
    """

    def hidden_layer(h, w_ref, b_ref):
        y = jnp.dot(h, w_ref[...], preferred_element_type=jnp.float32)
        y = y + b_ref[...]                          # f32 bias, broadcast over rows
        y = jnp.maximum(y, negative_slope * y)      # LeakyReLU (0 <= slope <= 1)
        return y.astype(jnp.bfloat16)               # bf16 inter-layer activation

    h = x_ref[...].astype(jnp.bfloat16)
    h = hidden_layer(h, w1_ref, b1_ref)
    h = hidden_layer(h, w2_ref, b2_ref)
    h = hidden_layer(h, w3_ref, b3_ref)
    h = hidden_layer(h, w4_ref, b4_ref)
    y = jnp.dot(h, w5_ref[...], preferred_element_type=jnp.float32) + b5_ref[...]
    o_ref[...] = y.astype(o_ref.dtype)


def _pick_batch_tile(batch: int, in_features: int, itemsize: int) -> int:
    """Batch tile: big (amortize ~0.35us/step), but prefer >=2 grid steps so both
    v7x TensorCores get work, and keep the double-buffered x tile modest."""
    if batch < 256 or batch % 8 != 0:
        return batch  # whole-array block; grid=(1,)
    max_by_vmem = max(128, (8 * 1024 * 1024) // max(1, in_features * itemsize))
    for tb in (1024, 512, 256, 128):
        if tb <= max_by_vmem and 2 * tb <= batch and batch % tb == 0:
            return tb
    return batch


def classifier_forward(params, x, *, negative_slope: float = 0.1, batch_tile=None):
    """Forward: 4x (Linear + LeakyReLU(0.1)) then a final Linear, in one kernel."""
    assert 0.0 <= negative_slope <= 1.0, "max(y, a*y) LeakyReLU needs 0 <= a <= 1"
    B, in_features = x.shape
    ws = [w for (w, _) in params]
    bs = [b.reshape(1, -1).astype(jnp.float32) for (_, b) in params]
    out_features = ws[-1].shape[1]

    # Lane-pad the final layer so the output tile is lane-dense (no masked stores).
    n_out_pad = max(_LANE, ((out_features + _LANE - 1) // _LANE) * _LANE)
    if n_out_pad != out_features:
        ws = ws[:-1] + [jnp.pad(ws[-1], ((0, 0), (0, n_out_pad - out_features)))]
        bs = bs[:-1] + [jnp.pad(bs[-1], ((0, 0), (0, n_out_pad - out_features)))]

    tb = batch_tile if batch_tile is not None else _pick_batch_tile(
        B, in_features, x.dtype.itemsize)
    assert B % tb == 0, (B, tb)
    grid = (B // tb,)

    # Activation tiles march over the batch; weight/bias blocks are pinned
    # (same block index every step) and single-buffered -> loaded once, resident.
    resident = pl.Buffered(buffer_count=1)
    in_specs = [pl.BlockSpec((tb, in_features), lambda i: (i, 0))]
    for w, b in zip(ws, bs):
        in_specs.append(pl.BlockSpec(w.shape, lambda i: (0, 0), pipeline_mode=resident))
        in_specs.append(pl.BlockSpec(b.shape, lambda i: (0, 0), pipeline_mode=resident))
    out_spec = pl.BlockSpec((tb, n_out_pad), lambda i: (i, 0))

    flops = sum(2 * B * w.shape[0] * w.shape[1] for w in ws)
    bytes_accessed = (x.size * x.dtype.itemsize
                      + B * n_out_pad * x.dtype.itemsize
                      + sum(w.size * w.dtype.itemsize for w in ws)
                      + sum(b.size * b.dtype.itemsize for b in bs))
    cost = pl.CostEstimate(flops=flops, transcendentals=0,
                           bytes_accessed=bytes_accessed)

    kernel = functools.partial(_fused_mlp_kernel, negative_slope=negative_slope)
    flat_args = [x]
    for w, b in zip(ws, bs):
        flat_args += [w, b]

    out = pl.pallas_call(
        kernel,
        out_shape=jax.ShapeDtypeStruct((B, n_out_pad), x.dtype),
        grid=grid,
        in_specs=in_specs,
        out_specs=out_spec,
        compiler_params=pltpu.CompilerParams(
            dimension_semantics=("parallel",),
            vmem_limit_bytes=52 * 1024 * 1024,
        ),
        cost_estimate=cost,
    )(*flat_args)

    if n_out_pad != out_features:
        out = out[:, :out_features]
    return out


def init_classifier_params(key, input_size: int, output_size: int = 2,
                           weight_dtype=jnp.bfloat16, bias_dtype=jnp.float32):
    """Init matching torch.nn.Linear's U(-1/sqrt(fan_in), 1/sqrt(fan_in)).

    Weights are stored as (in_features, out_features) — transposed relative to
    torch's (out, in) — so the kernel computes x @ W directly, in bf16.
    """
    dims = [input_size, 1024, 1024, 1024, 1024, output_size]
    params = []
    for i in range(5):
        fan_in, fan_out = dims[i], dims[i + 1]
        key, wk, bk = jax.random.split(key, 3)
        bound = 1.0 / math.sqrt(fan_in)
        w = jax.random.uniform(wk, (fan_in, fan_out), dtype=jnp.float32,
                               minval=-bound, maxval=bound).astype(weight_dtype)
        b = jax.random.uniform(bk, (fan_out,), dtype=jnp.float32,
                               minval=-bound, maxval=bound).astype(bias_dtype)
        params.append((w, b))
    return params


def classifier_reference(params, x, negative_slope: float = 0.1):
    """Pure-JAX reference with the same bf16 quantization points as the kernel."""
    h = x.astype(jnp.bfloat16)
    for i, (w, b) in enumerate(params):
        y = jnp.dot(h, w.astype(jnp.bfloat16), preferred_element_type=jnp.float32)
        y = y + b.astype(jnp.float32).reshape(1, -1)
        if i != len(params) - 1:
            y = jnp.maximum(y, negative_slope * y)
            h = y.astype(jnp.bfloat16)
        else:
            h = y
    return h.astype(x.dtype)


if __name__ == "__main__":
    key = jax.random.PRNGKey(0)
    batch = 8
    input_size = 32
    output_size = 2

    key, pkey, xkey = jax.random.split(key, 3)
    params = init_classifier_params(pkey, input_size, output_size)
    x = jax.random.normal(xkey, (batch, input_size), dtype=jnp.float32)

    out = jax.jit(classifier_forward)(params, x)
    out = jax.block_until_ready(out)

    ref = classifier_reference(params, x)
    assert out.shape == (batch, output_size), out.shape
    assert jnp.allclose(out, ref, atol=1e-2, rtol=1e-2), (
        "Pallas output mismatch vs reference; max abs err = "
        + str(float(jnp.max(jnp.abs(out - ref)))))

    print("KERNEL_OK")
</pallas_src>

<mosaic_0001>
module attributes {stable_mosaic.version = 11 : i64} {
  func.func @_fused_mlp_kernel(%arg0: i32, %arg1: memref<8x32xf32, #tpu.memory_space<vmem>>, %arg2: memref<32x1024xbf16, #tpu.memory_space<vmem>>, %arg3: memref<1x1024xf32, #tpu.memory_space<vmem>>, %arg4: memref<1024x1024xbf16, #tpu.memory_space<vmem>>, %arg5: memref<1x1024xf32, #tpu.memory_space<vmem>>, %arg6: memref<1024x1024xbf16, #tpu.memory_space<vmem>>, %arg7: memref<1x1024xf32, #tpu.memory_space<vmem>>, %arg8: memref<1024x1024xbf16, #tpu.memory_space<vmem>>, %arg9: memref<1x1024xf32, #tpu.memory_space<vmem>>, %arg10: memref<1024x128xbf16, #tpu.memory_space<vmem>>, %arg11: memref<1x128xf32, #tpu.memory_space<vmem>>, %arg12: memref<8x128xf32, #tpu.memory_space<vmem>>) attributes {dimension_semantics = [#tpu.dimension_semantics<parallel>], iteration_bounds = array<i64: 1>, scalar_prefetch = 0 : i64, scratch_operands = 0 : i64, tpu.core_type = #tpu.core_type<tc>, window_params = [{transform_indices = @transform_0, window_bounds = array<i64: 8, 32>}, {pipeline_mode = #tpu.pipeline_mode<synchronous>, transform_indices = @transform_1, window_bounds = array<i64: 32, 1024>}, {pipeline_mode = #tpu.pipeline_mode<synchronous>, transform_indices = @transform_2, window_bounds = array<i64: 1, 1024>}, {pipeline_mode = #tpu.pipeline_mode<synchronous>, transform_indices = @transform_3, window_bounds = array<i64: 1024, 1024>}, {pipeline_mode = #tpu.pipeline_mode<synchronous>, transform_indices = @transform_4, window_bounds = array<i64: 1, 1024>}, {pipeline_mode = #tpu.pipeline_mode<synchronous>, transform_indices = @transform_5, window_bounds = array<i64: 1024, 1024>}, {pipeline_mode = #tpu.pipeline_mode<synchronous>, transform_indices = @transform_6, window_bounds = array<i64: 1, 1024>}, {pipeline_mode = #tpu.pipeline_mode<synchronous>, transform_indices = @transform_7, window_bounds = array<i64: 1024, 1024>}, {pipeline_mode = #tpu.pipeline_mode<synchronous>, transform_indices = @transform_8, window_bounds = array<i64: 1, 1024>}, {pipeline_mode = #tpu.pipeline_mode<synchronous>, transform_indices = @transform_9, window_bounds = array<i64: 1024, 128>}, {pipeline_mode = #tpu.pipeline_mode<synchronous>, transform_indices = @transform_10, window_bounds = array<i64: 1, 128>}, {transform_indices = @transform_11, window_bounds = array<i64: 8, 128>}]} {
    %c0 = arith.constant 0 : index
    %c0_0 = arith.constant 0 : index
    %0 = vector.load %arg1[%c0, %c0_0] : memref<8x32xf32, #tpu.memory_space<vmem>>, vector<8x32xf32>
    %1 = arith.truncf %0 : vector<8x32xf32> to vector<8x32xbf16>
    %c0_1 = arith.constant 0 : index
    %c0_2 = arith.constant 0 : index
    %2 = vector.load %arg2[%c0_1, %c0_2] : memref<32x1024xbf16, #tpu.memory_space<vmem>>, vector<32x1024xbf16>
    %cst = arith.constant dense<0.000000e+00> : vector<8x1024xf32>
    %3 = tpu.matmul %1, %2, %cst {dimension_numbers = #tpu.dot_dimension_numbers<[1], [0], [0], [1], [0, 0, 1, 1], [], []>} : vector<8x32xbf16>, vector<32x1024xbf16>, vector<8x1024xf32> -> vector<8x1024xf32>
    %c0_3 = arith.constant 0 : index
    %c0_4 = arith.constant 0 : index
    %4 = vector.load %arg3[%c0_3, %c0_4] : memref<1x1024xf32, #tpu.memory_space<vmem>>, vector<1x1024xf32>
    %5 = vector.broadcast %4 : vector<1x1024xf32> to vector<8x1024xf32>
    %6 = arith.addf %3, %5 : vector<8x1024xf32>
    %cst_5 = arith.constant 1.000000e-01 : f32
    %7 = vector.broadcast %cst_5 : f32 to vector<8x1024xf32>
    %8 = arith.mulf %7, %6 : vector<8x1024xf32>
    %9 = arith.maximumf %6, %8 : vector<8x1024xf32>
    %10 = arith.truncf %9 : vector<8x1024xf32> to vector<8x1024xbf16>
    %c0_6 = arith.constant 0 : index
    %c0_7 = arith.constant 0 : index
    %11 = vector.load %arg4[%c0_6, %c0_7] : memref<1024x1024xbf16, #tpu.memory_space<vmem>>, vector<1024x1024xbf16>
    %cst_8 = arith.constant dense<0.000000e+00> : vector<8x1024xf32>
    %12 = tpu.matmul %10, %11, %cst_8 {dimension_numbers = #tpu.dot_dimension_numbers<[1], [0], [0], [1], [0, 0, 1, 1], [], []>} : vector<8x1024xbf16>, vector<1024x1024xbf16>, vector<8x1024xf32> -> vector<8x1024xf32>
    %c0_9 = arith.constant 0 : index
    %c0_10 = arith.constant 0 : index
    %13 = vector.load %arg5[%c0_9, %c0_10] : memref<1x1024xf32, #tpu.memory_space<vmem>>, vector<1x1024xf32>
    %14 = vector.broadcast %13 : vector<1x1024xf32> to vector<8x1024xf32>
    %15 = arith.addf %12, %14 : vector<8x1024xf32>
    %cst_11 = arith.constant 1.000000e-01 : f32
    %16 = vector.broadcast %cst_11 : f32 to vector<8x1024xf32>
    %17 = arith.mulf %16, %15 : vector<8x1024xf32>
    %18 = arith.maximumf %15, %17 : vector<8x1024xf32>
    %19 = arith.truncf %18 : vector<8x1024xf32> to vector<8x1024xbf16>
    %c0_12 = arith.constant 0 : index
    %c0_13 = arith.constant 0 : index
    %20 = vector.load %arg6[%c0_12, %c0_13] : memref<1024x1024xbf16, #tpu.memory_space<vmem>>, vector<1024x1024xbf16>
    %cst_14 = arith.constant dense<0.000000e+00> : vector<8x1024xf32>
    %21 = tpu.matmul %19, %20, %cst_14 {dimension_numbers = #tpu.dot_dimension_numbers<[1], [0], [0], [1], [0, 0, 1, 1], [], []>} : vector<8x1024xbf16>, vector<1024x1024xbf16>, vector<8x1024xf32> -> vector<8x1024xf32>
    %c0_15 = arith.constant 0 : index
    %c0_16 = arith.constant 0 : index
    %22 = vector.load %arg7[%c0_15, %c0_16] : memref<1x1024xf32, #tpu.memory_space<vmem>>, vector<1x1024xf32>
    %23 = vector.broadcast %22 : vector<1x1024xf32> to vector<8x1024xf32>
    %24 = arith.addf %21, %23 : vector<8x1024xf32>
    %cst_17 = arith.constant 1.000000e-01 : f32
    %25 = vector.broadcast %cst_17 : f32 to vector<8x1024xf32>
    %26 = arith.mulf %25, %24 : vector<8x1024xf32>
    %27 = arith.maximumf %24, %26 : vector<8x1024xf32>
    %28 = arith.truncf %27 : vector<8x1024xf32> to vector<8x1024xbf16>
    %c0_18 = arith.constant 0 : index
    %c0_19 = arith.constant 0 : index
    %29 = vector.load %arg8[%c0_18, %c0_19] : memref<1024x1024xbf16, #tpu.memory_space<vmem>>, vector<1024x1024xbf16>
    %cst_20 = arith.constant dense<0.000000e+00> : vector<8x1024xf32>
    %30 = tpu.matmul %28, %29, %cst_20 {dimension_numbers = #tpu.dot_dimension_numbers<[1], [0], [0], [1], [0, 0, 1, 1], [], []>} : vector<8x1024xbf16>, vector<1024x1024xbf16>, vector<8x1024xf32> -> vector<8x1024xf32>
    %c0_21 = arith.constant 0 : index
    %c0_22 = arith.constant 0 : index
    %31 = vector.load %arg9[%c0_21, %c0_22] : memref<1x1024xf32, #tpu.memory_space<vmem>>, vector<1x1024xf32>
    %32 = vector.broadcast %31 : vector<1x1024xf32> to vector<8x1024xf32>
    %33 = arith.addf %30, %32 : vector<8x1024xf32>
    %cst_23 = arith.constant 1.000000e-01 : f32
    %34 = vector.broadcast %cst_23 : f32 to vector<8x1024xf32>
    %35 = arith.mulf %34, %33 : vector<8x1024xf32>
    %36 = arith.maximumf %33, %35 : vector<8x1024xf32>
    %37 = arith.truncf %36 : vector<8x1024xf32> to vector<8x1024xbf16>
    %c0_24 = arith.constant 0 : index
    %c0_25 = arith.constant 0 : index
    %38 = vector.load %arg10[%c0_24, %c0_25] : memref<1024x128xbf16, #tpu.memory_space<vmem>>, vector<1024x128xbf16>
    %cst_26 = arith.constant dense<0.000000e+00> : vector<8x128xf32>
    %39 = tpu.matmul %37, %38, %cst_26 {dimension_numbers = #tpu.dot_dimension_numbers<[1], [0], [0], [1], [0, 0, 1, 1], [], []>} : vector<8x1024xbf16>, vector<1024x128xbf16>, vector<8x128xf32> -> vector<8x128xf32>
    %c0_27 = arith.constant 0 : index
    %c0_28 = arith.constant 0 : index
    %40 = vector.load %arg11[%c0_27, %c0_28] : memref<1x128xf32, #tpu.memory_space<vmem>>, vector<1x128xf32>
    %41 = vector.broadcast %40 : vector<1x128xf32> to vector<8x128xf32>
    %42 = arith.addf %39, %41 : vector<8x128xf32>
    %c0_29 = arith.constant 0 : index
    %c0_30 = arith.constant 0 : index
    %43 = vector.load %arg12[%c0_29, %c0_30] : memref<8x128xf32, #tpu.memory_space<vmem>>, vector<8x128xf32>
    tpu.vector_store %arg12[%c0_29, %c0_30], %42 {strides = array<i32>} : memref<8x128xf32, #tpu.memory_space<vmem>>, vector<8x128xf32>,
    return
  }
  func.func @transform_0(%arg0: i32) -> (i32, i32) {
    %c0_i32 = arith.constant 0 : i32
    %c0_i32_0 = arith.constant 0 : i32
    return %arg0, %c0_i32 : i32, i32
  }
  func.func @transform_1(%arg0: i32) -> (i32, i32) {
    %c0_i32 = arith.constant 0 : i32
    %c0_i32_0 = arith.constant 0 : i32
    %c0_i32_1 = arith.constant 0 : i32
    return %c0_i32, %c0_i32_0 : i32, i32
  }
  func.func @transform_2(%arg0: i32) -> (i32, i32) {
    %c0_i32 = arith.constant 0 : i32
    %c0_i32_0 = arith.constant 0 : i32
    %c0_i32_1 = arith.constant 0 : i32
    return %c0_i32, %c0_i32_0 : i32, i32
  }
  func.func @transform_3(%arg0: i32) -> (i32, i32) {
    %c0_i32 = arith.constant 0 : i32
    %c0_i32_0 = arith.constant 0 : i32
    %c0_i32_1 = arith.constant 0 : i32
    return %c0_i32, %c0_i32_0 : i32, i32
  }
  func.func @transform_4(%arg0: i32) -> (i32, i32) {
    %c0_i32 = arith.constant 0 : i32
    %c0_i32_0 = arith.constant 0 : i32
    %c0_i32_1 = arith.constant 0 : i32
    return %c0_i32, %c0_i32_0 : i32, i32
  }
  func.func @transform_5(%arg0: i32) -> (i32, i32) {
    %c0_i32 = arith.constant 0 : i32
    %c0_i32_0 = arith.constant 0 : i32
    %c0_i32_1 = arith.constant 0 : i32
    return %c0_i32, %c0_i32_0 : i32, i32
  }
  func.func @transform_6(%arg0: i32) -> (i32, i32) {
    %c0_i32 = arith.constant 0 : i32
    %c0_i32_0 = arith.constant 0 : i32
    %c0_i32_1 = arith.constant 0 : i32
    return %c0_i32, %c0_i32_0 : i32, i32
  }
  func.func @transform_7(%arg0: i32) -> (i32, i32) {
    %c0_i32 = arith.constant 0 : i32
    %c0_i32_0 = arith.constant 0 : i32
    %c0_i32_1 = arith.constant 0 : i32
    return %c0_i32, %c0_i32_0 : i32, i32
  }
  func.func @transform_8(%arg0: i32) -> (i32, i32) {
    %c0_i32 = arith.constant 0 : i32
    %c0_i32_0 = arith.constant 0 : i32
    %c0_i32_1 = arith.constant 0 : i32
    return %c0_i32, %c0_i32_0 : i32, i32
  }
  func.func @transform_9(%arg0: i32) -> (i32, i32) {
    %c0_i32 = arith.constant 0 : i32
    %c0_i32_0 = arith.constant 0 : i32
    %c0_i32_1 = arith.constant 0 : i32
    return %c0_i32, %c0_i32_0 : i32, i32
  }
  func.func @transform_10(%arg0: i32) -> (i32, i32) {
    %c0_i32 = arith.constant 0 : i32
    %c0_i32_0 = arith.constant 0 : i32
    %c0_i32_1 = arith.constant 0 : i32
    return %c0_i32, %c0_i32_0 : i32, i32
  }
  func.func @transform_11(%arg0: i32) -> (i32, i32) {
    %c0_i32 = arith.constant 0 : i32
    %c0_i32_0 = arith.constant 0 : i32
    return %arg0, %c0_i32 : i32, i32
  }
}

</mosaic_0001>

<llo_original>
// kernel: classifier_forward.1
$region0: #{classifier_forward.1}
  #allocation0 [shape = 'u32[]', space=smem, size = 0x4, offset = 0x4, fixed_abs, tag = 'smem constant byte address 0x4 - core index']
  #allocation1 [shape = 'u32[144,128]{1,0:T(1,128)}', space=vmem, size = 0x12000, scoped, tag = 'internal scratch']
  %s0 = inlined_call_operand.hbm [shape: f32[8,32], index: 0, kind: input, shape index: {}]
  %s1 = inlined_call_operand.hbm [shape: bf16[32,1024], index: 1, kind: input, shape index: {}]
  %s2 = inlined_call_operand.hbm [shape: f32[1,1024], index: 2, kind: input, shape index: {}]
  %s3 = inlined_call_operand.hbm [shape: bf16[1024,1024], index: 3, kind: input, shape index: {}]
  %s4 = inlined_call_operand.hbm [shape: f32[1,1024], index: 4, kind: input, shape index: {}]
  %s5 = inlined_call_operand.hbm [shape: bf16[1024,1024], index: 5, kind: input, shape index: {}]
  %s6 = inlined_call_operand.hbm [shape: f32[1,1024], index: 6, kind: input, shape index: {}]
  %s7 = inlined_call_operand.hbm [shape: bf16[1024,1024], index: 7, kind: input, shape index: {}]
  %s8 = inlined_call_operand.hbm [shape: f32[1,1024], index: 8, kind: input, shape index: {}]
  %s9 = inlined_call_operand.vmem [shape: bf16[1024,128], index: 9, kind: input, shape index: {}]
  %s10 = inlined_call_operand.vmem [shape: f32[1,128], index: 10, kind: input, shape index: {}]
  %s11 = inlined_call_operand.vmem [shape: f32[8,128], index: 11, kind: output, shape index: {}]
  %s12 = sld [smem:[#allocation0]]
  $region90: #{classifier_forward.1} parent=0
    _
  %s14 = ssub.s32 1, %s12
  %s15 = scalar_select 0, %s14, %s12
  $region1: #{classifier_forward.1} parent=0
    #allocation2 [shape = 'u8[4096]{0}', space=vmem, size = 0x1000, scoped, tag = 'input window, operand 0, single buffered']
    #allocation3 [shape = 's32[1]{0}', space=sflag, size = 0x4, scoped, tag = 'scoped memory for classifier_forward.1']
    #allocation4 [shape = 'u8[65536]{0}', space=vmem, size = 0x10000, scoped, tag = 'input window, operand 1, single buffered']
    #allocation5 [shape = 's32[1]{0}', space=sflag, size = 0x4, scoped, tag = 'scoped memory for classifier_forward.1']
    #allocation6 [shape = 'u8[4096]{0}', space=vmem, size = 0x1000, scoped, tag = 'input window, operand 2, single buffered']
    #allocation7 [shape = 'u8[2097152]{0}', space=vmem, size = 0x200000, scoped, tag = 'input window, operand 3, single buffered']
    #allocation8 [shape = 's32[1]{0}', space=sflag, size = 0x4, scoped, tag = 'scoped memory for classifier_forward.1']
    #allocation9 [shape = 'u8[4096]{0}', space=vmem, size = 0x1000, scoped, tag = 'input window, operand 4, single buffered']
    #allocation10 [shape = 'u8[2097152]{0}', space=vmem, size = 0x200000, scoped, tag = 'input window, operand 5, single buffered']
    #allocation11 [shape = 's32[1]{0}', space=sflag, size = 0x4, scoped, tag = 'scoped memory for classifier_forward.1']
    #allocation12 [shape = 'u8[4096]{0}', space=vmem, size = 0x1000, scoped, tag = 'input window, operand 6, single buffered']
    #allocation13 [shape = 'u8[2097152]{0}', space=vmem, size = 0x200000, scoped, tag = 'input window, operand 7, single buffered']
    #allocation14 [shape = 's32[1]{0}', space=sflag, size = 0x4, scoped, tag = 'scoped memory for classifier_forward.1']
    #allocation15 [shape = 'u8[4096]{0}', space=vmem, size = 0x1000, scoped, tag = 'input window, operand 8, single buffered']
    %16 = vsyncpa [#allocation3], 0
    %17 = vsyncpa [#allocation5], 0
    %18 = vsyncpa [#allocation8], 0
    %19 = vsyncpa [#allocation11], 0
    %20 = vsyncpa [#allocation14], 0
    // Predicated region
    $region2: #{classifier_forward.1} parent=1 // pred_check
      _
    $region3: #{classifier_forward.1} parent=1 // pred_check_branch
      %22 = sbr.rel (0) target = $region5
    $region4: #{classifier_forward.1} parent=1 // pred_region
      %s24 = ssub.s32 128, 128
      %25 = vsyncadd [#allocation3], %s24
      %s27 = sshll.u32 [#allocation2], 4
      %s28 = int_to_ptr.vmem [resolvable:$true] %s27
      %30 = dma.hbm_to_vmem [thread:$0]  %s0, 128, %s28, [#allocation3]
    $region5: #{classifier_forward.1} parent=1 // pred_fallthru
      _
    // Predicated region
    $region6: #{classifier_forward.1} parent=1 // pred_check
      _
    $region7: #{classifier_forward.1} parent=1 // pred_check_branch
      %32 = sbr.rel (0) target = $region9
    $region8: #{classifier_forward.1} parent=1 // pred_region
      %s34 = ssub.s32 2048, 2048
      %35 = vsyncadd [#allocation5], %s34
      %s36 = sshll.u32 [#allocation4], 4
      %s37 = int_to_ptr.vmem [resolvable:$true] %s36
      %42 = dma.hbm_to_vmem [thread:$0]  %s1, 2048, %s37, [#allocation5], 512, 512, 32
    $region9: #{classifier_forward.1} parent=1 // pred_fallthru
      _
    // Predicated region
    $region10: #{classifier_forward.1} parent=1 // pred_check
      _
    $region11: #{classifier_forward.1} parent=1 // pred_check_branch
      %44 = sbr.rel (0) target = $region13
    $region12: #{classifier_forward.1} parent=1 // pred_region
      %s46 = ssub.s32 128, 128
      %47 = vsyncadd [#allocation5], %s46
      %s49 = sshll.u32 [#allocation6], 4
      %s50 = int_to_ptr.vmem [resolvable:$true] %s49
      %52 = dma.hbm_to_vmem [thread:$0]  %s2, 128, %s50, [#allocation5]
    $region13: #{classifier_forward.1} parent=1 // pred_fallthru
      _
    // Predicated region
    $region14: #{classifier_forward.1} parent=1 // pred_check
      _
    $region15: #{classifier_forward.1} parent=1 // pred_check_branch
      %54 = sbr.rel (0) target = $region17
    $region16: #{classifier_forward.1} parent=1 // pred_region
      %s56 = ssub.s32 65536, 65536
      %57 = vsyncadd [#allocation8], %s56
      %s58 = sshll.u32 [#allocation7], 4
      %s59 = int_to_ptr.vmem [resolvable:$true] %s58
      %64 = dma.hbm_to_vmem [thread:$0]  %s3, 65536, %s59, [#allocation8], 512, 512, 32
    $region17: #{classifier_forward.1} parent=1 // pred_fallthru
      _
    // Predicated region
    $region18: #{classifier_forward.1} parent=1 // pred_check
      _
    $region19: #{classifier_forward.1} parent=1 // pred_check_branch
      %66 = sbr.rel (0) target = $region21
    $region20: #{classifier_forward.1} parent=1 // pred_region
      %s68 = ssub.s32 128, 128
      %69 = vsyncadd [#allocation8], %s68
      %s71 = sshll.u32 [#allocation9], 4
      %s72 = int_to_ptr.vmem [resolvable:$true] %s71
      %74 = dma.hbm_to_vmem [thread:$0]  %s4, 128, %s72, [#allocation8]
    $region21: #{classifier_forward.1} parent=1 // pred_fallthru
      _
    // Predicated region
    $region22: #{classifier_forward.1} parent=1 // pred_check
      _
    $region23: #{classifier_forward.1} parent=1 // pred_check_branch
      %76 = sbr.rel (0) target = $region25
    $region24: #{classifier_forward.1} parent=1 // pred_region
      %s78 = ssub.s32 65536, 65536
      %79 = vsyncadd [#allocation11], %s78
      %s80 = sshll.u32 [#allocation10], 4
      %s81 = int_to_ptr.vmem [resolvable:$true] %s80
      %86 = dma.hbm_to_vmem [thread:$0]  %s5, 65536, %s81, [#allocation11], 512, 512, 32
    $region25: #{classifier_forward.1} parent=1 // pred_fallthru
      _
    // Predicated region
    $region26: #{classifier_forward.1} parent=1 // pred_check
      _
    $region27: #{classifier_forward.1} parent=1 // pred_check_branch
      %88 = sbr.rel (0) target = $region29
    $region28: #{classifier_forward.1} parent=1 // pred_region
      %s90 = ssub.s32 128, 128
      %91 = vsyncadd [#allocation11], %s90
      %s93 = sshll.u32 [#allocation12], 4
      %s94 = int_to_ptr.vmem [resolvable:$true] %s93
      %96 = dma.hbm_to_vmem [thread:$0]  %s6, 128, %s94, [#allocation11]
    $region29: #{classifier_forward.1} parent=1 // pred_fallthru
      _
    // Predicated region
    $region30: #{classifier_forward.1} parent=1 // pred_check
      _
    $region31: #{classifier_forward.1} parent=1 // pred_check_branch
      %98 = sbr.rel (0) target = $region33
    $region32: #{classifier_forward.1} parent=1 // pred_region
      %s100 = ssub.s32 65536, 65536
      %101 = vsyncadd [#allocation14], %s100
      %s102 = sshll.u32 [#allocation13], 4
      %s103 = int_to_ptr.vmem [resolvable:$true] %s102
      %108 = dma.hbm_to_vmem [thread:$0]  %s7, 65536, %s103, [#allocation14], 512, 512, 32
    $region33: #{classifier_forward.1} parent=1 // pred_fallthru
      _
    // Predicated region
    $region34: #{classifier_forward.1} parent=1 // pred_check
      _
    $region35: #{classifier_forward.1} parent=1 // pred_check_branch
      %110 = sbr.rel (0) target = $region37
    $region36: #{classifier_forward.1} parent=1 // pred_region
      %s112 = ssub.s32 128, 128
      %113 = vsyncadd [#allocation14], %s112
      %s115 = sshll.u32 [#allocation15], 4
      %s116 = int_to_ptr.vmem [resolvable:$true] %s115
      %118 = dma.hbm_to_vmem [thread:$0]  %s8, 128, %s116, [#allocation14]
    $region37: #{classifier_forward.1} parent=1 // pred_fallthru
      _
    // Predicated region
    $region38: #{classifier_forward.1} parent=1 // pred_check
      _
    $region39: #{classifier_forward.1} parent=1 // pred_check_branch
      %120 = sbr.rel (0) target = $region41
    $region40: #{classifier_forward.1} parent=1 // pred_region
      _
    $region41: #{classifier_forward.1} parent=1 // pred_fallthru
      _
    // Predicated region
    $region42: #{classifier_forward.1} parent=1 // pred_check
      _
    $region43: #{classifier_forward.1} parent=1 // pred_check_branch
      %122 = sbr.rel (0) target = $region45
    $region44: #{classifier_forward.1} parent=1 // pred_region
      _
    $region45: #{classifier_forward.1} parent=1 // pred_fallthru
      _
    // Predicated region
    $region46: #{classifier_forward.1} parent=1 // pred_check
      _
    $region47: #{classifier_forward.1} parent=1 // pred_check_branch
      %124 = sbr.rel (0) target = $region49
    $region48: #{classifier_forward.1} parent=1 // pred_region
      %125 = dma.done [#allocation3], 128
    $region49: #{classifier_forward.1} parent=1 // pred_fallthru
      _
    // Predicated region
    $region50: #{classifier_forward.1} parent=1 // pred_check
      _
    $region51: #{classifier_forward.1} parent=1 // pred_check_branch
      %127 = sbr.rel (0) target = $region53
    $region52: #{classifier_forward.1} parent=1 // pred_region
      %128 = dma.done [#allocation5], 2048
    $region53: #{classifier_forward.1} parent=1 // pred_fallthru
      _
    // Predicated region
    $region54: #{classifier_forward.1} parent=1 // pred_check
      _
    $region55: #{classifier_forward.1} parent=1 // pred_check_branch
      %130 = sbr.rel (0) target = $region57
    $region56: #{classifier_forward.1} parent=1 // pred_region
      %131 = dma.done [#allocation5], 128
    $region57: #{classifier_forward.1} parent=1 // pred_fallthru
      _
    // Predicated region
    $region58: #{classifier_forward.1} parent=1 // pred_check
      _
    $region59: #{classifier_forward.1} parent=1 // pred_check_branch
      %133 = sbr.rel (0) target = $region61
    $region60: #{classifier_forward.1} parent=1 // pred_region
      %134 = dma.done [#allocation8], 65536
    $region61: #{classifier_forward.1} parent=1 // pred_fallthru
      _
    // Predicated region
    $region62: #{classifier_forward.1} parent=1 // pred_check
      _
    $region63: #{classifier_forward.1} parent=1 // pred_check_branch
      %136 = sbr.rel (0) target = $region65
    $region64: #{classifier_forward.1} parent=1 // pred_region
      %137 = dma.done [#allocation8], 128
    $region65: #{classifier_forward.1} parent=1 // pred_fallthru
      _
    // Predicated region
    $region66: #{classifier_forward.1} parent=1 // pred_check
      _
    $region67: #{classifier_forward.1} parent=1 // pred_check_branch
      %139 = sbr.rel (0) target = $region69
    $region68: #{classifier_forward.1} parent=1 // pred_region
      %140 = dma.done [#allocation11], 65536
    $region69: #{classifier_forward.1} parent=1 // pred_fallthru
      _
    // Predicated region
    $region70: #{classifier_forward.1} parent=1 // pred_check
      _
    $region71: #{classifier_forward.1} parent=1 // pred_check_branch
      %142 = sbr.rel (0) target = $region73
    $region72: #{classifier_forward.1} parent=1 // pred_region
      %143 = dma.done [#allocation11], 128
    $region73: #{classifier_forward.1} parent=1 // pred_fallthru
      _
    // Predicated region
    $region74: #{classifier_forward.1} parent=1 // pred_check
      _
    $region75: #{classifier_forward.1} parent=1 // pred_check_branch
      %145 = sbr.rel (0) target = $region77
    $region76: #{classifier_forward.1} parent=1 // pred_region
      %146 = dma.done [#allocation14], 65536
    $region77: #{classifier_forward.1} parent=1 // pred_fallthru
      _
    // Predicated region
    $region78: #{classifier_forward.1} parent=1 // pred_check
      _
    $region79: #{classifier_forward.1} parent=1 // pred_check_branch
      %148 = sbr.rel (0) target = $region81
    $region80: #{classifier_forward.1} parent=1 // pred_region
      %149 = dma.done [#allocation14], 128
    $region81: #{classifier_forward.1} parent=1 // pred_fallthru
      _
    %v151 = vld [vmem:[#allocation2] sm:$0xff]
    %v152 = vpack.c.bf16 %v151, %v151
    %v153 = vld [vmem:[#allocation4] sm:$0xff]
    %v154 = vld [vmem:[#allocation4 + $0x8] sm:$0xff]
    %v155 = vld [vmem:[#allocation4 + $0x10] sm:$0xff]
    %v156 = vld [vmem:[#allocation4 + $0x18] sm:$0xff]
    %v157 = vld [vmem:[#allocation4 + $0x20] sm:$0xff]
    %v158 = vld [vmem:[#allocation4 + $0x28] sm:$0xff]
    %v159 = vld [vmem:[#allocation4 + $0x30] sm:$0xff]
    %v160 = vld [vmem:[#allocation4 + $0x38] sm:$0xff]
    %v161 = vld [vmem:[#allocation4 + $0x40] sm:$0xff]
    %v162 = vld [vmem:[#allocation4 + $0x48] sm:$0xff]
    %v163 = vld [vmem:[#allocation4 + $0x50] sm:$0xff]
    %v164 = vld [vmem:[#allocation4 + $0x58] sm:$0xff]
    %v165 = vld [vmem:[#allocation4 + $0x60] sm:$0xff]
    %v166 = vld [vmem:[#allocation4 + $0x68] sm:$0xff]
    %v167 = vld [vmem:[#allocation4 + $0x70] sm:$0xff]
    %v168 = vld [vmem:[#allocation4 + $0x78] sm:$0xff]
    %v169 = vld [vmem:[#allocation6] sm:$0xff]
    %v171 = vlaneseq
    %v172 = vshrl.u32 %v171, 7
    %v173 = vsub.s32 0, %v172
    %v174 = vrot.slane %v169, %v173
    %v175 = vlaneseq
    %v176 = vshrl.u32 %v175, 7
    %v177 = vsub.s32 1, %v176
    %v178 = vrot.slane %v169, %v177
    %v179 = vlaneseq
    %v180 = vshrl.u32 %v179, 7
    %v181 = vsub.s32 2, %v180
    %v182 = vrot.slane %v169, %v181
    %v183 = vlaneseq
    %v184 = vshrl.u32 %v183, 7
    %v185 = vsub.s32 3, %v184
    %v186 = vrot.slane %v169, %v185
    %v187 = vlaneseq
    %v188 = vshrl.u32 %v187, 7
    %v189 = vsub.s32 4, %v188
    %v190 = vrot.slane %v169, %v189
    %v191 = vlaneseq
    %v192 = vshrl.u32 %v191, 7
    %v193 = vsub.s32 5, %v192
    %v194 = vrot.slane %v169, %v193
    %v195 = vlaneseq
    %v196 = vshrl.u32 %v195, 7
    %v197 = vsub.s32 6, %v196
    %v198 = vrot.slane %v169, %v197
    %v199 = vlaneseq
    %v200 = vshrl.u32 %v199, 7
    %v201 = vsub.s32 7, %v200
    %v202 = vrot.slane %v169, %v201
    %v227 = vunpack.c.l.b16 %v153
    %v228 = vunpack.c.h.b16 %v153
    %v229 = vunpack.c.l.b16 %v154
    %v230 = vunpack.c.h.b16 %v154
    %v231 = vunpack.c.l.b16 %v155
    %v232 = vunpack.c.h.b16 %v155
    %v233 = vunpack.c.l.b16 %v156
    %v234 = vunpack.c.h.b16 %v156
    %v235 = vunpack.c.l.b16 %v157
    %v236 = vunpack.c.h.b16 %v157
    %v237 = vunpack.c.l.b16 %v158
    %v238 = vunpack.c.h.b16 %v158
    %v239 = vunpack.c.l.b16 %v159
    %v240 = vunpack.c.h.b16 %v159
    %v241 = vunpack.c.l.b16 %v160
    %v242 = vunpack.c.h.b16 %v160
    %v243 = vunpack.c.l.b16 %v161
    %v244 = vunpack.c.h.b16 %v161
    %v245 = vunpack.c.l.b16 %v162
    %v246 = vunpack.c.h.b16 %v162
    %v247 = vunpack.c.l.b16 %v163
    %v248 = vunpack.c.h.b16 %v163
    %v249 = vunpack.c.l.b16 %v164
    %v250 = vunpack.c.h.b16 %v164
    %v251 = vunpack.c.l.b16 %v165
    %v252 = vunpack.c.h.b16 %v165
    %v253 = vunpack.c.l.b16 %v166
    %v254 = vunpack.c.h.b16 %v166
    %v255 = vunpack.c.l.b16 %v167
    %v256 = vunpack.c.h.b16 %v167
    %v257 = vunpack.c.l.b16 %v168
    %v258 = vunpack.c.h.b16 %v168
    %v259 = vpack.c.b16 %v235, %v227
    %v260 = vpack.c.b16 %v236, %v228
    %v261 = vpack.c.b16 %v237, %v229
    %v262 = vpack.c.b16 %v238, %v230
    %v263 = vpack.c.b16 %v239, %v231
    %v264 = vpack.c.b16 %v240, %v232
    %v265 = vpack.c.b16 %v241, %v233
    %v266 = vpack.c.b16 %v242, %v234
    %v267 = vpack.c.b16 %v251, %v243
    %v268 = vpack.c.b16 %v252, %v244
    %v269 = vpack.c.b16 %v253, %v245
    %v270 = vpack.c.b16 %v254, %v246
    %v271 = vpack.c.b16 %v255, %v247
    %v272 = vpack.c.b16 %v256, %v248
    %v273 = vpack.c.b16 %v257, %v249
    %v274 = vpack.c.b16 %v258, %v250
    %vm291 = vcmask 261120
    %v293 = vsel %vm291, %v152, 0
    %295 = vmatprep.subr.bf16.mxu0 %v260
    %296 = vmatpush1.bf16.msra.mxu0 %v259
    %297 = vmatprep.subr.bf16.mxu0 %v268
    %298 = vmatpush1.bf16.msra.mxu0 %v267
    %299 = vmatprep.subr.bf16.mxu0 0
    %300 = vmatpush1.bf16.msra.mxu0 0
    %301 = vmatprep.subr.bf16.mxu0 0
    %302 = vmatpush1.bf16.msra.mxu0 0
    %303 = vmatprep.subr.bf16.mxu0 0
    %304 = vmatpush1.bf16.msra.mxu0 0
    %305 = vmatprep.subr.bf16.mxu0 0
    %306 = vmatpush1.bf16.msra.mxu0 0
    %307 = vmatprep.subr.bf16.mxu0 0
    %308 = vmatpush1.bf16.msra.mxu0 0
    %309 = vmatprep.subr.bf16.mxu0 0
    %310 = vmatpush1.bf16.msra.mxu0 0
    %311 = vmatprep.subr.bf16.mxu0 0
    %312 = vmatpush1.bf16.msra.mxu0 0
    %313 = vmatprep.subr.bf16.mxu0 0
    %314 = vmatpush1.bf16.msra.mxu0 0
    %315 = vmatprep.subr.bf16.mxu0 0
    %316 = vmatpush1.bf16.msra.mxu0 0
    %317 = vmatprep.subr.bf16.mxu0 0
    %318 = vmatpush1.bf16.msra.mxu0 0
    %319 = vmatprep.subr.bf16.mxu0 0
    %320 = vmatpush1.bf16.msra.mxu0 0
    %321 = vmatprep.subr.bf16.mxu0 0
    %322 = vmatpush1.bf16.msra.mxu0 0
    %323 = vmatprep.subr.bf16.mxu0 0
    %324 = vmatpush1.bf16.msra.mxu0 0
    %325 = vmatprep.subr.bf16.mxu0 0
    %326 = vmatpush1.bf16.msra.mxu0 0
    %327 = vmatprep.mubr.bf16.mxu0 0
    %328 = vmatmul.mubr.bf16.gmra.mrb[0].mxu0 %v293
    %v329 = vpop.f32.mrb[0].mxu0
    %v330 = vadd.f32 %v174, %v329
    %v331 = vpop.f32.mrb[0].mxu0
    %v332 = vadd.f32 %v178, %v331
    %v333 = vpop.f32.mrb[0].mxu0
    %v334 = vpop.f32.mrb[0].mxu0
    %335 = vdwg.mxu0
    %336 = vmatprep.subr.bf16.mxu0 %v262
    %337 = vmatpush1.bf16.msra.mxu0 %v261
    %338 = vmatprep.subr.bf16.mxu0 %v270
    %339 = vmatpush1.bf16.msra.mxu0 %v269
    %340 = vmatprep.subr.bf16.mxu0 0
    %341 = vmatpush1.bf16.msra.mxu0 0
    %342 = vmatprep.subr.bf16.mxu0 0
    %343 = vmatpush1.bf16.msra.mxu0 0
    %344 = vmatprep.subr.bf16.mxu0 0
    %345 = vmatpush1.bf16.msra.mxu0 0
    %346 = vmatprep.subr.bf16.mxu0 0
    %347 = vmatpush1.bf16.msra.mxu0 0
    %348 = vmatprep.subr.bf16.mxu0 0
    %349 = vmatpush1.bf16.msra.mxu0 0
    %350 = vmatprep.subr.bf16.mxu0 0
    %351 = vmatpush1.bf16.msra.mxu0 0
    %352 = vmatprep.subr.bf16.mxu0 0
    %353 = vmatpush1.bf16.msra.mxu0 0
    %354 = vmatprep.subr.bf16.mxu0 0
    %355 = vmatpush1.bf16.msra.mxu0 0
    %356 = vmatprep.subr.bf16.mxu0 0
    %357 = vmatpush1.bf16.msra.mxu0 0
    %358 = vmatprep.subr.bf16.mxu0 0
    %359 = vmatpush1.bf16.msra.mxu0 0
    %360 = vmatprep.subr.bf16.mxu0 0
    %361 = vmatpush1.bf16.msra.mxu0 0
    %362 = vmatprep.subr.bf16.mxu0 0
    %363 = vmatpush1.bf16.msra.mxu0 0
    %364 = vmatprep.subr.bf16.mxu0 0
    %365 = vmatpush1.bf16.msra.mxu0 0
    %366 = vmatprep.subr.bf16.mxu0 0
    %367 = vmatpush1.bf16.msra.mxu0 0
    %368 = vmatprep.mubr.bf16.mxu0 0
    %369 = vmatmul.mubr.bf16.gmra.mrb[0].mxu0 %v293
    %v370 = vpop.f32.mrb[0].mxu0
    %v371 = vadd.f32 %v182, %v370
    %v372 = vpop.f32.mrb[0].mxu0
    %v373 = vadd.f32 %v186, %v372
    %v374 = vpop.f32.mrb[0].mxu0
    %v375 = vpop.f32.mrb[0].mxu0
    %376 = vdwg.mxu0
    %377 = vmatprep.subr.bf16.mxu0 %v264
    %378 = vmatpush1.bf16.msra.mxu0 %v263
    %379 = vmatprep.subr.bf16.mxu0 %v272
    %380 = vmatpush1.bf16.msra.mxu0 %v271
    %381 = vmatprep.subr.bf16.mxu0 0
    %382 = vmatpush1.bf16.msra.mxu0 0
    %383 = vmatprep.subr.bf16.mxu0 0
    %384 = vmatpush1.bf16.msra.mxu0 0
    %385 = vmatprep.subr.bf16.mxu0 0
    %386 = vmatpush1.bf16.msra.mxu0 0
    %387 = vmatprep.subr.bf16.mxu0 0
    %388 = vmatpush1.bf16.msra.mxu0 0
    %389 = vmatprep.subr.bf16.mxu0 0
    %390 = vmatpush1.bf16.msra.mxu0 0
    %391 = vmatprep.subr.bf16.mxu0 0
    %392 = vmatpush1.bf16.msra.mxu0 0
    %393 = vmatprep.subr.bf16.mxu0 0
    %394 = vmatpush1.bf16.msra.mxu0 0
    %395 = vmatprep.subr.bf16.mxu0 0
    %396 = vmatpush1.bf16.msra.mxu0 0
    %397 = vmatprep.subr.bf16.mxu0 0
    %398 = vmatpush1.bf16.msra.mxu0 0
    %399 = vmatprep.subr.bf16.mxu0 0
    %400 = vmatpush1.bf16.msra.mxu0 0
    %401 = vmatprep.subr.bf16.mxu0 0
    %402 = vmatpush1.bf16.msra.mxu0 0
    %403 = vmatprep.subr.bf16.mxu0 0
    %404 = vmatpush1.bf16.msra.mxu0 0
    %405 = vmatprep.subr.bf16.mxu0 0
    %406 = vmatpush1.bf16.msra.mxu0 0
    %407 = vmatprep.subr.bf16.mxu0 0
    %408 = vmatpush1.bf16.msra.mxu0 0
    %409 = vmatprep.mubr.bf16.mxu0 0
    %410 = vmatmul.mubr.bf16.gmra.mrb[0].mxu0 %v293
    %v411 = vpop.f32.mrb[0].mxu0
    %v412 = vadd.f32 %v190, %v411
    %v413 = vpop.f32.mrb[0].mxu0
    %v414 = vadd.f32 %v194, %v413
    %v415 = vpop.f32.mrb[0].mxu0
    %v416 = vpop.f32.mrb[0].mxu0
    %417 = vdwg.mxu0
    %418 = vmatprep.subr.bf16.mxu0 %v266
    %419 = vmatpush1.bf16.msra.mxu0 %v265
    %420 = vmatprep.subr.bf16.mxu0 %v274
    %421 = vmatpush1.bf16.msra.mxu0 %v273
    %422 = vmatprep.subr.bf16.mxu0 0
    %423 = vmatpush1.bf16.msra.mxu0 0
    %424 = vmatprep.subr.bf16.mxu0 0
    %425 = vmatpush1.bf16.msra.mxu0 0
    %426 = vmatprep.subr.bf16.mxu0 0
    %427 = vmatpush1.bf16.msra.mxu0 0
    %428 = vmatprep.subr.bf16.mxu0 0
    %429 = vmatpush1.bf16.msra.mxu0 0
    %430 = vmatprep.subr.bf16.mxu0 0
    %431 = vmatpush1.bf16.msra.mxu0 0
    %432 = vmatprep.subr.bf16.mxu0 0
    %433 = vmatpush1.bf16.msra.mxu0 0
    %434 = vmatprep.subr.bf16.mxu0 0
    %435 = vmatpush1.bf16.msra.mxu0 0
    %436 = vmatprep.subr.bf16.mxu0 0
    %437 = vmatpush1.bf16.msra.mxu0 0
    %438 = vmatprep.subr.bf16.mxu0 0
    %439 = vmatpush1.bf16.msra.mxu0 0
    %440 = vmatprep.subr.bf16.mxu0 0
    %441 = vmatpush1.bf16.msra.mxu0 0
    %442 = vmatprep.subr.bf16.mxu0 0
    %443 = vmatpush1.bf16.msra.mxu0 0
    %444 = vmatprep.subr.bf16.mxu0 0
    %445 = vmatpush1.bf16.msra.mxu0 0
    %446 = vmatprep.subr.bf16.mxu0 0
    %447 = vmatpush1.bf16.msra.mxu0 0
    %448 = vmatprep.subr.bf16.mxu0 0
    %449 = vmatpush1.bf16.msra.mxu0 0
    %450 = vmatprep.mubr.bf16.mxu0 0
    %451 = vmatmul.mubr.bf16.gmra.mrb[0].mxu0 %v293
    %v452 = vpop.f32.mrb[0].mxu0
    %v453 = vadd.f32 %v198, %v452
    %v454 = vpop.f32.mrb[0].mxu0
    %v455 = vadd.f32 %v202, %v454
    %v456 = vpop.f32.mrb[0].mxu0
    %v457 = vpop.f32.mrb[0].mxu0
    %458 = vdwg.mxu0
    %v459 = vmul.f32 %v330, 0.1
    %v460 = vmul.f32 %v332, 0.1
    %v461 = vmul.f32 %v371, 0.1
    %v462 = vmul.f32 %v373, 0.1
    %v463 = vmul.f32 %v412, 0.1
    %v464 = vmul.f32 %v414, 0.1
    %v465 = vmul.f32 %v453, 0.1
    %v466 = vmul.f32 %v455, 0.1
    %v467 = vmax.f32 %v330, %v459
    %v468 = vmax.f32 %v332, %v460
    %v469 = vmax.f32 %v371, %v461
    %v470 = vmax.f32 %v373, %v462
    %v471 = vmax.f32 %v412, %v463
    %v472 = vmax.f32 %v414, %v464
    %v473 = vmax.f32 %v453, %v465
    %v474 = vmax.f32 %v455, %v466
    %v475 = vpack.c.bf16 %v467, %v467
    %v476 = vpack.c.bf16 %v468, %v468
    %v477 = vpack.c.bf16 %v469, %v469
    %v478 = vpack.c.bf16 %v470, %v470
    %v479 = vpack.c.bf16 %v471, %v471
    %v480 = vpack.c.bf16 %v472, %v472
    %v481 = vpack.c.bf16 %v473, %v473
    %v482 = vpack.c.bf16 %v474, %v474
    %v483 = vld [vmem:[#allocation7] sm:$0xff]
    %v484 = vld [vmem:[#allocation7 + $0x8] sm:$0xff]
    %v485 = vld [vmem:[#allocation7 + $0x10] sm:$0xff]
    %v486 = vld [vmem:[#allocation7 + $0x18] sm:$0xff]
    %v487 = vld [vmem:[#allocation7 + $0x20] sm:$0xff]
    %v488 = vld [vmem:[#allocation7 + $0x28] sm:$0xff]
    %v489 = vld [vmem:[#allocation7 + $0x30] sm:$0xff]
    %v490 = vld [vmem:[#allocation7 + $0x38] sm:$0xff]
    %v491 = vld [vmem:[#allocation7 + $0x40] sm:$0xff]
    %v492 = vld [vmem:[#allocation7 + $0x48] sm:$0xff]
    %v493 = vld [vmem:[#allocation7 + $0x50] sm:$0xff]
    %v494 = vld [vmem:[#allocation7 + $0x58] sm:$0xff]
    %v495 = vld [vmem:[#allocation7 + $0x60] sm:$0xff]
    %v496 = vld [vmem:[#allocation7 + $0x68] sm:$0xff]
    %v497 = vld [vmem:[#allocation7 + $0x70] sm:$0xff]
    %v498 = vld [vmem:[#allocation7 + $0x78] sm:$0xff]
    %v499 = vld [vmem:[#allocation7 + $0x80] sm:$0xff]
    %v500 = vld [vmem:[#allocation7 + $0x88] sm:$0xff]
    %v501 = vld [vmem:[#allocation7 + $0x90] sm:$0xff]
    %v502 = vld [vmem:[#allocation7 + $0x98] sm:$0xff]
    %v503 = vld [vmem:[#allocation7 + $0xa0] sm:$0xff]
    %v504 = vld [vmem:[#allocation7 + $0xa8] sm:$0xff]
    %v505 = vld [vmem:[#allocation7 + $0xb0] sm:$0xff]
    %v506 = vld [vmem:[#allocation7 + $0xb8] sm:$0xff]
    %v507 = vld [vmem:[#allocation7 + $0xc0] sm:$0xff]
    %v508 = vld [vmem:[#allocation7 + $0xc8] sm:$0xff]
    %v509 = vld [vmem:[#allocation7 + $0xd0] sm:$0xff]
    %v510 = vld [vmem:[#allocation7 + $0xd8] sm:$0xff]
    %v511 = vld [vmem:[#allocation7 + $0xe0] sm:$0xff]
    %v512 = vld [vmem:[#allocation7 + $0xe8] sm:$0xff]
    %v513 = vld [vmem:[#allocation7 + $0xf0] sm:$0xff]
    %v514 = vld [vmem:[#allocation7 + $0xf8] sm:$0xff]
    %v515 = vld [vmem:[#allocation7 + $0x100] sm:$0xff]
    %v516 = vld [vmem:[#allocation7 + $0x108] sm:$0xff]
    %v517 = vld [vmem:[#allocation7 + $0x110] sm:$0xff]
    %v518 = vld [vmem:[#allocation7 + $0x118] sm:$0xff]
    %v519 = vld [vmem:[#allocation7 + $0x120] sm:$0xff]
    %v520 = vld [vmem:[#allocation7 + $0x128] sm:$0xff]
    %v521 = vld [vmem:[#allocation7 + $0x130] sm:$0xff]
    %v522 = vld [vmem:[#allocation7 + $0x138] sm:$0xff]
    %v523 = vld [vmem:[#allocation7 + $0x140] sm:$0xff]
    %v524 = vld [vmem:[#allocation7 + $0x148] sm:$0xff]
    %v525 = vld [vmem:[#allocation7 + $0x150] sm:$0xff]
    %v526 = vld [vmem:[#allocation7 + $0x158] sm:$0xff]
    %v527 = vld [vmem:[#allocation7 + $0x160] sm:$0xff]
    %v528 = vld [vmem:[#allocation7 + $0x168] sm:$0xff]
    %v529 = vld [vmem:[#allocation7 + $0x170] sm:$0xff]
    %v530 = vld [vmem:[#allocation7 + $0x178] sm:$0xff]
    %v531 = vld [vmem:[#allocation7 + $0x180] sm:$0xff]
    %v532 = vld [vmem:[#allocation7 + $0x188] sm:$0xff]
    %v533 = vld [vmem:[#allocation7 + $0x190] sm:$0xff]
    %v534 = vld [vmem:[#allocation7 + $0x198] sm:$0xff]
    %v535 = vld [vmem:[#allocation7 + $0x1a0] sm:$0xff]
    %v536 = vld [vmem:[#allocation7 + $0x1a8] sm:$0xff]
    %v537 = vld [vmem:[#allocation7 + $0x1b0] sm:$0xff]
    %v538 = vld [vmem:[#allocation7 + $0x1b8] sm:$0xff]
    %v539 = vld [vmem:[#allocation7 + $0x1c0] sm:$0xff]
    %v540 = vld [vmem:[#allocation7 + $0x1c8] sm:$0xff]
    %v541 = vld [vmem:[#allocation7 + $0x1d0] sm:$0xff]
    %v542 = vld [vmem:[#allocation7 + $0x1d8] sm:$0xff]
    %v543 = vld [vmem:[#allocation7 + $0x1e0] sm:$0xff]
    %v544 = vld [vmem:[#allocation7 + $0x1e8] sm:$0xff]
    %v545 = vld [vmem:[#allocation7 + $0x1f0] sm:$0xff]
    %v546 = vld [vmem:[#allocation7 + $0x1f8] sm:$0xff]
    %v547 = vld [vmem:[#allocation7 + $0x200] sm:$0xff]
    %v548 = vld [vmem:[#allocation7 + $0x208] sm:$0xff]
    %v549 = vld [vmem:[#allocation7 + $0x210] sm:$0xff]
    %v550 = vld [vmem:[#allocation7 + $0x218] sm:$0xff]
    %v551 = vld [vmem:[#allocation7 + $0x220] sm:$0xff]
    %v552 = vld [vmem:[#allocation7 + $0x228] sm:$0xff]
    %v553 = vld [vmem:[#allocation7 + $0x230] sm:$0xff]
    %v554 = vld [vmem:[#allocation7 + $0x238] sm:$0xff]
    %v555 = vld [vmem:[#allocation7 + $0x240] sm:$0xff]
    %v556 = vld [vmem:[#allocation7 + $0x248] sm:$0xff]
    %v557 = vld [vmem:[#allocation7 + $0x250] sm:$0xff]
    %v558 = vld [vmem:[#allocation7 + $0x258] sm:$0xff]
    %v559 = vld [vmem:[#allocation7 + $0x260] sm:$0xff]
    %v560 = vld [vmem:[#allocation7 + $0x268] sm:$0xff]
    %v561 = vld [vmem:[#allocation7 + $0x270] sm:$0xff]
    %v562 = vld [vmem:[#allocation7 + $0x278] sm:$0xff]
    %v563 = vld [vmem:[#allocation7 + $0x280] sm:$0xff]
    %v564 = vld [vmem:[#allocation7 + $0x288] sm:$0xff]
    %v565 = vld [vmem:[#allocation7 + $0x290] sm:$0xff]
    %v566 = vld [vmem:[#allocation7 + $0x298] sm:$0xff]
    %v567 = vld [vmem:[#allocation7 + $0x2a0] sm:$0xff]
    %v568 = vld [vmem:[#allocation7 + $0x2a8] sm:$0xff]
    %v569 = vld [vmem:[#allocation7 + $0x2b0] sm:$0xff]
    %v570 = vld [vmem:[#allocation7 + $0x2b8] sm:$0xff]
    %v571 = vld [vmem:[#allocation7 + $0x2c0] sm:$0xff]
    %v572 = vld [vmem:[#allocation7 + $0x2c8] sm:$0xff]
    %v573 = vld [vmem:[#allocation7 + $0x2d0] sm:$0xff]
    %v574 = vld [vmem:[#allocation7 + $0x2d8] sm:$0xff]
    %v575 = vld [vmem:[#allocation7 + $0x2e0] sm:$0xff]
    %v576 = vld [vmem:[#allocation7 + $0x2e8] sm:$0xff]
    %v577 = vld [vmem:[#allocation7 + $0x2f0] sm:$0xff]
    %v578 = vld [vmem:[#allocation7 + $0x2f8] sm:$0xff]
    %v579 = vld [vmem:[#allocation7 + $0x300] sm:$0xff]
    %v580 = vld [vmem:[#allocation7 + $0x308] sm:$0xff]
    %v581 = vld [vmem:[#allocation7 + $0x310] sm:$0xff]
    %v582 = vld [vmem:[#allocation7 + $0x318] sm:$0xff]
    %v583 = vld [vmem:[#allocation7 + $0x320] sm:$0xff]
    %v584 = vld [vmem:[#allocation7 + $0x328] sm:$0xff]
    %v585 = vld [vmem:[#allocation7 + $0x330] sm:$0xff]
    %v586 = vld [vmem:[#allocation7 + $0x338] sm:$0xff]
    %v587 = vld [vmem:[#allocation7 + $0x340] sm:$0xff]
    %v588 = vld [vmem:[#allocation7 + $0x348] sm:$0xff]
    %v589 = vld [vmem:[#allocation7 + $0x350] sm:$0xff]
    %v590 = vld [vmem:[#allocation7 + $0x358] sm:$0xff]
    %v591 = vld [vmem:[#allocation7 + $0x360] sm:$0xff]
    %v592 = vld [vmem:[#allocation7 + $0x368] sm:$0xff]
    %v593 = vld [vmem:[#allocation7 + $0x370] sm:$0xff]
    %v594 = vld [vmem:[#allocation7 + $0x378] sm:$0xff]
    %v595 = vld [vmem:[#allocation7 + $0x380] sm:$0xff]
    %v596 = vld [vmem:[#allocation7 + $0x388] sm:$0xff]
    %v597 = vld [vmem:[#allocation7 + $0x390] sm:$0xff]
    %v598 = vld [vmem:[#allocation7 + $0x398] sm:$0xff]
    %v599 = vld [vmem:[#allocation7 + $0x3a0] sm:$0xff]
    %v600 = vld [vmem:[#allocation7 + $0x3a8] sm:$0xff]
    %v601 = vld [vmem:[#allocation7 + $0x3b0] sm:$0xff]
    %v602 = vld [vmem:[#allocation7 + $0x3b8] sm:$0xff]
    %v603 = vld [vmem:[#allocation7 + $0x3c0] sm:$0xff]
    %v604 = vld [vmem:[#allocation7 + $0x3c8] sm:$0xff]
    %v605 = vld [vmem:[#allocation7 + $0x3d0] sm:$0xff]
    %v606 = vld [vmem:[#allocation7 + $0x3d8] sm:$0xff]
    %v607 = vld [vmem:[#allocation7 + $0x3e0] sm:$0xff]
    %v608 = vld [vmem:[#allocation7 + $0x3e8] sm:$0xff]
    %v609 = vld [vmem:[#allocation7 + $0x3f0] sm:$0xff]
    %v610 = vld [vmem:[#allocation7 + $0x3f8] sm:$0xff]
    %v611 = vld [vmem:[#allocation7 + $0x400] sm:$0xff]
    %v612 = vld [vmem:[#allocation7 + $0x408] sm:$0xff]
    %v613 = vld [vmem:[#allocation7 + $0x410] sm:$0xff]
    %v614 = vld [vmem:[#allocation7 + $0x418] sm:$0xff]
    %v615 = vld [vmem:[#allocation7 + $0x420] sm:$0xff]
    %v616 = vld [vmem:[#allocation7 + $0x428] sm:$0xff]
    %v617 = vld [vmem:[#allocation7 + $0x430] sm:$0xff]
    %v618 = vld [vmem:[#allocation7 + $0x438] sm:$0xff]
    %v619 = vld [vmem:[#allocation7 + $0x440] sm:$0xff]
    %v620 = vld [vmem:[#allocation7 + $0x448] sm:$0xff]
    %v621 = vld [vmem:[#allocation7 + $0x450] sm:$0xff]
    %v622 = vld [vmem:[#allocation7 + $0x458] sm:$0xff]
    %v623 = vld [vmem:[#allocation7 + $0x460] sm:$0xff]
    %v624 = vld [vmem:[#allocation7 + $0x468] sm:$0xff]
    %v625 = vld [vmem:[#allocation7 + $0x470] sm:$0xff]
    %v626 = vld [vmem:[#allocation7 + $0x478] sm:$0xff]
    %v627 = vld [vmem:[#allocation7 + $0x480] sm:$0xff]
    %v628 = vld [vmem:[#allocation7 + $0x488] sm:$0xff]
    %v629 = vld [vmem:[#allocation7 + $0x490] sm:$0xff]
    %v630 = vld [vmem:[#allocation7 + $0x498] sm:$0xff]
    %v631 = vld [vmem:[#allocation7 + $0x4a0] sm:$0xff]
    %v632 = vld [vmem:[#allocation7 + $0x4a8] sm:$0xff]
    %v633 = vld [vmem:[#allocation7 + $0x4b0] sm:$0xff]
    %v634 = vld [vmem:[#allocation7 + $0x4b8] sm:$0xff]
    %v635 = vld [vmem:[#allocation7 + $0x4c0] sm:$0xff]
    %v636 = vld [vmem:[#allocation7 + $0x4c8] sm:$0xff]
    %v637 = vld [vmem:[#allocation7 + $0x4d0] sm:$0xff]
    %v638 = vld [vmem:[#allocation7 + $0x4d8] sm:$0xff]
    %v639 = vld [vmem:[#allocation7 + $0x4e0] sm:$0xff]
    %v640 = vld [vmem:[#allocation7 + $0x4e8] sm:$0xff]
    %v641 = vld [vmem:[#allocation7 + $0x4f0] sm:$0xff]
    %v642 = vld [vmem:[#allocation7 + $0x4f8] sm:$0xff]
    %v643 = vld [vmem:[#allocation7 + $0x500] sm:$0xff]
    %v644 = vld [vmem:[#allocation7 + $0x508] sm:$0xff]
    %v645 = vld [vmem:[#allocation7 + $0x510] sm:$0xff]
    %v646 = vld [vmem:[#allocation7 + $0x518] sm:$0xff]
    %v647 = vld [vmem:[#allocation7 + $0x520] sm:$0xff]
    %v648 = vld [vmem:[#allocation7 + $0x528] sm:$0xff]
    %v649 = vld [vmem:[#allocation7 + $0x530] sm:$0xff]
    %v650 = vld [vmem:[#allocation7 + $0x538] sm:$0xff]
    %v651 = vld [vmem:[#allocation7 + $0x540] sm:$0xff]
    %v652 = vld [vmem:[#allocation7 + $0x548] sm:$0xff]
    %v653 = vld [vmem:[#allocation7 + $0x550] sm:$0xff]
    %v654 = vld [vmem:[#allocation7 + $0x558] sm:$0xff]
    %v655 = vld [vmem:[#allocation7 + $0x560] sm:$0xff]
    %v656 = vld [vmem:[#allocation7 + $0x568] sm:$0xff]
    %v657 = vld [vmem:[#allocation7 + $0x570] sm:$0xff]
    %v658 = vld [vmem:[#allocation7 + $0x578] sm:$0xff]
    %v659 = vld [vmem:[#allocation7 + $0x580] sm:$0xff]
    %v660 = vld [vmem:[#allocation7 + $0x588] sm:$0xff]
    %v661 = vld [vmem:[#allocation7 + $0x590] sm:$0xff]
    %v662 = vld [vmem:[#allocation7 + $0x598] sm:$0xff]
    %v663 = vld [vmem:[#allocation7 + $0x5a0] sm:$0xff]
    %v664 = vld [vmem:[#allocation7 + $0x5a8] sm:$0xff]
    %v665 = vld [vmem:[#allocation7 + $0x5b0] sm:$0xff]
    %v666 = vld [vmem:[#allocation7 + $0x5b8] sm:$0xff]
    %v667 = vld [vmem:[#allocation7 + $0x5c0] sm:$0xff]
    %v668 = vld [vmem:[#allocation7 + $0x5c8] sm:$0xff]
    %v669 = vld [vmem:[#allocation7 + $0x5d0] sm:$0xff]
    %v670 = vld [vmem:[#allocation7 + $0x5d8] sm:$0xff]
    %v671 = vld [vmem:[#allocation7 + $0x5e0] sm:$0xff]
    %v672 = vld [vmem:[#allocation7 + $0x5e8] sm:$0xff]
    %v673 = vld [vmem:[#allocation7 + $0x5f0] sm:$0xff]
    %v674 = vld [vmem:[#allocation7 + $0x5f8] sm:$0xff]
    %v675 = vld [vmem:[#allocation7 + $0x600] sm:$0xff]
    %v676 = vld [vmem:[#allocation7 + $0x608] sm:$0xff]
    %v677 = vld [vmem:[#allocation7 + $0x610] sm:$0xff]
    %v678 = vld [vmem:[#allocation7 + $0x618] sm:$0xff]
    %v679 = vld [vmem:[#allocation7 + $0x620] sm:$0xff]
    %v680 = vld [vmem:[#allocation7 + $0x628] sm:$0xff]
    %v681 = vld [vmem:[#allocation7 + $0x630] sm:$0xff]
    %v682 = vld [vmem:[#allocation7 + $0x638] sm:$0xff]
    %v683 = vld [vmem:[#allocation7 + $0x640] sm:$0xff]
    %v684 = vld [vmem:[#allocation7 + $0x648] sm:$0xff]
    %v685 = vld [vmem:[#allocation7 + $0x650] sm:$0xff]
    %v686 = vld [vmem:[#allocation7 + $0x658] sm:$0xff]
    %v687 = vld [vmem:[#allocation7 + $0x660] sm:$0xff]
    %v688 = vld [vmem:[#allocation7 + $0x668] sm:$0xff]
    %v689 = vld [vmem:[#allocation7 + $0x670] sm:$0xff]
    %v690 = vld [vmem:[#allocation7 + $0x678] sm:$0xff]
    %v691 = vld [vmem:[#allocation7 + $0x680] sm:$0xff]
    %v692 = vld [vmem:[#allocation7 + $0x688] sm:$0xff]
    %v693 = vld [vmem:[#allocation7 + $0x690] sm:$0xff]
    %v694 = vld [vmem:[#allocation7 + $0x698] sm:$0xff]
    %v695 = vld [vmem:[#allocation7 + $0x6a0] sm:$0xff]
    %v696 = vld [vmem:[#allocation7 + $0x6a8] sm:$0xff]
    %v697 = vld [vmem:[#allocation7 + $0x6b0] sm:$0xff]
    %v698 = vld [vmem:[#allocation7 + $0x6b8] sm:$0xff]
    %v699 = vld [vmem:[#allocation7 + $0x6c0] sm:$0xff]
    %v700 = vld [vmem:[#allocation7 + $0x6c8] sm:$0xff]
    %v701 = vld [vmem:[#allocation7 + $0x6d0] sm:$0xff]
    %v702 = vld [vmem:[#allocation7 + $0x6d8] sm:$0xff]
    %v703 = vld [vmem:[#allocation7 + $0x6e0] sm:$0xff]
    %v704 = vld [vmem:[#allocation7 + $0x6e8] sm:$0xff]
    %v705 = vld [vmem:[#allocation7 + $0x6f0] sm:$0xff]
    %v706 = vld [vmem:[#allocation7 + $0x6f8] sm:$0xff]
    %v707 = vld [vmem:[#allocation7 + $0x700] sm:$0xff]
    %v708 = vld [vmem:[#allocation7 + $0x708] sm:$0xff]
    %v709 = vld [vmem:[#allocation7 + $0x710] sm:$0xff]
    %v710 = vld [vmem:[#allocation7 + $0x718] sm:$0xff]
    %v711 = vld [vmem:[#allocation7 + $0x720] sm:$0xff]
    %v712 = vld [vmem:[#allocation7 + $0x728] sm:$0xff]
    %v713 = vld [vmem:[#allocation7 + $0x730] sm:$0xff]
    %v714 = vld [vmem:[#allocation7 + $0x738] sm:$0xff]
    %v715 = vld [vmem:[#allocation7 + $0x740] sm:$0xff]
    %v716 = vld [vmem:[#allocation7 + $0x748] sm:$0xff]
    %v717 = vld [vmem:[#allocation7 + $0x750] sm:$0xff]
    %v718 = vld [vmem:[#allocation7 + $0x758] sm:$0xff]
    %v719 = vld [vmem:[#allocation7 + $0x760] sm:$0xff]
    %v720 = vld [vmem:[#allocation7 + $0x768] sm:$0xff]
    %v721 = vld [vmem:[#allocation7 + $0x770] sm:$0xff]
    %v722 = vld [vmem:[#allocation7 + $0x778] sm:$0xff]
    %v723 = vld [vmem:[#allocation7 + $0x780] sm:$0xff]
    %v724 = vld [vmem:[#allocation7 + $0x788] sm:$0xff]
    %v725 = vld [vmem:[#allocation7 + $0x790] sm:$0xff]
    %v726 = vld [vmem:[#allocation7 + $0x798] sm:$0xff]
    %v727 = vld [vmem:[#allocation7 + $0x7a0] sm:$0xff]
    %v728 = vld [vmem:[#allocation7 + $0x7a8] sm:$0xff]
    %v729 = vld [vmem:[#allocation7 + $0x7b0] sm:$0xff]
    %v730 = vld [vmem:[#allocation7 + $0x7b8] sm:$0xff]
    %v731 = vld [vmem:[#allocation7 + $0x7c0] sm:$0xff]
    %v732 = vld [vmem:[#allocation7 + $0x7c8] sm:$0xff]
    %v733 = vld [vmem:[#allocation7 + $0x7d0] sm:$0xff]
    %v734 = vld [vmem:[#allocation7 + $0x7d8] sm:$0xff]
    %v735 = vld [vmem:[#allocation7 + $0x7e0] sm:$0xff]
    %v736 = vld [vmem:[#allocation7 + $0x7e8] sm:$0xff]
    %v737 = vld [vmem:[#allocation7 + $0x7f0] sm:$0xff]
    %v738 = vld [vmem:[#allocation7 + $0x7f8] sm:$0xff]
    %v739 = vld [vmem:[#allocation7 + $0x800] sm:$0xff]
    %v740 = vld [vmem:[#allocation7 + $0x808] sm:$0xff]
    %v741 = vld [vmem:[#allocation7 + $0x810] sm:$0xff]
    %v742 = vld [vmem:[#allocation7 + $0x818] sm:$0xff]
    %v743 = vld [vmem:[#allocation7 + $0x820] sm:$0xff]
    %v744 = vld [vmem:[#allocation7 + $0x828] sm:$0xff]
    %v745 = vld [vmem:[#allocation7 + $0x830] sm:$0xff]
    %v746 = vld [vmem:[#allocation7 + $0x838] sm:$0xff]
    %v747 = vld [vmem:[#allocation7 + $0x840] sm:$0xff]
    %v748 = vld [vmem:[#allocation7 + $0x848] sm:$0xff]
    %v749 = vld [vmem:[#allocation7 + $0x850] sm:$0xff]
    %v750 = vld [vmem:[#allocation7 + $0x858] sm:$0xff]
    %v751 = vld [vmem:[#allocation7 + $0x860] sm:$0xff]
    %v752 = vld [vmem:[#allocation7 + $0x868] sm:$0xff]
    %v753 = vld [vmem:[#allocation7 + $0x870] sm:$0xff]
    %v754 = vld [vmem:[#allocation7 + $0x878] sm:$0xff]
    %v755 = vld [vmem:[#allocation7 + $0x880] sm:$0xff]
    %v756 = vld [vmem:[#allocation7 + $0x888] sm:$0xff]
    %v757 = vld [vmem:[#allocation7 + $0x890] sm:$0xff]
    %v758 = vld [vmem:[#allocation7 + $0x898] sm:$0xff]
    %v759 = vld [vmem:[#allocation7 + $0x8a0] sm:$0xff]
    %v760 = vld [vmem:[#allocation7 + $0x8a8] sm:$0xff]
    %v761 = vld [vmem:[#allocation7 + $0x8b0] sm:$0xff]
    %v762 = vld [vmem:[#allocation7 + $0x8b8] sm:$0xff]
    %v763 = vld [vmem:[#allocation7 + $0x8c0] sm:$0xff]
    %v764 = vld [vmem:[#allocation7 + $0x8c8] sm:$0xff]
    %v765 = vld [vmem:[#allocation7 + $0x8d0] sm:$0xff]
    %v766 = vld [vmem:[#allocation7 + $0x8d8] sm:$0xff]
    %v767 = vld [vmem:[#allocation7 + $0x8e0] sm:$0xff]
    %v768 = vld [vmem:[#allocation7 + $0x8e8] sm:$0xff]
    %v769 = vld [vmem:[#allocation7 + $0x8f0] sm:$0xff]
    %v770 = vld [vmem:[#allocation7 + $0x8f8] sm:$0xff]
    %v771 = vld [vmem:[#allocation7 + $0x900] sm:$0xff]
    %v772 = vld [vmem:[#allocation7 + $0x908] sm:$0xff]
    %v773 = vld [vmem:[#allocation7 + $0x910] sm:$0xff]
    %v774 = vld [vmem:[#allocation7 + $0x918] sm:$0xff]
    %v775 = vld [vmem:[#allocation7 + $0x920] sm:$0xff]
    %v776 = vld [vmem:[#allocation7 + $0x928] sm:$0xff]
    %v777 = vld [vmem:[#allocation7 + $0x930] sm:$0xff]
    %v778 = vld [vmem:[#allocation7 + $0x938] sm:$0xff]
    %v779 = vld [vmem:[#allocation7 + $0x940] sm:$0xff]
    %v780 = vld [vmem:[#allocation7 + $0x948] sm:$0xff]
    %v781 = vld [vmem:[#allocation7 + $0x950] sm:$0xff]
    %v782 = vld [vmem:[#allocation7 + $0x958] sm:$0xff]
    %v783 = vld [vmem:[#allocation7 + $0x960] sm:$0xff]
    %v784 = vld [vmem:[#allocation7 + $0x968] sm:$0xff]
    %v785 = vld [vmem:[#allocation7 + $0x970] sm:$0xff]
    %v786 = vld [vmem:[#allocation7 + $0x978] sm:$0xff]
    %v787 = vld [vmem:[#allocation7 + $0x980] sm:$0xff]
    %v788 = vld [vmem:[#allocation7 + $0x988] sm:$0xff]
    %v789 = vld [vmem:[#allocation7 + $0x990] sm:$0xff]
    %v790 = vld [vmem:[#allocation7 + $0x998] sm:$0xff]
    %v791 = vld [vmem:[#allocation7 + $0x9a0] sm:$0xff]
    %v792 = vld [vmem:[#allocation7 + $0x9a8] sm:$0xff]
    %v793 = vld [vmem:[#allocation7 + $0x9b0] sm:$0xff]
    %v794 = vld [vmem:[#allocation7 + $0x9b8] sm:$0xff]
    %v795 = vld [vmem:[#allocation7 + $0x9c0] sm:$0xff]
    %v796 = vld [vmem:[#allocation7 + $0x9c8] sm:$0xff]
    %v797 = vld [vmem:[#allocation7 + $0x9d0] sm:$0xff]
    %v798 = vld [vmem:[#allocation7 + $0x9d8] sm:$0xff]
    %v799 = vld [vmem:[#allocation7 + $0x9e0] sm:$0xff]
    %v800 = vld [vmem:[#allocation7 + $0x9e8] sm:$0xff]
    %v801 = vld [vmem:[#allocation7 + $0x9f0] sm:$0xff]
    %v802 = vld [vmem:[#allocation7 + $0x9f8] sm:$0xff]
    %v803 = vld [vmem:[#allocation7 + $0xa00] sm:$0xff]
    %v804 = vld [vmem:[#allocation7 + $0xa08] sm:$0xff]
    %v805 = vld [vmem:[#allocation7 + $0xa10] sm:$0xff]
    %v806 = vld [vmem:[#allocation7 + $0xa18] sm:$0xff]
    %v807 = vld [vmem:[#allocation7 + $0xa20] sm:$0xff]
    %v808 = vld [vmem:[#allocation7 + $0xa28] sm:$0xff]
    %v809 = vld [vmem:[#allocation7 + $0xa30] sm:$0xff]
    %v810 = vld [vmem:[#allocation7 + $0xa38] sm:$0xff]
    %v811 = vld [vmem:[#allocation7 + $0xa40] sm:$0xff]
    %v812 = vld [vmem:[#allocation7 + $0xa48] sm:$0xff]
    %v813 = vld [vmem:[#allocation7 + $0xa50] sm:$0xff]
    %v814 = vld [vmem:[#allocation7 + $0xa58] sm:$0xff]
    %v815 = vld [vmem:[#allocation7 + $0xa60] sm:$0xff]
    %v816 = vld [vmem:[#allocation7 + $0xa68] sm:$0xff]
    %v817 = vld [vmem:[#allocation7 + $0xa70] sm:$0xff]
    %v818 = vld [vmem:[#allocation7 + $0xa78] sm:$0xff]
    %v819 = vld [vmem:[#allocation7 + $0xa80] sm:$0xff]
    %v820 = vld [vmem:[#allocation7 + $0xa88] sm:$0xff]
    %v821 = vld [vmem:[#allocation7 + $0xa90] sm:$0xff]
    %v822 = vld [vmem:[#allocation7 + $0xa98] sm:$0xff]
    %v823 = vld [vmem:[#allocation7 + $0xaa0] sm:$0xff]
    %v824 = vld [vmem:[#allocation7 + $0xaa8] sm:$0xff]
    %v825 = vld [vmem:[#allocation7 + $0xab0] sm:$0xff]
    %v826 = vld [vmem:[#allocation7 + $0xab8] sm:$0xff]
    %v827 = vld [vmem:[#allocation7 + $0xac0] sm:$0xff]
    %v828 = vld [vmem:[#allocation7 + $0xac8] sm:$0xff]
    %v829 = vld [vmem:[#allocation7 + $0xad0] sm:$0xff]
    %v830 = vld [vmem:[#allocation7 + $0xad8] sm:$0xff]
    %v831 = vld [vmem:[#allocation7 + $0xae0] sm:$0xff]
    %v832 = vld [vmem:[#allocation7 + $0xae8] sm:$0xff]
    %v833 = vld [vmem:[#allocation7 + $0xaf0] sm:$0xff]
    %v834 = vld [vmem:[#allocation7 + $0xaf8] sm:$0xff]
    %v835 = vld [vmem:[#allocation7 + $0xb00] sm:$0xff]
    %v836 = vld [vmem:[#allocation7 + $0xb08] sm:$0xff]
    %v837 = vld [vmem:[#allocation7 + $0xb10] sm:$0xff]
    %v838 = vld [vmem:[#allocation7 + $0xb18] sm:$0xff]
    %v839 = vld [vmem:[#allocation7 + $0xb20] sm:$0xff]
    %v840 = vld [vmem:[#allocation7 + $0xb28] sm:$0xff]
    %v841 = vld [vmem:[#allocation7 + $0xb30] sm:$0xff]
    %v842 = vld [vmem:[#allocation7 + $0xb38] sm:$0xff]
    %v843 = vld [vmem:[#allocation7 + $0xb40] sm:$0xff]
    %v844 = vld [vmem:[#allocation7 + $0xb48] sm:$0xff]
    %v845 = vld [vmem:[#allocation7 + $0xb50] sm:$0xff]
    %v846 = vld [vmem:[#allocation7 + $0xb58] sm:$0xff]
    %v847 = vld [vmem:[#allocation7 + $0xb60] sm:$0xff]
    %v848 = vld [vmem:[#allocation7 + $0xb68] sm:$0xff]
    %v849 = vld [vmem:[#allocation7 + $0xb70] sm:$0xff]
    %v850 = vld [vmem:[#allocation7 + $0xb78] sm:$0xff]
    %v851 = vld [vmem:[#allocation7 + $0xb80] sm:$0xff]
    %v852 = vld [vmem:[#allocation7 + $0xb88] sm:$0xff]
    %v853 = vld [vmem:[#allocation7 + $0xb90] sm:$0xff]
    %v854 = vld [vmem:[#allocation7 + $0xb98] sm:$0xff]
    %v855 = vld [vmem:[#allocation7 + $0xba0] sm:$0xff]
    %v856 = vld [vmem:[#allocation7 + $0xba8] sm:$0xff]
    %v857 = vld [vmem:[#allocation7 + $0xbb0] sm:$0xff]
    %v858 = vld [vmem:[#allocation7 + $0xbb8] sm:$0xff]
    %v859 = vld [vmem:[#allocation7 + $0xbc0] sm:$0xff]
    %v860 = vld [vmem:[#allocation7 + $0xbc8] sm:$0xff]
    %v861 = vld [vmem:[#allocation7 + $0xbd0] sm:$0xff]
    %v862 = vld [vmem:[#allocation7 + $0xbd8] sm:$0xff]
    %v863 = vld [vmem:[#allocation7 + $0xbe0] sm:$0xff]
    %v864 = vld [vmem:[#allocation7 + $0xbe8] sm:$0xff]
    %v865 = vld [vmem:[#allocation7 + $0xbf0] sm:$0xff]
    %v866 = vld [vmem:[#allocation7 + $0xbf8] sm:$0xff]
    %v867 = vld [vmem:[#allocation7 + $0xc00] sm:$0xff]
    %v868 = vld [vmem:[#allocation7 + $0xc08] sm:$0xff]
    %v869 = vld [vmem:[#allocation7 + $0xc10] sm:$0xff]
    %v870 = vld [vmem:[#allocation7 + $0xc18] sm:$0xff]
    %v871 = vld [vmem:[#allocation7 + $0xc20] sm:$0xff]
    %v872 = vld [vmem:[#allocation7 + $0xc28] sm:$0xff]
    %v873 = vld [vmem:[#allocation7 + $0xc30] sm:$0xff]
    %v874 = vld [vmem:[#allocation7 + $0xc38] sm:$0xff]
    %v875 = vld [vmem:[#allocation7 + $0xc40] sm:$0xff]
    %v876 = vld [vmem:[#allocation7 + $0xc48] sm:$0xff]
    %v877 = vld [vmem:[#allocation7 + $0xc50] sm:$0xff]
    %v878 = vld [vmem:[#allocation7 + $0xc58] sm:$0xff]
    %v879 = vld [vmem:[#allocation7 + $0xc60] sm:$0xff]
    %v880 = vld [vmem:[#allocation7 + $0xc68] sm:$0xff]
    %v881 = vld [vmem:[#allocation7 + $0xc70] sm:$0xff]
    %v882 = vld [vmem:[#allocation7 + $0xc78] sm:$0xff]
    %v883 = vld [vmem:[#allocation7 + $0xc80] sm:$0xff]
    %v884 = vld [vmem:[#allocation7 + $0xc88] sm:$0xff]
    %v885 = vld [vmem:[#allocation7 + $0xc90] sm:$0xff]
    %v886 = vld [vmem:[#allocation7 + $0xc98] sm:$0xff]
    %v887 = vld [vmem:[#allocation7 + $0xca0] sm:$0xff]
    %v888 = vld [vmem:[#allocation7 + $0xca8] sm:$0xff]
    %v889 = vld [vmem:[#allocation7 + $0xcb0] sm:$0xff]
    %v890 = vld [vmem:[#allocation7 + $0xcb8] sm:$0xff]
    %v891 = vld [vmem:[#allocation7 + $0xcc0] sm:$0xff]
    %v892 = vld [vmem:[#allocation7 + $0xcc8] sm:$0xff]
    %v893 = vld [vmem:[#allocation7 + $0xcd0] sm:$0xff]
    %v894 = vld [vmem:[#allocation7 + $0xcd8] sm:$0xff]
    %v895 = vld [vmem:[#allocation7 + $0xce0] sm:$0xff]
    %v896 = vld [vmem:[#allocation7 + $0xce8] sm:$0xff]
    %v897 = vld [vmem:[#allocation7 + $0xcf0] sm:$0xff]
    %v898 = vld [vmem:[#allocation7 + $0xcf8] sm:$0xff]
    %v899 = vld [vmem:[#allocation7 + $0xd00] sm:$0xff]
    %v900 = vld [vmem:[#allocation7 + $0xd08] sm:$0xff]
    %v901 = vld [vmem:[#allocation7 + $0xd10] sm:$0xff]
    %v902 = vld [vmem:[#allocation7 + $0xd18] sm:$0xff]
    %v903 = vld [vmem:[#allocation7 + $0xd20] sm:$0xff]
    %v904 = vld [vmem:[#allocation7 + $0xd28] sm:$0xff]
    %v905 = vld [vmem:[#allocation7 + $0xd30] sm:$0xff]
    %v906 = vld [vmem:[#allocation7 + $0xd38] sm:$0xff]
    %v907 = vld [vmem:[#allocation7 + $0xd40] sm:$0xff]
    %v908 = vld [vmem:[#allocation7 + $0xd48] sm:$0xff]
    %v909 = vld [vmem:[#allocation7 + $0xd50] sm:$0xff]
    %v910 = vld [vmem:[#allocation7 + $0xd58] sm:$0xff]
    %v911 = vld [vmem:[#allocation7 + $0xd60] sm:$0xff]
    %v912 = vld [vmem:[#allocation7 + $0xd68] sm:$0xff]
    %v913 = vld [vmem:[#allocation7 + $0xd70] sm:$0xff]
    %v914 = vld [vmem:[#allocation7 + $0xd78] sm:$0xff]
    %v915 = vld [vmem:[#allocation7 + $0xd80] sm:$0xff]
    %v916 = vld [vmem:[#allocation7 + $0xd88] sm:$0xff]
    %v917 = vld [vmem:[#allocation7 + $0xd90] sm:$0xff]
    %v918 = vld [vmem:[#allocation7 + $0xd98] sm:$0xff]
    %v919 = vld [vmem:[#allocation7 + $0xda0] sm:$0xff]
    %v920 = vld [vmem:[#allocation7 + $0xda8] sm:$0xff]
    %v921 = vld [vmem:[#allocation7 + $0xdb0] sm:$0xff]
    %v922 = vld [vmem:[#allocation7 + $0xdb8] sm:$0xff]
    %v923 = vld [vmem:[#allocation7 + $0xdc0] sm:$0xff]
    %v924 = vld [vmem:[#allocation7 + $0xdc8] sm:$0xff]
    %v925 = vld [vmem:[#allocation7 + $0xdd0] sm:$0xff]
    %v926 = vld [vmem:[#allocation7 + $0xdd8] sm:$0xff]
    %v927 = vld [vmem:[#allocation7 + $0xde0] sm:$0xff]
    %v928 = vld [vmem:[#allocation7 + $0xde8] sm:$0xff]
    %v929 = vld [vmem:[#allocation7 + $0xdf0] sm:$0xff]
    %v930 = vld [vmem:[#allocation7 + $0xdf8] sm:$0xff]
    %v931 = vld [vmem:[#allocation7 + $0xe00] sm:$0xff]
    %v932 = vld [vmem:[#allocation7 + $0xe08] sm:$0xff]
    %v933 = vld [vmem:[#allocation7 + $0xe10] sm:$0xff]
    %v934 = vld [vmem:[#allocation7 + $0xe18] sm:$0xff]
    %v935 = vld [vmem:[#allocation7 + $0xe20] sm:$0xff]
    %v936 = vld [vmem:[#allocation7 + $0xe28] sm:$0xff]
    %v937 = vld [vmem:[#allocation7 + $0xe30] sm:$0xff]
    %v938 = vld [vmem:[#allocation7 + $0xe38] sm:$0xff]
    %v939 = vld [vmem:[#allocation7 + $0xe40] sm:$0xff]
    %v940 = vld [vmem:[#allocation7 + $0xe48] sm:$0xff]
    %v941 = vld [vmem:[#allocation7 + $0xe50] sm:$0xff]
    %v942 = vld [vmem:[#allocation7 + $0xe58] sm:$0xff]
    %v943 = vld [vmem:[#allocation7 + $0xe60] sm:$0xff]
    %v944 = vld [vmem:[#allocation7 + $0xe68] sm:$0xff]
    %v945 = vld [vmem:[#allocation7 + $0xe70] sm:$0xff]
    %v946 = vld [vmem:[#allocation7 + $0xe78] sm:$0xff]
    %v947 = vld [vmem:[#allocation7 + $0xe80] sm:$0xff]
    %v948 = vld [vmem:[#allocation7 + $0xe88] sm:$0xff]
    %v949 = vld [vmem:[#allocation7 + $0xe90] sm:$0xff]
    %v950 = vld [vmem:[#allocation7 + $0xe98] sm:$0xff]
    %v951 = vld [vmem:[#allocation7 + $0xea0] sm:$0xff]
    %v952 = vld [vmem:[#allocation7 + $0xea8] sm:$0xff]
    %v953 = vld [vmem:[#allocation7 + $0xeb0] sm:$0xff]
    %v954 = vld [vmem:[#allocation7 + $0xeb8] sm:$0xff]
    %v955 = vld [vmem:[#allocation7 + $0xec0] sm:$0xff]
    %v956 = vld [vmem:[#allocation7 + $0xec8] sm:$0xff]
    %v957 = vld [vmem:[#allocation7 + $0xed0] sm:$0xff]
    %v958 = vld [vmem:[#allocation7 + $0xed8] sm:$0xff]
    %v959 = vld [vmem:[#allocation7 + $0xee0] sm:$0xff]
    %v960 = vld [vmem:[#allocation7 + $0xee8] sm:$0xff]
    %v961 = vld [vmem:[#allocation7 + $0xef0] sm:$0xff]
    %v962 = vld [vmem:[#allocation7 + $0xef8] sm:$0xff]
    %v963 = vld [vmem:[#allocation7 + $0xf00] sm:$0xff]
    %v964 = vld [vmem:[#allocation7 + $0xf08] sm:$0xff]
    %v965 = vld [vmem:[#allocation7 + $0xf10] sm:$0xff]
    %v966 = vld [vmem:[#allocation7 + $0xf18] sm:$0xff]
    %v967 = vld [vmem:[#allocation7 + $0xf20] sm:$0xff]
    %v968 = vld [vmem:[#allocation7 + $0xf28] sm:$0xff]
    %v969 = vld [vmem:[#allocation7 + $0xf30] sm:$0xff]
    %v970 = vld [vmem:[#allocation7 + $0xf38] sm:$0xff]
    %v971 = vld [vmem:[#allocation7 + $0xf40] sm:$0xff]
    %v972 = vld [vmem:[#allocation7 + $0xf48] sm:$0xff]
    %v973 = vld [vmem:[#allocation7 + $0xf50] sm:$0xff]
    %v974 = vld [vmem:[#allocation7 + $0xf58] sm:$0xff]
    %v975 = vld [vmem:[#allocation7 + $0xf60] sm:$0xff]
    %v976 = vld [vmem:[#allocation7 + $0xf68] sm:$0xff]
    %v977 = vld [vmem:[#allocation7 + $0xf70] sm:$0xff]
    %v978 = vld [vmem:[#allocation7 + $0xf78] sm:$0xff]
    %v979 = vld [vmem:[#allocation7 + $0xf80] sm:$0xff]
    %v980 = vld [vmem:[#allocation7 + $0xf88] sm:$0xff]
    %v981 = vld [vmem:[#allocation7 + $0xf90] sm:$0xff]
    %v982 = vld [vmem:[#allocation7 + $0xf98] sm:$0xff]
    %v983 = vld [vmem:[#allocation7 + $0xfa0] sm:$0xff]
    %v984 = vld [vmem:[#allocation7 + $0xfa8] sm:$0xff]
    %v985 = vld [vmem:[#allocation7 + $0xfb0] sm:$0xff]
    %v986 = vld [vmem:[#allocation7 + $0xfb8] sm:$0xff]
    %v987 = vld [vmem:[#allocation7 + $0xfc0] sm:$0xff]
    %v988 = vld [vmem:[#allocation7 + $0xfc8] sm:$0xff]
    %v989 = vld [vmem:[#allocation7 + $0xfd0] sm:$0xff]
    %v990 = vld [vmem:[#allocation7 + $0xfd8] sm:$0xff]
    %v991 = vld [vmem:[#allocation7 + $0xfe0] sm:$0xff]
    %v992 = vld [vmem:[#allocation7 + $0xfe8] sm:$0xff]
    %v993 = vld [vmem:[#allocation7 + $0xff0] sm:$0xff]
    %v994 = vld [vmem:[#allocation7 + $0xff8] sm:$0xff]
    %v995 = vld [vmem:[#allocation9] sm:$0xff]
    %v997 = vlaneseq
    %v998 = vshrl.u32 %v997, 7
    %v999 = vsub.s32 0, %v998
    %v1000 = vrot.slane %v995, %v999
    %v1001 = vlaneseq
    %v1002 = vshrl.u32 %v1001, 7
    %v1003 = vsub.s32 1, %v1002
    %v1004 = vrot.slane %v995, %v1003
    %v1005 = vlaneseq
    %v1006 = vshrl.u32 %v1005, 7
    %v1007 = vsub.s32 2, %v1006
    %v1008 = vrot.slane %v995, %v1007
    %v1009 = vlaneseq
    %v1010 = vshrl.u32 %v1009, 7
    %v1011 = vsub.s32 3, %v1010
    %v1012 = vrot.slane %v995, %v1011
    %v1013 = vlaneseq
    %v1014 = vshrl.u32 %v1013, 7
    %v1015 = vsub.s32 4, %v1014
    %v1016 = vrot.slane %v995, %v1015
    %v1017 = vlaneseq
    %v1018 = vshrl.u32 %v1017, 7
    %v1019 = vsub.s32 5, %v1018
    %v1020 = vrot.slane %v995, %v1019
    %v1021 = vlaneseq
    %v1022 = vshrl.u32 %v1021, 7
    %v1023 = vsub.s32 6, %v1022
    %v1024 = vrot.slane %v995, %v1023
    %v1025 = vlaneseq
    %v1026 = vshrl.u32 %v1025, 7
    %v1027 = vsub.s32 7, %v1026
    %v1028 = vrot.slane %v995, %v1027
    %v1549 = vunpack.c.l.b16 %v483
    %v1550 = vunpack.c.h.b16 %v483
    %v1551 = vunpack.c.l.b16 %v484
    %v1552 = vunpack.c.h.b16 %v484
    %v1553 = vunpack.c.l.b16 %v485
    %v1554 = vunpack.c.h.b16 %v485
    %v1555 = vunpack.c.l.b16 %v486
    %v1556 = vunpack.c.h.b16 %v486
    %v1557 = vunpack.c.l.b16 %v487
    %v1558 = vunpack.c.h.b16 %v487
    %v1559 = vunpack.c.l.b16 %v488
    %v1560 = vunpack.c.h.b16 %v488
    %v1561 = vunpack.c.l.b16 %v489
    %v1562 = vunpack.c.h.b16 %v489
    %v1563 = vunpack.c.l.b16 %v490
    %v1564 = vunpack.c.h.b16 %v490
    %v1565 = vunpack.c.l.b16 %v491
    %v1566 = vunpack.c.h.b16 %v491
    %v1567 = vunpack.c.l.b16 %v492
    %v1568 = vunpack.c.h.b16 %v492
    %v1569 = vunpack.c.l.b16 %v493
    %v1570 = vunpack.c.h.b16 %v493
    %v1571 = vunpack.c.l.b16 %v494
    %v1572 = vunpack.c.h.b16 %v494
    %v1573 = vunpack.c.l.b16 %v495
    %v1574 = vunpack.c.h.b16 %v495
    %v1575 = vunpack.c.l.b16 %v496
    %v1576 = vunpack.c.h.b16 %v496
    %v1577 = vunpack.c.l.b16 %v497
    %v1578 = vunpack.c.h.b16 %v497
    %v1579 = vunpack.c.l.b16 %v498
    %v1580 = vunpack.c.h.b16 %v498
    %v1581 = vunpack.c.l.b16 %v499
    %v1582 = vunpack.c.h.b16 %v499
    %v1583 = vunpack.c.l.b16 %v500
    %v1584 = vunpack.c.h.b16 %v500
    %v1585 = vunpack.c.l.b16 %v501
    %v1586 = vunpack.c.h.b16 %v501
    %v1587 = vunpack.c.l.b16 %v502
    %v1588 = vunpack.c.h.b16 %v502
    %v1589 = vunpack.c.l.b16 %v503
    %v1590 = vunpack.c.h.b16 %v503
    %v1591 = vunpack.c.l.b16 %v504
    %v1592 = vunpack.c.h.b16 %v504
    %v1593 = vunpack.c.l.b16 %v505
    %v1594 = vunpack.c.h.b16 %v505
    %v1595 = vunpack.c.l.b16 %v506
    %v1596 = vunpack.c.h.b16 %v506
    %v1597 = vunpack.c.l.b16 %v507
    %v1598 = vunpack.c.h.b16 %v507
    %v1599 = vunpack.c.l.b16 %v508
    %v1600 = vunpack.c.h.b16 %v508
    %v1601 = vunpack.c.l.b16 %v509
    %v1602 = vunpack.c.h.b16 %v509
    %v1603 = vunpack.c.l.b16 %v510
    %v1604 = vunpack.c.h.b16 %v510
    %v1605 = vunpack.c.l.b16 %v511
    %v1606 = vunpack.c.h.b16 %v511
    %v1607 = vunpack.c.l.b16 %v512
    %v1608 = vunpack.c.h.b16 %v512
    %v1609 = vunpack.c.l.b16 %v513
    %v1610 = vunpack.c.h.b16 %v513
    %v1611 = vunpack.c.l.b16 %v514
    %v1612 = vunpack.c.h.b16 %v514
    %v1613 = vunpack.c.l.b16 %v515
    %v1614 = vunpack.c.h.b16 %v515
    %v1615 = vunpack.c.l.b16 %v516
    %v1616 = vunpack.c.h.b16 %v516
    %v1617 = vunpack.c.l.b16 %v517
    %v1618 = vunpack.c.h.b16 %v517
    %v1619 = vunpack.c.l.b16 %v518
    %v1620 = vunpack.c.h.b16 %v518
    %v1621 = vunpack.c.l.b16 %v519
    %v1622 = vunpack.c.h.b16 %v519
    %v1623 = vunpack.c.l.b16 %v520
    %v1624 = vunpack.c.h.b16 %v520
    %v1625 = vunpack.c.l.b16 %v521
    %v1626 = vunpack.c.h.b16 %v521
    %v1627 = vunpack.c.l.b16 %v522
    %v1628 = vunpack.c.h.b16 %v522
    %v1629 = vunpack.c.l.b16 %v523
    %v1630 = vunpack.c.h.b16 %v523
    %v1631 = vunpack.c.l.b16 %v524
    %v1632 = vunpack.c.h.b16 %v524
    %v1633 = vunpack.c.l.b16 %v525
    %v1634 = vunpack.c.h.b16 %v525
    %v1635 = vunpack.c.l.b16 %v526
    %v1636 = vunpack.c.h.b16 %v526
    %v1637 = vunpack.c.l.b16 %v527
    %v1638 = vunpack.c.h.b16 %v527
    %v1639 = vunpack.c.l.b16 %v528
    %v1640 = vunpack.c.h.b16 %v528
    %v1641 = vunpack.c.l.b16 %v529
    %v1642 = vunpack.c.h.b16 %v529
    %v1643 = vunpack.c.l.b16 %v530
    %v1644 = vunpack.c.h.b16 %v530
    %v1645 = vunpack.c.l.b16 %v531
    %v1646 = vunpack.c.h.b16 %v531
    %v1647 = vunpack.c.l.b16 %v532
    %v1648 = vunpack.c.h.b16 %v532
    %v1649 = vunpack.c.l.b16 %v533
    %v1650 = vunpack.c.h.b16 %v533
    %v1651 = vunpack.c.l.b16 %v534
    %v1652 = vunpack.c.h.b16 %v534
    %v1653 = vunpack.c.l.b16 %v535
    %v1654 = vunpack.c.h.b16 %v535
    %v1655 = vunpack.c.l.b16 %v536
    %v1656 = vunpack.c.h.b16 %v536
    %v1657 = vunpack.c.l.b16 %v537
    %v1658 = vunpack.c.h.b16 %v537
    %v1659 = vunpack.c.l.b16 %v538
    %v1660 = vunpack.c.h.b16 %v538
    %v1661 = vunpack.c.l.b16 %v539
    %v1662 = vunpack.c.h.b16 %v539
    %v1663 = vunpack.c.l.b16 %v540
    %v1664 = vunpack.c.h.b16 %v540
    %v1665 = vunpack.c.l.b16 %v541
    %v1666 = vunpack.c.h.b16 %v541
    %v1667 = vunpack.c.l.b16 %v542
    %v1668 = vunpack.c.h.b16 %v542
    %v1669 = vunpack.c.l.b16 %v543
    %v1670 = vunpack.c.h.b16 %v543
    %v1671 = vunpack.c.l.b16 %v544
    %v1672 = vunpack.c.h.b16 %v544
    %v1673 = vunpack.c.l.b16 %v545
    %v1674 = vunpack.c.h.b16 %v545
    %v1675 = vunpack.c.l.b16 %v546
    %v1676 = vunpack.c.h.b16 %v546
    %v1677 = vunpack.c.l.b16 %v547
    %v1678 = vunpack.c.h.b16 %v547
    %v1679 = vunpack.c.l.b16 %v548
    %v1680 = vunpack.c.h.b16 %v548
    %v1681 = vunpack.c.l.b16 %v549
    %v1682 = vunpack.c.h.b16 %v549
    %v1683 = vunpack.c.l.b16 %v550
    %v1684 = vunpack.c.h.b16 %v550
    %v1685 = vunpack.c.l.b16 %v551
    %v1686 = vunpack.c.h.b16 %v551
    %v1687 = vunpack.c.l.b16 %v552
    %v1688 = vunpack.c.h.b16 %v552
    %v1689 = vunpack.c.l.b16 %v553
    %v1690 = vunpack.c.h.b16 %v553
    %v1691 = vunpack.c.l.b16 %v554
    %v1692 = vunpack.c.h.b16 %v554
    %v1693 = vunpack.c.l.b16 %v555
    %v1694 = vunpack.c.h.b16 %v555
    %v1695 = vunpack.c.l.b16 %v556
    %v1696 = vunpack.c.h.b16 %v556
    %v1697 = vunpack.c.l.b16 %v557
    %v1698 = vunpack.c.h.b16 %v557
    %v1699 = vunpack.c.l.b16 %v558
    %v1700 = vunpack.c.h.b16 %v558
    %v1701 = vunpack.c.l.b16 %v559
    %v1702 = vunpack.c.h.b16 %v559
    %v1703 = vunpack.c.l.b16 %v560
    %v1704 = vunpack.c.h.b16 %v560
    %v1705 = vunpack.c.l.b16 %v561
    %v1706 = vunpack.c.h.b16 %v561
    %v1707 = vunpack.c.l.b16 %v562
    %v1708 = vunpack.c.h.b16 %v562
    %v1709 = vunpack.c.l.b16 %v563
    %v1710 = vunpack.c.h.b16 %v563
    %v1711 = vunpack.c.l.b16 %v564
    %v1712 = vunpack.c.h.b16 %v564
    %v1713 = vunpack.c.l.b16 %v565
    %v1714 = vunpack.c.h.b16 %v565
    %v1715 = vunpack.c.l.b16 %v566
    %v1716 = vunpack.c.h.b16 %v566
    %v1717 = vunpack.c.l.b16 %v567
    %v1718 = vunpack.c.h.b16 %v567
    %v1719 = vunpack.c.l.b16 %v568
    %v1720 = vunpack.c.h.b16 %v568
    %v1721 = vunpack.c.l.b16 %v569
    %v1722 = vunpack.c.h.b16 %v569
    %v1723 = vunpack.c.l.b16 %v570
    %v1724 = vunpack.c.h.b16 %v570
    %v1725 = vunpack.c.l.b16 %v571
    %v1726 = vunpack.c.h.b16 %v571
    %v1727 = vunpack.c.l.b16 %v572
    %v1728 = vunpack.c.h.b16 %v572
    %v1729 = vunpack.c.l.b16 %v573
    %v1730 = vunpack.c.h.b16 %v573
    %v1731 = vunpack.c.l.b16 %v574
    %v1732 = vunpack.c.h.b16 %v574
    %v1733 = vunpack.c.l.b16 %v575
    %v1734 = vunpack.c.h.b16 %v575
    %v1735 = vunpack.c.l.b16 %v576
    %v1736 = vunpack.c.h.b16 %v576
    %v1737 = vunpack.c.l.b16 %v577
    %v1738 = vunpack.c.h.b16 %v577
    %v1739 = vunpack.c.l.b16 %v578
    %v1740 = vunpack.c.h.b16 %v578
    %v1741 = vunpack.c.l.b16 %v579
    %v1742 = vunpack.c.h.b16 %v579
    %v1743 = vunpack.c.l.b16 %v580
    %v1744 = vunpack.c.h.b16 %v580
    %v1745 = vunpack.c.l.b16 %v581
    %v1746 = vunpack.c.h.b16 %v581
    %v1747 = vunpack.c.l.b16 %v582
    %v1748 = vunpack.c.h.b16 %v582
    %v1749 = vunpack.c.l.b16 %v583
    %v1750 = vunpack.c.h.b16 %v583
    %v1751 = vunpack.c.l.b16 %v584
    %v1752 = vunpack.c.h.b16 %v584
    %v1753 = vunpack.c.l.b16 %v585
    %v1754 = vunpack.c.h.b16 %v585
    %v1755 = vunpack.c.l.b16 %v586
    %v1756 = vunpack.c.h.b16 %v586
    %v1757 = vunpack.c.l.b16 %v587
    %v1758 = vunpack.c.h.b16 %v587
    %v1759 = vunpack.c.l.b16 %v588
    %v1760 = vunpack.c.h.b16 %v588
    %v1761 = vunpack.c.l.b16 %v589
    %v1762 = vunpack.c.h.b16 %v589
    %v1763 = vunpack.c.l.b16 %v590
    %v1764 = vunpack.c.h.b16 %v590
    %v1765 = vunpack.c.l.b16 %v591
    %v1766 = vunpack.c.h.b16 %v591
    %v1767 = vunpack.c.l.b16 %v592
    %v1768 = vunpack.c.h.b16 %v592
    %v1769 = vunpack.c.l.b16 %v593
    %v1770 = vunpack.c.h.b16 %v593
    %v1771 = vunpack.c.l.b16 %v594
    %v1772 = vunpack.c.h.b16 %v594
    %v1773 = vunpack.c.l.b16 %v595
    %v1774 = vunpack.c.h.b16 %v595
    %v1775 = vunpack.c.l.b16 %v596
    %v1776 = vunpack.c.h.b16 %v596
    %v1777 = vunpack.c.l.b16 %v597
    %v1778 = vunpack.c.h.b16 %v597
    %v1779 = vunpack.c.l.b16 %v598
    %v1780 = vunpack.c.h.b16 %v598
    %v1781 = vunpack.c.l.b16 %v599
    %v1782 = vunpack.c.h.b16 %v599
    %v1783 = vunpack.c.l.b16 %v600
    %v1784 = vunpack.c.h.b16 %v600
    %v1785 = vunpack.c.l.b16 %v601
    %v1786 = vunpack.c.h.b16 %v601
    %v1787 = vunpack.c.l.b16 %v602
    %v1788 = vunpack.c.h.b16 %v602
    %v1789 = vunpack.c.l.b16 %v603
    %v1790 = vunpack.c.h.b16 %v603
    %v1791 = vunpack.c.l.b16 %v604
    %v1792 = vunpack.c.h.b16 %v604
    %v1793 = vunpack.c.l.b16 %v605
    %v1794 = vunpack.c.h.b16 %v605
    %v1795 = vunpack.c.l.b16 %v606
    %v1796 = vunpack.c.h.b16 %v606
    %v1797 = vunpack.c.l.b16 %v607
    %v1798 = vunpack.c.h.b16 %v607
    %v1799 = vunpack.c.l.b16 %v608
    %v1800 = vunpack.c.h.b16 %v608
    %v1801 = vunpack.c.l.b16 %v609
    %v1802 = vunpack.c.h.b16 %v609
    %v1803 = vunpack.c.l.b16 %v610
    %v1804 = vunpack.c.h.b16 %v610
    %v1805 = vunpack.c.l.b16 %v611
    %v1806 = vunpack.c.h.b16 %v611
    %v1807 = vunpack.c.l.b16 %v612
    %v1808 = vunpack.c.h.b16 %v612
    %v1809 = vunpack.c.l.b16 %v613
    %v1810 = vunpack.c.h.b16 %v613
    %v1811 = vunpack.c.l.b16 %v614
    %v1812 = vunpack.c.h.b16 %v614
    %v1813 = vunpack.c.l.b16 %v615
    %v1814 = vunpack.c.h.b16 %v615
    %v1815 = vunpack.c.l.b16 %v616
    %v1816 = vunpack.c.h.b16 %v616
    %v1817 = vunpack.c.l.b16 %v617
    %v1818 = vunpack.c.h.b16 %v617
    %v1819 = vunpack.c.l.b16 %v618
    %v1820 = vunpack.c.h.b16 %v618
    %v1821 = vunpack.c.l.b16 %v619
    %v1822 = vunpack.c.h.b16 %v619
    %v1823 = vunpack.c.l.b16 %v620
    %v1824 = vunpack.c.h.b16 %v620
    %v1825 = vunpack.c.l.b16 %v621
    %v1826 = vunpack.c.h.b16 %v621
    %v1827 = vunpack.c.l.b16 %v622
    %v1828 = vunpack.c.h.b16 %v622
    %v1829 = vunpack.c.l.b16 %v623
    %v1830 = vunpack.c.h.b16 %v623
    %v1831 = vunpack.c.l.b16 %v624
    %v1832 = vunpack.c.h.b16 %v624
    %v1833 = vunpack.c.l.b16 %v625
    %v1834 = vunpack.c.h.b16 %v625
    %v1835 = vunpack.c.l.b16 %v626
    %v1836 = vunpack.c.h.b16 %v626
    %v1837 = vunpack.c.l.b16 %v627
    %v1838 = vunpack.c.h.b16 %v627
    %v1839 = vunpack.c.l.b16 %v628
    %v1840 = vunpack.c.h.b16 %v628
    %v1841 = vunpack.c.l.b16 %v629
    %v1842 = vunpack.c.h.b16 %v629
    %v1843 = vunpack.c.l.b16 %v630
    %v1844 = vunpack.c.h.b16 %v630
    %v1845 = vunpack.c.l.b16 %v631
    %v1846 = vunpack.c.h.b16 %v631
    %v1847 = vunpack.c.l.b16 %v632
    %v1848 = vunpack.c.h.b16 %v632
    %v1849 = vunpack.c.l.b16 %v633
    %v1850 = vunpack.c.h.b16 %v633
    %v1851 = vunpack.c.l.b16 %v634
    %v1852 = vunpack.c.h.b16 %v634
    %v1853 = vunpack.c.l.b16 %v635
    %v1854 = vunpack.c.h.b16 %v635
    %v1855 = vunpack.c.l.b16 %v636
    %v1856 = vunpack.c.h.b16 %v636
    %v1857 = vunpack.c.l.b16 %v637
    %v1858 = vunpack.c.h.b16 %v637
    %v1859 = vunpack.c.l.b16 %v638
    %v1860 = vunpack.c.h.b16 %v638
    %v1861 = vunpack.c.l.b16 %v639
    %v1862 = vunpack.c.h.b16 %v639
    %v1863 = vunpack.c.l.b16 %v640
    %v1864 = vunpack.c.h.b16 %v640
    %v1865 = vunpack.c.l.b16 %v641
    %v1866 = vunpack.c.h.b16 %v641
    %v1867 = vunpack.c.l.b16 %v642
    %v1868 = vunpack.c.h.b16 %v642
    %v1869 = vunpack.c.l.b16 %v643
    %v1870 = vunpack.c.h.b16 %v643
    %v1871 = vunpack.c.l.b16 %v644
    %v1872 = vunpack.c.h.b16 %v644
    %v1873 = vunpack.c.l.b16 %v645
    %v1874 = vunpack.c.h.b16 %v645
    %v1875 = vunpack.c.l.b16 %v646
    %v1876 = vunpack.c.h.b16 %v646
    %v1877 = vunpack.c.l.b16 %v647
    %v1878 = vunpack.c.h.b16 %v647
    %v1879 = vunpack.c.l.b16 %v648
    %v1880 = vunpack.c.h.b16 %v648
    %v1881 = vunpack.c.l.b16 %v649
    %v1882 = vunpack.c.h.b16 %v649
    %v1883 = vunpack.c.l.b16 %v650
    %v1884 = vunpack.c.h.b16 %v650
    %v1885 = vunpack.c.l.b16 %v651
    %v1886 = vunpack.c.h.b16 %v651
    %v1887 = vunpack.c.l.b16 %v652
    %v1888 = vunpack.c.h.b16 %v652
    %v1889 = vunpack.c.l.b16 %v653
    %v1890 = vunpack.c.h.b16 %v653
    %v1891 = vunpack.c.l.b16 %v654
    %v1892 = vunpack.c.h.b16 %v654
    %v1893 = vunpack.c.l.b16 %v655
    %v1894 = vunpack.c.h.b16 %v655
    %v1895 = vunpack.c.l.b16 %v656
    %v1896 = vunpack.c.h.b16 %v656
    %v1897 = vunpack.c.l.b16 %v657
    %v1898 = vunpack.c.h.b16 %v657
    %v1899 = vunpack.c.l.b16 %v658
    %v1900 = vunpack.c.h.b16 %v658
    %v1901 = vunpack.c.l.b16 %v659
    %v1902 = vunpack.c.h.b16 %v659
    %v1903 = vunpack.c.l.b16 %v660
    %v1904 = vunpack.c.h.b16 %v660
    %v1905 = vunpack.c.l.b16 %v661
    %v1906 = vunpack.c.h.b16 %v661
    %v1907 = vunpack.c.l.b16 %v662
    %v1908 = vunpack.c.h.b16 %v662
    %v1909 = vunpack.c.l.b16 %v663
    %v1910 = vunpack.c.h.b16 %v663
    %v1911 = vunpack.c.l.b16 %v664
    %v1912 = vunpack.c.h.b16 %v664
    %v1913 = vunpack.c.l.b16 %v665
    %v1914 = vunpack.c.h.b16 %v665
    %v1915 = vunpack.c.l.b16 %v666
    %v1916 = vunpack.c.h.b16 %v666
    %v1917 = vunpack.c.l.b16 %v667
    %v1918 = vunpack.c.h.b16 %v667
    %v1919 = vunpack.c.l.b16 %v668
    %v1920 = vunpack.c.h.b16 %v668
    %v1921 = vunpack.c.l.b16 %v669
    %v1922 = vunpack.c.h.b16 %v669
    %v1923 = vunpack.c.l.b16 %v670
    %v1924 = vunpack.c.h.b16 %v670
    %v1925 = vunpack.c.l.b16 %v671
    %v1926 = vunpack.c.h.b16 %v671
    %v1927 = vunpack.c.l.b16 %v672
    %v1928 = vunpack.c.h.b16 %v672
    %v1929 = vunpack.c.l.b16 %v673
    %v1930 = vunpack.c.h.b16 %v673
    %v1931 = vunpack.c.l.b16 %v674
    %v1932 = vunpack.c.h.b16 %v674
    %v1933 = vunpack.c.l.b16 %v675
    %v1934 = vunpack.c.h.b16 %v675
    %v1935 = vunpack.c.l.b16 %v676
    %v1936 = vunpack.c.h.b16 %v676
    %v1937 = vunpack.c.l.b16 %v677
    %v1938 = vunpack.c.h.b16 %v677
    %v1939 = vunpack.c.l.b16 %v678
    %v1940 = vunpack.c.h.b16 %v678
    %v1941 = vunpack.c.l.b16 %v679
    %v1942 = vunpack.c.h.b16 %v679
    %v1943 = vunpack.c.l.b16 %v680
    %v1944 = vunpack.c.h.b16 %v680
    %v1945 = vunpack.c.l.b16 %v681
    %v1946 = vunpack.c.h.b16 %v681
    %v1947 = vunpack.c.l.b16 %v682
    %v1948 = vunpack.c.h.b16 %v682
    %v1949 = vunpack.c.l.b16 %v683
    %v1950 = vunpack.c.h.b16 %v683
    %v1951 = vunpack.c.l.b16 %v684
    %v1952 = vunpack.c.h.b16 %v684
    %v1953 = vunpack.c.l.b16 %v685
    %v1954 = vunpack.c.h.b16 %v685
    %v1955 = vunpack.c.l.b16 %v686
    %v1956 = vunpack.c.h.b16 %v686
    %v1957 = vunpack.c.l.b16 %v687
    %v1958 = vunpack.c.h.b16 %v687
    %v1959 = vunpack.c.l.b16 %v688
    %v1960 = vunpack.c.h.b16 %v688
    %v1961 = vunpack.c.l.b16 %v689
    %v1962 = vunpack.c.h.b16 %v689
    %v1963 = vunpack.c.l.b16 %v690
    %v1964 = vunpack.c.h.b16 %v690
    %v1965 = vunpack.c.l.b16 %v691
    %v1966 = vunpack.c.h.b16 %v691
    %v1967 = vunpack.c.l.b16 %v692
    %v1968 = vunpack.c.h.b16 %v692
    %v1969 = vunpack.c.l.b16 %v693
    %v1970 = vunpack.c.h.b16 %v693
    %v1971 = vunpack.c.l.b16 %v694
    %v1972 = vunpack.c.h.b16 %v694
    %v1973 = vunpack.c.l.b16 %v695
    %v1974 = vunpack.c.h.b16 %v695
    %v1975 = vunpack.c.l.b16 %v696
    %v1976 = vunpack.c.h.b16 %v696
    %v1977 = vunpack.c.l.b16 %v697
    %v1978 = vunpack.c.h.b16 %v697
    %v1979 = vunpack.c.l.b16 %v698
    %v1980 = vunpack.c.h.b16 %v698
    %v1981 = vunpack.c.l.b16 %v699
    %v1982 = vunpack.c.h.b16 %v699
    %v1983 = vunpack.c.l.b16 %v700
    %v1984 = vunpack.c.h.b16 %v700
    %v1985 = vunpack.c.l.b16 %v701
    %v1986 = vunpack.c.h.b16 %v701
    %v1987 = vunpack.c.l.b16 %v702
    %v1988 = vunpack.c.h.b16 %v702
    %v1989 = vunpack.c.l.b16 %v703
    %v1990 = vunpack.c.h.b16 %v703
    %v1991 = vunpack.c.l.b16 %v704
    %v1992 = vunpack.c.h.b16 %v704
    %v1993 = vunpack.c.l.b16 %v705
    %v1994 = vunpack.c.h.b16 %v705
    %v1995 = vunpack.c.l.b16 %v706
    %v1996 = vunpack.c.h.b16 %v706
    %v1997 = vunpack.c.l.b16 %v707
    %v1998 = vunpack.c.h.b16 %v707
    %v1999 = vunpack.c.l.b16 %v708
    %v2000 = vunpack.c.h.b16 %v708
    %v2001 = vunpack.c.l.b16 %v709
    %v2002 = vunpack.c.h.b16 %v709
    %v2003 = vunpack.c.l.b16 %v710
    %v2004 = vunpack.c.h.b16 %v710
    %v2005 = vunpack.c.l.b16 %v711
    %v2006 = vunpack.c.h.b16 %v711
    %v2007 = vunpack.c.l.b16 %v712
    %v2008 = vunpack.c.h.b16 %v712
    %v2009 = vunpack.c.l.b16 %v713
    %v2010 = vunpack.c.h.b16 %v713
    %v2011 = vunpack.c.l.b16 %v714
    %v2012 = vunpack.c.h.b16 %v714
    %v2013 = vunpack.c.l.b16 %v715
    %v2014 = vunpack.c.h.b16 %v715
    %v2015 = vunpack.c.l.b16 %v716
    %v2016 = vunpack.c.h.b16 %v716
    %v2017 = vunpack.c.l.b16 %v717
    %v2018 = vunpack.c.h.b16 %v717
    %v2019 = vunpack.c.l.b16 %v718
    %v2020 = vunpack.c.h.b16 %v718
    %v2021 = vunpack.c.l.b16 %v719
    %v2022 = vunpack.c.h.b16 %v719
    %v2023 = vunpack.c.l.b16 %v720
    %v2024 = vunpack.c.h.b16 %v720
    %v2025 = vunpack.c.l.b16 %v721
    %v2026 = vunpack.c.h.b16 %v721
    %v2027 = vunpack.c.l.b16 %v722
    %v2028 = vunpack.c.h.b16 %v722
    %v2029 = vunpack.c.l.b16 %v723
    %v2030 = vunpack.c.h.b16 %v723
    %v2031 = vunpack.c.l.b16 %v724
    %v2032 = vunpack.c.h.b16 %v724
    %v2033 = vunpack.c.l.b16 %v725
    %v2034 = vunpack.c.h.b16 %v725
    %v2035 = vunpack.c.l.b16 %v726
    %v2036 = vunpack.c.h.b16 %v726
    %v2037 = vunpack.c.l.b16 %v727
    %v2038 = vunpack.c.h.b16 %v727
    %v2039 = vunpack.c.l.b16 %v728
    %v2040 = vunpack.c.h.b16 %v728
    %v2041 = vunpack.c.l.b16 %v729
    %v2042 = vunpack.c.h.b16 %v729
    %v2043 = vunpack.c.l.b16 %v730
    %v2044 = vunpack.c.h.b16 %v730
    %v2045 = vunpack.c.l.b16 %v731
    %v2046 = vunpack.c.h.b16 %v731
    %v2047 = vunpack.c.l.b16 %v732
    %v2048 = vunpack.c.h.b16 %v732
    %v2049 = vunpack.c.l.b16 %v733
    %v2050 = vunpack.c.h.b16 %v733
    %v2051 = vunpack.c.l.b16 %v734
    %v2052 = vunpack.c.h.b16 %v734
    %v2053 = vunpack.c.l.b16 %v735
    %v2054 = vunpack.c.h.b16 %v735
    %v2055 = vunpack.c.l.b16 %v736
    %v2056 = vunpack.c.h.b16 %v736
    %v2057 = vunpack.c.l.b16 %v737
    %v2058 = vunpack.c.h.b16 %v737
    %v2059 = vunpack.c.l.b16 %v738
    %v2060 = vunpack.c.h.b16 %v738
    %v2061 = vunpack.c.l.b16 %v739
    %v2062 = vunpack.c.h.b16 %v739
    %v2063 = vunpack.c.l.b16 %v740
    %v2064 = vunpack.c.h.b16 %v740
    %v2065 = vunpack.c.l.b16 %v741
    %v2066 = vunpack.c.h.b16 %v741
    %v2067 = vunpack.c.l.b16 %v742
    %v2068 = vunpack.c.h.b16 %v742
    %v2069 = vunpack.c.l.b16 %v743
    %v2070 = vunpack.c.h.b16 %v743
    %v2071 = vunpack.c.l.b16 %v744
    %v2072 = vunpack.c.h.b16 %v744
    %v2073 = vunpack.c.l.b16 %v745
    %v2074 = vunpack.c.h.b16 %v745
    %v2075 = vunpack.c.l.b16 %v746
    %v2076 = vunpack.c.h.b16 %v746
    %v2077 = vunpack.c.l.b16 %v747
    %v2078 = vunpack.c.h.b16 %v747
    %v2079 = vunpack.c.l.b16 %v748
    %v2080 = vunpack.c.h.b16 %v748
    %v2081 = vunpack.c.l.b16 %v749
    %v2082 = vunpack.c.h.b16 %v749
    %v2083 = vunpack.c.l.b16 %v750
    %v2084 = vunpack.c.h.b16 %v750
    %v2085 = vunpack.c.l.b16 %v751
    %v2086 = vunpack.c.h.b16 %v751
    %v2087 = vunpack.c.l.b16 %v752
    %v2088 = vunpack.c.h.b16 %v752
    %v2089 = vunpack.c.l.b16 %v753
    %v2090 = vunpack.c.h.b16 %v753
    %v2091 = vunpack.c.l.b16 %v754
    %v2092 = vunpack.c.h.b16 %v754
    %v2093 = vunpack.c.l.b16 %v755
    %v2094 = vunpack.c.h.b16 %v755
    %v2095 = vunpack.c.l.b16 %v756
    %v2096 = vunpack.c.h.b16 %v756
    %v2097 = vunpack.c.l.b16 %v757
    %v2098 = vunpack.c.h.b16 %v757
    %v2099 = vunpack.c.l.b16 %v758
    %v2100 = vunpack.c.h.b16 %v758
    %v2101 = vunpack.c.l.b16 %v759
    %v2102 = vunpack.c.h.b16 %v759
    %v2103 = vunpack.c.l.b16 %v760
    %v2104 = vunpack.c.h.b16 %v760
    %v2105 = vunpack.c.l.b16 %v761
    %v2106 = vunpack.c.h.b16 %v761
    %v2107 = vunpack.c.l.b16 %v762
    %v2108 = vunpack.c.h.b16 %v762
    %v2109 = vunpack.c.l.b16 %v763
    %v2110 = vunpack.c.h.b16 %v763
    %v2111 = vunpack.c.l.b16 %v764
    %v2112 = vunpack.c.h.b16 %v764
    %v2113 = vunpack.c.l.b16 %v765
    %v2114 = vunpack.c.h.b16 %v765
    %v2115 = vunpack.c.l.b16 %v766
    %v2116 = vunpack.c.h.b16 %v766
    %v2117 = vunpack.c.l.b16 %v767
    %v2118 = vunpack.c.h.b16 %v767
    %v2119 = vunpack.c.l.b16 %v768
    %v2120 = vunpack.c.h.b16 %v768
    %v2121 = vunpack.c.l.b16 %v769
    %v2122 = vunpack.c.h.b16 %v769
    %v2123 = vunpack.c.l.b16 %v770
    %v2124 = vunpack.c.h.b16 %v770
    %v2125 = vunpack.c.l.b16 %v771
    %v2126 = vunpack.c.h.b16 %v771
    %v2127 = vunpack.c.l.b16 %v772
    %v2128 = vunpack.c.h.b16 %v772
    %v2129 = vunpack.c.l.b16 %v773
    %v2130 = vunpack.c.h.b16 %v773
    %v2131 = vunpack.c.l.b16 %v774
    %v2132 = vunpack.c.h.b16 %v774
    %v2133 = vunpack.c.l.b16 %v775
    %v2134 = vunpack.c.h.b16 %v775
    %v2135 = vunpack.c.l.b16 %v776
    %v2136 = vunpack.c.h.b16 %v776
    %v2137 = vunpack.c.l.b16 %v777
    %v2138 = vunpack.c.h.b16 %v777
    %v2139 = vunpack.c.l.b16 %v778
    %v2140 = vunpack.c.h.b16 %v778
    %v2141 = vunpack.c.l.b16 %v779
    %v2142 = vunpack.c.h.b16 %v779
    %v2143 = vunpack.c.l.b16 %v780
    %v2144 = vunpack.c.h.b16 %v780
    %v2145 = vunpack.c.l.b16 %v781
    %v2146 = vunpack.c.h.b16 %v781
    %v2147 = vunpack.c.l.b16 %v782
    %v2148 = vunpack.c.h.b16 %v782
    %v2149 = vunpack.c.l.b16 %v783
    %v2150 = vunpack.c.h.b16 %v783
    %v2151 = vunpack.c.l.b16 %v784
    %v2152 = vunpack.c.h.b16 %v784
    %v2153 = vunpack.c.l.b16 %v785
    %v2154 = vunpack.c.h.b16 %v785
    %v2155 = vunpack.c.l.b16 %v786
    %v2156 = vunpack.c.h.b16 %v786
    %v2157 = vunpack.c.l.b16 %v787
    %v2158 = vunpack.c.h.b16 %v787
    %v2159 = vunpack.c.l.b16 %v788
    %v2160 = vunpack.c.h.b16 %v788
    %v2161 = vunpack.c.l.b16 %v789
    %v2162 = vunpack.c.h.b16 %v789
    %v2163 = vunpack.c.l.b16 %v790
    %v2164 = vunpack.c.h.b16 %v790
    %v2165 = vunpack.c.l.b16 %v791
    %v2166 = vunpack.c.h.b16 %v791
    %v2167 = vunpack.c.l.b16 %v792
    %v2168 = vunpack.c.h.b16 %v792
    %v2169 = vunpack.c.l.b16 %v793
    %v2170 = vunpack.c.h.b16 %v793
    %v2171 = vunpack.c.l.b16 %v794
    %v2172 = vunpack.c.h.b16 %v794
    %v2173 = vunpack.c.l.b16 %v795
    %v2174 = vunpack.c.h.b16 %v795
    %v2175 = vunpack.c.l.b16 %v796
    %v2176 = vunpack.c.h.b16 %v796
    %v2177 = vunpack.c.l.b16 %v797
    %v2178 = vunpack.c.h.b16 %v797
    %v2179 = vunpack.c.l.b16 %v798
    %v2180 = vunpack.c.h.b16 %v798
    %v2181 = vunpack.c.l.b16 %v799
    %v2182 = vunpack.c.h.b16 %v799
    %v2183 = vunpack.c.l.b16 %v800
    %v2184 = vunpack.c.h.b16 %v800
    %v2185 = vunpack.c.l.b16 %v801
    %v2186 = vunpack.c.h.b16 %v801
    %v2187 = vunpack.c.l.b16 %v802
    %v2188 = vunpack.c.h.b16 %v802
    %v2189 = vunpack.c.l.b16 %v803
    %v2190 = vunpack.c.h.b16 %v803
    %v2191 = vunpack.c.l.b16 %v804
    %v2192 = vunpack.c.h.b16 %v804
    %v2193 = vunpack.c.l.b16 %v805
    %v2194 = vunpack.c.h.b16 %v805
    %v2195 = vunpack.c.l.b16 %v806
    %v2196 = vunpack.c.h.b16 %v806
    %v2197 = vunpack.c.l.b16 %v807
    %v2198 = vunpack.c.h.b16 %v807
    %v2199 = vunpack.c.l.b16 %v808
    %v2200 = vunpack.c.h.b16 %v808
    %v2201 = vunpack.c.l.b16 %v809
    %v2202 = vunpack.c.h.b16 %v809
    %v2203 = vunpack.c.l.b16 %v810
    %v2204 = vunpack.c.h.b16 %v810
    %v2205 = vunpack.c.l.b16 %v811
    %v2206 = vunpack.c.h.b16 %v811
    %v2207 = vunpack.c.l.b16 %v812
    %v2208 = vunpack.c.h.b16 %v812
    %v2209 = vunpack.c.l.b16 %v813
    %v2210 = vunpack.c.h.b16 %v813
    %v2211 = vunpack.c.l.b16 %v814
    %v2212 = vunpack.c.h.b16 %v814
    %v2213 = vunpack.c.l.b16 %v815
    %v2214 = vunpack.c.h.b16 %v815
    %v2215 = vunpack.c.l.b16 %v816
    %v2216 = vunpack.c.h.b16 %v816
    %v2217 = vunpack.c.l.b16 %v817
    %v2218 = vunpack.c.h.b16 %v817
    %v2219 = vunpack.c.l.b16 %v818
    %v2220 = vunpack.c.h.b16 %v818
    %v2221 = vunpack.c.l.b16 %v819
    %v2222 = vunpack.c.h.b16 %v819
    %v2223 = vunpack.c.l.b16 %v820
    %v2224 = vunpack.c.h.b16 %v820
    %v2225 = vunpack.c.l.b16 %v821
    %v2226 = vunpack.c.h.b16 %v821
    %v2227 = vunpack.c.l.b16 %v822
    %v2228 = vunpack.c.h.b16 %v822
    %v2229 = vunpack.c.l.b16 %v823
    %v2230 = vunpack.c.h.b16 %v823
    %v2231 = vunpack.c.l.b16 %v824
    %v2232 = vunpack.c.h.b16 %v824
    %v2233 = vunpack.c.l.b16 %v825
    %v2234 = vunpack.c.h.b16 %v825
    %v2235 = vunpack.c.l.b16 %v826
    %v2236 = vunpack.c.h.b16 %v826
    %v2237 = vunpack.c.l.b16 %v827
    %v2238 = vunpack.c.h.b16 %v827
    %v2239 = vunpack.c.l.b16 %v828
    %v2240 = vunpack.c.h.b16 %v828
    %v2241 = vunpack.c.l.b16 %v829
    %v2242 = vunpack.c.h.b16 %v829
    %v2243 = vunpack.c.l.b16 %v830
    %v2244 = vunpack.c.h.b16 %v830
    %v2245 = vunpack.c.l.b16 %v831
    %v2246 = vunpack.c.h.b16 %v831
    %v2247 = vunpack.c.l.b16 %v832
    %v2248 = vunpack.c.h.b16 %v832
    %v2249 = vunpack.c.l.b16 %v833
    %v2250 = vunpack.c.h.b16 %v833
    %v2251 = vunpack.c.l.b16 %v834
    %v2252 = vunpack.c.h.b16 %v834
    %v2253 = vunpack.c.l.b16 %v835
    %v2254 = vunpack.c.h.b16 %v835
    %v2255 = vunpack.c.l.b16 %v836
    %v2256 = vunpack.c.h.b16 %v836
    %v2257 = vunpack.c.l.b16 %v837
    %v2258 = vunpack.c.h.b16 %v837
    %v2259 = vunpack.c.l.b16 %v838
    %v2260 = vunpack.c.h.b16 %v838
    %v2261 = vunpack.c.l.b16 %v839
    %v2262 = vunpack.c.h.b16 %v839
    %v2263 = vunpack.c.l.b16 %v840
    %v2264 = vunpack.c.h.b16 %v840
    %v2265 = vunpack.c.l.b16 %v841
    %v2266 = vunpack.c.h.b16 %v841
    %v2267 = vunpack.c.l.b16 %v842
    %v2268 = vunpack.c.h.b16 %v842
    %v2269 = vunpack.c.l.b16 %v843
    %v2270 = vunpack.c.h.b16 %v843
    %v2271 = vunpack.c.l.b16 %v844
    %v2272 = vunpack.c.h.b16 %v844
    %v2273 = vunpack.c.l.b16 %v845
    %v2274 = vunpack.c.h.b16 %v845
    %v2275 = vunpack.c.l.b16 %v846
    %v2276 = vunpack.c.h.b16 %v846
    %v2277 = vunpack.c.l.b16 %v847
    %v2278 = vunpack.c.h.b16 %v847
    %v2279 = vunpack.c.l.b16 %v848
    %v2280 = vunpack.c.h.b16 %v848
    %v2281 = vunpack.c.l.b16 %v849
    %v2282 = vunpack.c.h.b16 %v849
    %v2283 = vunpack.c.l.b16 %v850
    %v2284 = vunpack.c.h.b16 %v850
    %v2285 = vunpack.c.l.b16 %v851
    %v2286 = vunpack.c.h.b16 %v851
    %v2287 = vunpack.c.l.b16 %v852
    %v2288 = vunpack.c.h.b16 %v852
    %v2289 = vunpack.c.l.b16 %v853
    %v2290 = vunpack.c.h.b16 %v853
    %v2291 = vunpack.c.l.b16 %v854
    %v2292 = vunpack.c.h.b16 %v854
    %v2293 = vunpack.c.l.b16 %v855
    %v2294 = vunpack.c.h.b16 %v855
    %v2295 = vunpack.c.l.b16 %v856
    %v2296 = vunpack.c.h.b16 %v856
    %v2297 = vunpack.c.l.b16 %v857
    %v2298 = vunpack.c.h.b16 %v857
    %v2299 = vunpack.c.l.b16 %v858
    %v2300 = vunpack.c.h.b16 %v858
    %v2301 = vunpack.c.l.b16 %v859
    %v2302 = vunpack.c.h.b16 %v859
    %v2303 = vunpack.c.l.b16 %v860
    %v2304 = vunpack.c.h.b16 %v860
    %v2305 = vunpack.c.l.b16 %v861
    %v2306 = vunpack.c.h.b16 %v861
    %v2307 = vunpack.c.l.b16 %v862
    %v2308 = vunpack.c.h.b16 %v862
    %v2309 = vunpack.c.l.b16 %v863
    %v2310 = vunpack.c.h.b16 %v863
    %v2311 = vunpack.c.l.b16 %v864
    %v2312 = vunpack.c.h.b16 %v864
    %v2313 = vunpack.c.l.b16 %v865
    %v2314 = vunpack.c.h.b16 %v865
    %v2315 = vunpack.c.l.b16 %v866
    %v2316 = vunpack.c.h.b16 %v866
    %v2317 = vunpack.c.l.b16 %v867
    %v2318 = vunpack.c.h.b16 %v867
    %v2319 = vunpack.c.l.b16 %v868
    %v2320 = vunpack.c.h.b16 %v868
    %v2321 = vunpack.c.l.b16 %v869
    %v2322 = vunpack.c.h.b16 %v869
    %v2323 = vunpack.c.l.b16 %v870
    %v2324 = vunpack.c.h.b16 %v870
    %v2325 = vunpack.c.l.b16 %v871
    %v2326 = vunpack.c.h.b16 %v871
    %v2327 = vunpack.c.l.b16 %v872
    %v2328 = vunpack.c.h.b16 %v872
    %v2329 = vunpack.c.l.b16 %v873
    %v2330 = vunpack.c.h.b16 %v873
    %v2331 = vunpack.c.l.b16 %v874
    %v2332 = vunpack.c.h.b16 %v874
    %v2333 = vunpack.c.l.b16 %v875
    %v2334 = vunpack.c.h.b16 %v875
    %v2335 = vunpack.c.l.b16 %v876
    %v2336 = vunpack.c.h.b16 %v876
    %v2337 = vunpack.c.l.b16 %v877
    %v2338 = vunpack.c.h.b16 %v877
    %v2339 = vunpack.c.l.b16 %v878
    %v2340 = vunpack.c.h.b16 %v878
    %v2341 = vunpack.c.l.b16 %v879
    %v2342 = vunpack.c.h.b16 %v879
    %v2343 = vunpack.c.l.b16 %v880
    %v2344 = vunpack.c.h.b16 %v880
    %v2345 = vunpack.c.l.b16 %v881
    %v2346 = vunpack.c.h.b16 %v881
    %v2347 = vunpack.c.l.b16 %v882
    %v2348 = vunpack.c.h.b16 %v882
    %v2349 = vunpack.c.l.b16 %v883
    %v2350 = vunpack.c.h.b16 %v883
    %v2351 = vunpack.c.l.b16 %v884
    %v2352 = vunpack.c.h.b16 %v884
    %v2353 = vunpack.c.l.b16 %v885
    %v2354 = vunpack.c.h.b16 %v885
    %v2355 = vunpack.c.l.b16 %v886
    %v2356 = vunpack.c.h.b16 %v886
    %v2357 = vunpack.c.l.b16 %v887
    %v2358 = vunpack.c.h.b16 %v887
    %v2359 = vunpack.c.l.b16 %v888
    %v2360 = vunpack.c.h.b16 %v888
    %v2361 = vunpack.c.l.b16 %v889
    %v2362 = vunpack.c.h.b16 %v889
    %v2363 = vunpack.c.l.b16 %v890
    %v2364 = vunpack.c.h.b16 %v890
    %v2365 = vunpack.c.l.b16 %v891
    %v2366 = vunpack.c.h.b16 %v891
    %v2367 = vunpack.c.l.b16 %v892
    %v2368 = vunpack.c.h.b16 %v892
    %v2369 = vunpack.c.l.b16 %v893
    %v2370 = vunpack.c.h.b16 %v893
    %v2371 = vunpack.c.l.b16 %v894
    %v2372 = vunpack.c.h.b16 %v894
    %v2373 = vunpack.c.l.b16 %v895
    %v2374 = vunpack.c.h.b16 %v895
    %v2375 = vunpack.c.l.b16 %v896
    %v2376 = vunpack.c.h.b16 %v896
    %v2377 = vunpack.c.l.b16 %v897
    %v2378 = vunpack.c.h.b16 %v897
    %v2379 = vunpack.c.l.b16 %v898
    %v2380 = vunpack.c.h.b16 %v898
    %v2381 = vunpack.c.l.b16 %v899
    %v2382 = vunpack.c.h.b16 %v899
    %v2383 = vunpack.c.l.b16 %v900
    %v2384 = vunpack.c.h.b16 %v900
    %v2385 = vunpack.c.l.b16 %v901
    %v2386 = vunpack.c.h.b16 %v901
    %v2387 = vunpack.c.l.b16 %v902
    %v2388 = vunpack.c.h.b16 %v902
    %v2389 = vunpack.c.l.b16 %v903
    %v2390 = vunpack.c.h.b16 %v903
    %v2391 = vunpack.c.l.b16 %v904
    %v2392 = vunpack.c.h.b16 %v904
    %v2393 = vunpack.c.l.b16 %v905
    %v2394 = vunpack.c.h.b16 %v905
    %v2395 = vunpack.c.l.b16 %v906
    %v2396 = vunpack.c.h.b16 %v906
    %v2397 = vunpack.c.l.b16 %v907
    %v2398 = vunpack.c.h.b16 %v907
    %v2399 = vunpack.c.l.b16 %v908
    %v2400 = vunpack.c.h.b16 %v908
    %v2401 = vunpack.c.l.b16 %v909
    %v2402 = vunpack.c.h.b16 %v909
    %v2403 = vunpack.c.l.b16 %v910
    %v2404 = vunpack.c.h.b16 %v910
    %v2405 = vunpack.c.l.b16 %v911
    %v2406 = vunpack.c.h.b16 %v911
    %v2407 = vunpack.c.l.b16 %v912
    %v2408 = vunpack.c.h.b16 %v912
    %v2409 = vunpack.c.l.b16 %v913
    %v2410 = vunpack.c.h.b16 %v913
    %v2411 = vunpack.c.l.b16 %v914
    %v2412 = vunpack.c.h.b16 %v914
    %v2413 = vunpack.c.l.b16 %v915
    %v2414 = vunpack.c.h.b16 %v915
    %v2415 = vunpack.c.l.b16 %v916
    %v2416 = vunpack.c.h.b16 %v916
    %v2417 = vunpack.c.l.b16 %v917
    %v2418 = vunpack.c.h.b16 %v917
    %v2419 = vunpack.c.l.b16 %v918
    %v2420 = vunpack.c.h.b16 %v918
    %v2421 = vunpack.c.l.b16 %v919
    %v2422 = vunpack.c.h.b16 %v919
    %v2423 = vunpack.c.l.b16 %v920
    %v2424 = vunpack.c.h.b16 %v920
    %v2425 = vunpack.c.l.b16 %v921
    %v2426 = vunpack.c.h.b16 %v921
    %v2427 = vunpack.c.l.b16 %v922
    %v2428 = vunpack.c.h.b16 %v922
    %v2429 = vunpack.c.l.b16 %v923
    %v2430 = vunpack.c.h.b16 %v923
    %v2431 = vunpack.c.l.b16 %v924
    %v2432 = vunpack.c.h.b16 %v924
    %v2433 = vunpack.c.l.b16 %v925
    %v2434 = vunpack.c.h.b16 %v925
    %v2435 = vunpack.c.l.b16 %v926
    %v2436 = vunpack.c.h.b16 %v926
    %v2437 = vunpack.c.l.b16 %v927
    %v2438 = vunpack.c.h.b16 %v927
    %v2439 = vunpack.c.l.b16 %v928
    %v2440 = vunpack.c.h.b16 %v928
    %v2441 = vunpack.c.l.b16 %v929
    %v2442 = vunpack.c.h.b16 %v929
    %v2443 = vunpack.c.l.b16 %v930
    %v2444 = vunpack.c.h.b16 %v930
    %v2445 = vunpack.c.l.b16 %v931
    %v2446 = vunpack.c.h.b16 %v931
    %v2447 = vunpack.c.l.b16 %v932
    %v2448 = vunpack.c.h.b16 %v932
    %v2449 = vunpack.c.l.b16 %v933
    %v2450 = vunpack.c.h.b16 %v933
    %v2451 = vunpack.c.l.b16 %v934
    %v2452 = vunpack.c.h.b16 %v934
    %v2453 = vunpack.c.l.b16 %v935
    %v2454 = vunpack.c.h.b16 %v935
    %v2455 = vunpack.c.l.b16 %v936
    %v2456 = vunpack.c.h.b16 %v936
    %v2457 = vunpack.c.l.b16 %v937
    %v2458 = vunpack.c.h.b16 %v937
    %v2459 = vunpack.c.l.b16 %v938
    %v2460 = vunpack.c.h.b16 %v938
    %v2461 = vunpack.c.l.b16 %v939
    %v2462 = vunpack.c.h.b16 %v939
    %v2463 = vunpack.c.l.b16 %v940
    %v2464 = vunpack.c.h.b16 %v940
    %v2465 = vunpack.c.l.b16 %v941
    %v2466 = vunpack.c.h.b16 %v941
    %v2467 = vunpack.c.l.b16 %v942
    %v2468 = vunpack.c.h.b16 %v942
    %v2469 = vunpack.c.l.b16 %v943
    %v2470 = vunpack.c.h.b16 %v943
    %v2471 = vunpack.c.l.b16 %v944
    %v2472 = vunpack.c.h.b16 %v944
    %v2473 = vunpack.c.l.b16 %v945
    %v2474 = vunpack.c.h.b16 %v945
    %v2475 = vunpack.c.l.b16 %v946
    %v2476 = vunpack.c.h.b16 %v946
    %v2477 = vunpack.c.l.b16 %v947
    %v2478 = vunpack.c.h.b16 %v947
    %v2479 = vunpack.c.l.b16 %v948
    %v2480 = vunpack.c.h.b16 %v948
    %v2481 = vunpack.c.l.b16 %v949
    %v2482 = vunpack.c.h.b16 %v949
    %v2483 = vunpack.c.l.b16 %v950
    %v2484 = vunpack.c.h.b16 %v950
    %v2485 = vunpack.c.l.b16 %v951
    %v2486 = vunpack.c.h.b16 %v951
    %v2487 = vunpack.c.l.b16 %v952
    %v2488 = vunpack.c.h.b16 %v952
    %v2489 = vunpack.c.l.b16 %v953
    %v2490 = vunpack.c.h.b16 %v953
    %v2491 = vunpack.c.l.b16 %v954
    %v2492 = vunpack.c.h.b16 %v954
    %v2493 = vunpack.c.l.b16 %v955
    %v2494 = vunpack.c.h.b16 %v955
    %v2495 = vunpack.c.l.b16 %v956
    %v2496 = vunpack.c.h.b16 %v956
    %v2497 = vunpack.c.l.b16 %v957
    %v2498 = vunpack.c.h.b16 %v957
    %v2499 = vunpack.c.l.b16 %v958
    %v2500 = vunpack.c.h.b16 %v958
    %v2501 = vunpack.c.l.b16 %v959
    %v2502 = vunpack.c.h.b16 %v959
    %v2503 = vunpack.c.l.b16 %v960
    %v2504 = vunpack.c.h.b16 %v960
    %v2505 = vunpack.c.l.b16 %v961
    %v2506 = vunpack.c.h.b16 %v961
    %v2507 = vunpack.c.l.b16 %v962
    %v2508 = vunpack.c.h.b16 %v962
    %v2509 = vunpack.c.l.b16 %v963
    %v2510 = vunpack.c.h.b16 %v963
    %v2511 = vunpack.c.l.b16 %v964
    %v2512 = vunpack.c.h.b16 %v964
    %v2513 = vunpack.c.l.b16 %v965
    %v2514 = vunpack.c.h.b16 %v965
    %v2515 = vunpack.c.l.b16 %v966
    %v2516 = vunpack.c.h.b16 %v966
    %v2517 = vunpack.c.l.b16 %v967
    %v2518 = vunpack.c.h.b16 %v967
    %v2519 = vunpack.c.l.b16 %v968
    %v2520 = vunpack.c.h.b16 %v968
    %v2521 = vunpack.c.l.b16 %v969
    %v2522 = vunpack.c.h.b16 %v969
    %v2523 = vunpack.c.l.b16 %v970
    %v2524 = vunpack.c.h.b16 %v970
    %v2525 = vunpack.c.l.b16 %v971
    %v2526 = vunpack.c.h.b16 %v971
    %v2527 = vunpack.c.l.b16 %v972
    %v2528 = vunpack.c.h.b16 %v972
    %v2529 = vunpack.c.l.b16 %v973
    %v2530 = vunpack.c.h.b16 %v973
    %v2531 = vunpack.c.l.b16 %v974
    %v2532 = vunpack.c.h.b16 %v974
    %v2533 = vunpack.c.l.b16 %v975
    %v2534 = vunpack.c.h.b16 %v975
    %v2535 = vunpack.c.l.b16 %v976
    %v2536 = vunpack.c.h.b16 %v976
    %v2537 = vunpack.c.l.b16 %v977
    %v2538 = vunpack.c.h.b16 %v977
    %v2539 = vunpack.c.l.b16 %v978
    %v2540 = vunpack.c.h.b16 %v978
    %v2541 = vunpack.c.l.b16 %v979
    %v2542 = vunpack.c.h.b16 %v979
    %v2543 = vunpack.c.l.b16 %v980
    %v2544 = vunpack.c.h.b16 %v980
    %v2545 = vunpack.c.l.b16 %v981
    %v2546 = vunpack.c.h.b16 %v981
    %v2547 = vunpack.c.l.b16 %v982
    %v2548 = vunpack.c.h.b16 %v982
    %v2549 = vunpack.c.l.b16 %v983
    %v2550 = vunpack.c.h.b16 %v983
    %v2551 = vunpack.c.l.b16 %v984
    %v2552 = vunpack.c.h.b16 %v984
    %v2553 = vunpack.c.l.b16 %v985
    %v2554 = vunpack.c.h.b16 %v985
    %v2555 = vunpack.c.l.b16 %v986
    %v2556 = vunpack.c.h.b16 %v986
    %v2557 = vunpack.c.l.b16 %v987
    %v2558 = vunpack.c.h.b16 %v987
    %v2559 = vunpack.c.l.b16 %v988
    %v2560 = vunpack.c.h.b16 %v988
    %v2561 = vunpack.c.l.b16 %v989
    %v2562 = vunpack.c.h.b16 %v989
    %v2563 = vunpack.c.l.b16 %v990
    %v2564 = vunpack.c.h.b16 %v990
    %v2565 = vunpack.c.l.b16 %v991
    %v2566 = vunpack.c.h.b16 %v991
    %v2567 = vunpack.c.l.b16 %v992
    %v2568 = vunpack.c.h.b16 %v992
    %v2569 = vunpack.c.l.b16 %v993
    %v2570 = vunpack.c.h.b16 %v993
    %v2571 = vunpack.c.l.b16 %v994
    %v2572 = vunpack.c.h.b16 %v994
    %v2573 = vpack.c.b16 %v1557, %v1549
    %v2574 = vpack.c.b16 %v1558, %v1550
    %v2575 = vpack.c.b16 %v1559, %v1551
    %v2576 = vpack.c.b16 %v1560, %v1552
    %v2577 = vpack.c.b16 %v1561, %v1553
    %v2578 = vpack.c.b16 %v1562, %v1554
    %v2579 = vpack.c.b16 %v1563, %v1555
    %v2580 = vpack.c.b16 %v1564, %v1556
    %v2581 = vpack.c.b16 %v1573, %v1565
    %v2582 = vpack.c.b16 %v1574, %v1566
    %v2583 = vpack.c.b16 %v1575, %v1567
    %v2584 = vpack.c.b16 %v1576, %v1568
    %v2585 = vpack.c.b16 %v1577, %v1569
    %v2586 = vpack.c.b16 %v1578, %v1570
    %v2587 = vpack.c.b16 %v1579, %v1571
    %v2588 = vpack.c.b16 %v1580, %v1572
    %v2589 = vpack.c.b16 %v1589, %v1581
    %v2590 = vpack.c.b16 %v1590, %v1582
    %v2591 = vpack.c.b16 %v1591, %v1583
    %v2592 = vpack.c.b16 %v1592, %v1584
    %v2593 = vpack.c.b16 %v1593, %v1585
    %v2594 = vpack.c.b16 %v1594, %v1586
    %v2595 = vpack.c.b16 %v1595, %v1587
    %v2596 = vpack.c.b16 %v1596, %v1588
    %v2597 = vpack.c.b16 %v1605, %v1597
    %v2598 = vpack.c.b16 %v1606, %v1598
    %v2599 = vpack.c.b16 %v1607, %v1599
    %v2600 = vpack.c.b16 %v1608, %v1600
    %v2601 = vpack.c.b16 %v1609, %v1601
    %v2602 = vpack.c.b16 %v1610, %v1602
    %v2603 = vpack.c.b16 %v1611, %v1603
    %v2604 = vpack.c.b16 %v1612, %v1604
    %v2605 = vpack.c.b16 %v1621, %v1613
    %v2606 = vpack.c.b16 %v1622, %v1614
    %v2607 = vpack.c.b16 %v1623, %v1615
    %v2608 = vpack.c.b16 %v1624, %v1616
    %v2609 = vpack.c.b16 %v1625, %v1617
    %v2610 = vpack.c.b16 %v1626, %v1618
    %v2611 = vpack.c.b16 %v1627, %v1619
    %v2612 = vpack.c.b16 %v1628, %v1620
    %v2613 = vpack.c.b16 %v1637, %v1629
    %v2614 = vpack.c.b16 %v1638, %v1630
    %v2615 = vpack.c.b16 %v1639, %v1631
    %v2616 = vpack.c.b16 %v1640, %v1632
    %v2617 = vpack.c.b16 %v1641, %v1633
    %v2618 = vpack.c.b16 %v1642, %v1634
    %v2619 = vpack.c.b16 %v1643, %v1635
    %v2620 = vpack.c.b16 %v1644, %v1636
    %v2621 = vpack.c.b16 %v1653, %v1645
    %v2622 = vpack.c.b16 %v1654, %v1646
    %v2623 = vpack.c.b16 %v1655, %v1647
    %v2624 = vpack.c.b16 %v1656, %v1648
    %v2625 = vpack.c.b16 %v1657, %v1649
    %v2626 = vpack.c.b16 %v1658, %v1650
    %v2627 = vpack.c.b16 %v1659, %v1651
    %v2628 = vpack.c.b16 %v1660, %v1652
    %v2629 = vpack.c.b16 %v1669, %v1661
    %v2630 = vpack.c.b16 %v1670, %v1662
    %v2631 = vpack.c.b16 %v1671, %v1663
    %v2632 = vpack.c.b16 %v1672, %v1664
    %v2633 = vpack.c.b16 %v1673, %v1665
    %v2634 = vpack.c.b16 %v1674, %v1666
    %v2635 = vpack.c.b16 %v1675, %v1667
    %v2636 = vpack.c.b16 %v1676, %v1668
    %v2637 = vpack.c.b16 %v1685, %v1677
    %v2638 = vpack.c.b16 %v1686, %v1678
    %v2639 = vpack.c.b16 %v1687, %v1679
    %v2640 = vpack.c.b16 %v1688, %v1680
    %v2641 = vpack.c.b16 %v1689, %v1681
    %v2642 = vpack.c.b16 %v1690, %v1682
    %v2643 = vpack.c.b16 %v1691, %v1683
    %v2644 = vpack.c.b16 %v1692, %v1684
    %v2645 = vpack.c.b16 %v1701, %v1693
    %v2646 = vpack.c.b16 %v1702, %v1694
    %v2647 = vpack.c.b16 %v1703, %v1695
    %v2648 = vpack.c.b16 %v1704, %v1696
    %v2649 = vpack.c.b16 %v1705, %v1697
    %v2650 = vpack.c.b16 %v1706, %v1698
    %v2651 = vpack.c.b16 %v1707, %v1699
    %v2652 = vpack.c.b16 %v1708, %v1700
    %v2653 = vpack.c.b16 %v1717, %v1709
    %v2654 = vpack.c.b16 %v1718, %v1710
    %v2655 = vpack.c.b16 %v1719, %v1711
    %v2656 = vpack.c.b16 %v1720, %v1712
    %v2657 = vpack.c.b16 %v1721, %v1713
    %v2658 = vpack.c.b16 %v1722, %v1714
    %v2659 = vpack.c.b16 %v1723, %v1715
    %v2660 = vpack.c.b16 %v1724, %v1716
    %v2661 = vpack.c.b16 %v1733, %v1725
    %v2662 = vpack.c.b16 %v1734, %v1726
    %v2663 = vpack.c.b16 %v1735, %v1727
    %v2664 = vpack.c.b16 %v1736, %v1728
    %v2665 = vpack.c.b16 %v1737, %v1729
    %v2666 = vpack.c.b16 %v1738, %v1730
    %v2667 = vpack.c.b16 %v1739, %v1731
    %v2668 = vpack.c.b16 %v1740, %v1732
    %v2669 = vpack.c.b16 %v1749, %v1741
    %v2670 = vpack.c.b16 %v1750, %v1742
    %v2671 = vpack.c.b16 %v1751, %v1743
    %v2672 = vpack.c.b16 %v1752, %v1744
    %v2673 = vpack.c.b16 %v1753, %v1745
    %v2674 = vpack.c.b16 %v1754, %v1746
    %v2675 = vpack.c.b16 %v1755, %v1747
    %v2676 = vpack.c.b16 %v1756, %v1748
    %v2677 = vpack.c.b16 %v1765, %v1757
    %v2678 = vpack.c.b16 %v1766, %v1758
    %v2679 = vpack.c.b16 %v1767, %v1759
    %v2680 = vpack.c.b16 %v1768, %v1760
    %v2681 = vpack.c.b16 %v1769, %v1761
    %v2682 = vpack.c.b16 %v1770, %v1762
    %v2683 = vpack.c.b16 %v1771, %v1763
    %v2684 = vpack.c.b16 %v1772, %v1764
    %v2685 = vpack.c.b16 %v1781, %v1773
    %v2686 = vpack.c.b16 %v1782, %v1774
    %v2687 = vpack.c.b16 %v1783, %v1775
    %v2688 = vpack.c.b16 %v1784, %v1776
    %v2689 = vpack.c.b16 %v1785, %v1777
    %v2690 = vpack.c.b16 %v1786, %v1778
    %v2691 = vpack.c.b16 %v1787, %v1779
    %v2692 = vpack.c.b16 %v1788, %v1780
    %v2693 = vpack.c.b16 %v1797, %v1789
    %v2694 = vpack.c.b16 %v1798, %v1790
    %v2695 = vpack.c.b16 %v1799, %v1791
    %v2696 = vpack.c.b16 %v1800, %v1792
    %v2697 = vpack.c.b16 %v1801, %v1793
    %v2698 = vpack.c.b16 %v1802, %v1794
    %v2699 = vpack.c.b16 %v1803, %v1795
    %v2700 = vpack.c.b16 %v1804, %v1796
    %v2701 = vpack.c.b16 %v1813, %v1805
    %v2702 = vpack.c.b16 %v1814, %v1806
    %v2703 = vpack.c.b16 %v1815, %v1807
    %v2704 = vpack.c.b16 %v1816, %v1808
    %v2705 = vpack.c.b16 %v1817, %v1809
    %v2706 = vpack.c.b16 %v1818, %v1810
    %v2707 = vpack.c.b16 %v1819, %v1811
    %v2708 = vpack.c.b16 %v1820, %v1812
    %v2709 = vpack.c.b16 %v1829, %v1821
    %v2710 = vpack.c.b16 %v1830, %v1822
    %v2711 = vpack.c.b16 %v1831, %v1823
    %v2712 = vpack.c.b16 %v1832, %v1824
    %v2713 = vpack.c.b16 %v1833, %v1825
    %v2714 = vpack.c.b16 %v1834, %v1826
    %v2715 = vpack.c.b16 %v1835, %v1827
    %v2716 = vpack.c.b16 %v1836, %v1828
    %v2717 = vpack.c.b16 %v1845, %v1837
    %v2718 = vpack.c.b16 %v1846, %v1838
    %v2719 = vpack.c.b16 %v1847, %v1839
    %v2720 = vpack.c.b16 %v1848, %v1840
    %v2721 = vpack.c.b16 %v1849, %v1841
    %v2722 = vpack.c.b16 %v1850, %v1842
    %v2723 = vpack.c.b16 %v1851, %v1843
    %v2724 = vpack.c.b16 %v1852, %v1844
    %v2725 = vpack.c.b16 %v1861, %v1853
    %v2726 = vpack.c.b16 %v1862, %v1854
    %v2727 = vpack.c.b16 %v1863, %v1855
    %v2728 = vpack.c.b16 %v1864, %v1856
    %v2729 = vpack.c.b16 %v1865, %v1857
    %v2730 = vpack.c.b16 %v1866, %v1858
    %v2731 = vpack.c.b16 %v1867, %v1859
    %v2732 = vpack.c.b16 %v1868, %v1860
    %v2733 = vpack.c.b16 %v1877, %v1869
    %v2734 = vpack.c.b16 %v1878, %v1870
    %v2735 = vpack.c.b16 %v1879, %v1871
    %v2736 = vpack.c.b16 %v1880, %v1872
    %v2737 = vpack.c.b16 %v1881, %v1873
    %v2738 = vpack.c.b16 %v1882, %v1874
    %v2739 = vpack.c.b16 %v1883, %v1875
    %v2740 = vpack.c.b16 %v1884, %v1876
    %v2741 = vpack.c.b16 %v1893, %v1885
    %v2742 = vpack.c.b16 %v1894, %v1886
    %v2743 = vpack.c.b16 %v1895, %v1887
    %v2744 = vpack.c.b16 %v1896, %v1888
    %v2745 = vpack.c.b16 %v1897, %v1889
    %v2746 = vpack.c.b16 %v1898, %v1890
    %v2747 = vpack.c.b16 %v1899, %v1891
    %v2748 = vpack.c.b16 %v1900, %v1892
    %v2749 = vpack.c.b16 %v1909, %v1901
    %v2750 = vpack.c.b16 %v1910, %v1902
    %v2751 = vpack.c.b16 %v1911, %v1903
    %v2752 = vpack.c.b16 %v1912, %v1904
    %v2753 = vpack.c.b16 %v1913, %v1905
    %v2754 = vpack.c.b16 %v1914, %v1906
    %v2755 = vpack.c.b16 %v1915, %v1907
    %v2756 = vpack.c.b16 %v1916, %v1908
    %v2757 = vpack.c.b16 %v1925, %v1917
    %v2758 = vpack.c.b16 %v1926, %v1918
    %v2759 = vpack.c.b16 %v1927, %v1919
    %v2760 = vpack.c.b16 %v1928, %v1920
    %v2761 = vpack.c.b16 %v1929, %v1921
    %v2762 = vpack.c.b16 %v1930, %v1922
    %v2763 = vpack.c.b16 %v1931, %v1923
    %v2764 = vpack.c.b16 %v1932, %v1924
    %v2765 = vpack.c.b16 %v1941, %v1933
    %v2766 = vpack.c.b16 %v1942, %v1934
    %v2767 = vpack.c.b16 %v1943, %v1935
    %v2768 = vpack.c.b16 %v1944, %v1936
    %v2769 = vpack.c.b16 %v1945, %v1937
    %v2770 = vpack.c.b16 %v1946, %v1938
    %v2771 = vpack.c.b16 %v1947, %v1939
    %v2772 = vpack.c.b16 %v1948, %v1940
    %v2773 = vpack.c.b16 %v1957, %v1949
    %v2774 = vpack.c.b16 %v1958, %v1950
    %v2775 = vpack.c.b16 %v1959, %v1951
    %v2776 = vpack.c.b16 %v1960, %v1952
    %v2777 = vpack.c.b16 %v1961, %v1953
    %v2778 = vpack.c.b16 %v1962, %v1954
    %v2779 = vpack.c.b16 %v1963, %v1955
    %v2780 = vpack.c.b16 %v1964, %v1956
    %v2781 = vpack.c.b16 %v1973, %v1965
    %v2782 = vpack.c.b16 %v1974, %v1966
    %v2783 = vpack.c.b16 %v1975, %v1967
    %v2784 = vpack.c.b16 %v1976, %v1968
    %v2785 = vpack.c.b16 %v1977, %v1969
    %v2786 = vpack.c.b16 %v1978, %v1970
    %v2787 = vpack.c.b16 %v1979, %v1971
    %v2788 = vpack.c.b16 %v1980, %v1972
    %v2789 = vpack.c.b16 %v1989, %v1981
    %v2790 = vpack.c.b16 %v1990, %v1982
    %v2791 = vpack.c.b16 %v1991, %v1983
    %v2792 = vpack.c.b16 %v1992, %v1984
    %v2793 = vpack.c.b16 %v1993, %v1985
    %v2794 = vpack.c.b16 %v1994, %v1986
    %v2795 = vpack.c.b16 %v1995, %v1987
    %v2796 = vpack.c.b16 %v1996, %v1988
    %v2797 = vpack.c.b16 %v2005, %v1997
    %v2798 = vpack.c.b16 %v2006, %v1998
    %v2799 = vpack.c.b16 %v2007, %v1999
    %v2800 = vpack.c.b16 %v2008, %v2000
    %v2801 = vpack.c.b16 %v2009, %v2001
    %v2802 = vpack.c.b16 %v2010, %v2002
    %v2803 = vpack.c.b16 %v2011, %v2003
    %v2804 = vpack.c.b16 %v2012, %v2004
    %v2805 = vpack.c.b16 %v2021, %v2013
    %v2806 = vpack.c.b16 %v2022, %v2014
    %v2807 = vpack.c.b16 %v2023, %v2015
    %v2808 = vpack.c.b16 %v2024, %v2016
    %v2809 = vpack.c.b16 %v2025, %v2017
    %v2810 = vpack.c.b16 %v2026, %v2018
    %v2811 = vpack.c.b16 %v2027, %v2019
    %v2812 = vpack.c.b16 %v2028, %v2020
    %v2813 = vpack.c.b16 %v2037, %v2029
    %v2814 = vpack.c.b16 %v2038, %v2030
    %v2815 = vpack.c.b16 %v2039, %v2031
    %v2816 = vpack.c.b16 %v2040, %v2032
    %v2817 = vpack.c.b16 %v2041, %v2033
    %v2818 = vpack.c.b16 %v2042, %v2034
    %v2819 = vpack.c.b16 %v2043, %v2035
    %v2820 = vpack.c.b16 %v2044, %v2036
    %v2821 = vpack.c.b16 %v2053, %v2045
    %v2822 = vpack.c.b16 %v2054, %v2046
    %v2823 = vpack.c.b16 %v2055, %v2047
    %v2824 = vpack.c.b16 %v2056, %v2048
    %v2825 = vpack.c.b16 %v2057, %v2049
    %v2826 = vpack.c.b16 %v2058, %v2050
    %v2827 = vpack.c.b16 %v2059, %v2051
    %v2828 = vpack.c.b16 %v2060, %v2052
    %v2829 = vpack.c.b16 %v2069, %v2061
    %v2830 = vpack.c.b16 %v2070, %v2062
    %v2831 = vpack.c.b16 %v2071, %v2063
    %v2832 = vpack.c.b16 %v2072, %v2064
    %v2833 = vpack.c.b16 %v2073, %v2065
    %v2834 = vpack.c.b16 %v2074, %v2066
    %v2835 = vpack.c.b16 %v2075, %v2067
    %v2836 = vpack.c.b16 %v2076, %v2068
    %v2837 = vpack.c.b16 %v2085, %v2077
    %v2838 = vpack.c.b16 %v2086, %v2078
    %v2839 = vpack.c.b16 %v2087, %v2079
    %v2840 = vpack.c.b16 %v2088, %v2080
    %v2841 = vpack.c.b16 %v2089, %v2081
    %v2842 = vpack.c.b16 %v2090, %v2082
    %v2843 = vpack.c.b16 %v2091, %v2083
    %v2844 = vpack.c.b16 %v2092, %v2084
    %v2845 = vpack.c.b16 %v2101, %v2093
    %v2846 = vpack.c.b16 %v2102, %v2094
    %v2847 = vpack.c.b16 %v2103, %v2095
    %v2848 = vpack.c.b16 %v2104, %v2096
    %v2849 = vpack.c.b16 %v2105, %v2097
    %v2850 = vpack.c.b16 %v2106, %v2098
    %v2851 = vpack.c.b16 %v2107, %v2099
    %v2852 = vpack.c.b16 %v2108, %v2100
    %v2853 = vpack.c.b16 %v2117, %v2109
    %v2854 = vpack.c.b16 %v2118, %v2110
    %v2855 = vpack.c.b16 %v2119, %v2111
    %v2856 = vpack.c.b16 %v2120, %v2112
    %v2857 = vpack.c.b16 %v2121, %v2113
    %v2858 = vpack.c.b16 %v2122, %v2114
    %v2859 = vpack.c.b16 %v2123, %v2115
    %v2860 = vpack.c.b16 %v2124, %v2116
    %v2861 = vpack.c.b16 %v2133, %v2125
    %v2862 = vpack.c.b16 %v2134, %v2126
    %v2863 = vpack.c.b16 %v2135, %v2127
    %v2864 = vpack.c.b16 %v2136, %v2128
    %v2865 = vpack.c.b16 %v2137, %v2129
    %v2866 = vpack.c.b16 %v2138, %v2130
    %v2867 = vpack.c.b16 %v2139, %v2131
    %v2868 = vpack.c.b16 %v2140, %v2132
    %v2869 = vpack.c.b16 %v2149, %v2141
    %v2870 = vpack.c.b16 %v2150, %v2142
    %v2871 = vpack.c.b16 %v2151, %v2143
    %v2872 = vpack.c.b16 %v2152, %v2144
    %v2873 = vpack.c.b16 %v2153, %v2145
    %v2874 = vpack.c.b16 %v2154, %v2146
    %v2875 = vpack.c.b16 %v2155, %v2147
    %v2876 = vpack.c.b16 %v2156, %v2148
    %v2877 = vpack.c.b16 %v2165, %v2157
    %v2878 = vpack.c.b16 %v2166, %v2158
    %v2879 = vpack.c.b16 %v2167, %v2159
    %v2880 = vpack.c.b16 %v2168, %v2160
    %v2881 = vpack.c.b16 %v2169, %v2161
    %v2882 = vpack.c.b16 %v2170, %v2162
    %v2883 = vpack.c.b16 %v2171, %v2163
    %v2884 = vpack.c.b16 %v2172, %v2164
    %v2885 = vpack.c.b16 %v2181, %v2173
    %v2886 = vpack.c.b16 %v2182, %v2174
    %v2887 = vpack.c.b16 %v2183, %v2175
    %v2888 = vpack.c.b16 %v2184, %v2176
    %v2889 = vpack.c.b16 %v2185, %v2177
    %v2890 = vpack.c.b16 %v2186, %v2178
    %v2891 = vpack.c.b16 %v2187, %v2179
    %v2892 = vpack.c.b16 %v2188, %v2180
    %v2893 = vpack.c.b16 %v2197, %v2189
    %v2894 = vpack.c.b16 %v2198, %v2190
    %v2895 = vpack.c.b16 %v2199, %v2191
    %v2896 = vpack.c.b16 %v2200, %v2192
    %v2897 = vpack.c.b16 %v2201, %v2193
    %v2898 = vpack.c.b16 %v2202, %v2194
    %v2899 = vpack.c.b16 %v2203, %v2195
    %v2900 = vpack.c.b16 %v2204, %v2196
    %v2901 = vpack.c.b16 %v2213, %v2205
    %v2902 = vpack.c.b16 %v2214, %v2206
    %v2903 = vpack.c.b16 %v2215, %v2207
    %v2904 = vpack.c.b16 %v2216, %v2208
    %v2905 = vpack.c.b16 %v2217, %v2209
    %v2906 = vpack.c.b16 %v2218, %v2210
    %v2907 = vpack.c.b16 %v2219, %v2211
    %v2908 = vpack.c.b16 %v2220, %v2212
    %v2909 = vpack.c.b16 %v2229, %v2221
    %v2910 = vpack.c.b16 %v2230, %v2222
    %v2911 = vpack.c.b16 %v2231, %v2223
    %v2912 = vpack.c.b16 %v2232, %v2224
    %v2913 = vpack.c.b16 %v2233, %v2225
    %v2914 = vpack.c.b16 %v2234, %v2226
    %v2915 = vpack.c.b16 %v2235, %v2227
    %v2916 = vpack.c.b16 %v2236, %v2228
    %v2917 = vpack.c.b16 %v2245, %v2237
    %v2918 = vpack.c.b16 %v2246, %v2238
    %v2919 = vpack.c.b16 %v2247, %v2239
    %v2920 = vpack.c.b16 %v2248, %v2240
    %v2921 = vpack.c.b16 %v2249, %v2241
    %v2922 = vpack.c.b16 %v2250, %v2242
    %v2923 = vpack.c.b16 %v2251, %v2243
    %v2924 = vpack.c.b16 %v2252, %v2244
    %v2925 = vpack.c.b16 %v2261, %v2253
    %v2926 = vpack.c.b16 %v2262, %v2254
    %v2927 = vpack.c.b16 %v2263, %v2255
    %v2928 = vpack.c.b16 %v2264, %v2256
    %v2929 = vpack.c.b16 %v2265, %v2257
    %v2930 = vpack.c.b16 %v2266, %v2258
    %v2931 = vpack.c.b16 %v2267, %v2259
    %v2932 = vpack.c.b16 %v2268, %v2260
    %v2933 = vpack.c.b16 %v2277, %v2269
    %v2934 = vpack.c.b16 %v2278, %v2270
    %v2935 = vpack.c.b16 %v2279, %v2271
    %v2936 = vpack.c.b16 %v2280, %v2272
    %v2937 = vpack.c.b16 %v2281, %v2273
    %v2938 = vpack.c.b16 %v2282, %v2274
    %v2939 = vpack.c.b16 %v2283, %v2275
    %v2940 = vpack.c.b16 %v2284, %v2276
    %v2941 = vpack.c.b16 %v2293, %v2285
    %v2942 = vpack.c.b16 %v2294, %v2286
    %v2943 = vpack.c.b16 %v2295, %v2287
    %v2944 = vpack.c.b16 %v2296, %v2288
    %v2945 = vpack.c.b16 %v2297, %v2289
    %v2946 = vpack.c.b16 %v2298, %v2290
    %v2947 = vpack.c.b16 %v2299, %v2291
    %v2948 = vpack.c.b16 %v2300, %v2292
    %v2949 = vpack.c.b16 %v2309, %v2301
    %v2950 = vpack.c.b16 %v2310, %v2302
    %v2951 = vpack.c.b16 %v2311, %v2303
    %v2952 = vpack.c.b16 %v2312, %v2304
    %v2953 = vpack.c.b16 %v2313, %v2305
    %v2954 = vpack.c.b16 %v2314, %v2306
    %v2955 = vpack.c.b16 %v2315, %v2307
    %v2956 = vpack.c.b16 %v2316, %v2308
    %v2957 = vpack.c.b16 %v2325, %v2317
    %v2958 = vpack.c.b16 %v2326, %v2318
    %v2959 = vpack.c.b16 %v2327, %v2319
    %v2960 = vpack.c.b16 %v2328, %v2320
    %v2961 = vpack.c.b16 %v2329, %v2321
    %v2962 = vpack.c.b16 %v2330, %v2322
    %v2963 = vpack.c.b16 %v2331, %v2323
    %v2964 = vpack.c.b16 %v2332, %v2324
    %v2965 = vpack.c.b16 %v2341, %v2333
    %v2966 = vpack.c.b16 %v2342, %v2334
    %v2967 = vpack.c.b16 %v2343, %v2335
    %v2968 = vpack.c.b16 %v2344, %v2336
    %v2969 = vpack.c.b16 %v2345, %v2337
    %v2970 = vpack.c.b16 %v2346, %v2338
    %v2971 = vpack.c.b16 %v2347, %v2339
    %v2972 = vpack.c.b16 %v2348, %v2340
    %v2973 = vpack.c.b16 %v2357, %v2349
    %v2974 = vpack.c.b16 %v2358, %v2350
    %v2975 = vpack.c.b16 %v2359, %v2351
    %v2976 = vpack.c.b16 %v2360, %v2352
    %v2977 = vpack.c.b16 %v2361, %v2353
    %v2978 = vpack.c.b16 %v2362, %v2354
    %v2979 = vpack.c.b16 %v2363, %v2355
    %v2980 = vpack.c.b16 %v2364, %v2356
    %v2981 = vpack.c.b16 %v2373, %v2365
    %v2982 = vpack.c.b16 %v2374, %v2366
    %v2983 = vpack.c.b16 %v2375, %v2367
    %v2984 = vpack.c.b16 %v2376, %v2368
    %v2985 = vpack.c.b16 %v2377, %v2369
    %v2986 = vpack.c.b16 %v2378, %v2370
    %v2987 = vpack.c.b16 %v2379, %v2371
    %v2988 = vpack.c.b16 %v2380, %v2372
    %v2989 = vpack.c.b16 %v2389, %v2381
    %v2990 = vpack.c.b16 %v2390, %v2382
    %v2991 = vpack.c.b16 %v2391, %v2383
    %v2992 = vpack.c.b16 %v2392, %v2384
    %v2993 = vpack.c.b16 %v2393, %v2385
    %v2994 = vpack.c.b16 %v2394, %v2386
    %v2995 = vpack.c.b16 %v2395, %v2387
    %v2996 = vpack.c.b16 %v2396, %v2388
    %v2997 = vpack.c.b16 %v2405, %v2397
    %v2998 = vpack.c.b16 %v2406, %v2398
    %v2999 = vpack.c.b16 %v2407, %v2399
    %v3000 = vpack.c.b16 %v2408, %v2400
    %v3001 = vpack.c.b16 %v2409, %v2401
    %v3002 = vpack.c.b16 %v2410, %v2402
    %v3003 = vpack.c.b16 %v2411, %v2403
    %v3004 = vpack.c.b16 %v2412, %v2404
    %v3005 = vpack.c.b16 %v2421, %v2413
    %v3006 = vpack.c.b16 %v2422, %v2414
    %v3007 = vpack.c.b16 %v2423, %v2415
    %v3008 = vpack.c.b16 %v2424, %v2416
    %v3009 = vpack.c.b16 %v2425, %v2417
    %v3010 = vpack.c.b16 %v2426, %v2418
    %v3011 = vpack.c.b16 %v2427, %v2419
    %v3012 = vpack.c.b16 %v2428, %v2420
    %v3013 = vpack.c.b16 %v2437, %v2429
    %v3014 = vpack.c.b16 %v2438, %v2430
    %v3015 = vpack.c.b16 %v2439, %v2431
    %v3016 = vpack.c.b16 %v2440, %v2432
    %v3017 = vpack.c.b16 %v2441, %v2433
    %v3018 = vpack.c.b16 %v2442, %v2434
    %v3019 = vpack.c.b16 %v2443, %v2435
    %v3020 = vpack.c.b16 %v2444, %v2436
    %v3021 = vpack.c.b16 %v2453, %v2445
    %v3022 = vpack.c.b16 %v2454, %v2446
    %v3023 = vpack.c.b16 %v2455, %v2447
    %v3024 = vpack.c.b16 %v2456, %v2448
    %v3025 = vpack.c.b16 %v2457, %v2449
    %v3026 = vpack.c.b16 %v2458, %v2450
    %v3027 = vpack.c.b16 %v2459, %v2451
    %v3028 = vpack.c.b16 %v2460, %v2452
    %v3029 = vpack.c.b16 %v2469, %v2461
    %v3030 = vpack.c.b16 %v2470, %v2462
    %v3031 = vpack.c.b16 %v2471, %v2463
    %v3032 = vpack.c.b16 %v2472, %v2464
    %v3033 = vpack.c.b16 %v2473, %v2465
    %v3034 = vpack.c.b16 %v2474, %v2466
    %v3035 = vpack.c.b16 %v2475, %v2467
    %v3036 = vpack.c.b16 %v2476, %v2468
    %v3037 = vpack.c.b16 %v2485, %v2477
    %v3038 = vpack.c.b16 %v2486, %v2478
    %v3039 = vpack.c.b16 %v2487, %v2479
    %v3040 = vpack.c.b16 %v2488, %v2480
    %v3041 = vpack.c.b16 %v2489, %v2481
    %v3042 = vpack.c.b16 %v2490, %v2482
    %v3043 = vpack.c.b16 %v2491, %v2483
    %v3044 = vpack.c.b16 %v2492, %v2484
    %v3045 = vpack.c.b16 %v2501, %v2493
    %v3046 = vpack.c.b16 %v2502, %v2494
    %v3047 = vpack.c.b16 %v2503, %v2495
    %v3048 = vpack.c.b16 %v2504, %v2496
    %v3049 = vpack.c.b16 %v2505, %v2497
    %v3050 = vpack.c.b16 %v2506, %v2498
    %v3051 = vpack.c.b16 %v2507, %v2499
    %v3052 = vpack.c.b16 %v2508, %v2500
    %v3053 = vpack.c.b16 %v2517, %v2509
    %v3054 = vpack.c.b16 %v2518, %v2510
    %v3055 = vpack.c.b16 %v2519, %v2511
    %v3056 = vpack.c.b16 %v2520, %v2512
    %v3057 = vpack.c.b16 %v2521, %v2513
    %v3058 = vpack.c.b16 %v2522, %v2514
    %v3059 = vpack.c.b16 %v2523, %v2515
    %v3060 = vpack.c.b16 %v2524, %v2516
    %v3061 = vpack.c.b16 %v2533, %v2525
    %v3062 = vpack.c.b16 %v2534, %v2526
    %v3063 = vpack.c.b16 %v2535, %v2527
    %v3064 = vpack.c.b16 %v2536, %v2528
    %v3065 = vpack.c.b16 %v2537, %v2529
    %v3066 = vpack.c.b16 %v2538, %v2530
    %v3067 = vpack.c.b16 %v2539, %v2531
    %v3068 = vpack.c.b16 %v2540, %v2532
    %v3069 = vpack.c.b16 %v2549, %v2541
    %v3070 = vpack.c.b16 %v2550, %v2542
    %v3071 = vpack.c.b16 %v2551, %v2543
    %v3072 = vpack.c.b16 %v2552, %v2544
    %v3073 = vpack.c.b16 %v2553, %v2545
    %v3074 = vpack.c.b16 %v2554, %v2546
    %v3075 = vpack.c.b16 %v2555, %v2547
    %v3076 = vpack.c.b16 %v2556, %v2548
    %v3077 = vpack.c.b16 %v2565, %v2557
    %v3078 = vpack.c.b16 %v2566, %v2558
    %v3079 = vpack.c.b16 %v2567, %v2559
    %v3080 = vpack.c.b16 %v2568, %v2560
    %v3081 = vpack.c.b16 %v2569, %v2561
    %v3082 = vpack.c.b16 %v2570, %v2562
    %v3083 = vpack.c.b16 %v2571, %v2563
    %v3084 = vpack.c.b16 %v2572, %v2564
    %3597 = vmatprep.subr.bf16.mxu0 %v2574
    %3598 = vmatpush1.bf16.msra.mxu0 %v2573
    %3599 = vmatprep.subr.bf16.mxu0 %v2582
    %3600 = vmatpush1.bf16.msra.mxu0 %v2581
    %3601 = vmatprep.subr.bf16.mxu0 %v2590
    %3602 = vmatpush1.bf16.msra.mxu0 %v2589
    %3603 = vmatprep.subr.bf16.mxu0 %v2598
    %3604 = vmatpush1.bf16.msra.mxu0 %v2597
    %3605 = vmatprep.subr.bf16.mxu0 %v2606
    %3606 = vmatpush1.bf16.msra.mxu0 %v2605
    %3607 = vmatprep.subr.bf16.mxu0 %v2614
    %3608 = vmatpush1.bf16.msra.mxu0 %v2613
    %3609 = vmatprep.subr.bf16.mxu0 %v2622
    %3610 = vmatpush1.bf16.msra.mxu0 %v2621
    %3611 = vmatprep.subr.bf16.mxu0 %v2630
    %3612 = vmatpush1.bf16.msra.mxu0 %v2629
    %3613 = vmatprep.subr.bf16.mxu0 %v2638
    %3614 = vmatpush1.bf16.msra.mxu0 %v2637
    %3615 = vmatprep.subr.bf16.mxu0 %v2646
    %3616 = vmatpush1.bf16.msra.mxu0 %v2645
    %3617 = vmatprep.subr.bf16.mxu0 %v2654
    %3618 = vmatpush1.bf16.msra.mxu0 %v2653
    %3619 = vmatprep.subr.bf16.mxu0 %v2662
    %3620 = vmatpush1.bf16.msra.mxu0 %v2661
    %3621 = vmatprep.subr.bf16.mxu0 %v2670
    %3622 = vmatpush1.bf16.msra.mxu0 %v2669
    %3623 = vmatprep.subr.bf16.mxu0 %v2678
    %3624 = vmatpush1.bf16.msra.mxu0 %v2677
    %3625 = vmatprep.subr.bf16.mxu0 %v2686
    %3626 = vmatpush1.bf16.msra.mxu0 %v2685
    %3627 = vmatprep.subr.bf16.mxu0 %v2694
    %3628 = vmatpush1.bf16.msra.mxu0 %v2693
    %3629 = vmatprep.mubr.bf16.mxu0 %v476
    %3630 = vmatmul.mubr.bf16.gmra.mrb[0].mxu0 %v475
    %v3631 = vpop.f32.mrb[0].mxu0
    %v3632 = vadd.f32 %v1000, %v3631
    %v3633 = vpop.f32.mrb[0].mxu0
    %v3634 = vadd.f32 %v1004, %v3633
    %v3635 = vpop.f32.mrb[0].mxu0
    %v3636 = vpop.f32.mrb[0].mxu0
    %3637 = vdwg.mxu0
    %3638 = vmatprep.subr.bf16.mxu0 %v2702
    %3639 = vmatpush1.bf16.msra.mxu0 %v2701
    %3640 = vmatprep.subr.bf16.mxu0 %v2710
    %3641 = vmatpush1.bf16.msra.mxu0 %v2709
    %3642 = vmatprep.subr.bf16.mxu0 %v2718
    %3643 = vmatpush1.bf16.msra.mxu0 %v2717
    %3644 = vmatprep.subr.bf16.mxu0 %v2726
    %3645 = vmatpush1.bf16.msra.mxu0 %v2725
    %3646 = vmatprep.subr.bf16.mxu0 %v2734
    %3647 = vmatpush1.bf16.msra.mxu0 %v2733
    %3648 = vmatprep.subr.bf16.mxu0 %v2742
    %3649 = vmatpush1.bf16.msra.mxu0 %v2741
    %3650 = vmatprep.subr.bf16.mxu0 %v2750
    %3651 = vmatpush1.bf16.msra.mxu0 %v2749
    %3652 = vmatprep.subr.bf16.mxu0 %v2758
    %3653 = vmatpush1.bf16.msra.mxu0 %v2757
    %3654 = vmatprep.subr.bf16.mxu0 %v2766
    %3655 = vmatpush1.bf16.msra.mxu0 %v2765
    %3656 = vmatprep.subr.bf16.mxu0 %v2774
    %3657 = vmatpush1.bf16.msra.mxu0 %v2773
    %3658 = vmatprep.subr.bf16.mxu0 %v2782
    %3659 = vmatpush1.bf16.msra.mxu0 %v2781
    %3660 = vmatprep.subr.bf16.mxu0 %v2790
    %3661 = vmatpush1.bf16.msra.mxu0 %v2789
    %3662 = vmatprep.subr.bf16.mxu0 %v2798
    %3663 = vmatpush1.bf16.msra.mxu0 %v2797
    %3664 = vmatprep.subr.bf16.mxu0 %v2806
    %3665 = vmatpush1.bf16.msra.mxu0 %v2805
    %3666 = vmatprep.subr.bf16.mxu0 %v2814
    %3667 = vmatpush1.bf16.msra.mxu0 %v2813
    %3668 = vmatprep.subr.bf16.mxu0 %v2822
    %3669 = vmatpush1.bf16.msra.mxu0 %v2821
    %3670 = vmatprep.mubr.bf16.mxu0 %v478
    %3671 = vmatmul.mubr.bf16.gmra.mrb[0].mxu0 %v477
    %v3672 = vpop.f32.mrb[0].mxu0
    %v3673 = vadd.f32 %v3632, %v3672
    %v3674 = vpop.f32.mrb[0].mxu0
    %v3675 = vadd.f32 %v3634, %v3674
    %v3676 = vpop.f32.mrb[0].mxu0
    %v3677 = vpop.f32.mrb[0].mxu0
    %3678 = vdwg.mxu0
    %3679 = vmatprep.subr.bf16.mxu0 %v2830
    %3680 = vmatpush1.bf16.msra.mxu0 %v2829
    %3681 = vmatprep.subr.bf16.mxu0 %v2838
    %3682 = vmatpush1.bf16.msra.mxu0 %v2837
    %3683 = vmatprep.subr.bf16.mxu0 %v2846
    %3684 = vmatpush1.bf16.msra.mxu0 %v2845
    %3685 = vmatprep.subr.bf16.mxu0 %v2854
    %3686 = vmatpush1.bf16.msra.mxu0 %v2853
    %3687 = vmatprep.subr.bf16.mxu0 %v2862
    %3688 = vmatpush1.bf16.msra.mxu0 %v2861
    %3689 = vmatprep.subr.bf16.mxu0 %v2870
    %3690 = vmatpush1.bf16.msra.mxu0 %v2869
    %3691 = vmatprep.subr.bf16.mxu0 %v2878
    %3692 = vmatpush1.bf16.msra.mxu0 %v2877
    %3693 = vmatprep.subr.bf16.mxu0 %v2886
    %3694 = vmatpush1.bf16.msra.mxu0 %v2885
    %3695 = vmatprep.subr.bf16.mxu0 %v2894
    %3696 = vmatpush1.bf16.msra.mxu0 %v2893
    %3697 = vmatprep.subr.bf16.mxu0 %v2902
    %3698 = vmatpush1.bf16.msra.mxu0 %v2901
    %3699 = vmatprep.subr.bf16.mxu0 %v2910
    %3700 = vmatpush1.bf16.msra.mxu0 %v2909
    %3701 = vmatprep.subr.bf16.mxu0 %v2918
    %3702 = vmatpush1.bf16.msra.mxu0 %v2917
    %3703 = vmatprep.subr.bf16.mxu0 %v2926
    %3704 = vmatpush1.bf16.msra.mxu0 %v2925
    %3705 = vmatprep.subr.bf16.mxu0 %v2934
    %3706 = vmatpush1.bf16.msra.mxu0 %v2933
    %3707 = vmatprep.subr.bf16.mxu0 %v2942
    %3708 = vmatpush1.bf16.msra.mxu0 %v2941
    %3709 = vmatprep.subr.bf16.mxu0 %v2950
    %3710 = vmatpush1.bf16.msra.mxu0 %v2949
    %3711 = vmatprep.mubr.bf16.mxu0 %v480
    %3712 = vmatmul.mubr.bf16.gmra.mrb[0].mxu0 %v479
    %v3713 = vpop.f32.mrb[0].mxu0
    %v3714 = vadd.f32 %v3673, %v3713
    %v3715 = vpop.f32.mrb[0].mxu0
    %v3716 = vadd.f32 %v3675, %v3715
    %v3717 = vpop.f32.mrb[0].mxu0
    %v3718 = vpop.f32.mrb[0].mxu0
    %3719 = vdwg.mxu0
    %3720 = vmatprep.subr.bf16.mxu0 %v2958
    %3721 = vmatpush1.bf16.msra.mxu0 %v2957
    %3722 = vmatprep.subr.bf16.mxu0 %v2966
    %3723 = vmatpush1.bf16.msra.mxu0 %v2965
    %3724 = vmatprep.subr.bf16.mxu0 %v2974
    %3725 = vmatpush1.bf16.msra.mxu0 %v2973
    %3726 = vmatprep.subr.bf16.mxu0 %v2982
    %3727 = vmatpush1.bf16.msra.mxu0 %v2981
    %3728 = vmatprep.subr.bf16.mxu0 %v2990
    %3729 = vmatpush1.bf16.msra.mxu0 %v2989
    %3730 = vmatprep.subr.bf16.mxu0 %v2998
    %3731 = vmatpush1.bf16.msra.mxu0 %v2997
    %3732 = vmatprep.subr.bf16.mxu0 %v3006
    %3733 = vmatpush1.bf16.msra.mxu0 %v3005
    %3734 = vmatprep.subr.bf16.mxu0 %v3014
    %3735 = vmatpush1.bf16.msra.mxu0 %v3013
    %3736 = vmatprep.subr.bf16.mxu0 %v3022
    %3737 = vmatpush1.bf16.msra.mxu0 %v3021
    %3738 = vmatprep.subr.bf16.mxu0 %v3030
    %3739 = vmatpush1.bf16.msra.mxu0 %v3029
    %3740 = vmatprep.subr.bf16.mxu0 %v3038
    %3741 = vmatpush1.bf16.msra.mxu0 %v3037
    %3742 = vmatprep.subr.bf16.mxu0 %v3046
    %3743 = vmatpush1.bf16.msra.mxu0 %v3045
    %3744 = vmatprep.subr.bf16.mxu0 %v3054
    %3745 = vmatpush1.bf16.msra.mxu0 %v3053
    %3746 = vmatprep.subr.bf16.mxu0 %v3062
    %3747 = vmatpush1.bf16.msra.mxu0 %v3061
    %3748 = vmatprep.subr.bf16.mxu0 %v3070
    %3749 = vmatpush1.bf16.msra.mxu0 %v3069
    %3750 = vmatprep.subr.bf16.mxu0 %v3078
    %3751 = vmatpush1.bf16.msra.mxu0 %v3077
    %3752 = vmatprep.mubr.bf16.mxu0 %v482
    %3753 = vmatmul.mubr.bf16.gmra.mrb[0].mxu0 %v481
    %v3754 = vpop.f32.mrb[0].mxu0
    %v3755 = vadd.f32 %v3714, %v3754
    %v3756 = vpop.f32.mrb[0].mxu0
    %v3757 = vadd.f32 %v3716, %v3756
    %v3758 = vpop.f32.mrb[0].mxu0
    %v3759 = vpop.f32.mrb[0].mxu0
    %3760 = vdwg.mxu0
    %3761 = vmatprep.subr.bf16.mxu0 %v2576
    %3762 = vmatpush1.bf16.msra.mxu0 %v2575
    %3763 = vmatprep.subr.bf16.mxu0 %v2584
    %3764 = vmatpush1.bf16.msra.mxu0 %v2583
    %3765 = vmatprep.subr.bf16.mxu0 %v2592
    %3766 = vmatpush1.bf16.msra.mxu0 %v2591
    %3767 = vmatprep.subr.bf16.mxu0 %v2600
    %3768 = vmatpush1.bf16.msra.mxu0 %v2599
    %3769 = vmatprep.subr.bf16.mxu0 %v2608
    %3770 = vmatpush1.bf16.msra.mxu0 %v2607
    %3771 = vmatprep.subr.bf16.mxu0 %v2616
    %3772 = vmatpush1.bf16.msra.mxu0 %v2615
    %3773 = vmatprep.subr.bf16.mxu0 %v2624
    %3774 = vmatpush1.bf16.msra.mxu0 %v2623
    %3775 = vmatprep.subr.bf16.mxu0 %v2632
    %3776 = vmatpush1.bf16.msra.mxu0 %v2631
    %3777 = vmatprep.subr.bf16.mxu0 %v2640
    %3778 = vmatpush1.bf16.msra.mxu0 %v2639
    %3779 = vmatprep.subr.bf16.mxu0 %v2648
    %3780 = vmatpush1.bf16.msra.mxu0 %v2647
    %3781 = vmatprep.subr.bf16.mxu0 %v2656
    %3782 = vmatpush1.bf16.msra.mxu0 %v2655
    %3783 = vmatprep.subr.bf16.mxu0 %v2664
    %3784 = vmatpush1.bf16.msra.mxu0 %v2663
    %3785 = vmatprep.subr.bf16.mxu0 %v2672
    %3786 = vmatpush1.bf16.msra.mxu0 %v2671
    %3787 = vmatprep.subr.bf16.mxu0 %v2680
    %3788 = vmatpush1.bf16.msra.mxu0 %v2679
    %3789 = vmatprep.subr.bf16.mxu0 %v2688
    %3790 = vmatpush1.bf16.msra.mxu0 %v2687
    %3791 = vmatprep.subr.bf16.mxu0 %v2696
    %3792 = vmatpush1.bf16.msra.mxu0 %v2695
    %3793 = vmatprep.mubr.bf16.mxu0 %v476
    %3794 = vmatmul.mubr.bf16.gmra.mrb[0].mxu0 %v475
    %v3795 = vpop.f32.mrb[0].mxu0
    %v3796 = vadd.f32 %v1008, %v3795
    %v3797 = vpop.f32.mrb[0].mxu0
    %v3798 = vadd.f32 %v1012, %v3797
    %v3799 = vpop.f32.mrb[0].mxu0
    %v3800 = vpop.f32.mrb[0].mxu0
    %3801 = vdwg.mxu0
    %3802 = vmatprep.subr.bf16.mxu0 %v2704
    %3803 = vmatpush1.bf16.msra.mxu0 %v2703
    %3804 = vmatprep.subr.bf16.mxu0 %v2712
    %3805 = vmatpush1.bf16.msra.mxu0 %v2711
    %3806 = vmatprep.subr.bf16.mxu0 %v2720
    %3807 = vmatpush1.bf16.msra.mxu0 %v2719
    %3808 = vmatprep.subr.bf16.mxu0 %v2728
    %3809 = vmatpush1.bf16.msra.mxu0 %v2727
    %3810 = vmatprep.subr.bf16.mxu0 %v2736
    %3811 = vmatpush1.bf16.msra.mxu0 %v2735
    %3812 = vmatprep.subr.bf16.mxu0 %v2744
    %3813 = vmatpush1.bf16.msra.mxu0 %v2743
    %3814 = vmatprep.subr.bf16.mxu0 %v2752
    %3815 = vmatpush1.bf16.msra.mxu0 %v2751
    %3816 = vmatprep.subr.bf16.mxu0 %v2760
    %3817 = vmatpush1.bf16.msra.mxu0 %v2759
    %3818 = vmatprep.subr.bf16.mxu0 %v2768
    %3819 = vmatpush1.bf16.msra.mxu0 %v2767
    %3820 = vmatprep.subr.bf16.mxu0 %v2776
    %3821 = vmatpush1.bf16.msra.mxu0 %v2775
    %3822 = vmatprep.subr.bf16.mxu0 %v2784
    %3823 = vmatpush1.bf16.msra.mxu0 %v2783
    %3824 = vmatprep.subr.bf16.mxu0 %v2792
    %3825 = vmatpush1.bf16.msra.mxu0 %v2791
    %3826 = vmatprep.subr.bf16.mxu0 %v2800
    %3827 = vmatpush1.bf16.msra.mxu0 %v2799
    %3828 = vmatprep.subr.bf16.mxu0 %v2808
    %3829 = vmatpush1.bf16.msra.mxu0 %v2807
    %3830 = vmatprep.subr.bf16.mxu0 %v2816
    %3831 = vmatpush1.bf16.msra.mxu0 %v2815
    %3832 = vmatprep.subr.bf16.mxu0 %v2824
    %3833 = vmatpush1.bf16.msra.mxu0 %v2823
    %3834 = vmatprep.mubr.bf16.mxu0 %v478
    %3835 = vmatmul.mubr.bf16.gmra.mrb[0].mxu0 %v477
    %v3836 = vpop.f32.mrb[0].mxu0
    %v3837 = vadd.f32 %v3796, %v3836
    %v3838 = vpop.f32.mrb[0].mxu0
    %v3839 = vadd.f32 %v3798, %v3838
    %v3840 = vpop.f32.mrb[0].mxu0
    %v3841 = vpop.f32.mrb[0].mxu0
    %3842 = vdwg.mxu0
    %3843 = vmatprep.subr.bf16.mxu0 %v2832
    %3844 = vmatpush1.bf16.msra.mxu0 %v2831
    %3845 = vmatprep.subr.bf16.mxu0 %v2840
    %3846 = vmatpush1.bf16.msra.mxu0 %v2839
    %3847 = vmatprep.subr.bf16.mxu0 %v2848
    %3848 = vmatpush1.bf16.msra.mxu0 %v2847
    %3849 = vmatprep.subr.bf16.mxu0 %v2856
    %3850 = vmatpush1.bf16.msra.mxu0 %v2855
    %3851 = vmatprep.subr.bf16.mxu0 %v2864
    %3852 = vmatpush1.bf16.msra.mxu0 %v2863
    %3853 = vmatprep.subr.bf16.mxu0 %v2872
    %3854 = vmatpush1.bf16.msra.mxu0 %v2871
    %3855 = vmatprep.subr.bf16.mxu0 %v2880
    %3856 = vmatpush1.bf16.msra.mxu0 %v2879
    %3857 = vmatprep.subr.bf16.mxu0 %v2888
    %3858 = vmatpush1.bf16.msra.mxu0 %v2887
    %3859 = vmatprep.subr.bf16.mxu0 %v2896
    %3860 = vmatpush1.bf16.msra.mxu0 %v2895
    %3861 = vmatprep.subr.bf16.mxu0 %v2904
    %3862 = vmatpush1.bf16.msra.mxu0 %v2903
    %3863 = vmatprep.subr.bf16.mxu0 %v2912
    %3864 = vmatpush1.bf16.msra.mxu0 %v2911
    %3865 = vmatprep.subr.bf16.mxu0 %v2920
    %3866 = vmatpush1.bf16.msra.mxu0 %v2919
    %3867 = vmatprep.subr.bf16.mxu0 %v2928
    %3868 = vmatpush1.bf16.msra.mxu0 %v2927
    %3869 = vmatprep.subr.bf16.mxu0 %v2936
    %3870 = vmatpush1.bf16.msra.mxu0 %v2935
    %3871 = vmatprep.subr.bf16.mxu0 %v2944
    %3872 = vmatpush1.bf16.msra.mxu0 %v2943
    %3873 = vmatprep.subr.bf16.mxu0 %v2952
    %3874 = vmatpush1.bf16.msra.mxu0 %v2951
    %3875 = vmatprep.mubr.bf16.mxu0 %v480
    %3876 = vmatmul.mubr.bf16.gmra.mrb[0].mxu0 %v479
    %v3877 = vpop.f32.mrb[0].mxu0
    %v3878 = vadd.f32 %v3837, %v3877
    %v3879 = vpop.f32.mrb[0].mxu0
    %v3880 = vadd.f32 %v3839, %v3879
    %v3881 = vpop.f32.mrb[0].mxu0
    %v3882 = vpop.f32.mrb[0].mxu0
    %3883 = vdwg.mxu0
    %3884 = vmatprep.subr.bf16.mxu0 %v2960
    %3885 = vmatpush1.bf16.msra.mxu0 %v2959
    %3886 = vmatprep.subr.bf16.mxu0 %v2968
    %3887 = vmatpush1.bf16.msra.mxu0 %v2967
    %3888 = vmatprep.subr.bf16.mxu0 %v2976
    %3889 = vmatpush1.bf16.msra.mxu0 %v2975
    %3890 = vmatprep.subr.bf16.mxu0 %v2984
    %3891 = vmatpush1.bf16.msra.mxu0 %v2983
    %3892 = vmatprep.subr.bf16.mxu0 %v2992
    %3893 = vmatpush1.bf16.msra.mxu0 %v2991
    %3894 = vmatprep.subr.bf16.mxu0 %v3000
    %3895 = vmatpush1.bf16.msra.mxu0 %v2999
    %3896 = vmatprep.subr.bf16.mxu0 %v3008
    %3897 = vmatpush1.bf16.msra.mxu0 %v3007
    %3898 = vmatprep.subr.bf16.mxu0 %v3016
    %3899 = vmatpush1.bf16.msra.mxu0 %v3015
    %3900 = vmatprep.subr.bf16.mxu0 %v3024
    %3901 = vmatpush1.bf16.msra.mxu0 %v3023
    %3902 = vmatprep.subr.bf16.mxu0 %v3032
    %3903 = vmatpush1.bf16.msra.mxu0 %v3031
    %3904 = vmatprep.subr.bf16.mxu0 %v3040
    %3905 = vmatpush1.bf16.msra.mxu0 %v3039
    %3906 = vmatprep.subr.bf16.mxu0 %v3048
    %3907 = vmatpush1.bf16.msra.mxu0 %v3047
    %3908 = vmatprep.subr.bf16.mxu0 %v3056
    %3909 = vmatpush1.bf16.msra.mxu0 %v3055
    %3910 = vmatprep.subr.bf16.mxu0 %v3064
    %3911 = vmatpush1.bf16.msra.mxu0 %v3063
    %3912 = vmatprep.subr.bf16.mxu0 %v3072
    %3913 = vmatpush1.bf16.msra.mxu0 %v3071
    %3914 = vmatprep.subr.bf16.mxu0 %v3080
    %3915 = vmatpush1.bf16.msra.mxu0 %v3079
    %3916 = vmatprep.mubr.bf16.mxu0 %v482
    %3917 = vmatmul.mubr.bf16.gmra.mrb[0].mxu0 %v481
    %v3918 = vpop.f32.mrb[0].mxu0
    %v3919 = vadd.f32 %v3878, %v3918
    %v3920 = vpop.f32.mrb[0].mxu0
    %v3921 = vadd.f32 %v3880, %v3920
    %v3922 = vpop.f32.mrb[0].mxu0
    %v3923 = vpop.f32.mrb[0].mxu0
    %3924 = vdwg.mxu0
    %3925 = vmatprep.subr.bf16.mxu0 %v2578
    %3926 = vmatpush1.bf16.msra.mxu0 %v2577
    %3927 = vmatprep.subr.bf16.mxu0 %v2586
    %3928 = vmatpush1.bf16.msra.mxu0 %v2585
    %3929 = vmatprep.subr.bf16.mxu0 %v2594
    %3930 = vmatpush1.bf16.msra.mxu0 %v2593
    %3931 = vmatprep.subr.bf16.mxu0 %v2602
    %3932 = vmatpush1.bf16.msra.mxu0 %v2601
    %3933 = vmatprep.subr.bf16.mxu0 %v2610
    %3934 = vmatpush1.bf16.msra.mxu0 %v2609
    %3935 = vmatprep.subr.bf16.mxu0 %v2618
    %3936 = vmatpush1.bf16.msra.mxu0 %v2617
    %3937 = vmatprep.subr.bf16.mxu0 %v2626
    %3938 = vmatpush1.bf16.msra.mxu0 %v2625
    %3939 = vmatprep.subr.bf16.mxu0 %v2634
    %3940 = vmatpush1.bf16.msra.mxu0 %v2633
    %3941 = vmatprep.subr.bf16.mxu0 %v2642
    %3942 = vmatpush1.bf16.msra.mxu0 %v2641
    %3943 = vmatprep.subr.bf16.mxu0 %v2650
    %3944 = vmatpush1.bf16.msra.mxu0 %v2649
    %3945 = vmatprep.subr.bf16.mxu0 %v2658
    %3946 = vmatpush1.bf16.msra.mxu0 %v2657
    %3947 = vmatprep.subr.bf16.mxu0 %v2666
    %3948 = vmatpush1.bf16.msra.mxu0 %v2665
    %3949 = vmatprep.subr.bf16.mxu0 %v2674
    %3950 = vmatpush1.bf16.msra.mxu0 %v2673
    %3951 = vmatprep.subr.bf16.mxu0 %v2682
    %3952 = vmatpush1.bf16.msra.mxu0 %v2681
    %3953 = vmatprep.subr.bf16.mxu0 %v2690
    %3954 = vmatpush1.bf16.msra.mxu0 %v2689
    %3955 = vmatprep.subr.bf16.mxu0 %v2698
    %3956 = vmatpush1.bf16.msra.mxu0 %v2697
    %3957 = vmatprep.mubr.bf16.mxu0 %v476
    %3958 = vmatmul.mubr.bf16.gmra.mrb[0].mxu0 %v475
    %v3959 = vpop.f32.mrb[0].mxu0
    %v3960 = vadd.f32 %v1016, %v3959
    %v3961 = vpop.f32.mrb[0].mxu0
    %v3962 = vadd.f32 %v1020, %v3961
    %v3963 = vpop.f32.mrb[0].mxu0
    %v3964 = vpop.f32.mrb[0].mxu0
    %3965 = vdwg.mxu0
    %3966 = vmatprep.subr.bf16.mxu0 %v2706
    %3967 = vmatpush1.bf16.msra.mxu0 %v2705
    %3968 = vmatprep.subr.bf16.mxu0 %v2714
    %3969 = vmatpush1.bf16.msra.mxu0 %v2713
    %3970 = vmatprep.subr.bf16.mxu0 %v2722
    %3971 = vmatpush1.bf16.msra.mxu0 %v2721
    %3972 = vmatprep.subr.bf16.mxu0 %v2730
    %3973 = vmatpush1.bf16.msra.mxu0 %v2729
    %3974 = vmatprep.subr.bf16.mxu0 %v2738
    %3975 = vmatpush1.bf16.msra.mxu0 %v2737
    %3976 = vmatprep.subr.bf16.mxu0 %v2746
    %3977 = vmatpush1.bf16.msra.mxu0 %v2745
    %3978 = vmatprep.subr.bf16.mxu0 %v2754
    %3979 = vmatpush1.bf16.msra.mxu0 %v2753
    %3980 = vmatprep.subr.bf16.mxu0 %v2762
    %3981 = vmatpush1.bf16.msra.mxu0 %v2761
    %3982 = vmatprep.subr.bf16.mxu0 %v2770
    %3983 = vmatpush1.bf16.msra.mxu0 %v2769
    %3984 = vmatprep.subr.bf16.mxu0 %v2778
    %3985 = vmatpush1.bf16.msra.mxu0 %v2777
    %3986 = vmatprep.subr.bf16.mxu0 %v2786
    %3987 = vmatpush1.bf16.msra.mxu0 %v2785
    %3988 = vmatprep.subr.bf16.mxu0 %v2794
    %3989 = vmatpush1.bf16.msra.mxu0 %v2793
    %3990 = vmatprep.subr.bf16.mxu0 %v2802
    %3991 = vmatpush1.bf16.msra.mxu0 %v2801
    %3992 = vmatprep.subr.bf16.mxu0 %v2810
    %3993 = vmatpush1.bf16.msra.mxu0 %v2809
    %3994 = vmatprep.subr.bf16.mxu0 %v2818
    %3995 = vmatpush1.bf16.msra.mxu0 %v2817
    %3996 = vmatprep.subr.bf16.mxu0 %v2826
    %3997 = vmatpush1.bf16.msra.mxu0 %v2825
    %3998 = vmatprep.mubr.bf16.mxu0 %v478
    %3999 = vmatmul.mubr.bf16.gmra.mrb[0].mxu0 %v477
    %v4000 = vpop.f32.mrb[0].mxu0
    %v4001 = vadd.f32 %v3960, %v4000
    %v4002 = vpop.f32.mrb[0].mxu0
    %v4003 = vadd.f32 %v3962, %v4002
    %v4004 = vpop.f32.mrb[0].mxu0
    %v4005 = vpop.f32.mrb[0].mxu0
    %4006 = vdwg.mxu0
    %4007 = vmatprep.subr.bf16.mxu0 %v2834
    %4008 = vmatpush1.bf16.msra.mxu0 %v2833
    %4009 = vmatprep.subr.bf16.mxu0 %v2842
    %4010 = vmatpush1.bf16.msra.mxu0 %v2841
    %4011 = vmatprep.subr.bf16.mxu0 %v2850
    %4012 = vmatpush1.bf16.msra.mxu0 %v2849
    %4013 = vmatprep.subr.bf16.mxu0 %v2858
    %4014 = vmatpush1.bf16.msra.mxu0 %v2857
    %4015 = vmatprep.subr.bf16.mxu0 %v2866
    %4016 = vmatpush1.bf16.msra.mxu0 %v2865
    %4017 = vmatprep.subr.bf16.mxu0 %v2874
    %4018 = vmatpush1.bf16.msra.mxu0 %v2873
    %4019 = vmatprep.subr.bf16.mxu0 %v2882
    %4020 = vmatpush1.bf16.msra.mxu0 %v2881
    %4021 = vmatprep.subr.bf16.mxu0 %v2890
    %4022 = vmatpush1.bf16.msra.mxu0 %v2889
    %4023 = vmatprep.subr.bf16.mxu0 %v2898
    %4024 = vmatpush1.bf16.msra.mxu0 %v2897
    %4025 = vmatprep.subr.bf16.mxu0 %v2906
    %4026 = vmatpush1.bf16.msra.mxu0 %v2905
    %4027 = vmatprep.subr.bf16.mxu0 %v2914
    %4028 = vmatpush1.bf16.msra.mxu0 %v2913
    %4029 = vmatprep.subr.bf16.mxu0 %v2922
    %4030 = vmatpush1.bf16.msra.mxu0 %v2921
    %4031 = vmatprep.subr.bf16.mxu0 %v2930
    %4032 = vmatpush1.bf16.msra.mxu0 %v2929
    %4033 = vmatprep.subr.bf16.mxu0 %v2938
    %4034 = vmatpush1.bf16.msra.mxu0 %v2937
    %4035 = vmatprep.subr.bf16.mxu0 %v2946
    %4036 = vmatpush1.bf16.msra.mxu0 %v2945
    %4037 = vmatprep.subr.bf16.mxu0 %v2954
    %4038 = vmatpush1.bf16.msra.mxu0 %v2953
    %4039 = vmatprep.mubr.bf16.mxu0 %v480
    %4040 = vmatmul.mubr.bf16.gmra.mrb[0].mxu0 %v479
    %v4041 = vpop.f32.mrb[0].mxu0
    %v4042 = vadd.f32 %v4001, %v4041
    %v4043 = vpop.f32.mrb[0].mxu0
    %v4044 = vadd.f32 %v4003, %v4043
    %v4045 = vpop.f32.mrb[0].mxu0
    %v4046 = vpop.f32.mrb[0].mxu0
    %4047 = vdwg.mxu0
    %4048 = vmatprep.subr.bf16.mxu0 %v2962
    %4049 = vmatpush1.bf16.msra.mxu0 %v2961
    %4050 = vmatprep.subr.bf16.mxu0 %v2970
    %4051 = vmatpush1.bf16.msra.mxu0 %v2969
    %4052 = vmatprep.subr.bf16.mxu0 %v2978
    %4053 = vmatpush1.bf16.msra.mxu0 %v2977
    %4054 = vmatprep.subr.bf16.mxu0 %v2986
    %4055 = vmatpush1.bf16.msra.mxu0 %v2985
    %4056 = vmatprep.subr.bf16.mxu0 %v2994
    %4057 = vmatpush1.bf16.msra.mxu0 %v2993
    %4058 = vmatprep.subr.bf16.mxu0 %v3002
    %4059 = vmatpush1.bf16.msra.mxu0 %v3001
    %4060 = vmatprep.subr.bf16.mxu0 %v3010
    %4061 = vmatpush1.bf16.msra.mxu0 %v3009
    %4062 = vmatprep.subr.bf16.mxu0 %v3018
    %4063 = vmatpush1.bf16.msra.mxu0 %v3017
    %4064 = vmatprep.subr.bf16.mxu0 %v3026
    %4065 = vmatpush1.bf16.msra.mxu0 %v3025
    %4066 = vmatprep.subr.bf16.mxu0 %v3034
    %4067 = vmatpush1.bf16.msra.mxu0 %v3033
    %4068 = vmatprep.subr.bf16.mxu0 %v3042
    %4069 = vmatpush1.bf16.msra.mxu0 %v3041
    %4070 = vmatprep.subr.bf16.mxu0 %v3050
    %4071 = vmatpush1.bf16.msra.mxu0 %v3049
    %4072 = vmatprep.subr.bf16.mxu0 %v3058
    %4073 = vmatpush1.bf16.msra.mxu0 %v3057
    %4074 = vmatprep.subr.bf16.mxu0 %v3066
    %4075 = vmatpush1.bf16.msra.mxu0 %v3065
    %4076 = vmatprep.subr.bf16.mxu0 %v3074
    %4077 = vmatpush1.bf16.msra.mxu0 %v3073
    %4078 = vmatprep.subr.bf16.mxu0 %v3082
    %4079 = vmatpush1.bf16.msra.mxu0 %v3081
    %4080 = vmatprep.mubr.bf16.mxu0 %v482
    %4081 = vmatmul.mubr.bf16.gmra.mrb[0].mxu0 %v481
    %v4082 = vpop.f32.mrb[0].mxu0
    %v4083 = vadd.f32 %v4042, %v4082
    %v4084 = vpop.f32.mrb[0].mxu0
    %v4085 = vadd.f32 %v4044, %v4084
    %v4086 = vpop.f32.mrb[0].mxu0
    %v4087 = vpop.f32.mrb[0].mxu0
    %4088 = vdwg.mxu0
    %4089 = vmatprep.subr.bf16.mxu0 %v2580
    %4090 = vmatpush1.bf16.msra.mxu0 %v2579
    %4091 = vmatprep.subr.bf16.mxu0 %v2588
    %4092 = vmatpush1.bf16.msra.mxu0 %v2587
    %4093 = vmatprep.subr.bf16.mxu0 %v2596
    %4094 = vmatpush1.bf16.msra.mxu0 %v2595
    %4095 = vmatprep.subr.bf16.mxu0 %v2604
    %4096 = vmatpush1.bf16.msra.mxu0 %v2603
    %4097 = vmatprep.subr.bf16.mxu0 %v2612
    %4098 = vmatpush1.bf16.msra.mxu0 %v2611
    %4099 = vmatprep.subr.bf16.mxu0 %v2620
    %4100 = vmatpush1.bf16.msra.mxu0 %v2619
    %4101 = vmatprep.subr.bf16.mxu0 %v2628
    %4102 = vmatpush1.bf16.msra.mxu0 %v2627
    %4103 = vmatprep.subr.bf16.mxu0 %v2636
    %4104 = vmatpush1.bf16.msra.mxu0 %v2635
    %4105 = vmatprep.subr.bf16.mxu0 %v2644
    %4106 = vmatpush1.bf16.msra.mxu0 %v2643
    %4107 = vmatprep.subr.bf16.mxu0 %v2652
    %4108 = vmatpush1.bf16.msra.mxu0 %v2651
    %4109 = vmatprep.subr.bf16.mxu0 %v2660
    %4110 = vmatpush1.bf16.msra.mxu0 %v2659
    %4111 = vmatprep.subr.bf16.mxu0 %v2668
    %4112 = vmatpush1.bf16.msra.mxu0 %v2667
    %4113 = vmatprep.subr.bf16.mxu0 %v2676
    %4114 = vmatpush1.bf16.msra.mxu0 %v2675
    %4115 = vmatprep.subr.bf16.mxu0 %v2684
    %4116 = vmatpush1.bf16.msra.mxu0 %v2683
    %4117 = vmatprep.subr.bf16.mxu0 %v2692
    %4118 = vmatpush1.bf16.msra.mxu0 %v2691
    %4119 = vmatprep.subr.bf16.mxu0 %v2700
    %4120 = vmatpush1.bf16.msra.mxu0 %v2699
    %4121 = vmatprep.mubr.bf16.mxu0 %v476
    %4122 = vmatmul.mubr.bf16.gmra.mrb[0].mxu0 %v475
    %v4123 = vpop.f32.mrb[0].mxu0
    %v4124 = vadd.f32 %v1024, %v4123
    %v4125 = vpop.f32.mrb[0].mxu0
    %v4126 = vadd.f32 %v1028, %v4125
    %v4127 = vpop.f32.mrb[0].mxu0
    %v4128 = vpop.f32.mrb[0].mxu0
    %4129 = vdwg.mxu0
    %4130 = vmatprep.subr.bf16.mxu0 %v2708
    %4131 = vmatpush1.bf16.msra.mxu0 %v2707
    %4132 = vmatprep.subr.bf16.mxu0 %v2716
    %4133 = vmatpush1.bf16.msra.mxu0 %v2715
    %4134 = vmatprep.subr.bf16.mxu0 %v2724
    %4135 = vmatpush1.bf16.msra.mxu0 %v2723
    %4136 = vmatprep.subr.bf16.mxu0 %v2732
    %4137 = vmatpush1.bf16.msra.mxu0 %v2731
    %4138 = vmatprep.subr.bf16.mxu0 %v2740
    %4139 = vmatpush1.bf16.msra.mxu0 %v2739
    %4140 = vmatprep.subr.bf16.mxu0 %v2748
    %4141 = vmatpush1.bf16.msra.mxu0 %v2747
    %4142 = vmatprep.subr.bf16.mxu0 %v2756
    %4143 = vmatpush1.bf16.msra.mxu0 %v2755
    %4144 = vmatprep.subr.bf16.mxu0 %v2764
    %4145 = vmatpush1.bf16.msra.mxu0 %v2763
    %4146 = vmatprep.subr.bf16.mxu0 %v2772
    %4147 = vmatpush1.bf16.msra.mxu0 %v2771
    %4148 = vmatprep.subr.bf16.mxu0 %v2780
    %4149 = vmatpush1.bf16.msra.mxu0 %v2779
    %4150 = vmatprep.subr.bf16.mxu0 %v2788
    %4151 = vmatpush1.bf16.msra.mxu0 %v2787
    %4152 = vmatprep.subr.bf16.mxu0 %v2796
    %4153 = vmatpush1.bf16.msra.mxu0 %v2795
    %4154 = vmatprep.subr.bf16.mxu0 %v2804
    %4155 = vmatpush1.bf16.msra.mxu0 %v2803
    %4156 = vmatprep.subr.bf16.mxu0 %v2812
    %4157 = vmatpush1.bf16.msra.mxu0 %v2811
    %4158 = vmatprep.subr.bf16.mxu0 %v2820
    %4159 = vmatpush1.bf16.msra.mxu0 %v2819
    %4160 = vmatprep.subr.bf16.mxu0 %v2828
    %4161 = vmatpush1.bf16.msra.mxu0 %v2827
    %4162 = vmatprep.mubr.bf16.mxu0 %v478
    %4163 = vmatmul.mubr.bf16.gmra.mrb[0].mxu0 %v477
    %v4164 = vpop.f32.mrb[0].mxu0
    %v4165 = vadd.f32 %v4124, %v4164
    %v4166 = vpop.f32.mrb[0].mxu0
    %v4167 = vadd.f32 %v4126, %v4166
    %v4168 = vpop.f32.mrb[0].mxu0
    %v4169 = vpop.f32.mrb[0].mxu0
    %4170 = vdwg.mxu0
    %4171 = vmatprep.subr.bf16.mxu0 %v2836
    %4172 = vmatpush1.bf16.msra.mxu0 %v2835
    %4173 = vmatprep.subr.bf16.mxu0 %v2844
    %4174 = vmatpush1.bf16.msra.mxu0 %v2843
    %4175 = vmatprep.subr.bf16.mxu0 %v2852
    %4176 = vmatpush1.bf16.msra.mxu0 %v2851
    %4177 = vmatprep.subr.bf16.mxu0 %v2860
    %4178 = vmatpush1.bf16.msra.mxu0 %v2859
    %4179 = vmatprep.subr.bf16.mxu0 %v2868
    %4180 = vmatpush1.bf16.msra.mxu0 %v2867
    %4181 = vmatprep.subr.bf16.mxu0 %v2876
    %4182 = vmatpush1.bf16.msra.mxu0 %v2875
    %4183 = vmatprep.subr.bf16.mxu0 %v2884
    %4184 = vmatpush1.bf16.msra.mxu0 %v2883
    %4185 = vmatprep.subr.bf16.mxu0 %v2892
    %4186 = vmatpush1.bf16.msra.mxu0 %v2891
    %4187 = vmatprep.subr.bf16.mxu0 %v2900
    %4188 = vmatpush1.bf16.msra.mxu0 %v2899
    %4189 = vmatprep.subr.bf16.mxu0 %v2908
    %4190 = vmatpush1.bf16.msra.mxu0 %v2907
    %4191 = vmatprep.subr.bf16.mxu0 %v2916
    %4192 = vmatpush1.bf16.msra.mxu0 %v2915
    %4193 = vmatprep.subr.bf16.mxu0 %v2924
    %4194 = vmatpush1.bf16.msra.mxu0 %v2923
    %4195 = vmatprep.subr.bf16.mxu0 %v2932
    %4196 = vmatpush1.bf16.msra.mxu0 %v2931
    %4197 = vmatprep.subr.bf16.mxu0 %v2940
    %4198 = vmatpush1.bf16.msra.mxu0 %v2939
    %4199 = vmatprep.subr.bf16.mxu0 %v2948
    %4200 = vmatpush1.bf16.msra.mxu0 %v2947
    %4201 = vmatprep.subr.bf16.mxu0 %v2956
    %4202 = vmatpush1.bf16.msra.mxu0 %v2955
    %4203 = vmatprep.mubr.bf16.mxu0 %v480
    %4204 = vmatmul.mubr.bf16.gmra.mrb[0].mxu0 %v479
    %v4205 = vpop.f32.mrb[0].mxu0
    %v4206 = vadd.f32 %v4165, %v4205
    %v4207 = vpop.f32.mrb[0].mxu0
    %v4208 = vadd.f32 %v4167, %v4207
    %v4209 = vpop.f32.mrb[0].mxu0
    %v4210 = vpop.f32.mrb[0].mxu0
    %4211 = vdwg.mxu0
    %4212 = vmatprep.subr.bf16.mxu0 %v2964
    %4213 = vmatpush1.bf16.msra.mxu0 %v2963
    %4214 = vmatprep.subr.bf16.mxu0 %v2972
    %4215 = vmatpush1.bf16.msra.mxu0 %v2971
    %4216 = vmatprep.subr.bf16.mxu0 %v2980
    %4217 = vmatpush1.bf16.msra.mxu0 %v2979
    %4218 = vmatprep.subr.bf16.mxu0 %v2988
    %4219 = vmatpush1.bf16.msra.mxu0 %v2987
    %4220 = vmatprep.subr.bf16.mxu0 %v2996
    %4221 = vmatpush1.bf16.msra.mxu0 %v2995
    %4222 = vmatprep.subr.bf16.mxu0 %v3004
    %4223 = vmatpush1.bf16.msra.mxu0 %v3003
    %4224 = vmatprep.subr.bf16.mxu0 %v3012
    %4225 = vmatpush1.bf16.msra.mxu0 %v3011
    %4226 = vmatprep.subr.bf16.mxu0 %v3020
    %4227 = vmatpush1.bf16.msra.mxu0 %v3019
    %4228 = vmatprep.subr.bf16.mxu0 %v3028
    %4229 = vmatpush1.bf16.msra.mxu0 %v3027
    %4230 = vmatprep.subr.bf16.mxu0 %v3036
    %4231 = vmatpush1.bf16.msra.mxu0 %v3035
    %4232 = vmatprep.subr.bf16.mxu0 %v3044
    %4233 = vmatpush1.bf16.msra.mxu0 %v3043
    %4234 = vmatprep.subr.bf16.mxu0 %v3052
    %4235 = vmatpush1.bf16.msra.mxu0 %v3051
    %4236 = vmatprep.subr.bf16.mxu0 %v3060
    %4237 = vmatpush1.bf16.msra.mxu0 %v3059
    %4238 = vmatprep.subr.bf16.mxu0 %v3068
    %4239 = vmatpush1.bf16.msra.mxu0 %v3067
    %4240 = vmatprep.subr.bf16.mxu0 %v3076
    %4241 = vmatpush1.bf16.msra.mxu0 %v3075
    %4242 = vmatprep.subr.bf16.mxu0 %v3084
    %4243 = vmatpush1.bf16.msra.mxu0 %v3083
    %4244 = vmatprep.mubr.bf16.mxu0 %v482
    %4245 = vmatmul.mubr.bf16.gmra.mrb[0].mxu0 %v481
    %v4246 = vpop.f32.mrb[0].mxu0
    %v4247 = vadd.f32 %v4206, %v4246
    %v4248 = vpop.f32.mrb[0].mxu0
    %v4249 = vadd.f32 %v4208, %v4248
    %v4250 = vpop.f32.mrb[0].mxu0
    %v4251 = vpop.f32.mrb[0].mxu0
    %4252 = vdwg.mxu0
    %v4253 = vmul.f32 %v3755, 0.1
    %v4254 = vmul.f32 %v3757, 0.1
    %v4255 = vmul.f32 %v3919, 0.1
    %v4256 = vmul.f32 %v3921, 0.1
    %v4257 = vmul.f32 %v4083, 0.1
    %v4258 = vmul.f32 %v4085, 0.1
    %v4259 = vmul.f32 %v4247, 0.1
    %v4260 = vmul.f32 %v4249, 0.1
    %v4261 = vmax.f32 %v3755, %v4253
    %v4262 = vmax.f32 %v3757, %v4254
    %v4263 = vmax.f32 %v3919, %v4255
    %v4264 = vmax.f32 %v3921, %v4256
    %v4265 = vmax.f32 %v4083, %v4257
    %v4266 = vmax.f32 %v4085, %v4258
    %v4267 = vmax.f32 %v4247, %v4259
    %v4268 = vmax.f32 %v4249, %v4260
    %v4269 = vpack.c.bf16 %v4261, %v4261
    %v4270 = vpack.c.bf16 %v4262, %v4262
    %v4271 = vpack.c.bf16 %v4263, %v4263
    %v4272 = vpack.c.bf16 %v4264, %v4264
    %v4273 = vpack.c.bf16 %v4265, %v4265
    %v4274 = vpack.c.bf16 %v4266, %v4266
    %v4275 = vpack.c.bf16 %v4267, %v4267
    %v4276 = vpack.c.bf16 %v4268, %v4268
    %v4277 = vld [vmem:[#allocation10] sm:$0xff]
    %v4278 = vld [vmem:[#allocation10 + $0x8] sm:$0xff]
    %v4279 = vld [vmem:[#allocation10 + $0x10] sm:$0xff]
    %v4280 = vld [vmem:[#allocation10 + $0x18] sm:$0xff]
    %v4281 = vld [vmem:[#allocation10 + $0x20] sm:$0xff]
    %v4282 = vld [vmem:[#allocation10 + $0x28] sm:$0xff]
    %v4283 = vld [vmem:[#allocation10 + $0x30] sm:$0xff]
    %v4284 = vld [vmem:[#allocation10 + $0x38] sm:$0xff]
    %v4285 = vld [vmem:[#allocation10 + $0x40] sm:$0xff]
    %v4286 = vld [vmem:[#allocation10 + $0x48] sm:$0xff]
    %v4287 = vld [vmem:[#allocation10 + $0x50] sm:$0xff]
    %v4288 = vld [vmem:[#allocation10 + $0x58] sm:$0xff]
    %v4289 = vld [vmem:[#allocation10 + $0x60] sm:$0xff]
    %v4290 = vld [vmem:[#allocation10 + $0x68] sm:$0xff]
    %v4291 = vld [vmem:[#allocation10 + $0x70] sm:$0xff]
    %v4292 = vld [vmem:[#allocation10 + $0x78] sm:$0xff]
    %v4293 = vld [vmem:[#allocation10 + $0x80] sm:$0xff]
    %v4294 = vld [vmem:[#allocation10 + $0x88] sm:$0xff]
    %v4295 = vld [vmem:[#allocation10 + $0x90] sm:$0xff]
    %v4296 = vld [vmem:[#allocation10 + $0x98] sm:$0xff]
    %v4297 = vld [vmem:[#allocation10 + $0xa0] sm:$0xff]
    %v4298 = vld [vmem:[#allocation10 + $0xa8] sm:$0xff]
    %v4299 = vld [vmem:[#allocation10 + $0xb0] sm:$0xff]
    %v4300 = vld [vmem:[#allocation10 + $0xb8] sm:$0xff]
    %v4301 = vld [vmem:[#allocation10 + $0xc0] sm:$0xff]
    %v4302 = vld [vmem:[#allocation10 + $0xc8] sm:$0xff]
    %v4303 = vld [vmem:[#allocation10 + $0xd0] sm:$0xff]
    %v4304 = vld [vmem:[#allocation10 + $0xd8] sm:$0xff]
    %v4305 = vld [vmem:[#allocation10 + $0xe0] sm:$0xff]
    %v4306 = vld [vmem:[#allocation10 + $0xe8] sm:$0xff]
    %v4307 = vld [vmem:[#allocation10 + $0xf0] sm:$0xff]
    %v4308 = vld [vmem:[#allocation10 + $0xf8] sm:$0xff]
    %v4309 = vld [vmem:[#allocation10 + $0x100] sm:$0xff]
    %v4310 = vld [vmem:[#allocation10 + $0x108] sm:$0xff]
    %v4311 = vld [vmem:[#allocation10 + $0x110] sm:$0xff]
    %v4312 = vld [vmem:[#allocation10 + $0x118] sm:$0xff]
    %v4313 = vld [vmem:[#allocation10 + $0x120] sm:$0xff]
    %v4314 = vld [vmem:[#allocation10 + $0x128] sm:$0xff]
    %v4315 = vld [vmem:[#allocation10 + $0x130] sm:$0xff]
    %v4316 = vld [vmem:[#allocation10 + $0x138] sm:$0xff]
    %v4317 = vld [vmem:[#allocation10 + $0x140] sm:$0xff]
    %v4318 = vld [vmem:[#allocation10 + $0x148] sm:$0xff]
    %v4319 = vld [vmem:[#allocation10 + $0x150] sm:$0xff]
    %v4320 = vld [vmem:[#allocation10 + $0x158] sm:$0xff]
    %v4321 = vld [vmem:[#allocation10 + $0x160] sm:$0xff]
    %v4322 = vld [vmem:[#allocation10 + $0x168] sm:$0xff]
    %v4323 = vld [vmem:[#allocation10 + $0x170] sm:$0xff]
    %v4324 = vld [vmem:[#allocation10 + $0x178] sm:$0xff]
    %v4325 = vld [vmem:[#allocation10 + $0x180] sm:$0xff]
    %v4326 = vld [vmem:[#allocation10 + $0x188] sm:$0xff]
    %v4327 = vld [vmem:[#allocation10 + $0x190] sm:$0xff]
    %v4328 = vld [vmem:[#allocation10 + $0x198] sm:$0xff]
    %v4329 = vld [vmem:[#allocation10 + $0x1a0] sm:$0xff]
    %v4330 = vld [vmem:[#allocation10 + $0x1a8] sm:$0xff]
    %v4331 = vld [vmem:[#allocation10 + $0x1b0] sm:$0xff]
    %v4332 = vld [vmem:[#allocation10 + $0x1b8] sm:$0xff]
    %v4333 = vld [vmem:[#allocation10 + $0x1c0] sm:$0xff]
    %v4334 = vld [vmem:[#allocation10 + $0x1c8] sm:$0xff]
    %v4335 = vld [vmem:[#allocation10 + $0x1d0] sm:$0xff]
    %v4336 = vld [vmem:[#allocation10 + $0x1d8] sm:$0xff]
    %v4337 = vld [vmem:[#allocation10 + $0x1e0] sm:$0xff]
    %v4338 = vld [vmem:[#allocation10 + $0x1e8] sm:$0xff]
    %v4339 = vld [vmem:[#allocation10 + $0x1f0] sm:$0xff]
    %v4340 = vld [vmem:[#allocation10 + $0x1f8] sm:$0xff]
    %v4341 = vld [vmem:[#allocation10 + $0x200] sm:$0xff]
    %v4342 = vld [vmem:[#allocation10 + $0x208] sm:$0xff]
    %v4343 = vld [vmem:[#allocation10 + $0x210] sm:$0xff]
    %v4344 = vld [vmem:[#allocation10 + $0x218] sm:$0xff]
    %v4345 = vld [vmem:[#allocation10 + $0x220] sm:$0xff]
    %v4346 = vld [vmem:[#allocation10 + $0x228] sm:$0xff]
    %v4347 = vld [vmem:[#allocation10 + $0x230] sm:$0xff]
    %v4348 = vld [vmem:[#allocation10 + $0x238] sm:$0xff]
    %v4349 = vld [vmem:[#allocation10 + $0x240] sm:$0xff]
    %v4350 = vld [vmem:[#allocation10 + $0x248] sm:$0xff]
    %v4351 = vld [vmem:[#allocation10 + $0x250] sm:$0xff]
    %v4352 = vld [vmem:[#allocation10 + $0x258] sm:$0xff]
    %v4353 = vld [vmem:[#allocation10 + $0x260] sm:$0xff]
    %v4354 = vld [vmem:[#allocation10 + $0x268] sm:$0xff]
    %v4355 = vld [vmem:[#allocation10 + $0x270] sm:$0xff]
    %v4356 = vld [vmem:[#allocation10 + $0x278] sm:$0xff]
    %v4357 = vld [vmem:[#allocation10 + $0x280] sm:$0xff]
    %v4358 = vld [vmem:[#allocation10 + $0x288] sm:$0xff]
    %v4359 = vld [vmem:[#allocation10 + $0x290] sm:$0xff]
    %v4360 = vld [vmem:[#allocation10 + $0x298] sm:$0xff]
    %v4361 = vld [vmem:[#allocation10 + $0x2a0] sm:$0xff]
    %v4362 = vld [vmem:[#allocation10 + $0x2a8] sm:$0xff]
    %v4363 = vld [vmem:[#allocation10 + $0x2b0] sm:$0xff]
    %v4364 = vld [vmem:[#allocation10 + $0x2b8] sm:$0xff]
    %v4365 = vld [vmem:[#allocation10 + $0x2c0] sm:$0xff]
    %v4366 = vld [vmem:[#allocation10 + $0x2c8] sm:$0xff]
    %v4367 = vld [vmem:[#allocation10 + $0x2d0] sm:$0xff]
    %v4368 = vld [vmem:[#allocation10 + $0x2d8] sm:$0xff]
    %v4369 = vld [vmem:[#allocation10 + $0x2e0] sm:$0xff]
    %v4370 = vld [vmem:[#allocation10 + $0x2e8] sm:$0xff]
    %v4371 = vld [vmem:[#allocation10 + $0x2f0] sm:$0xff]
    %v4372 = vld [vmem:[#allocation10 + $0x2f8] sm:$0xff]
    %v4373 = vld [vmem:[#allocation10 + $0x300] sm:$0xff]
    %v4374 = vld [vmem:[#allocation10 + $0x308] sm:$0xff]
    %v4375 = vld [vmem:[#allocation10 + $0x310] sm:$0xff]
    %v4376 = vld [vmem:[#allocation10 + $0x318] sm:$0xff]
    %v4377 = vld [vmem:[#allocation10 + $0x320] sm:$0xff]
    %v4378 = vld [vmem:[#allocation10 + $0x328] sm:$0xff]
    %v4379 = vld [vmem:[#allocation10 + $0x330] sm:$0xff]
    %v4380 = vld [vmem:[#allocation10 + $0x338] sm:$0xff]
    %v4381 = vld [vmem:[#allocation10 + $0x340] sm:$0xff]
    %v4382 = vld [vmem:[#allocation10 + $0x348] sm:$0xff]
    %v4383 = vld [vmem:[#allocation10 + $0x350] sm:$0xff]
    %v4384 = vld [vmem:[#allocation10 + $0x358] sm:$0xff]
    %v4385 = vld [vmem:[#allocation10 + $0x360] sm:$0xff]
    %v4386 = vld [vmem:[#allocation10 + $0x368] sm:$0xff]
    %v4387 = vld [vmem:[#allocation10 + $0x370] sm:$0xff]
    %v4388 = vld [vmem:[#allocation10 + $0x378] sm:$0xff]
    %v4389 = vld [vmem:[#allocation10 + $0x380] sm:$0xff]
    %v4390 = vld [vmem:[#allocation10 + $0x388] sm:$0xff]
    %v4391 = vld [vmem:[#allocation10 + $0x390] sm:$0xff]
    %v4392 = vld [vmem:[#allocation10 + $0x398] sm:$0xff]
    %v4393 = vld [vmem:[#allocation10 + $0x3a0] sm:$0xff]
    %v4394 = vld [vmem:[#allocation10 + $0x3a8] sm:$0xff]
    %v4395 = vld [vmem:[#allocation10 + $0x3b0] sm:$0xff]
    %v4396 = vld [vmem:[#allocation10 + $0x3b8] sm:$0xff]
    %v4397 = vld [vmem:[#allocation10 + $0x3c0] sm:$0xff]
    %v4398 = vld [vmem:[#allocation10 + $0x3c8] sm:$0xff]
    %v4399 = vld [vmem:[#allocation10 + $0x3d0] sm:$0xff]
    %v4400 = vld [vmem:[#allocation10 + $0x3d8] sm:$0xff]
    %v4401 = vld [vmem:[#allocation10 + $0x3e0] sm:$0xff]
    %v4402 = vld [vmem:[#allocation10 + $0x3e8] sm:$0xff]
    %v4403 = vld [vmem:[#allocation10 + $0x3f0] sm:$0xff]
    %v4404 = vld [vmem:[#allocation10 + $0x3f8] sm:$0xff]
    %v4405 = vld [vmem:[#allocation10 + $0x400] sm:$0xff]
    %v4406 = vld [vmem:[#allocation10 + $0x408] sm:$0xff]
    %v4407 = vld [vmem:[#allocation10 + $0x410] sm:$0xff]
    %v4408 = vld [vmem:[#allocation10 + $0x418] sm:$0xff]
    %v4409 = vld [vmem:[#allocation10 + $0x420] sm:$0xff]
    %v4410 = vld [vmem:[#allocation10 + $0x428] sm:$0xff]
    %v4411 = vld [vmem:[#allocation10 + $0x430] sm:$0xff]
    %v4412 = vld [vmem:[#allocation10 + $0x438] sm:$0xff]
    %v4413 = vld [vmem:[#allocation10 + $0x440] sm:$0xff]
    %v4414 = vld [vmem:[#allocation10 + $0x448] sm:$0xff]
    %v4415 = vld [vmem:[#allocation10 + $0x450] sm:$0xff]
    %v4416 = vld [vmem:[#allocation10 + $0x458] sm:$0xff]
    %v4417 = vld [vmem:[#allocation10 + $0x460] sm:$0xff]
    %v4418 = vld [vmem:[#allocation10 + $0x468] sm:$0xff]
    %v4419 = vld [vmem:[#allocation10 + $0x470] sm:$0xff]
    %v4420 = vld [vmem:[#allocation10 + $0x478] sm:$0xff]
    %v4421 = vld [vmem:[#allocation10 + $0x480] sm:$0xff]
    %v4422 = vld [vmem:[#allocation10 + $0x488] sm:$0xff]
    %v4423 = vld [vmem:[#allocation10 + $0x490] sm:$0xff]
    %v4424 = vld [vmem:[#allocation10 + $0x498] sm:$0xff]
    %v4425 = vld [vmem:[#allocation10 + $0x4a0] sm:$0xff]
    %v4426 = vld [vmem:[#allocation10 + $0x4a8] sm:$0xff]
    %v4427 = vld [vmem:[#allocation10 + $0x4b0] sm:$0xff]
    %v4428 = vld [vmem:[#allocation10 + $0x4b8] sm:$0xff]
    %v4429 = vld [vmem:[#allocation10 + $0x4c0] sm:$0xff]
    %v4430 = vld [vmem:[#allocation10 + $0x4c8] sm:$0xff]
    %v4431 = vld [vmem:[#allocation10 + $0x4d0] sm:$0xff]
    %v4432 = vld [vmem:[#allocation10 + $0x4d8] sm:$0xff]
    %v4433 = vld [vmem:[#allocation10 + $0x4e0] sm:$0xff]
    %v4434 = vld [vmem:[#allocation10 + $0x4e8] sm:$0xff]
    %v4435 = vld [vmem:[#allocation10 + $0x4f0] sm:$0xff]
    %v4436 = vld [vmem:[#allocation10 + $0x4f8] sm:$0xff]
    %v4437 = vld [vmem:[#allocation10 + $0x500] sm:$0xff]
    %v4438 = vld [vmem:[#allocation10 + $0x508] sm:$0xff]
    %v4439 = vld [vmem:[#allocation10 + $0x510] sm:$0xff]
    %v4440 = vld [vmem:[#allocation10 + $0x518] sm:$0xff]
    %v4441 = vld [vmem:[#allocation10 + $0x520] sm:$0xff]
    %v4442 = vld [vmem:[#allocation10 + $0x528] sm:$0xff]
    %v4443 = vld [vmem:[#allocation10 + $0x530] sm:$0xff]
    %v4444 = vld [vmem:[#allocation10 + $0x538] sm:$0xff]
    %v4445 = vld [vmem:[#allocation10 + $0x540] sm:$0xff]
    %v4446 = vld [vmem:[#allocation10 + $0x548] sm:$0xff]
    %v4447 = vld [vmem:[#allocation10 + $0x550] sm:$0xff]
    %v4448 = vld [vmem:[#allocation10 + $0x558] sm:$0xff]
    %v4449 = vld [vmem:[#allocation10 + $0x560] sm:$0xff]
    %v4450 = vld [vmem:[#allocation10 + $0x568] sm:$0xff]
    %v4451 = vld [vmem:[#allocation10 + $0x570] sm:$0xff]
    %v4452 = vld [vmem:[#allocation10 + $0x578] sm:$0xff]
    %v4453 = vld [vmem:[#allocation10 + $0x580] sm:$0xff]
    %v4454 = vld [vmem:[#allocation10 + $0x588] sm:$0xff]
    %v4455 = vld [vmem:[#allocation10 + $0x590] sm:$0xff]
    %v4456 = vld [vmem:[#allocation10 + $0x598] sm:$0xff]
    %v4457 = vld [vmem:[#allocation10 + $0x5a0] sm:$0xff]
    %v4458 = vld [vmem:[#allocation10 + $0x5a8] sm:$0xff]
    %v4459 = vld [vmem:[#allocation10 + $0x5b0] sm:$0xff]
    %v4460 = vld [vmem:[#allocation10 + $0x5b8] sm:$0xff]
    %v4461 = vld [vmem:[#allocation10 + $0x5c0] sm:$0xff]
    %v4462 = vld [vmem:[#allocation10 + $0x5c8] sm:$0xff]
    %v4463 = vld [vmem:[#allocation10 + $0x5d0] sm:$0xff]
    %v4464 = vld [vmem:[#allocation10 + $0x5d8] sm:$0xff]
    %v4465 = vld [vmem:[#allocation10 + $0x5e0] sm:$0xff]
    %v4466 = vld [vmem:[#allocation10 + $0x5e8] sm:$0xff]
    %v4467 = vld [vmem:[#allocation10 + $0x5f0] sm:$0xff]
    %v4468 = vld [vmem:[#allocation10 + $0x5f8] sm:$0xff]
    %v4469 = vld [vmem:[#allocation10 + $0x600] sm:$0xff]
    %v4470 = vld [vmem:[#allocation10 + $0x608] sm:$0xff]
    %v4471 = vld [vmem:[#allocation10 + $0x610] sm:$0xff]
    %v4472 = vld [vmem:[#allocation10 + $0x618] sm:$0xff]
    %v4473 = vld [vmem:[#allocation10 + $0x620] sm:$0xff]
    %v4474 = vld [vmem:[#allocation10 + $0x628] sm:$0xff]
    %v4475 = vld [vmem:[#allocation10 + $0x630] sm:$0xff]
    %v4476 = vld [vmem:[#allocation10 + $0x638] sm:$0xff]
    %v4477 = vld [vmem:[#allocation10 + $0x640] sm:$0xff]
    %v4478 = vld [vmem:[#allocation10 + $0x648] sm:$0xff]
    %v4479 = vld [vmem:[#allocation10 + $0x650] sm:$0xff]
    %v4480 = vld [vmem:[#allocation10 + $0x658] sm:$0xff]
    %v4481 = vld [vmem:[#allocation10 + $0x660] sm:$0xff]
    %v4482 = vld [vmem:[#allocation10 + $0x668] sm:$0xff]
    %v4483 = vld [vmem:[#allocation10 + $0x670] sm:$0xff]
    %v4484 = vld [vmem:[#allocation10 + $0x678] sm:$0xff]
    %v4485 = vld [vmem:[#allocation10 + $0x680] sm:$0xff]
    %v4486 = vld [vmem:[#allocation10 + $0x688] sm:$0xff]
    %v4487 = vld [vmem:[#allocation10 + $0x690] sm:$0xff]
    %v4488 = vld [vmem:[#allocation10 + $0x698] sm:$0xff]
    %v4489 = vld [vmem:[#allocation10 + $0x6a0] sm:$0xff]
    %v4490 = vld [vmem:[#allocation10 + $0x6a8] sm:$0xff]
    %v4491 = vld [vmem:[#allocation10 + $0x6b0] sm:$0xff]
    %v4492 = vld [vmem:[#allocation10 + $0x6b8] sm:$0xff]
    %v4493 = vld [vmem:[#allocation10 + $0x6c0] sm:$0xff]
    %v4494 = vld [vmem:[#allocation10 + $0x6c8] sm:$0xff]
    %v4495 = vld [vmem:[#allocation10 + $0x6d0] sm:$0xff]
    %v4496 = vld [vmem:[#allocation10 + $0x6d8] sm:$0xff]
    %v4497 = vld [vmem:[#allocation10 + $0x6e0] sm:$0xff]
    %v4498 = vld [vmem:[#allocation10 + $0x6e8] sm:$0xff]
    %v4499 = vld [vmem:[#allocation10 + $0x6f0] sm:$0xff]
    %v4500 = vld [vmem:[#allocation10 + $0x6f8] sm:$0xff]
    %v4501 = vld [vmem:[#allocation10 + $0x700] sm:$0xff]
    %v4502 = vld [vmem:[#allocation10 + $0x708] sm:$0xff]
    %v4503 = vld [vmem:[#allocation10 + $0x710] sm:$0xff]
    %v4504 = vld [vmem:[#allocation10 + $0x718] sm:$0xff]
    %v4505 = vld [vmem:[#allocation10 + $0x720] sm:$0xff]
    %v4506 = vld [vmem:[#allocation10 + $0x728] sm:$0xff]
    %v4507 = vld [vmem:[#allocation10 + $0x730] sm:$0xff]
    %v4508 = vld [vmem:[#allocation10 + $0x738] sm:$0xff]
    %v4509 = vld [vmem:[#allocation10 + $0x740] sm:$0xff]
    %v4510 = vld [vmem:[#allocation10 + $0x748] sm:$0xff]
    %v4511 = vld [vmem:[#allocation10 + $0x750] sm:$0xff]
    %v4512 = vld [vmem:[#allocation10 + $0x758] sm:$0xff]
    %v4513 = vld [vmem:[#allocation10 + $0x760] sm:$0xff]
    %v4514 = vld [vmem:[#allocation10 + $0x768] sm:$0xff]
    %v4515 = vld [vmem:[#allocation10 + $0x770] sm:$0xff]
    %v4516 = vld [vmem:[#allocation10 + $0x778] sm:$0xff]
    %v4517 = vld [vmem:[#allocation10 + $0x780] sm:$0xff]
    %v4518 = vld [vmem:[#allocation10 + $0x788] sm:$0xff]
    %v4519 = vld [vmem:[#allocation10 + $0x790] sm:$0xff]
    %v4520 = vld [vmem:[#allocation10 + $0x798] sm:$0xff]
    %v4521 = vld [vmem:[#allocation10 + $0x7a0] sm:$0xff]
    %v4522 = vld [vmem:[#allocation10 + $0x7a8] sm:$0xff]
    %v4523 = vld [vmem:[#allocation10 + $0x7b0] sm:$0xff]
    %v4524 = vld [vmem:[#allocation10 + $0x7b8] sm:$0xff]
    %v4525 = vld [vmem:[#allocation10 + $0x7c0] sm:$0xff]
    %v4526 = vld [vmem:[#allocation10 + $0x7c8] sm:$0xff]
    %v4527 = vld [vmem:[#allocation10 + $0x7d0] sm:$0xff]
    %v4528 = vld [vmem:[#allocation10 + $0x7d8] sm:$0xff]
    %v4529 = vld [vmem:[#allocation10 + $0x7e0] sm:$0xff]
    %v4530 = vld [vmem:[#allocation10 + $0x7e8] sm:$0xff]
    %v4531 = vld [vmem:[#allocation10 + $0x7f0] sm:$0xff]
    %v4532 = vld [vmem:[#allocation10 + $0x7f8] sm:$0xff]
    %v4533 = vld [vmem:[#allocation10 + $0x800] sm:$0xff]
    %v4534 = vld [vmem:[#allocation10 + $0x808] sm:$0xff]
    %v4535 = vld [vmem:[#allocation10 + $0x810] sm:$0xff]
    %v4536 = vld [vmem:[#allocation10 + $0x818] sm:$0xff]
    %v4537 = vld [vmem:[#allocation10 + $0x820] sm:$0xff]
    %v4538 = vld [vmem:[#allocation10 + $0x828] sm:$0xff]
    %v4539 = vld [vmem:[#allocation10 + $0x830] sm:$0xff]
    %v4540 = vld [vmem:[#allocation10 + $0x838] sm:$0xff]
    %v4541 = vld [vmem:[#allocation10 + $0x840] sm:$0xff]
    %v4542 = vld [vmem:[#allocation10 + $0x848] sm:$0xff]
    %v4543 = vld [vmem:[#allocation10 + $0x850] sm:$0xff]
    %v4544 = vld [vmem:[#allocation10 + $0x858] sm:$0xff]
    %v4545 = vld [vmem:[#allocation10 + $0x860] sm:$0xff]
    %v4546 = vld [vmem:[#allocation10 + $0x868] sm:$0xff]
    %v4547 = vld [vmem:[#allocation10 + $0x870] sm:$0xff]
    %v4548 = vld [vmem:[#allocation10 + $0x878] sm:$0xff]
    %v4549 = vld [vmem:[#allocation10 + $0x880] sm:$0xff]
    %v4550 = vld [vmem:[#allocation10 + $0x888] sm:$0xff]
    %v4551 = vld [vmem:[#allocation10 + $0x890] sm:$0xff]
    %v4552 = vld [vmem:[#allocation10 + $0x898] sm:$0xff]
    %v4553 = vld [vmem:[#allocation10 + $0x8a0] sm:$0xff]
    %v4554 = vld [vmem:[#allocation10 + $0x8a8] sm:$0xff]
    %v4555 = vld [vmem:[#allocation10 + $0x8b0] sm:$0xff]
    %v4556 = vld [vmem:[#allocation10 + $0x8b8] sm:$0xff]
    %v4557 = vld [vmem:[#allocation10 + $0x8c0] sm:$0xff]
    %v4558 = vld [vmem:[#allocation10 + $0x8c8] sm:$0xff]
    %v4559 = vld [vmem:[#allocation10 + $0x8d0] sm:$0xff]
    %v4560 = vld [vmem:[#allocation10 + $0x8d8] sm:$0xff]
    %v4561 = vld [vmem:[#allocation10 + $0x8e0] sm:$0xff]
    %v4562 = vld [vmem:[#allocation10 + $0x8e8] sm:$0xff]
    %v4563 = vld [vmem:[#allocation10 + $0x8f0] sm:$0xff]
    %v4564 = vld [vmem:[#allocation10 + $0x8f8] sm:$0xff]
    %v4565 = vld [vmem:[#allocation10 + $0x900] sm:$0xff]
    %v4566 = vld [vmem:[#allocation10 + $0x908] sm:$0xff]
    %v4567 = vld [vmem:[#allocation10 + $0x910] sm:$0xff]
    %v4568 = vld [vmem:[#allocation10 + $0x918] sm:$0xff]
    %v4569 = vld [vmem:[#allocation10 + $0x920] sm:$0xff]
    %v4570 = vld [vmem:[#allocation10 + $0x928] sm:$0xff]
    %v4571 = vld [vmem:[#allocation10 + $0x930] sm:$0xff]
    %v4572 = vld [vmem:[#allocation10 + $0x938] sm:$0xff]
    %v4573 = vld [vmem:[#allocation10 + $0x940] sm:$0xff]
    %v4574 = vld [vmem:[#allocation10 + $0x948] sm:$0xff]
    %v4575 = vld [vmem:[#allocation10 + $0x950] sm:$0xff]
    %v4576 = vld [vmem:[#allocation10 + $0x958] sm:$0xff]
    %v4577 = vld [vmem:[#allocation10 + $0x960] sm:$0xff]
    %v4578 = vld [vmem:[#allocation10 + $0x968] sm:$0xff]
    %v4579 = vld [vmem:[#allocation10 + $0x970] sm:$0xff]
    %v4580 = vld [vmem:[#allocation10 + $0x978] sm:$0xff]
    %v4581 = vld [vmem:[#allocation10 + $0x980] sm:$0xff]
    %v4582 = vld [vmem:[#allocation10 + $0x988] sm:$0xff]
    %v4583 = vld [vmem:[#allocation10 + $0x990] sm:$0xff]
    %v4584 = vld [vmem:[#allocation10 + $0x998] sm:$0xff]
    %v4585 = vld [vmem:[#allocation10 + $0x9a0] sm:$0xff]
    %v4586 = vld [vmem:[#allocation10 + $0x9a8] sm:$0xff]
    %v4587 = vld [vmem:[#allocation10 + $0x9b0] sm:$0xff]
    %v4588 = vld [vmem:[#allocation10 + $0x9b8] sm:$0xff]
    %v4589 = vld [vmem:[#allocation10 + $0x9c0] sm:$0xff]
    %v4590 = vld [vmem:[#allocation10 + $0x9c8] sm:$0xff]
    %v4591 = vld [vmem:[#allocation10 + $0x9d0] sm:$0xff]
    %v4592 = vld [vmem:[#allocation10 + $0x9d8] sm:$0xff]
    %v4593 = vld [vmem:[#allocation10 + $0x9e0] sm:$0xff]
    %v4594 = vld [vmem:[#allocation10 + $0x9e8] sm:$0xff]
    %v4595 = vld [vmem:[#allocation10 + $0x9f0] sm:$0xff]
    %v4596 = vld [vmem:[#allocation10 + $0x9f8] sm:$0xff]
    %v4597 = vld [vmem:[#allocation10 + $0xa00] sm:$0xff]
    %v4598 = vld [vmem:[#allocation10 + $0xa08] sm:$0xff]
    %v4599 = vld [vmem:[#allocation10 + $0xa10] sm:$0xff]
    %v4600 = vld [vmem:[#allocation10 + $0xa18] sm:$0xff]
    %v4601 = vld [vmem:[#allocation10 + $0xa20] sm:$0xff]
    %v4602 = vld [vmem:[#allocation10 + $0xa28] sm:$0xff]
    %v4603 = vld [vmem:[#allocation10 + $0xa30] sm:$0xff]
    %v4604 = vld [vmem:[#allocation10 + $0xa38] sm:$0xff]
    %v4605 = vld [vmem:[#allocation10 + $0xa40] sm:$0xff]
    %v4606 = vld [vmem:[#allocation10 + $0xa48] sm:$0xff]
    %v4607 = vld [vmem:[#allocation10 + $0xa50] sm:$0xff]
    %v4608 = vld [vmem:[#allocation10 + $0xa58] sm:$0xff]
    %v4609 = vld [vmem:[#allocation10 + $0xa60] sm:$0xff]
    %v4610 = vld [vmem:[#allocation10 + $0xa68] sm:$0xff]
    %v4611 = vld [vmem:[#allocation10 + $0xa70] sm:$0xff]
    %v4612 = vld [vmem:[#allocation10 + $0xa78] sm:$0xff]
    %v4613 = vld [vmem:[#allocation10 + $0xa80] sm:$0xff]
    %v4614 = vld [vmem:[#allocation10 + $0xa88] sm:$0xff]
    %v4615 = vld [vmem:[#allocation10 + $0xa90] sm:$0xff]
    %v4616 = vld [vmem:[#allocation10 + $0xa98] sm:$0xff]
    %v4617 = vld [vmem:[#allocation10 + $0xaa0] sm:$0xff]
    %v4618 = vld [vmem:[#allocation10 + $0xaa8] sm:$0xff]
    %v4619 = vld [vmem:[#allocation10 + $0xab0] sm:$0xff]
    %v4620 = vld [vmem:[#allocation10 + $0xab8] sm:$0xff]
    %v4621 = vld [vmem:[#allocation10 + $0xac0] sm:$0xff]
    %v4622 = vld [vmem:[#allocation10 + $0xac8] sm:$0xff]
    %v4623 = vld [vmem:[#allocation10 + $0xad0] sm:$0xff]
    %v4624 = vld [vmem:[#allocation10 + $0xad8] sm:$0xff]
    %v4625 = vld [vmem:[#allocation10 + $0xae0] sm:$0xff]
    %v4626 = vld [vmem:[#allocation10 + $0xae8] sm:$0xff]
    %v4627 = vld [vmem:[#allocation10 + $0xaf0] sm:$0xff]
    %v4628 = vld [vmem:[#allocation10 + $0xaf8] sm:$0xff]
    %v4629 = vld [vmem:[#allocation10 + $0xb00] sm:$0xff]
    %v4630 = vld [vmem:[#allocation10 + $0xb08] sm:$0xff]
    %v4631 = vld [vmem:[#allocation10 + $0xb10] sm:$0xff]
    %v4632 = vld [vmem:[#allocation10 + $0xb18] sm:$0xff]
    %v4633 = vld [vmem:[#allocation10 + $0xb20] sm:$0xff]
    %v4634 = vld [vmem:[#allocation10 + $0xb28] sm:$0xff]
    %v4635 = vld [vmem:[#allocation10 + $0xb30] sm:$0xff]
    %v4636 = vld [vmem:[#allocation10 + $0xb38] sm:$0xff]
    %v4637 = vld [vmem:[#allocation10 + $0xb40] sm:$0xff]
    %v4638 = vld [vmem:[#allocation10 + $0xb48] sm:$0xff]
    %v4639 = vld [vmem:[#allocation10 + $0xb50] sm:$0xff]
    %v4640 = vld [vmem:[#allocation10 + $0xb58] sm:$0xff]
    %v4641 = vld [vmem:[#allocation10 + $0xb60] sm:$0xff]
    %v4642 = vld [vmem:[#allocation10 + $0xb68] sm:$0xff]
    %v4643 = vld [vmem:[#allocation10 + $0xb70] sm:$0xff]
    %v4644 = vld [vmem:[#allocation10 + $0xb78] sm:$0xff]
    %v4645 = vld [vmem:[#allocation10 + $0xb80] sm:$0xff]
    %v4646 = vld [vmem:[#allocation10 + $0xb88] sm:$0xff]
    %v4647 = vld [vmem:[#allocation10 + $0xb90] sm:$0xff]
    %v4648 = vld [vmem:[#allocation10 + $0xb98] sm:$0xff]
    %v4649 = vld [vmem:[#allocation10 + $0xba0] sm:$0xff]
    %v4650 = vld [vmem:[#allocation10 + $0xba8] sm:$0xff]
    %v4651 = vld [vmem:[#allocation10 + $0xbb0] sm:$0xff]
    %v4652 = vld [vmem:[#allocation10 + $0xbb8] sm:$0xff]
    %v4653 = vld [vmem:[#allocation10 + $0xbc0] sm:$0xff]
    %v4654 = vld [vmem:[#allocation10 + $0xbc8] sm:$0xff]
    %v4655 = vld [vmem:[#allocation10 + $0xbd0] sm:$0xff]
    %v4656 = vld [vmem:[#allocation10 + $0xbd8] sm:$0xff]
    %v4657 = vld [vmem:[#allocation10 + $0xbe0] sm:$0xff]
    %v4658 = vld [vmem:[#allocation10 + $0xbe8] sm:$0xff]
    %v4659 = vld [vmem:[#allocation10 + $0xbf0] sm:$0xff]
    %v4660 = vld [vmem:[#allocation10 + $0xbf8] sm:$0xff]
    %v4661 = vld [vmem:[#allocation10 + $0xc00] sm:$0xff]
    %v4662 = vld [vmem:[#allocation10 + $0xc08] sm:$0xff]
    %v4663 = vld [vmem:[#allocation10 + $0xc10] sm:$0xff]
    %v4664 = vld [vmem:[#allocation10 + $0xc18] sm:$0xff]
    %v4665 = vld [vmem:[#allocation10 + $0xc20] sm:$0xff]
    %v4666 = vld [vmem:[#allocation10 + $0xc28] sm:$0xff]
    %v4667 = vld [vmem:[#allocation10 + $0xc30] sm:$0xff]
    %v4668 = vld [vmem:[#allocation10 + $0xc38] sm:$0xff]
    %v4669 = vld [vmem:[#allocation10 + $0xc40] sm:$0xff]
    %v4670 = vld [vmem:[#allocation10 + $0xc48] sm:$0xff]
    %v4671 = vld [vmem:[#allocation10 + $0xc50] sm:$0xff]
    %v4672 = vld [vmem:[#allocation10 + $0xc58] sm:$0xff]
    %v4673 = vld [vmem:[#allocation10 + $0xc60] sm:$0xff]
    %v4674 = vld [vmem:[#allocation10 + $0xc68] sm:$0xff]
    %v4675 = vld [vmem:[#allocation10 + $0xc70] sm:$0xff]
    %v4676 = vld [vmem:[#allocation10 + $0xc78] sm:$0xff]
    %v4677 = vld [vmem:[#allocation10 + $0xc80] sm:$0xff]
    %v4678 = vld [vmem:[#allocation10 + $0xc88] sm:$0xff]
    %v4679 = vld [vmem:[#allocation10 + $0xc90] sm:$0xff]
    %v4680 = vld [vmem:[#allocation10 + $0xc98] sm:$0xff]
    %v4681 = vld [vmem:[#allocation10 + $0xca0] sm:$0xff]
    %v4682 = vld [vmem:[#allocation10 + $0xca8] sm:$0xff]
    %v4683 = vld [vmem:[#allocation10 + $0xcb0] sm:$0xff]
    %v4684 = vld [vmem:[#allocation10 + $0xcb8] sm:$0xff]
    %v4685 = vld [vmem:[#allocation10 + $0xcc0] sm:$0xff]
    %v4686 = vld [vmem:[#allocation10 + $0xcc8] sm:$0xff]
    %v4687 = vld [vmem:[#allocation10 + $0xcd0] sm:$0xff]
    %v4688 = vld [vmem:[#allocation10 + $0xcd8] sm:$0xff]
    %v4689 = vld [vmem:[#allocation10 + $0xce0] sm:$0xff]
    %v4690 = vld [vmem:[#allocation10 + $0xce8] sm:$0xff]
    %v4691 = vld [vmem:[#allocation10 + $0xcf0] sm:$0xff]
    %v4692 = vld [vmem:[#allocation10 + $0xcf8] sm:$0xff]
    %v4693 = vld [vmem:[#allocation10 + $0xd00] sm:$0xff]
    %v4694 = vld [vmem:[#allocation10 + $0xd08] sm:$0xff]
    %v4695 = vld [vmem:[#allocation10 + $0xd10] sm:$0xff]
    %v4696 = vld [vmem:[#allocation10 + $0xd18] sm:$0xff]
    %v4697 = vld [vmem:[#allocation10 + $0xd20] sm:$0xff]
    %v4698 = vld [vmem:[#allocation10 + $0xd28] sm:$0xff]
    %v4699 = vld [vmem:[#allocation10 + $0xd30] sm:$0xff]
    %v4700 = vld [vmem:[#allocation10 + $0xd38] sm:$0xff]
    %v4701 = vld [vmem:[#allocation10 + $0xd40] sm:$0xff]
    %v4702 = vld [vmem:[#allocation10 + $0xd48] sm:$0xff]
    %v4703 = vld [vmem:[#allocation10 + $0xd50] sm:$0xff]
    %v4704 = vld [vmem:[#allocation10 + $0xd58] sm:$0xff]
    %v4705 = vld [vmem:[#allocation10 + $0xd60] sm:$0xff]
    %v4706 = vld [vmem:[#allocation10 + $0xd68] sm:$0xff]
    %v4707 = vld [vmem:[#allocation10 + $0xd70] sm:$0xff]
    %v4708 = vld [vmem:[#allocation10 + $0xd78] sm:$0xff]
    %v4709 = vld [vmem:[#allocation10 + $0xd80] sm:$0xff]
    %v4710 = vld [vmem:[#allocation10 + $0xd88] sm:$0xff]
    %v4711 = vld [vmem:[#allocation10 + $0xd90] sm:$0xff]
    %v4712 = vld [vmem:[#allocation10 + $0xd98] sm:$0xff]
    %v4713 = vld [vmem:[#allocation10 + $0xda0] sm:$0xff]
    %v4714 = vld [vmem:[#allocation10 + $0xda8] sm:$0xff]
    %v4715 = vld [vmem:[#allocation10 + $0xdb0] sm:$0xff]
    %v4716 = vld [vmem:[#allocation10 + $0xdb8] sm:$0xff]
    %v4717 = vld [vmem:[#allocation10 + $0xdc0] sm:$0xff]
    %v4718 = vld [vmem:[#allocation10 + $0xdc8] sm:$0xff]
    %v4719 = vld [vmem:[#allocation10 + $0xdd0] sm:$0xff]
    %v4720 = vld [vmem:[#allocation10 + $0xdd8] sm:$0xff]
    %v4721 = vld [vmem:[#allocation10 + $0xde0] sm:$0xff]
    %v4722 = vld [vmem:[#allocation10 + $0xde8] sm:$0xff]
    %v4723 = vld [vmem:[#allocation10 + $0xdf0] sm:$0xff]
    %v4724 = vld [vmem:[#allocation10 + $0xdf8] sm:$0xff]
    %v4725 = vld [vmem:[#allocation10 + $0xe00] sm:$0xff]
    %v4726 = vld [vmem:[#allocation10 + $0xe08] sm:$0xff]
    %v4727 = vld [vmem:[#allocation10 + $0xe10] sm:$0xff]
    %v4728 = vld [vmem:[#allocation10 + $0xe18] sm:$0xff]
    %v4729 = vld [vmem:[#allocation10 + $0xe20] sm:$0xff]
    %v4730 = vld [vmem:[#allocation10 + $0xe28] sm:$0xff]
    %v4731 = vld [vmem:[#allocation10 + $0xe30] sm:$0xff]
    %v4732 = vld [vmem:[#allocation10 + $0xe38] sm:$0xff]
    %v4733 = vld [vmem:[#allocation10 + $0xe40] sm:$0xff]
    %v4734 = vld [vmem:[#allocation10 + $0xe48] sm:$0xff]
    %v4735 = vld [vmem:[#allocation10 + $0xe50] sm:$0xff]
    %v4736 = vld [vmem:[#allocation10 + $0xe58] sm:$0xff]
    %v4737 = vld [vmem:[#allocation10 + $0xe60] sm:$0xff]
    %v4738 = vld [vmem:[#allocation10 + $0xe68] sm:$0xff]
    %v4739 = vld [vmem:[#allocation10 + $0xe70] sm:$0xff]
    %v4740 = vld [vmem:[#allocation10 + $0xe78] sm:$0xff]
    %v4741 = vld [vmem:[#allocation10 + $0xe80] sm:$0xff]
    %v4742 = vld [vmem:[#allocation10 + $0xe88] sm:$0xff]
    %v4743 = vld [vmem:[#allocation10 + $0xe90] sm:$0xff]
    %v4744 = vld [vmem:[#allocation10 + $0xe98] sm:$0xff]
    %v4745 = vld [vmem:[#allocation10 + $0xea0] sm:$0xff]
    %v4746 = vld [vmem:[#allocation10 + $0xea8] sm:$0xff]
    %v4747 = vld [vmem:[#allocation10 + $0xeb0] sm:$0xff]
    %v4748 = vld [vmem:[#allocation10 + $0xeb8] sm:$0xff]
    %v4749 = vld [vmem:[#allocation10 + $0xec0] sm:$0xff]
    %v4750 = vld [vmem:[#allocation10 + $0xec8] sm:$0xff]
    %v4751 = vld [vmem:[#allocation10 + $0xed0] sm:$0xff]
    %v4752 = vld [vmem:[#allocation10 + $0xed8] sm:$0xff]
    %v4753 = vld [vmem:[#allocation10 + $0xee0] sm:$0xff]
    %v4754 = vld [vmem:[#allocation10 + $0xee8] sm:$0xff]
    %v4755 = vld [vmem:[#allocation10 + $0xef0] sm:$0xff]
    %v4756 = vld [vmem:[#allocation10 + $0xef8] sm:$0xff]
    %v4757 = vld [vmem:[#allocation10 + $0xf00] sm:$0xff]
    %v4758 = vld [vmem:[#allocation10 + $0xf08] sm:$0xff]
    %v4759 = vld [vmem:[#allocation10 + $0xf10] sm:$0xff]
    %v4760 = vld [vmem:[#allocation10 + $0xf18] sm:$0xff]
    %v4761 = vld [vmem:[#allocation10 + $0xf20] sm:$0xff]
    %v4762 = vld [vmem:[#allocation10 + $0xf28] sm:$0xff]
    %v4763 = vld [vmem:[#allocation10 + $0xf30] sm:$0xff]
    %v4764 = vld [vmem:[#allocation10 + $0xf38] sm:$0xff]
    %v4765 = vld [vmem:[#allocation10 + $0xf40] sm:$0xff]
    %v4766 = vld [vmem:[#allocation10 + $0xf48] sm:$0xff]
    %v4767 = vld [vmem:[#allocation10 + $0xf50] sm:$0xff]
    %v4768 = vld [vmem:[#allocation10 + $0xf58] sm:$0xff]
    %v4769 = vld [vmem:[#allocation10 + $0xf60] sm:$0xff]
    %v4770 = vld [vmem:[#allocation10 + $0xf68] sm:$0xff]
    %v4771 = vld [vmem:[#allocation10 + $0xf70] sm:$0xff]
    %v4772 = vld [vmem:[#allocation10 + $0xf78] sm:$0xff]
    %v4773 = vld [vmem:[#allocation10 + $0xf80] sm:$0xff]
    %v4774 = vld [vmem:[#allocation10 + $0xf88] sm:$0xff]
    %v4775 = vld [vmem:[#allocation10 + $0xf90] sm:$0xff]
    %v4776 = vld [vmem:[#allocation10 + $0xf98] sm:$0xff]
    %v4777 = vld [vmem:[#allocation10 + $0xfa0] sm:$0xff]
    %v4778 = vld [vmem:[#allocation10 + $0xfa8] sm:$0xff]
    %v4779 = vld [vmem:[#allocation10 + $0xfb0] sm:$0xff]
    %v4780 = vld [vmem:[#allocation10 + $0xfb8] sm:$0xff]
    %v4781 = vld [vmem:[#allocation10 + $0xfc0] sm:$0xff]
    %v4782 = vld [vmem:[#allocation10 + $0xfc8] sm:$0xff]
    %v4783 = vld [vmem:[#allocation10 + $0xfd0] sm:$0xff]
    %v4784 = vld [vmem:[#allocation10 + $0xfd8] sm:$0xff]
    %v4785 = vld [vmem:[#allocation10 + $0xfe0] sm:$0xff]
    %v4786 = vld [vmem:[#allocation10 + $0xfe8] sm:$0xff]
    %v4787 = vld [vmem:[#allocation10 + $0xff0] sm:$0xff]
    %v4788 = vld [vmem:[#allocation10 + $0xff8] sm:$0xff]
    %v4789 = vld [vmem:[#allocation12] sm:$0xff]
    %v4791 = vlaneseq
    %v4792 = vshrl.u32 %v4791, 7
    %v4793 = vsub.s32 0, %v4792
    %v4794 = vrot.slane %v4789, %v4793
    %v4795 = vlaneseq
    %v4796 = vshrl.u32 %v4795, 7
    %v4797 = vsub.s32 1, %v4796
    %v4798 = vrot.slane %v4789, %v4797
    %v4799 = vlaneseq
    %v4800 = vshrl.u32 %v4799, 7
    %v4801 = vsub.s32 2, %v4800
    %v4802 = vrot.slane %v4789, %v4801
    %v4803 = vlaneseq
    %v4804 = vshrl.u32 %v4803, 7
    %v4805 = vsub.s32 3, %v4804
    %v4806 = vrot.slane %v4789, %v4805
    %v4807 = vlaneseq
    %v4808 = vshrl.u32 %v4807, 7
    %v4809 = vsub.s32 4, %v4808
    %v4810 = vrot.slane %v4789, %v4809
    %v4811 = vlaneseq
    %v4812 = vshrl.u32 %v4811, 7
    %v4813 = vsub.s32 5, %v4812
    %v4814 = vrot.slane %v4789, %v4813
    %v4815 = vlaneseq
    %v4816 = vshrl.u32 %v4815, 7
    %v4817 = vsub.s32 6, %v4816
    %v4818 = vrot.slane %v4789, %v4817
    %v4819 = vlaneseq
    %v4820 = vshrl.u32 %v4819, 7
    %v4821 = vsub.s32 7, %v4820
    %v4822 = vrot.slane %v4789, %v4821
    %v5343 = vunpack.c.l.b16 %v4277
    %v5344 = vunpack.c.h.b16 %v4277
    %v5345 = vunpack.c.l.b16 %v4278
    %v5346 = vunpack.c.h.b16 %v4278
    %v5347 = vunpack.c.l.b16 %v4279
    %v5348 = vunpack.c.h.b16 %v4279
    %v5349 = vunpack.c.l.b16 %v4280
    %v5350 = vunpack.c.h.b16 %v4280
    %v5351 = vunpack.c.l.b16 %v4281
    %v5352 = vunpack.c.h.b16 %v4281
    %v5353 = vunpack.c.l.b16 %v4282
    %v5354 = vunpack.c.h.b16 %v4282
    %v5355 = vunpack.c.l.b16 %v4283
    %v5356 = vunpack.c.h.b16 %v4283
    %v5357 = vunpack.c.l.b16 %v4284
    %v5358 = vunpack.c.h.b16 %v4284
    %v5359 = vunpack.c.l.b16 %v4285
    %v5360 = vunpack.c.h.b16 %v4285
    %v5361 = vunpack.c.l.b16 %v4286
    %v5362 = vunpack.c.h.b16 %v4286
    %v5363 = vunpack.c.l.b16 %v4287
    %v5364 = vunpack.c.h.b16 %v4287
    %v5365 = vunpack.c.l.b16 %v4288
    %v5366 = vunpack.c.h.b16 %v4288
    %v5367 = vunpack.c.l.b16 %v4289
    %v5368 = vunpack.c.h.b16 %v4289
    %v5369 = vunpack.c.l.b16 %v4290
    %v5370 = vunpack.c.h.b16 %v4290
    %v5371 = vunpack.c.l.b16 %v4291
    %v5372 = vunpack.c.h.b16 %v4291
    %v5373 = vunpack.c.l.b16 %v4292
    %v5374 = vunpack.c.h.b16 %v4292
    %v5375 = vunpack.c.l.b16 %v4293
    %v5376 = vunpack.c.h.b16 %v4293
    %v5377 = vunpack.c.l.b16 %v4294
    %v5378 = vunpack.c.h.b16 %v4294
    %v5379 = vunpack.c.l.b16 %v4295
    %v5380 = vunpack.c.h.b16 %v4295
    %v5381 = vunpack.c.l.b16 %v4296
    %v5382 = vunpack.c.h.b16 %v4296
    %v5383 = vunpack.c.l.b16 %v4297
    %v5384 = vunpack.c.h.b16 %v4297
    %v5385 = vunpack.c.l.b16 %v4298
    %v5386 = vunpack.c.h.b16 %v4298
    %v5387 = vunpack.c.l.b16 %v4299
    %v5388 = vunpack.c.h.b16 %v4299
    %v5389 = vunpack.c.l.b16 %v4300
    %v5390 = vunpack.c.h.b16 %v4300
    %v5391 = vunpack.c.l.b16 %v4301
    %v5392 = vunpack.c.h.b16 %v4301
    %v5393 = vunpack.c.l.b16 %v4302
    %v5394 = vunpack.c.h.b16 %v4302
    %v5395 = vunpack.c.l.b16 %v4303
    %v5396 = vunpack.c.h.b16 %v4303
    %v5397 = vunpack.c.l.b16 %v4304
    %v5398 = vunpack.c.h.b16 %v4304
    %v5399 = vunpack.c.l.b16 %v4305
    %v5400 = vunpack.c.h.b16 %v4305
    %v5401 = vunpack.c.l.b16 %v4306
    %v5402 = vunpack.c.h.b16 %v4306
    %v5403 = vunpack.c.l.b16 %v4307
    %v5404 = vunpack.c.h.b16 %v4307
    %v5405 = vunpack.c.l.b16 %v4308
    %v5406 = vunpack.c.h.b16 %v4308
    %v5407 = vunpack.c.l.b16 %v4309
    %v5408 = vunpack.c.h.b16 %v4309
    %v5409 = vunpack.c.l.b16 %v4310
    %v5410 = vunpack.c.h.b16 %v4310
    %v5411 = vunpack.c.l.b16 %v4311
    %v5412 = vunpack.c.h.b16 %v4311
    %v5413 = vunpack.c.l.b16 %v4312
    %v5414 = vunpack.c.h.b16 %v4312
    %v5415 = vunpack.c.l.b16 %v4313
    %v5416 = vunpack.c.h.b16 %v4313
    %v5417 = vunpack.c.l.b16 %v4314
    %v5418 = vunpack.c.h.b16 %v4314
    %v5419 = vunpack.c.l.b16 %v4315
    %v5420 = vunpack.c.h.b16 %v4315
    %v5421 = vunpack.c.l.b16 %v4316
    %v5422 = vunpack.c.h.b16 %v4316
    %v5423 = vunpack.c.l.b16 %v4317
    %v5424 = vunpack.c.h.b16 %v4317
    %v5425 = vunpack.c.l.b16 %v4318
    %v5426 = vunpack.c.h.b16 %v4318
    %v5427 = vunpack.c.l.b16 %v4319
    %v5428 = vunpack.c.h.b16 %v4319
    %v5429 = vunpack.c.l.b16 %v4320
    %v5430 = vunpack.c.h.b16 %v4320
    %v5431 = vunpack.c.l.b16 %v4321
    %v5432 = vunpack.c.h.b16 %v4321
    %v5433 = vunpack.c.l.b16 %v4322
    %v5434 = vunpack.c.h.b16 %v4322
    %v5435 = vunpack.c.l.b16 %v4323
    %v5436 = vunpack.c.h.b16 %v4323
    %v5437 = vunpack.c.l.b16 %v4324
    %v5438 = vunpack.c.h.b16 %v4324
    %v5439 = vunpack.c.l.b16 %v4325
    %v5440 = vunpack.c.h.b16 %v4325
    %v5441 = vunpack.c.l.b16 %v4326
    %v5442 = vunpack.c.h.b16 %v4326
    %v5443 = vunpack.c.l.b16 %v4327
    %v5444 = vunpack.c.h.b16 %v4327
    %v5445 = vunpack.c.l.b16 %v4328
    %v5446 = vunpack.c.h.b16 %v4328
    %v5447 = vunpack.c.l.b16 %v4329
    %v5448 = vunpack.c.h.b16 %v4329
    %v5449 = vunpack.c.l.b16 %v4330
    %v5450 = vunpack.c.h.b16 %v4330
    %v5451 = vunpack.c.l.b16 %v4331
    %v5452 = vunpack.c.h.b16 %v4331
    %v5453 = vunpack.c.l.b16 %v4332
    %v5454 = vunpack.c.h.b16 %v4332
    %v5455 = vunpack.c.l.b16 %v4333
    %v5456 = vunpack.c.h.b16 %v4333
    %v5457 = vunpack.c.l.b16 %v4334
    %v5458 = vunpack.c.h.b16 %v4334
    %v5459 = vunpack.c.l.b16 %v4335
    %v5460 = vunpack.c.h.b16 %v4335
    %v5461 = vunpack.c.l.b16 %v4336
    %v5462 = vunpack.c.h.b16 %v4336
    %v5463 = vunpack.c.l.b16 %v4337
    %v5464 = vunpack.c.h.b16 %v4337
    %v5465 = vunpack.c.l.b16 %v4338
    %v5466 = vunpack.c.h.b16 %v4338
    %v5467 = vunpack.c.l.b16 %v4339
    %v5468 = vunpack.c.h.b16 %v4339
    %v5469 = vunpack.c.l.b16 %v4340
    %v5470 = vunpack.c.h.b16 %v4340
    %v5471 = vunpack.c.l.b16 %v4341
    %v5472 = vunpack.c.h.b16 %v4341
    %v5473 = vunpack.c.l.b16 %v4342
    %v5474 = vunpack.c.h.b16 %v4342
    %v5475 = vunpack.c.l.b16 %v4343
    %v5476 = vunpack.c.h.b16 %v4343
    %v5477 = vunpack.c.l.b16 %v4344
    %v5478 = vunpack.c.h.b16 %v4344
    %v5479 = vunpack.c.l.b16 %v4345
    %v5480 = vunpack.c.h.b16 %v4345
    %v5481 = vunpack.c.l.b16 %v4346
    %v5482 = vunpack.c.h.b16 %v4346
    %v5483 = vunpack.c.l.b16 %v4347
    %v5484 = vunpack.c.h.b16 %v4347
    %v5485 = vunpack.c.l.b16 %v4348
    %v5486 = vunpack.c.h.b16 %v4348
    %v5487 = vunpack.c.l.b16 %v4349
    %v5488 = vunpack.c.h.b16 %v4349
    %v5489 = vunpack.c.l.b16 %v4350
    %v5490 = vunpack.c.h.b16 %v4350
    %v5491 = vunpack.c.l.b16 %v4351
    %v5492 = vunpack.c.h.b16 %v4351
    %v5493 = vunpack.c.l.b16 %v4352
    %v5494 = vunpack.c.h.b16 %v4352
    %v5495 = vunpack.c.l.b16 %v4353
    %v5496 = vunpack.c.h.b16 %v4353
    %v5497 = vunpack.c.l.b16 %v4354
    %v5498 = vunpack.c.h.b16 %v4354
    %v5499 = vunpack.c.l.b16 %v4355
    %v5500 = vunpack.c.h.b16 %v4355
    %v5501 = vunpack.c.l.b16 %v4356
    %v5502 = vunpack.c.h.b16 %v4356
    %v5503 = vunpack.c.l.b16 %v4357
    %v5504 = vunpack.c.h.b16 %v4357
    %v5505 = vunpack.c.l.b16 %v4358
    %v5506 = vunpack.c.h.b16 %v4358
    %v5507 = vunpack.c.l.b16 %v4359
    %v5508 = vunpack.c.h.b16 %v4359
    %v5509 = vunpack.c.l.b16 %v4360
    %v5510 = vunpack.c.h.b16 %v4360
    %v5511 = vunpack.c.l.b16 %v4361
    %v5512 = vunpack.c.h.b16 %v4361
    %v5513 = vunpack.c.l.b16 %v4362
    %v5514 = vunpack.c.h.b16 %v4362
    %v5515 = vunpack.c.l.b16 %v4363
    %v5516 = vunpack.c.h.b16 %v4363
    %v5517 = vunpack.c.l.b16 %v4364
    %v5518 = vunpack.c.h.b16 %v4364
    %v5519 = vunpack.c.l.b16 %v4365
    %v5520 = vunpack.c.h.b16 %v4365
    %v5521 = vunpack.c.l.b16 %v4366
    %v5522 = vunpack.c.h.b16 %v4366
    %v5523 = vunpack.c.l.b16 %v4367
    %v5524 = vunpack.c.h.b16 %v4367
    %v5525 = vunpack.c.l.b16 %v4368
    %v5526 = vunpack.c.h.b16 %v4368
    %v5527 = vunpack.c.l.b16 %v4369
    %v5528 = vunpack.c.h.b16 %v4369
    %v5529 = vunpack.c.l.b16 %v4370
    %v5530 = vunpack.c.h.b16 %v4370
    %v5531 = vunpack.c.l.b16 %v4371
    %v5532 = vunpack.c.h.b16 %v4371
    %v5533 = vunpack.c.l.b16 %v4372
    %v5534 = vunpack.c.h.b16 %v4372
    %v5535 = vunpack.c.l.b16 %v4373
    %v5536 = vunpack.c.h.b16 %v4373
    %v5537 = vunpack.c.l.b16 %v4374
    %v5538 = vunpack.c.h.b16 %v4374
    %v5539 = vunpack.c.l.b16 %v4375
    %v5540 = vunpack.c.h.b16 %v4375
    %v5541 = vunpack.c.l.b16 %v4376
    %v5542 = vunpack.c.h.b16 %v4376
    %v5543 = vunpack.c.l.b16 %v4377
    %v5544 = vunpack.c.h.b16 %v4377
    %v5545 = vunpack.c.l.b16 %v4378
    %v5546 = vunpack.c.h.b16 %v4378
    %v5547 = vunpack.c.l.b16 %v4379
    %v5548 = vunpack.c.h.b16 %v4379
    %v5549 = vunpack.c.l.b16 %v4380
    %v5550 = vunpack.c.h.b16 %v4380
    %v5551 = vunpack.c.l.b16 %v4381
    %v5552 = vunpack.c.h.b16 %v4381
    %v5553 = vunpack.c.l.b16 %v4382
    %v5554 = vunpack.c.h.b16 %v4382
    %v5555 = vunpack.c.l.b16 %v4383
    %v5556 = vunpack.c.h.b16 %v4383
    %v5557 = vunpack.c.l.b16 %v4384
    %v5558 = vunpack.c.h.b16 %v4384
    %v5559 = vunpack.c.l.b16 %v4385
    %v5560 = vunpack.c.h.b16 %v4385
    %v5561 = vunpack.c.l.b16 %v4386
    %v5562 = vunpack.c.h.b16 %v4386
    %v5563 = vunpack.c.l.b16 %v4387
    %v5564 = vunpack.c.h.b16 %v4387
    %v5565 = vunpack.c.l.b16 %v4388
    %v5566 = vunpack.c.h.b16 %v4388
    %v5567 = vunpack.c.l.b16 %v4389
    %v5568 = vunpack.c.h.b16 %v4389
    %v5569 = vunpack.c.l.b16 %v4390
    %v5570 = vunpack.c.h.b16 %v4390
    %v5571 = vunpack.c.l.b16 %v4391
    %v5572 = vunpack.c.h.b16 %v4391
    %v5573 = vunpack.c.l.b16 %v4392
    %v5574 = vunpack.c.h.b16 %v4392
    %v5575 = vunpack.c.l.b16 %v4393
    %v5576 = vunpack.c.h.b16 %v4393
    %v5577 = vunpack.c.l.b16 %v4394
    %v5578 = vunpack.c.h.b16 %v4394
    %v5579 = vunpack.c.l.b16 %v4395
    %v5580 = vunpack.c.h.b16 %v4395
    %v5581 = vunpack.c.l.b16 %v4396
    %v5582 = vunpack.c.h.b16 %v4396
    %v5583 = vunpack.c.l.b16 %v4397
    %v5584 = vunpack.c.h.b16 %v4397
    %v5585 = vunpack.c.l.b16 %v4398
    %v5586 = vunpack.c.h.b16 %v4398
    %v5587 = vunpack.c.l.b16 %v4399
    %v5588 = vunpack.c.h.b16 %v4399
    %v5589 = vunpack.c.l.b16 %v4400
    %v5590 = vunpack.c.h.b16 %v4400
    %v5591 = vunpack.c.l.b16 %v4401
    %v5592 = vunpack.c.h.b16 %v4401
    %v5593 = vunpack.c.l.b16 %v4402
    %v5594 = vunpack.c.h.b16 %v4402
    %v5595 = vunpack.c.l.b16 %v4403
    %v5596 = vunpack.c.h.b16 %v4403
    %v5597 = vunpack.c.l.b16 %v4404
    %v5598 = vunpack.c.h.b16 %v4404
    %v5599 = vunpack.c.l.b16 %v4405
    %v5600 = vunpack.c.h.b16 %v4405
    %v5601 = vunpack.c.l.b16 %v4406
    %v5602 = vunpack.c.h.b16 %v4406
    %v5603 = vunpack.c.l.b16 %v4407
    %v5604 = vunpack.c.h.b16 %v4407
    %v5605 = vunpack.c.l.b16 %v4408
    %v5606 = vunpack.c.h.b16 %v4408
    %v5607 = vunpack.c.l.b16 %v4409
    %v5608 = vunpack.c.h.b16 %v4409
    %v5609 = vunpack.c.l.b16 %v4410
    %v5610 = vunpack.c.h.b16 %v4410
    %v5611 = vunpack.c.l.b16 %v4411
    %v5612 = vunpack.c.h.b16 %v4411
    %v5613 = vunpack.c.l.b16 %v4412
    %v5614 = vunpack.c.h.b16 %v4412
    %v5615 = vunpack.c.l.b16 %v4413
    %v5616 = vunpack.c.h.b16 %v4413
    %v5617 = vunpack.c.l.b16 %v4414
    %v5618 = vunpack.c.h.b16 %v4414
    %v5619 = vunpack.c.l.b16 %v4415
    %v5620 = vunpack.c.h.b16 %v4415
    %v5621 = vunpack.c.l.b16 %v4416
    %v5622 = vunpack.c.h.b16 %v4416
    %v5623 = vunpack.c.l.b16 %v4417
    %v5624 = vunpack.c.h.b16 %v4417
    %v5625 = vunpack.c.l.b16 %v4418
    %v5626 = vunpack.c.h.b16 %v4418
    %v5627 = vunpack.c.l.b16 %v4419
    %v5628 = vunpack.c.h.b16 %v4419
    %v5629 = vunpack.c.l.b16 %v4420
    %v5630 = vunpack.c.h.b16 %v4420
    %v5631 = vunpack.c.l.b16 %v4421
    %v5632 = vunpack.c.h.b16 %v4421
    %v5633 = vunpack.c.l.b16 %v4422
    %v5634 = vunpack.c.h.b16 %v4422
    %v5635 = vunpack.c.l.b16 %v4423
    %v5636 = vunpack.c.h.b16 %v4423
    %v5637 = vunpack.c.l.b16 %v4424
    %v5638 = vunpack.c.h.b16 %v4424
    %v5639 = vunpack.c.l.b16 %v4425
    %v5640 = vunpack.c.h.b16 %v4425
    %v5641 = vunpack.c.l.b16 %v4426
    %v5642 = vunpack.c.h.b16 %v4426
    %v5643 = vunpack.c.l.b16 %v4427
    %v5644 = vunpack.c.h.b16 %v4427
    %v5645 = vunpack.c.l.b16 %v4428
    %v5646 = vunpack.c.h.b16 %v4428
    %v5647 = vunpack.c.l.b16 %v4429
    %v5648 = vunpack.c.h.b16 %v4429
    %v5649 = vunpack.c.l.b16 %v4430
    %v5650 = vunpack.c.h.b16 %v4430
    %v5651 = vunpack.c.l.b16 %v4431
    %v5652 = vunpack.c.h.b16 %v4431
    %v5653 = vunpack.c.l.b16 %v4432
    %v5654 = vunpack.c.h.b16 %v4432
    %v5655 = vunpack.c.l.b16 %v4433
    %v5656 = vunpack.c.h.b16 %v4433
    %v5657 = vunpack.c.l.b16 %v4434
    %v5658 = vunpack.c.h.b16 %v4434
    %v5659 = vunpack.c.l.b16 %v4435
    %v5660 = vunpack.c.h.b16 %v4435
    %v5661 = vunpack.c.l.b16 %v4436
    %v5662 = vunpack.c.h.b16 %v4436
    %v5663 = vunpack.c.l.b16 %v4437
    %v5664 = vunpack.c.h.b16 %v4437
    %v5665 = vunpack.c.l.b16 %v4438
    %v5666 = vunpack.c.h.b16 %v4438
    %v5667 = vunpack.c.l.b16 %v4439
    %v5668 = vunpack.c.h.b16 %v4439
    %v5669 = vunpack.c.l.b16 %v4440
    %v5670 = vunpack.c.h.b16 %v4440
    %v5671 = vunpack.c.l.b16 %v4441
    %v5672 = vunpack.c.h.b16 %v4441
    %v5673 = vunpack.c.l.b16 %v4442
    %v5674 = vunpack.c.h.b16 %v4442
    %v5675 = vunpack.c.l.b16 %v4443
    %v5676 = vunpack.c.h.b16 %v4443
    %v5677 = vunpack.c.l.b16 %v4444
    %v5678 = vunpack.c.h.b16 %v4444
    %v5679 = vunpack.c.l.b16 %v4445
    %v5680 = vunpack.c.h.b16 %v4445
    %v5681 = vunpack.c.l.b16 %v4446
    %v5682 = vunpack.c.h.b16 %v4446
    %v5683 = vunpack.c.l.b16 %v4447
    %v5684 = vunpack.c.h.b16 %v4447
    %v5685 = vunpack.c.l.b16 %v4448
    %v5686 = vunpack.c.h.b16 %v4448
    %v5687 = vunpack.c.l.b16 %v4449
    %v5688 = vunpack.c.h.b16 %v4449
    %v5689 = vunpack.c.l.b16 %v4450
    %v5690 = vunpack.c.h.b16 %v4450
    %v5691 = vunpack.c.l.b16 %v4451
    %v5692 = vunpack.c.h.b16 %v4451
    %v5693 = vunpack.c.l.b16 %v4452
    %v5694 = vunpack.c.h.b16 %v4452
    %v5695 = vunpack.c.l.b16 %v4453
    %v5696 = vunpack.c.h.b16 %v4453
    %v5697 = vunpack.c.l.b16 %v4454
    %v5698 = vunpack.c.h.b16 %v4454
    %v5699 = vunpack.c.l.b16 %v4455
    %v5700 = vunpack.c.h.b16 %v4455
    %v5701 = vunpack.c.l.b16 %v4456
    %v5702 = vunpack.c.h.b16 %v4456
    %v5703 = vunpack.c.l.b16 %v4457
    %v5704 = vunpack.c.h.b16 %v4457
    %v5705 = vunpack.c.l.b16 %v4458
    %v5706 = vunpack.c.h.b16 %v4458
    %v5707 = vunpack.c.l.b16 %v4459
    %v5708 = vunpack.c.h.b16 %v4459
    %v5709 = vunpack.c.l.b16 %v4460
    %v5710 = vunpack.c.h.b16 %v4460
    %v5711 = vunpack.c.l.b16 %v4461
    %v5712 = vunpack.c.h.b16 %v4461
    %v5713 = vunpack.c.l.b16 %v4462
    %v5714 = vunpack.c.h.b16 %v4462
    %v5715 = vunpack.c.l.b16 %v4463
    %v5716 = vunpack.c.h.b16 %v4463
    %v5717 = vunpack.c.l.b16 %v4464
    %v5718 = vunpack.c.h.b16 %v4464
    %v5719 = vunpack.c.l.b16 %v4465
    %v5720 = vunpack.c.h.b16 %v4465
    %v5721 = vunpack.c.l.b16 %v4466
    %v5722 = vunpack.c.h.b16 %v4466
    %v5723 = vunpack.c.l.b16 %v4467
    %v5724 = vunpack.c.h.b16 %v4467
    %v5725 = vunpack.c.l.b16 %v4468
    %v5726 = vunpack.c.h.b16 %v4468
    %v5727 = vunpack.c.l.b16 %v4469
    %v5728 = vunpack.c.h.b16 %v4469
    %v5729 = vunpack.c.l.b16 %v4470
    %v5730 = vunpack.c.h.b16 %v4470
    %v5731 = vunpack.c.l.b16 %v4471
    %v5732 = vunpack.c.h.b16 %v4471
    %v5733 = vunpack.c.l.b16 %v4472
    %v5734 = vunpack.c.h.b16 %v4472
    %v5735 = vunpack.c.l.b16 %v4473
    %v5736 = vunpack.c.h.b16 %v4473
    %v5737 = vunpack.c.l.b16 %v4474
    %v5738 = vunpack.c.h.b16 %v4474
    %v5739 = vunpack.c.l.b16 %v4475
    %v5740 = vunpack.c.h.b16 %v4475
    %v5741 = vunpack.c.l.b16 %v4476
    %v5742 = vunpack.c.h.b16 %v4476
    %v5743 = vunpack.c.l.b16 %v4477
    %v5744 = vunpack.c.h.b16 %v4477
    %v5745 = vunpack.c.l.b16 %v4478
    %v5746 = vunpack.c.h.b16 %v4478
    %v5747 = vunpack.c.l.b16 %v4479
    %v5748 = vunpack.c.h.b16 %v4479
    %v5749 = vunpack.c.l.b16 %v4480
    %v5750 = vunpack.c.h.b16 %v4480
    %v5751 = vunpack.c.l.b16 %v4481
    %v5752 = vunpack.c.h.b16 %v4481
    %v5753 = vunpack.c.l.b16 %v4482
    %v5754 = vunpack.c.h.b16 %v4482
    %v5755 = vunpack.c.l.b16 %v4483
    %v5756 = vunpack.c.h.b16 %v4483
    %v5757 = vunpack.c.l.b16 %v4484
    %v5758 = vunpack.c.h.b16 %v4484
    %v5759 = vunpack.c.l.b16 %v4485
    %v5760 = vunpack.c.h.b16 %v4485
    %v5761 = vunpack.c.l.b16 %v4486
    %v5762 = vunpack.c.h.b16 %v4486
    %v5763 = vunpack.c.l.b16 %v4487
    %v5764 = vunpack.c.h.b16 %v4487
    %v5765 = vunpack.c.l.b16 %v4488
    %v5766 = vunpack.c.h.b16 %v4488
    %v5767 = vunpack.c.l.b16 %v4489
    %v5768 = vunpack.c.h.b16 %v4489
    %v5769 = vunpack.c.l.b16 %v4490
    %v5770 = vunpack.c.h.b16 %v4490
    %v5771 = vunpack.c.l.b16 %v4491
    %v5772 = vunpack.c.h.b16 %v4491
    %v5773 = vunpack.c.l.b16 %v4492
    %v5774 = vunpack.c.h.b16 %v4492
    %v5775 = vunpack.c.l.b16 %v4493
    %v5776 = vunpack.c.h.b16 %v4493
    %v5777 = vunpack.c.l.b16 %v4494
    %v5778 = vunpack.c.h.b16 %v4494
    %v5779 = vunpack.c.l.b16 %v4495
    %v5780 = vunpack.c.h.b16 %v4495
    %v5781 = vunpack.c.l.b16 %v4496
    %v5782 = vunpack.c.h.b16 %v4496
    %v5783 = vunpack.c.l.b16 %v4497
    %v5784 = vunpack.c.h.b16 %v4497
    %v5785 = vunpack.c.l.b16 %v4498
    %v5786 = vunpack.c.h.b16 %v4498
    %v5787 = vunpack.c.l.b16 %v4499
    %v5788 = vunpack.c.h.b16 %v4499
    %v5789 = vunpack.c.l.b16 %v4500
    %v5790 = vunpack.c.h.b16 %v4500
    %v5791 = vunpack.c.l.b16 %v4501
    %v5792 = vunpack.c.h.b16 %v4501
    %v5793 = vunpack.c.l.b16 %v4502
    %v5794 = vunpack.c.h.b16 %v4502
    %v5795 = vunpack.c.l.b16 %v4503
    %v5796 = vunpack.c.h.b16 %v4503
    %v5797 = vunpack.c.l.b16 %v4504
    %v5798 = vunpack.c.h.b16 %v4504
    %v5799 = vunpack.c.l.b16 %v4505
    %v5800 = vunpack.c.h.b16 %v4505
    %v5801 = vunpack.c.l.b16 %v4506
    %v5802 = vunpack.c.h.b16 %v4506
    %v5803 = vunpack.c.l.b16 %v4507
    %v5804 = vunpack.c.h.b16 %v4507
    %v5805 = vunpack.c.l.b16 %v4508
    %v5806 = vunpack.c.h.b16 %v4508
    %v5807 = vunpack.c.l.b16 %v4509
    %v5808 = vunpack.c.h.b16 %v4509
    %v5809 = vunpack.c.l.b16 %v4510
    %v5810 = vunpack.c.h.b16 %v4510
    %v5811 = vunpack.c.l.b16 %v4511
    %v5812 = vunpack.c.h.b16 %v4511
    %v5813 = vunpack.c.l.b16 %v4512
    %v5814 = vunpack.c.h.b16 %v4512
    %v5815 = vunpack.c.l.b16 %v4513
    %v5816 = vunpack.c.h.b16 %v4513
    %v5817 = vunpack.c.l.b16 %v4514
    %v5818 = vunpack.c.h.b16 %v4514
    %v5819 = vunpack.c.l.b16 %v4515
    %v5820 = vunpack.c.h.b16 %v4515
    %v5821 = vunpack.c.l.b16 %v4516
    %v5822 = vunpack.c.h.b16 %v4516
    %v5823 = vunpack.c.l.b16 %v4517
    %v5824 = vunpack.c.h.b16 %v4517
    %v5825 = vunpack.c.l.b16 %v4518
    %v5826 = vunpack.c.h.b16 %v4518
    %v5827 = vunpack.c.l.b16 %v4519
    %v5828 = vunpack.c.h.b16 %v4519
    %v5829 = vunpack.c.l.b16 %v4520
    %v5830 = vunpack.c.h.b16 %v4520
    %v5831 = vunpack.c.l.b16 %v4521
    %v5832 = vunpack.c.h.b16 %v4521
    %v5833 = vunpack.c.l.b16 %v4522
    %v5834 = vunpack.c.h.b16 %v4522
    %v5835 = vunpack.c.l.b16 %v4523
    %v5836 = vunpack.c.h.b16 %v4523
    %v5837 = vunpack.c.l.b16 %v4524
    %v5838 = vunpack.c.h.b16 %v4524
    %v5839 = vunpack.c.l.b16 %v4525
    %v5840 = vunpack.c.h.b16 %v4525
    %v5841 = vunpack.c.l.b16 %v4526
    %v5842 = vunpack.c.h.b16 %v4526
    %v5843 = vunpack.c.l.b16 %v4527
    %v5844 = vunpack.c.h.b16 %v4527
    %v5845 = vunpack.c.l.b16 %v4528
    %v5846 = vunpack.c.h.b16 %v4528
    %v5847 = vunpack.c.l.b16 %v4529
    %v5848 = vunpack.c.h.b16 %v4529
    %v5849 = vunpack.c.l.b16 %v4530
    %v5850 = vunpack.c.h.b16 %v4530
    %v5851 = vunpack.c.l.b16 %v4531
    %v5852 = vunpack.c.h.b16 %v4531
    %v5853 = vunpack.c.l.b16 %v4532
    %v5854 = vunpack.c.h.b16 %v4532
    %v5855 = vunpack.c.l.b16 %v4533
    %v5856 = vunpack.c.h.b16 %v4533
    %v5857 = vunpack.c.l.b16 %v4534
    %v5858 = vunpack.c.h.b16 %v4534
    %v5859 = vunpack.c.l.b16 %v4535
    %v5860 = vunpack.c.h.b16 %v4535
    %v5861 = vunpack.c.l.b16 %v4536
    %v5862 = vunpack.c.h.b16 %v4536
    %v5863 = vunpack.c.l.b16 %v4537
    %v5864 = vunpack.c.h.b16 %v4537
    %v5865 = vunpack.c.l.b16 %v4538
    %v5866 = vunpack.c.h.b16 %v4538
    %v5867 = vunpack.c.l.b16 %v4539
    %v5868 = vunpack.c.h.b16 %v4539
    %v5869 = vunpack.c.l.b16 %v4540
    %v5870 = vunpack.c.h.b16 %v4540
    %v5871 = vunpack.c.l.b16 %v4541
    %v5872 = vunpack.c.h.b16 %v4541
    %v5873 = vunpack.c.l.b16 %v4542
    %v5874 = vunpack.c.h.b16 %v4542
    %v5875 = vunpack.c.l.b16 %v4543
    %v5876 = vunpack.c.h.b16 %v4543
    %v5877 = vunpack.c.l.b16 %v4544
    %v5878 = vunpack.c.h.b16 %v4544
    %v5879 = vunpack.c.l.b16 %v4545
    %v5880 = vunpack.c.h.b16 %v4545
    %v5881 = vunpack.c.l.b16 %v4546
    %v5882 = vunpack.c.h.b16 %v4546
    %v5883 = vunpack.c.l.b16 %v4547
    %v5884 = vunpack.c.h.b16 %v4547
    %v5885 = vunpack.c.l.b16 %v4548
    %v5886 = vunpack.c.h.b16 %v4548
    %v5887 = vunpack.c.l.b16 %v4549
    %v5888 = vunpack.c.h.b16 %v4549
    %v5889 = vunpack.c.l.b16 %v4550
    %v5890 = vunpack.c.h.b16 %v4550
    %v5891 = vunpack.c.l.b16 %v4551
    %v5892 = vunpack.c.h.b16 %v4551
    %v5893 = vunpack.c.l.b16 %v4552
    %v5894 = vunpack.c.h.b16 %v4552
    %v5895 = vunpack.c.l.b16 %v4553
    %v5896 = vunpack.c.h.b16 %v4553
    %v5897 = vunpack.c.l.b16 %v4554
    %v5898 = vunpack.c.h.b16 %v4554
    %v5899 = vunpack.c.l.b16 %v4555
    %v5900 = vunpack.c.h.b16 %v4555
    %v5901 = vunpack.c.l.b16 %v4556
    %v5902 = vunpack.c.h.b16 %v4556
    %v5903 = vunpack.c.l.b16 %v4557
    %v5904 = vunpack.c.h.b16 %v4557
    %v5905 = vunpack.c.l.b16 %v4558
    %v5906 = vunpack.c.h.b16 %v4558
    %v5907 = vunpack.c.l.b16 %v4559
    %v5908 = vunpack.c.h.b16 %v4559
    %v5909 = vunpack.c.l.b16 %v4560
    %v5910 = vunpack.c.h.b16 %v4560
    %v5911 = vunpack.c.l.b16 %v4561
    %v5912 = vunpack.c.h.b16 %v4561
    %v5913 = vunpack.c.l.b16 %v4562
    %v5914 = vunpack.c.h.b16 %v4562
    %v5915 = vunpack.c.l.b16 %v4563
    %v5916 = vunpack.c.h.b16 %v4563
    %v5917 = vunpack.c.l.b16 %v4564
    %v5918 = vunpack.c.h.b16 %v4564
    %v5919 = vunpack.c.l.b16 %v4565
    %v5920 = vunpack.c.h.b16 %v4565
    %v5921 = vunpack.c.l.b16 %v4566
    %v5922 = vunpack.c.h.b16 %v4566
    %v5923 = vunpack.c.l.b16 %v4567
    %v5924 = vunpack.c.h.b16 %v4567
    %v5925 = vunpack.c.l.b16 %v4568
    %v5926 = vunpack.c.h.b16 %v4568
    %v5927 = vunpack.c.l.b16 %v4569
    %v5928 = vunpack.c.h.b16 %v4569
    %v5929 = vunpack.c.l.b16 %v4570
    %v5930 = vunpack.c.h.b16 %v4570
    %v5931 = vunpack.c.l.b16 %v4571
    %v5932 = vunpack.c.h.b16 %v4571
    %v5933 = vunpack.c.l.b16 %v4572
    %v5934 = vunpack.c.h.b16 %v4572
    %v5935 = vunpack.c.l.b16 %v4573
    %v5936 = vunpack.c.h.b16 %v4573
    %v5937 = vunpack.c.l.b16 %v4574
    %v5938 = vunpack.c.h.b16 %v4574
    %v5939 = vunpack.c.l.b16 %v4575
    %v5940 = vunpack.c.h.b16 %v4575
    %v5941 = vunpack.c.l.b16 %v4576
    %v5942 = vunpack.c.h.b16 %v4576
    %v5943 = vunpack.c.l.b16 %v4577
    %v5944 = vunpack.c.h.b16 %v4577
    %v5945 = vunpack.c.l.b16 %v4578
    %v5946 = vunpack.c.h.b16 %v4578
    %v5947 = vunpack.c.l.b16 %v4579
    %v5948 = vunpack.c.h.b16 %v4579
    %v5949 = vunpack.c.l.b16 %v4580
    %v5950 = vunpack.c.h.b16 %v4580
    %v5951 = vunpack.c.l.b16 %v4581
    %v5952 = vunpack.c.h.b16 %v4581
    %v5953 = vunpack.c.l.b16 %v4582
    %v5954 = vunpack.c.h.b16 %v4582
    %v5955 = vunpack.c.l.b16 %v4583
    %v5956 = vunpack.c.h.b16 %v4583
    %v5957 = vunpack.c.l.b16 %v4584
    %v5958 = vunpack.c.h.b16 %v4584
    %v5959 = vunpack.c.l.b16 %v4585
    %v5960 = vunpack.c.h.b16 %v4585
    %v5961 = vunpack.c.l.b16 %v4586
    %v5962 = vunpack.c.h.b16 %v4586
    %v5963 = vunpack.c.l.b16 %v4587
    %v5964 = vunpack.c.h.b16 %v4587
    %v5965 = vunpack.c.l.b16 %v4588
    %v5966 = vunpack.c.h.b16 %v4588
    %v5967 = vunpack.c.l.b16 %v4589
    %v5968 = vunpack.c.h.b16 %v4589
    %v5969 = vunpack.c.l.b16 %v4590
    %v5970 = vunpack.c.h.b16 %v4590
    %v5971 = vunpack.c.l.b16 %v4591
    %v5972 = vunpack.c.h.b16 %v4591
    %v5973 = vunpack.c.l.b16 %v4592
    %v5974 = vunpack.c.h.b16 %v4592
    %v5975 = vunpack.c.l.b16 %v4593
    %v5976 = vunpack.c.h.b16 %v4593
    %v5977 = vunpack.c.l.b16 %v4594
    %v5978 = vunpack.c.h.b16 %v4594
    %v5979 = vunpack.c.l.b16 %v4595
    %v5980 = vunpack.c.h.b16 %v4595
    %v5981 = vunpack.c.l.b16 %v4596
    %v5982 = vunpack.c.h.b16 %v4596
    %v5983 = vunpack.c.l.b16 %v4597
    %v5984 = vunpack.c.h.b16 %v4597
    %v5985 = vunpack.c.l.b16 %v4598
    %v5986 = vunpack.c.h.b16 %v4598
    %v5987 = vunpack.c.l.b16 %v4599
    %v5988 = vunpack.c.h.b16 %v4599
    %v5989 = vunpack.c.l.b16 %v4600
    %v5990 = vunpack.c.h.b16 %v4600
    %v5991 = vunpack.c.l.b16 %v4601
    %v5992 = vunpack.c.h.b16 %v4601
    %v5993 = vunpack.c.l.b16 %v4602
    %v5994 = vunpack.c.h.b16 %v4602
    %v5995 = vunpack.c.l.b16 %v4603
    %v5996 = vunpack.c.h.b16 %v4603
    %v5997 = vunpack.c.l.b16 %v4604
    %v5998 = vunpack.c.h.b16 %v4604
    %v5999 = vunpack.c.l.b16 %v4605
    %v6000 = vunpack.c.h.b16 %v4605
    %v6001 = vunpack.c.l.b16 %v4606
    %v6002 = vunpack.c.h.b16 %v4606
    %v6003 = vunpack.c.l.b16 %v4607
    %v6004 = vunpack.c.h.b16 %v4607
    %v6005 = vunpack.c.l.b16 %v4608
    %v6006 = vunpack.c.h.b16 %v4608
    %v6007 = vunpack.c.l.b16 %v4609
    %v6008 = vunpack.c.h.b16 %v4609
    %v6009 = vunpack.c.l.b16 %v4610
    %v6010 = vunpack.c.h.b16 %v4610
    %v6011 = vunpack.c.l.b16 %v4611
    %v6012 = vunpack.c.h.b16 %v4611
    %v6013 = vunpack.c.l.b16 %v4612
    %v6014 = vunpack.c.h.b16 %v4612
    %v6015 = vunpack.c.l.b16 %v4613
    %v6016 = vunpack.c.h.b16 %v4613
    %v6017 = vunpack.c.l.b16 %v4614
    %v6018 = vunpack.c.h.b16 %v4614
    %v6019 = vunpack.c.l.b16 %v4615
    %v6020 = vunpack.c.h.b16 %v4615
    %v6021 = vunpack.c.l.b16 %v4616
    %v6022 = vunpack.c.h.b16 %v4616
    %v6023 = vunpack.c.l.b16 %v4617
    %v6024 = vunpack.c.h.b16 %v4617
    %v6025 = vunpack.c.l.b16 %v4618
    %v6026 = vunpack.c.h.b16 %v4618
    %v6027 = vunpack.c.l.b16 %v4619
    %v6028 = vunpack.c.h.b16 %v4619
    %v6029 = vunpack.c.l.b16 %v4620
    %v6030 = vunpack.c.h.b16 %v4620
    %v6031 = vunpack.c.l.b16 %v4621
    %v6032 = vunpack.c.h.b16 %v4621
    %v6033 = vunpack.c.l.b16 %v4622
    %v6034 = vunpack.c.h.b16 %v4622
    %v6035 = vunpack.c.l.b16 %v4623
    %v6036 = vunpack.c.h.b16 %v4623
    %v6037 = vunpack.c.l.b16 %v4624
    %v6038 = vunpack.c.h.b16 %v4624
    %v6039 = vunpack.c.l.b16 %v4625
    %v6040 = vunpack.c.h.b16 %v4625
    %v6041 = vunpack.c.l.b16 %v4626
    %v6042 = vunpack.c.h.b16 %v4626
    %v6043 = vunpack.c.l.b16 %v4627
    %v6044 = vunpack.c.h.b16 %v4627
    %v6045 = vunpack.c.l.b16 %v4628
    %v6046 = vunpack.c.h.b16 %v4628
    %v6047 = vunpack.c.l.b16 %v4629
    %v6048 = vunpack.c.h.b16 %v4629
    %v6049 = vunpack.c.l.b16 %v4630
    %v6050 = vunpack.c.h.b16 %v4630
    %v6051 = vunpack.c.l.b16 %v4631
    %v6052 = vunpack.c.h.b16 %v4631
    %v6053 = vunpack.c.l.b16 %v4632
    %v6054 = vunpack.c.h.b16 %v4632
    %v6055 = vunpack.c.l.b16 %v4633
    %v6056 = vunpack.c.h.b16 %v4633
    %v6057 = vunpack.c.l.b16 %v4634
    %v6058 = vunpack.c.h.b16 %v4634
    %v6059 = vunpack.c.l.b16 %v4635
    %v6060 = vunpack.c.h.b16 %v4635
    %v6061 = vunpack.c.l.b16 %v4636
    %v6062 = vunpack.c.h.b16 %v4636
    %v6063 = vunpack.c.l.b16 %v4637
    %v6064 = vunpack.c.h.b16 %v4637
    %v6065 = vunpack.c.l.b16 %v4638
    %v6066 = vunpack.c.h.b16 %v4638
    %v6067 = vunpack.c.l.b16 %v4639
    %v6068 = vunpack.c.h.b16 %v4639
    %v6069 = vunpack.c.l.b16 %v4640
    %v6070 = vunpack.c.h.b16 %v4640
    %v6071 = vunpack.c.l.b16 %v4641
    %v6072 = vunpack.c.h.b16 %v4641
    %v6073 = vunpack.c.l.b16 %v4642
    %v6074 = vunpack.c.h.b16 %v4642
    %v6075 = vunpack.c.l.b16 %v4643
    %v6076 = vunpack.c.h.b16 %v4643
    %v6077 = vunpack.c.l.b16 %v4644
    %v6078 = vunpack.c.h.b16 %v4644
    %v6079 = vunpack.c.l.b16 %v4645
    %v6080 = vunpack.c.h.b16 %v4645
    %v6081 = vunpack.c.l.b16 %v4646
    %v6082 = vunpack.c.h.b16 %v4646
    %v6083 = vunpack.c.l.b16 %v4647
    %v6084 = vunpack.c.h.b16 %v4647
    %v6085 = vunpack.c.l.b16 %v4648
    %v6086 = vunpack.c.h.b16 %v4648
    %v6087 = vunpack.c.l.b16 %v4649
    %v6088 = vunpack.c.h.b16 %v4649
    %v6089 = vunpack.c.l.b16 %v4650
    %v6090 = vunpack.c.h.b16 %v4650
    %v6091 = vunpack.c.l.b16 %v4651
    %v6092 = vunpack.c.h.b16 %v4651
    %v6093 = vunpack.c.l.b16 %v4652
    %v6094 = vunpack.c.h.b16 %v4652
    %v6095 = vunpack.c.l.b16 %v4653
    %v6096 = vunpack.c.h.b16 %v4653
    %v6097 = vunpack.c.l.b16 %v4654
    %v6098 = vunpack.c.h.b16 %v4654
    %v6099 = vunpack.c.l.b16 %v4655
    %v6100 = vunpack.c.h.b16 %v4655
    %v6101 = vunpack.c.l.b16 %v4656
    %v6102 = vunpack.c.h.b16 %v4656
    %v6103 = vunpack.c.l.b16 %v4657
    %v6104 = vunpack.c.h.b16 %v4657
    %v6105 = vunpack.c.l.b16 %v4658
    %v6106 = vunpack.c.h.b16 %v4658
    %v6107 = vunpack.c.l.b16 %v4659
    %v6108 = vunpack.c.h.b16 %v4659
    %v6109 = vunpack.c.l.b16 %v4660
    %v6110 = vunpack.c.h.b16 %v4660
    %v6111 = vunpack.c.l.b16 %v4661
    %v6112 = vunpack.c.h.b16 %v4661
    %v6113 = vunpack.c.l.b16 %v4662
    %v6114 = vunpack.c.h.b16 %v4662
    %v6115 = vunpack.c.l.b16 %v4663
    %v6116 = vunpack.c.h.b16 %v4663
    %v6117 = vunpack.c.l.b16 %v4664
    %v6118 = vunpack.c.h.b16 %v4664
    %v6119 = vunpack.c.l.b16 %v4665
    %v6120 = vunpack.c.h.b16 %v4665
    %v6121 = vunpack.c.l.b16 %v4666
    %v6122 = vunpack.c.h.b16 %v4666
    %v6123 = vunpack.c.l.b16 %v4667
    %v6124 = vunpack.c.h.b16 %v4667
    %v6125 = vunpack.c.l.b16 %v4668
    %v6126 = vunpack.c.h.b16 %v4668
    %v6127 = vunpack.c.l.b16 %v4669
    %v6128 = vunpack.c.h.b16 %v4669
    %v6129 = vunpack.c.l.b16 %v4670
    %v6130 = vunpack.c.h.b16 %v4670
    %v6131 = vunpack.c.l.b16 %v4671
    %v6132 = vunpack.c.h.b16 %v4671
    %v6133 = vunpack.c.l.b16 %v4672
    %v6134 = vunpack.c.h.b16 %v4672
    %v6135 = vunpack.c.l.b16 %v4673
    %v6136 = vunpack.c.h.b16 %v4673
    %v6137 = vunpack.c.l.b16 %v4674
    %v6138 = vunpack.c.h.b16 %v4674
    %v6139 = vunpack.c.l.b16 %v4675
    %v6140 = vunpack.c.h.b16 %v4675
    %v6141 = vunpack.c.l.b16 %v4676
    %v6142 = vunpack.c.h.b16 %v4676
    %v6143 = vunpack.c.l.b16 %v4677
    %v6144 = vunpack.c.h.b16 %v4677
    %v6145 = vunpack.c.l.b16 %v4678
    %v6146 = vunpack.c.h.b16 %v4678
    %v6147 = vunpack.c.l.b16 %v4679
    %v6148 = vunpack.c.h.b16 %v4679
    %v6149 = vunpack.c.l.b16 %v4680
    %v6150 = vunpack.c.h.b16 %v4680
    %v6151 = vunpack.c.l.b16 %v4681
    %v6152 = vunpack.c.h.b16 %v4681
    %v6153 = vunpack.c.l.b16 %v4682
    %v6154 = vunpack.c.h.b16 %v4682
    %v6155 = vunpack.c.l.b16 %v4683
    %v6156 = vunpack.c.h.b16 %v4683
    %v6157 = vunpack.c.l.b16 %v4684
    %v6158 = vunpack.c.h.b16 %v4684
    %v6159 = vunpack.c.l.b16 %v4685
    %v6160 = vunpack.c.h.b16 %v4685
    %v6161 = vunpack.c.l.b16 %v4686
    %v6162 = vunpack.c.h.b16 %v4686
    %v6163 = vunpack.c.l.b16 %v4687
    %v6164 = vunpack.c.h.b16 %v4687
    %v6165 = vunpack.c.l.b16 %v4688
    %v6166 = vunpack.c.h.b16 %v4688
    %v6167 = vunpack.c.l.b16 %v4689
    %v6168 = vunpack.c.h.b16 %v4689
    %v6169 = vunpack.c.l.b16 %v4690
    %v6170 = vunpack.c.h.b16 %v4690
    %v6171 = vunpack.c.l.b16 %v4691
    %v6172 = vunpack.c.h.b16 %v4691
    %v6173 = vunpack.c.l.b16 %v4692
    %v6174 = vunpack.c.h.b16 %v4692
    %v6175 = vunpack.c.l.b16 %v4693
    %v6176 = vunpack.c.h.b16 %v4693
    %v6177 = vunpack.c.l.b16 %v4694
    %v6178 = vunpack.c.h.b16 %v4694
    %v6179 = vunpack.c.l.b16 %v4695
    %v6180 = vunpack.c.h.b16 %v4695
    %v6181 = vunpack.c.l.b16 %v4696
    %v6182 = vunpack.c.h.b16 %v4696
    %v6183 = vunpack.c.l.b16 %v4697
    %v6184 = vunpack.c.h.b16 %v4697
    %v6185 = vunpack.c.l.b16 %v4698
    %v6186 = vunpack.c.h.b16 %v4698
    %v6187 = vunpack.c.l.b16 %v4699
    %v6188 = vunpack.c.h.b16 %v4699
    %v6189 = vunpack.c.l.b16 %v4700
    %v6190 = vunpack.c.h.b16 %v4700
    %v6191 = vunpack.c.l.b16 %v4701
    %v6192 = vunpack.c.h.b16 %v4701
    %v6193 = vunpack.c.l.b16 %v4702
    %v6194 = vunpack.c.h.b16 %v4702
    %v6195 = vunpack.c.l.b16 %v4703
    %v6196 = vunpack.c.h.b16 %v4703
    %v6197 = vunpack.c.l.b16 %v4704
    %v6198 = vunpack.c.h.b16 %v4704
    %v6199 = vunpack.c.l.b16 %v4705
    %v6200 = vunpack.c.h.b16 %v4705
    %v6201 = vunpack.c.l.b16 %v4706
    %v6202 = vunpack.c.h.b16 %v4706
    %v6203 = vunpack.c.l.b16 %v4707
    %v6204 = vunpack.c.h.b16 %v4707
    %v6205 = vunpack.c.l.b16 %v4708
    %v6206 = vunpack.c.h.b16 %v4708
    %v6207 = vunpack.c.l.b16 %v4709
    %v6208 = vunpack.c.h.b16 %v4709
    %v6209 = vunpack.c.l.b16 %v4710
    %v6210 = vunpack.c.h.b16 %v4710
    %v6211 = vunpack.c.l.b16 %v4711
    %v6212 = vunpack.c.h.b16 %v4711
    %v6213 = vunpack.c.l.b16 %v4712
    %v6214 = vunpack.c.h.b16 %v4712
    %v6215 = vunpack.c.l.b16 %v4713
    %v6216 = vunpack.c.h.b16 %v4713
    %v6217 = vunpack.c.l.b16 %v4714
    %v6218 = vunpack.c.h.b16 %v4714
    %v6219 = vunpack.c.l.b16 %v4715
    %v6220 = vunpack.c.h.b16 %v4715
    %v6221 = vunpack.c.l.b16 %v4716
    %v6222 = vunpack.c.h.b16 %v4716
    %v6223 = vunpack.c.l.b16 %v4717
    %v6224 = vunpack.c.h.b16 %v4717
    %v6225 = vunpack.c.l.b16 %v4718
    %v6226 = vunpack.c.h.b16 %v4718
    %v6227 = vunpack.c.l.b16 %v4719
    %v6228 = vunpack.c.h.b16 %v4719
    %v6229 = vunpack.c.l.b16 %v4720
    %v6230 = vunpack.c.h.b16 %v4720
    %v6231 = vunpack.c.l.b16 %v4721
    %v6232 = vunpack.c.h.b16 %v4721
    %v6233 = vunpack.c.l.b16 %v4722
    %v6234 = vunpack.c.h.b16 %v4722
    %v6235 = vunpack.c.l.b16 %v4723
    %v6236 = vunpack.c.h.b16 %v4723
    %v6237 = vunpack.c.l.b16 %v4724
    %v6238 = vunpack.c.h.b16 %v4724
    %v6239 = vunpack.c.l.b16 %v4725
    %v6240 = vunpack.c.h.b16 %v4725
    %v6241 = vunpack.c.l.b16 %v4726
    %v6242 = vunpack.c.h.b16 %v4726
    %v6243 = vunpack.c.l.b16 %v4727
    %v6244 = vunpack.c.h.b16 %v4727
    %v6245 = vunpack.c.l.b16 %v4728
    %v6246 = vunpack.c.h.b16 %v4728
    %v6247 = vunpack.c.l.b16 %v4729
    %v6248 = vunpack.c.h.b16 %v4729
    %v6249 = vunpack.c.l.b16 %v4730
    %v6250 = vunpack.c.h.b16 %v4730
    %v6251 = vunpack.c.l.b16 %v4731
    %v6252 = vunpack.c.h.b16 %v4731
    %v6253 = vunpack.c.l.b16 %v4732
    %v6254 = vunpack.c.h.b16 %v4732
    %v6255 = vunpack.c.l.b16 %v4733
    %v6256 = vunpack.c.h.b16 %v4733
    %v6257 = vunpack.c.l.b16 %v4734
    %v6258 = vunpack.c.h.b16 %v4734
    %v6259 = vunpack.c.l.b16 %v4735
    %v6260 = vunpack.c.h.b16 %v4735
    %v6261 = vunpack.c.l.b16 %v4736
    %v6262 = vunpack.c.h.b16 %v4736
    %v6263 = vunpack.c.l.b16 %v4737
    %v6264 = vunpack.c.h.b16 %v4737
    %v6265 = vunpack.c.l.b16 %v4738
    %v6266 = vunpack.c.h.b16 %v4738
    %v6267 = vunpack.c.l.b16 %v4739
    %v6268 = vunpack.c.h.b16 %v4739
    %v6269 = vunpack.c.l.b16 %v4740
    %v6270 = vunpack.c.h.b16 %v4740
    %v6271 = vunpack.c.l.b16 %v4741
    %v6272 = vunpack.c.h.b16 %v4741
    %v6273 = vunpack.c.l.b16 %v4742
    %v6274 = vunpack.c.h.b16 %v4742
    %v6275 = vunpack.c.l.b16 %v4743
    %v6276 = vunpack.c.h.b16 %v4743
    %v6277 = vunpack.c.l.b16 %v4744
    %v6278 = vunpack.c.h.b16 %v4744
    %v6279 = vunpack.c.l.b16 %v4745
    %v6280 = vunpack.c.h.b16 %v4745
    %v6281 = vunpack.c.l.b16 %v4746
    %v6282 = vunpack.c.h.b16 %v4746
    %v6283 = vunpack.c.l.b16 %v4747
    %v6284 = vunpack.c.h.b16 %v4747
    %v6285 = vunpack.c.l.b16 %v4748
    %v6286 = vunpack.c.h.b16 %v4748
    %v6287 = vunpack.c.l.b16 %v4749
    %v6288 = vunpack.c.h.b16 %v4749
    %v6289 = vunpack.c.l.b16 %v4750
    %v6290 = vunpack.c.h.b16 %v4750
    %v6291 = vunpack.c.l.b16 %v4751
    %v6292 = vunpack.c.h.b16 %v4751
    %v6293 = vunpack.c.l.b16 %v4752
    %v6294 = vunpack.c.h.b16 %v4752
    %v6295 = vunpack.c.l.b16 %v4753
    %v6296 = vunpack.c.h.b16 %v4753
    %v6297 = vunpack.c.l.b16 %v4754
    %v6298 = vunpack.c.h.b16 %v4754
    %v6299 = vunpack.c.l.b16 %v4755
    %v6300 = vunpack.c.h.b16 %v4755
    %v6301 = vunpack.c.l.b16 %v4756
    %v6302 = vunpack.c.h.b16 %v4756
    %v6303 = vunpack.c.l.b16 %v4757
    %v6304 = vunpack.c.h.b16 %v4757
    %v6305 = vunpack.c.l.b16 %v4758
    %v6306 = vunpack.c.h.b16 %v4758
    %v6307 = vunpack.c.l.b16 %v4759
    %v6308 = vunpack.c.h.b16 %v4759
    %v6309 = vunpack.c.l.b16 %v4760
    %v6310 = vunpack.c.h.b16 %v4760
    %v6311 = vunpack.c.l.b16 %v4761
    %v6312 = vunpack.c.h.b16 %v4761
    %v6313 = vunpack.c.l.b16 %v4762
    %v6314 = vunpack.c.h.b16 %v4762
    %v6315 = vunpack.c.l.b16 %v4763
    %v6316 = vunpack.c.h.b16 %v4763
    %v6317 = vunpack.c.l.b16 %v4764
    %v6318 = vunpack.c.h.b16 %v4764
    %v6319 = vunpack.c.l.b16 %v4765
    %v6320 = vunpack.c.h.b16 %v4765
    %v6321 = vunpack.c.l.b16 %v4766
    %v6322 = vunpack.c.h.b16 %v4766
    %v6323 = vunpack.c.l.b16 %v4767
    %v6324 = vunpack.c.h.b16 %v4767
    %v6325 = vunpack.c.l.b16 %v4768
    %v6326 = vunpack.c.h.b16 %v4768
    %v6327 = vunpack.c.l.b16 %v4769
    %v6328 = vunpack.c.h.b16 %v4769
    %v6329 = vunpack.c.l.b16 %v4770
    %v6330 = vunpack.c.h.b16 %v4770
    %v6331 = vunpack.c.l.b16 %v4771
    %v6332 = vunpack.c.h.b16 %v4771
    %v6333 = vunpack.c.l.b16 %v4772
    %v6334 = vunpack.c.h.b16 %v4772
    %v6335 = vunpack.c.l.b16 %v4773
    %v6336 = vunpack.c.h.b16 %v4773
    %v6337 = vunpack.c.l.b16 %v4774
    %v6338 = vunpack.c.h.b16 %v4774
    %v6339 = vunpack.c.l.b16 %v4775
    %v6340 = vunpack.c.h.b16 %v4775
    %v6341 = vunpack.c.l.b16 %v4776
    %v6342 = vunpack.c.h.b16 %v4776
    %v6343 = vunpack.c.l.b16 %v4777
    %v6344 = vunpack.c.h.b16 %v4777
    %v6345 = vunpack.c.l.b16 %v4778
    %v6346 = vunpack.c.h.b16 %v4778
    %v6347 = vunpack.c.l.b16 %v4779
    %v6348 = vunpack.c.h.b16 %v4779
    %v6349 = vunpack.c.l.b16 %v4780
    %v6350 = vunpack.c.h.b16 %v4780
    %v6351 = vunpack.c.l.b16 %v4781
    %v6352 = vunpack.c.h.b16 %v4781
    %v6353 = vunpack.c.l.b16 %v4782
    %v6354 = vunpack.c.h.b16 %v4782
    %v6355 = vunpack.c.l.b16 %v4783
    %v6356 = vunpack.c.h.b16 %v4783
    %v6357 = vunpack.c.l.b16 %v4784
    %v6358 = vunpack.c.h.b16 %v4784
    %v6359 = vunpack.c.l.b16 %v4785
    %v6360 = vunpack.c.h.b16 %v4785
    %v6361 = vunpack.c.l.b16 %v4786
    %v6362 = vunpack.c.h.b16 %v4786
    %v6363 = vunpack.c.l.b16 %v4787
    %v6364 = vunpack.c.h.b16 %v4787
    %v6365 = vunpack.c.l.b16 %v4788
    %v6366 = vunpack.c.h.b16 %v4788
    %v6367 = vpack.c.b16 %v5351, %v5343
    %v6368 = vpack.c.b16 %v5352, %v5344
    %v6369 = vpack.c.b16 %v5353, %v5345
    %v6370 = vpack.c.b16 %v5354, %v5346
    %v6371 = vpack.c.b16 %v5355, %v5347
    %v6372 = vpack.c.b16 %v5356, %v5348
    %v6373 = vpack.c.b16 %v5357, %v5349
    %v6374 = vpack.c.b16 %v5358, %v5350
    %v6375 = vpack.c.b16 %v5367, %v5359
    %v6376 = vpack.c.b16 %v5368, %v5360
    %v6377 = vpack.c.b16 %v5369, %v5361
    %v6378 = vpack.c.b16 %v5370, %v5362
    %v6379 = vpack.c.b16 %v5371, %v5363
    %v6380 = vpack.c.b16 %v5372, %v5364
    %v6381 = vpack.c.b16 %v5373, %v5365
    %v6382 = vpack.c.b16 %v5374, %v5366
    %v6383 = vpack.c.b16 %v5383, %v5375
    %v6384 = vpack.c.b16 %v5384, %v5376
    %v6385 = vpack.c.b16 %v5385, %v5377
    %v6386 = vpack.c.b16 %v5386, %v5378
    %v6387 = vpack.c.b16 %v5387, %v5379
    %v6388 = vpack.c.b16 %v5388, %v5380
    %v6389 = vpack.c.b16 %v5389, %v5381
    %v6390 = vpack.c.b16 %v5390, %v5382
    %v6391 = vpack.c.b16 %v5399, %v5391
    %v6392 = vpack.c.b16 %v5400, %v5392
    %v6393 = vpack.c.b16 %v5401, %v5393
    %v6394 = vpack.c.b16 %v5402, %v5394
    %v6395 = vpack.c.b16 %v5403, %v5395
    %v6396 = vpack.c.b16 %v5404, %v5396
    %v6397 = vpack.c.b16 %v5405, %v5397
    %v6398 = vpack.c.b16 %v5406, %v5398
    %v6399 = vpack.c.b16 %v5415, %v5407
    %v6400 = vpack.c.b16 %v5416, %v5408
    %v6401 = vpack.c.b16 %v5417, %v5409
    %v6402 = vpack.c.b16 %v5418, %v5410
    %v6403 = vpack.c.b16 %v5419, %v5411
    %v6404 = vpack.c.b16 %v5420, %v5412
    %v6405 = vpack.c.b16 %v5421, %v5413
    %v6406 = vpack.c.b16 %v5422, %v5414
    %v6407 = vpack.c.b16 %v5431, %v5423
    %v6408 = vpack.c.b16 %v5432, %v5424
    %v6409 = vpack.c.b16 %v5433, %v5425
    %v6410 = vpack.c.b16 %v5434, %v5426
    %v6411 = vpack.c.b16 %v5435, %v5427
    %v6412 = vpack.c.b16 %v5436, %v5428
    %v6413 = vpack.c.b16 %v5437, %v5429
    %v6414 = vpack.c.b16 %v5438, %v5430
    %v6415 = vpack.c.b16 %v5447, %v5439
    %v6416 = vpack.c.b16 %v5448, %v5440
    %v6417 = vpack.c.b16 %v5449, %v5441
    %v6418 = vpack.c.b16 %v5450, %v5442
    %v6419 = vpack.c.b16 %v5451, %v5443
    %v6420 = vpack.c.b16 %v5452, %v5444
    %v6421 = vpack.c.b16 %v5453, %v5445
    %v6422 = vpack.c.b16 %v5454, %v5446
    %v6423 = vpack.c.b16 %v5463, %v5455
    %v6424 = vpack.c.b16 %v5464, %v5456
    %v6425 = vpack.c.b16 %v5465, %v5457
    %v6426 = vpack.c.b16 %v5466, %v5458
    %v6427 = vpack.c.b16 %v5467, %v5459
    %v6428 = vpack.c.b16 %v5468, %v5460
    %v6429 = vpack.c.b16 %v5469, %v5461
    %v6430 = vpack.c.b16 %v5470, %v5462
    %v6431 = vpack.c.b16 %v5479, %v5471
    %v6432 = vpack.c.b16 %v5480, %v5472
    %v6433 = vpack.c.b16 %v5481, %v5473
    %v6434 = vpack.c.b16 %v5482, %v5474
    %v6435 = vpack.c.b16 %v5483, %v5475
    %v6436 = vpack.c.b16 %v5484, %v5476
    %v6437 = vpack.c.b16 %v5485, %v5477
    %v6438 = vpack.c.b16 %v5486, %v5478
    %v6439 = vpack.c.b16 %v5495, %v5487
    %v6440 = vpack.c.b16 %v5496, %v5488
    %v6441 = vpack.c.b16 %v5497, %v5489
    %v6442 = vpack.c.b16 %v5498, %v5490
    %v6443 = vpack.c.b16 %v5499, %v5491
    %v6444 = vpack.c.b16 %v5500, %v5492
    %v6445 = vpack.c.b16 %v5501, %v5493
    %v6446 = vpack.c.b16 %v5502, %v5494
    %v6447 = vpack.c.b16 %v5511, %v5503
    %v6448 = vpack.c.b16 %v5512, %v5504
    %v6449 = vpack.c.b16 %v5513, %v5505
    %v6450 = vpack.c.b16 %v5514, %v5506
    %v6451 = vpack.c.b16 %v5515, %v5507
    %v6452 = vpack.c.b16 %v5516, %v5508
    %v6453 = vpack.c.b16 %v5517, %v5509
    %v6454 = vpack.c.b16 %v5518, %v5510
    %v6455 = vpack.c.b16 %v5527, %v5519
    %v6456 = vpack.c.b16 %v5528, %v5520
    %v6457 = vpack.c.b16 %v5529, %v5521
    %v6458 = vpack.c.b16 %v5530, %v5522
    %v6459 = vpack.c.b16 %v5531, %v5523
    %v6460 = vpack.c.b16 %v5532, %v5524
    %v6461 = vpack.c.b16 %v5533, %v5525
    %v6462 = vpack.c.b16 %v5534, %v5526
    %v6463 = vpack.c.b16 %v5543, %v5535
    %v6464 = vpack.c.b16 %v5544, %v5536
    %v6465 = vpack.c.b16 %v5545, %v5537
    %v6466 = vpack.c.b16 %v5546, %v5538
    %v6467 = vpack.c.b16 %v5547, %v5539
    %v6468 = vpack.c.b16 %v5548, %v5540
    %v6469 = vpack.c.b16 %v5549, %v5541
    %v6470 = vpack.c.b16 %v5550, %v5542
    %v6471 = vpack.c.b16 %v5559, %v5551
    %v6472 = vpack.c.b16 %v5560, %v5552
    %v6473 = vpack.c.b16 %v5561, %v5553
    %v6474 = vpack.c.b16 %v5562, %v5554
    %v6475 = vpack.c.b16 %v5563, %v5555
    %v6476 = vpack.c.b16 %v5564, %v5556
    %v6477 = vpack.c.b16 %v5565, %v5557
    %v6478 = vpack.c.b16 %v5566, %v5558
    %v6479 = vpack.c.b16 %v5575, %v5567
    %v6480 = vpack.c.b16 %v5576, %v5568
    %v6481 = vpack.c.b16 %v5577, %v5569
    %v6482 = vpack.c.b16 %v5578, %v5570
    %v6483 = vpack.c.b16 %v5579, %v5571
    %v6484 = vpack.c.b16 %v5580, %v5572
    %v6485 = vpack.c.b16 %v5581, %v5573
    %v6486 = vpack.c.b16 %v5582, %v5574
    %v6487 = vpack.c.b16 %v5591, %v5583
    %v6488 = vpack.c.b16 %v5592, %v5584
    %v6489 = vpack.c.b16 %v5593, %v5585
    %v6490 = vpack.c.b16 %v5594, %v5586
    %v6491 = vpack.c.b16 %v5595, %v5587
    %v6492 = vpack.c.b16 %v5596, %v5588
    %v6493 = vpack.c.b16 %v5597, %v5589
    %v6494 = vpack.c.b16 %v5598, %v5590
    %v6495 = vpack.c.b16 %v5607, %v5599
    %v6496 = vpack.c.b16 %v5608, %v5600
    %v6497 = vpack.c.b16 %v5609, %v5601
    %v6498 = vpack.c.b16 %v5610, %v5602
    %v6499 = vpack.c.b16 %v5611, %v5603
    %v6500 = vpack.c.b16 %v5612, %v5604
    %v6501 = vpack.c.b16 %v5613, %v5605
    %v6502 = vpack.c.b16 %v5614, %v5606
    %v6503 = vpack.c.b16 %v5623, %v5615
    %v6504 = vpack.c.b16 %v5624, %v5616
    %v6505 = vpack.c.b16 %v5625, %v5617
    %v6506 = vpack.c.b16 %v5626, %v5618
    %v6507 = vpack.c.b16 %v5627, %v5619
    %v6508 = vpack.c.b16 %v5628, %v5620
    %v6509 = vpack.c.b16 %v5629, %v5621
    %v6510 = vpack.c.b16 %v5630, %v5622
    %v6511 = vpack.c.b16 %v5639, %v5631
    %v6512 = vpack.c.b16 %v5640, %v5632
    %v6513 = vpack.c.b16 %v5641, %v5633
    %v6514 = vpack.c.b16 %v5642, %v5634
    %v6515 = vpack.c.b16 %v5643, %v5635
    %v6516 = vpack.c.b16 %v5644, %v5636
    %v6517 = vpack.c.b16 %v5645, %v5637
    %v6518 = vpack.c.b16 %v5646, %v5638
    %v6519 = vpack.c.b16 %v5655, %v5647
    %v6520 = vpack.c.b16 %v5656, %v5648
    %v6521 = vpack.c.b16 %v5657, %v5649
    %v6522 = vpack.c.b16 %v5658, %v5650
    %v6523 = vpack.c.b16 %v5659, %v5651
    %v6524 = vpack.c.b16 %v5660, %v5652
    %v6525 = vpack.c.b16 %v5661, %v5653
    %v6526 = vpack.c.b16 %v5662, %v5654
    %v6527 = vpack.c.b16 %v5671, %v5663
    %v6528 = vpack.c.b16 %v5672, %v5664
    %v6529 = vpack.c.b16 %v5673, %v5665
    %v6530 = vpack.c.b16 %v5674, %v5666
    %v6531 = vpack.c.b16 %v5675, %v5667
    %v6532 = vpack.c.b16 %v5676, %v5668
    %v6533 = vpack.c.b16 %v5677, %v5669
    %v6534 = vpack.c.b16 %v5678, %v5670
    %v6535 = vpack.c.b16 %v5687, %v5679
    %v6536 = vpack.c.b16 %v5688, %v5680
    %v6537 = vpack.c.b16 %v5689, %v5681
    %v6538 = vpack.c.b16 %v5690, %v5682
    %v6539 = vpack.c.b16 %v5691, %v5683
    %v6540 = vpack.c.b16 %v5692, %v5684
    %v6541 = vpack.c.b16 %v5693, %v5685
    %v6542 = vpack.c.b16 %v5694, %v5686
    %v6543 = vpack.c.b16 %v5703, %v5695
    %v6544 = vpack.c.b16 %v5704, %v5696
    %v6545 = vpack.c.b16 %v5705, %v5697
    %v6546 = vpack.c.b16 %v5706, %v5698
    %v6547 = vpack.c.b16 %v5707, %v5699
    %v6548 = vpack.c.b16 %v5708, %v5700
    %v6549 = vpack.c.b16 %v5709, %v5701
    %v6550 = vpack.c.b16 %v5710, %v5702
    %v6551 = vpack.c.b16 %v5719, %v5711
    %v6552 = vpack.c.b16 %v5720, %v5712
    %v6553 = vpack.c.b16 %v5721, %v5713
    %v6554 = vpack.c.b16 %v5722, %v5714
    %v6555 = vpack.c.b16 %v5723, %v5715
    %v6556 = vpack.c.b16 %v5724, %v5716
    %v6557 = vpack.c.b16 %v5725, %v5717
    %v6558 = vpack.c.b16 %v5726, %v5718
    %v6559 = vpack.c.b16 %v5735, %v5727
    %v6560 = vpack.c.b16 %v5736, %v5728
    %v6561 = vpack.c.b16 %v5737, %v5729
    %v6562 = vpack.c.b16 %v5738, %v5730
    %v6563 = vpack.c.b16 %v5739, %v5731
    %v6564 = vpack.c.b16 %v5740, %v5732
    %v6565 = vpack.c.b16 %v5741, %v5733
    %v6566 = vpack.c.b16 %v5742, %v5734
    %v6567 = vpack.c.b16 %v5751, %v5743
    %v6568 = vpack.c.b16 %v5752, %v5744
    %v6569 = vpack.c.b16 %v5753, %v5745
    %v6570 = vpack.c.b16 %v5754, %v5746
    %v6571 = vpack.c.b16 %v5755, %v5747
    %v6572 = vpack.c.b16 %v5756, %v5748
    %v6573 = vpack.c.b16 %v5757, %v5749
    %v6574 = vpack.c.b16 %v5758, %v5750
    %v6575 = vpack.c.b16 %v5767, %v5759
    %v6576 = vpack.c.b16 %v5768, %v5760
    %v6577 = vpack.c.b16 %v5769, %v5761
    %v6578 = vpack.c.b16 %v5770, %v5762
    %v6579 = vpack.c.b16 %v5771, %v5763
    %v6580 = vpack.c.b16 %v5772, %v5764
    %v6581 = vpack.c.b16 %v5773, %v5765
    %v6582 = vpack.c.b16 %v5774, %v5766
    %v6583 = vpack.c.b16 %v5783, %v5775
    %v6584 = vpack.c.b16 %v5784, %v5776
    %v6585 = vpack.c.b16 %v5785, %v5777
    %v6586 = vpack.c.b16 %v5786, %v5778
    %v6587 = vpack.c.b16 %v5787, %v5779
    %v6588 = vpack.c.b16 %v5788, %v5780
    %v6589 = vpack.c.b16 %v5789, %v5781
    %v6590 = vpack.c.b16 %v5790, %v5782
    %v6591 = vpack.c.b16 %v5799, %v5791
    %v6592 = vpack.c.b16 %v5800, %v5792
    %v6593 = vpack.c.b16 %v5801, %v5793
    %v6594 = vpack.c.b16 %v5802, %v5794
    %v6595 = vpack.c.b16 %v5803, %v5795
    %v6596 = vpack.c.b16 %v5804, %v5796
    %v6597 = vpack.c.b16 %v5805, %v5797
    %v6598 = vpack.c.b16 %v5806, %v5798
    %v6599 = vpack.c.b16 %v5815, %v5807
    %v6600 = vpack.c.b16 %v5816, %v5808
    %v6601 = vpack.c.b16 %v5817, %v5809
    %v6602 = vpack.c.b16 %v5818, %v5810
    %v6603 = vpack.c.b16 %v5819, %v5811
    %v6604 = vpack.c.b16 %v5820, %v5812
    %v6605 = vpack.c.b16 %v5821, %v5813
    %v6606 = vpack.c.b16 %v5822, %v5814
    %v6607 = vpack.c.b16 %v5831, %v5823
    %v6608 = vpack.c.b16 %v5832, %v5824
    %v6609 = vpack.c.b16 %v5833, %v5825
    %v6610 = vpack.c.b16 %v5834, %v5826
    %v6611 = vpack.c.b16 %v5835, %v5827
    %v6612 = vpack.c.b16 %v5836, %v5828
    %v6613 = vpack.c.b16 %v5837, %v5829
    %v6614 = vpack.c.b16 %v5838, %v5830
    %v6615 = vpack.c.b16 %v5847, %v5839
    %v6616 = vpack.c.b16 %v5848, %v5840
    %v6617 = vpack.c.b16 %v5849, %v5841
    %v6618 = vpack.c.b16 %v5850, %v5842
    %v6619 = vpack.c.b16 %v5851, %v5843
    %v6620 = vpack.c.b16 %v5852, %v5844
    %v6621 = vpack.c.b16 %v5853, %v5845
    %v6622 = vpack.c.b16 %v5854, %v5846
    %v6623 = vpack.c.b16 %v5863, %v5855
    %v6624 = vpack.c.b16 %v5864, %v5856
    %v6625 = vpack.c.b16 %v5865, %v5857
    %v6626 = vpack.c.b16 %v5866, %v5858
    %v6627 = vpack.c.b16 %v5867, %v5859
    %v6628 = vpack.c.b16 %v5868, %v5860
    %v6629 = vpack.c.b16 %v5869, %v5861
    %v6630 = vpack.c.b16 %v5870, %v5862
    %v6631 = vpack.c.b16 %v5879, %v5871
    %v6632 = vpack.c.b16 %v5880, %v5872
    %v6633 = vpack.c.b16 %v5881, %v5873
    %v6634 = vpack.c.b16 %v5882, %v5874
    %v6635 = vpack.c.b16 %v5883, %v5875
    %v6636 = vpack.c.b16 %v5884, %v5876
    %v6637 = vpack.c.b16 %v5885, %v5877
    %v6638 = vpack.c.b16 %v5886, %v5878
    %v6639 = vpack.c.b16 %v5895, %v5887
    %v6640 = vpack.c.b16 %v5896, %v5888
    %v6641 = vpack.c.b16 %v5897, %v5889
    %v6642 = vpack.c.b16 %v5898, %v5890
    %v6643 = vpack.c.b16 %v5899, %v5891
    %v6644 = vpack.c.b16 %v5900, %v5892
    %v6645 = vpack.c.b16 %v5901, %v5893
    %v6646 = vpack.c.b16 %v5902, %v5894
    %v6647 = vpack.c.b16 %v5911, %v5903
    %v6648 = vpack.c.b16 %v5912, %v5904
    %v6649 = vpack.c.b16 %v5913, %v5905
    %v6650 = vpack.c.b16 %v5914, %v5906
    %v6651 = vpack.c.b16 %v5915, %v5907
    %v6652 = vpack.c.b16 %v5916, %v5908
    %v6653 = vpack.c.b16 %v5917, %v5909
    %v6654 = vpack.c.b16 %v5918, %v5910
    %v6655 = vpack.c.b16 %v5927, %v5919
    %v6656 = vpack.c.b16 %v5928, %v5920
    %v6657 = vpack.c.b16 %v5929, %v5921
    %v6658 = vpack.c.b16 %v5930, %v5922
    %v6659 = vpack.c.b16 %v5931, %v5923
    %v6660 = vpack.c.b16 %v5932, %v5924
    %v6661 = vpack.c.b16 %v5933, %v5925
    %v6662 = vpack.c.b16 %v5934, %v5926
    %v6663 = vpack.c.b16 %v5943, %v5935
    %v6664 = vpack.c.b16 %v5944, %v5936
    %v6665 = vpack.c.b16 %v5945, %v5937
    %v6666 = vpack.c.b16 %v5946, %v5938
    %v6667 = vpack.c.b16 %v5947, %v5939
    %v6668 = vpack.c.b16 %v5948, %v5940
    %v6669 = vpack.c.b16 %v5949, %v5941
    %v6670 = vpack.c.b16 %v5950, %v5942
    %v6671 = vpack.c.b16 %v5959, %v5951
    %v6672 = vpack.c.b16 %v5960, %v5952
    %v6673 = vpack.c.b16 %v5961, %v5953
    %v6674 = vpack.c.b16 %v5962, %v5954
    %v6675 = vpack.c.b16 %v5963, %v5955
    %v6676 = vpack.c.b16 %v5964, %v5956
    %v6677 = vpack.c.b16 %v5965, %v5957
    %v6678 = vpack.c.b16 %v5966, %v5958
    %v6679 = vpack.c.b16 %v5975, %v5967
    %v6680 = vpack.c.b16 %v5976, %v5968
    %v6681 = vpack.c.b16 %v5977, %v5969
    %v6682 = vpack.c.b16 %v5978, %v5970
    %v6683 = vpack.c.b16 %v5979, %v5971
    %v6684 = vpack.c.b16 %v5980, %v5972
    %v6685 = vpack.c.b16 %v5981, %v5973
    %v6686 = vpack.c.b16 %v5982, %v5974
    %v6687 = vpack.c.b16 %v5991, %v5983
    %v6688 = vpack.c.b16 %v5992, %v5984
    %v6689 = vpack.c.b16 %v5993, %v5985
    %v6690 = vpack.c.b16 %v5994, %v5986
    %v6691 = vpack.c.b16 %v5995, %v5987
    %v6692 = vpack.c.b16 %v5996, %v5988
    %v6693 = vpack.c.b16 %v5997, %v5989
    %v6694 = vpack.c.b16 %v5998, %v5990
    %v6695 = vpack.c.b16 %v6007, %v5999
    %v6696 = vpack.c.b16 %v6008, %v6000
    %v6697 = vpack.c.b16 %v6009, %v6001
    %v6698 = vpack.c.b16 %v6010, %v6002
    %v6699 = vpack.c.b16 %v6011, %v6003
    %v6700 = vpack.c.b16 %v6012, %v6004
    %v6701 = vpack.c.b16 %v6013, %v6005
    %v6702 = vpack.c.b16 %v6014, %v6006
    %v6703 = vpack.c.b16 %v6023, %v6015
    %v6704 = vpack.c.b16 %v6024, %v6016
    %v6705 = vpack.c.b16 %v6025, %v6017
    %v6706 = vpack.c.b16 %v6026, %v6018
    %v6707 = vpack.c.b16 %v6027, %v6019
    %v6708 = vpack.c.b16 %v6028, %v6020
    %v6709 = vpack.c.b16 %v6029, %v6021
    %v6710 = vpack.c.b16 %v6030, %v6022
    %v6711 = vpack.c.b16 %v6039, %v6031
    %v6712 = vpack.c.b16 %v6040, %v6032
    %v6713 = vpack.c.b16 %v6041, %v6033
    %v6714 = vpack.c.b16 %v6042, %v6034
    %v6715 = vpack.c.b16 %v6043, %v6035
    %v6716 = vpack.c.b16 %v6044, %v6036
    %v6717 = vpack.c.b16 %v6045, %v6037
    %v6718 = vpack.c.b16 %v6046, %v6038
    %v6719 = vpack.c.b16 %v6055, %v6047
    %v6720 = vpack.c.b16 %v6056, %v6048
    %v6721 = vpack.c.b16 %v6057, %v6049
    %v6722 = vpack.c.b16 %v6058, %v6050
    %v6723 = vpack.c.b16 %v6059, %v6051
    %v6724 = vpack.c.b16 %v6060, %v6052
    %v6725 = vpack.c.b16 %v6061, %v6053
    %v6726 = vpack.c.b16 %v6062, %v6054
    %v6727 = vpack.c.b16 %v6071, %v6063
    %v6728 = vpack.c.b16 %v6072, %v6064
    %v6729 = vpack.c.b16 %v6073, %v6065
    %v6730 = vpack.c.b16 %v6074, %v6066
    %v6731 = vpack.c.b16 %v6075, %v6067
    %v6732 = vpack.c.b16 %v6076, %v6068
    %v6733 = vpack.c.b16 %v6077, %v6069
    %v6734 = vpack.c.b16 %v6078, %v6070
    %v6735 = vpack.c.b16 %v6087, %v6079
    %v6736 = vpack.c.b16 %v6088, %v6080
    %v6737 = vpack.c.b16 %v6089, %v6081
    %v6738 = vpack.c.b16 %v6090, %v6082
    %v6739 = vpack.c.b16 %v6091, %v6083
    %v6740 = vpack.c.b16 %v6092, %v6084
    %v6741 = vpack.c.b16 %v6093, %v6085
    %v6742 = vpack.c.b16 %v6094, %v6086
    %v6743 = vpack.c.b16 %v6103, %v6095
    %v6744 = vpack.c.b16 %v6104, %v6096
    %v6745 = vpack.c.b16 %v6105, %v6097
    %v6746 = vpack.c.b16 %v6106, %v6098
    %v6747 = vpack.c.b16 %v6107, %v6099
    %v6748 = vpack.c.b16 %v6108, %v6100
    %v6749 = vpack.c.b16 %v6109, %v6101
    %v6750 = vpack.c.b16 %v6110, %v6102
    %v6751 = vpack.c.b16 %v6119, %v6111
    %v6752 = vpack.c.b16 %v6120, %v6112
    %v6753 = vpack.c.b16 %v6121, %v6113
    %v6754 = vpack.c.b16 %v6122, %v6114
    %v6755 = vpack.c.b16 %v6123, %v6115
    %v6756 = vpack.c.b16 %v6124, %v6116
    %v6757 = vpack.c.b16 %v6125, %v6117
    %v6758 = vpack.c.b16 %v6126, %v6118
    %v6759 = vpack.c.b16 %v6135, %v6127
    %v6760 = vpack.c.b16 %v6136, %v6128
    %v6761 = vpack.c.b16 %v6137, %v6129
    %v6762 = vpack.c.b16 %v6138, %v6130
    %v6763 = vpack.c.b16 %v6139, %v6131
    %v6764 = vpack.c.b16 %v6140, %v6132
    %v6765 = vpack.c.b16 %v6141, %v6133
    %v6766 = vpack.c.b16 %v6142, %v6134
    %v6767 = vpack.c.b16 %v6151, %v6143
    %v6768 = vpack.c.b16 %v6152, %v6144
    %v6769 = vpack.c.b16 %v6153, %v6145
    %v6770 = vpack.c.b16 %v6154, %v6146
    %v6771 = vpack.c.b16 %v6155, %v6147
    %v6772 = vpack.c.b16 %v6156, %v6148
    %v6773 = vpack.c.b16 %v6157, %v6149
    %v6774 = vpack.c.b16 %v6158, %v6150
    %v6775 = vpack.c.b16 %v6167, %v6159
    %v6776 = vpack.c.b16 %v6168, %v6160
    %v6777 = vpack.c.b16 %v6169, %v6161
    %v6778 = vpack.c.b16 %v6170, %v6162
    %v6779 = vpack.c.b16 %v6171, %v6163
    %v6780 = vpack.c.b16 %v6172, %v6164
    %v6781 = vpack.c.b16 %v6173, %v6165
    %v6782 = vpack.c.b16 %v6174, %v6166
    %v6783 = vpack.c.b16 %v6183, %v6175
    %v6784 = vpack.c.b16 %v6184, %v6176
    %v6785 = vpack.c.b16 %v6185, %v6177
    %v6786 = vpack.c.b16 %v6186, %v6178
    %v6787 = vpack.c.b16 %v6187, %v6179
    %v6788 = vpack.c.b16 %v6188, %v6180
    %v6789 = vpack.c.b16 %v6189, %v6181
    %v6790 = vpack.c.b16 %v6190, %v6182
    %v6791 = vpack.c.b16 %v6199, %v6191
    %v6792 = vpack.c.b16 %v6200, %v6192
    %v6793 = vpack.c.b16 %v6201, %v6193
    %v6794 = vpack.c.b16 %v6202, %v6194
    %v6795 = vpack.c.b16 %v6203, %v6195
    %v6796 = vpack.c.b16 %v6204, %v6196
    %v6797 = vpack.c.b16 %v6205, %v6197
    %v6798 = vpack.c.b16 %v6206, %v6198
    %v6799 = vpack.c.b16 %v6215, %v6207
    %v6800 = vpack.c.b16 %v6216, %v6208
    %v6801 = vpack.c.b16 %v6217, %v6209
    %v6802 = vpack.c.b16 %v6218, %v6210
    %v6803 = vpack.c.b16 %v6219, %v6211
    %v6804 = vpack.c.b16 %v6220, %v6212
    %v6805 = vpack.c.b16 %v6221, %v6213
    %v6806 = vpack.c.b16 %v6222, %v6214
    %v6807 = vpack.c.b16 %v6231, %v6223
    %v6808 = vpack.c.b16 %v6232, %v6224
    %v6809 = vpack.c.b16 %v6233, %v6225
    %v6810 = vpack.c.b16 %v6234, %v6226
    %v6811 = vpack.c.b16 %v6235, %v6227
    %v6812 = vpack.c.b16 %v6236, %v6228
    %v6813 = vpack.c.b16 %v6237, %v6229
    %v6814 = vpack.c.b16 %v6238, %v6230
    %v6815 = vpack.c.b16 %v6247, %v6239
    %v6816 = vpack.c.b16 %v6248, %v6240
    %v6817 = vpack.c.b16 %v6249, %v6241
    %v6818 = vpack.c.b16 %v6250, %v6242
    %v6819 = vpack.c.b16 %v6251, %v6243
    %v6820 = vpack.c.b16 %v6252, %v6244
    %v6821 = vpack.c.b16 %v6253, %v6245
    %v6822 = vpack.c.b16 %v6254, %v6246
    %v6823 = vpack.c.b16 %v6263, %v6255
    %v6824 = vpack.c.b16 %v6264, %v6256
    %v6825 = vpack.c.b16 %v6265, %v6257
    %v6826 = vpack.c.b16 %v6266, %v6258
    %v6827 = vpack.c.b16 %v6267, %v6259
    %v6828 = vpack.c.b16 %v6268, %v6260
    %v6829 = vpack.c.b16 %v6269, %v6261
    %v6830 = vpack.c.b16 %v6270, %v6262
    %v6831 = vpack.c.b16 %v6279, %v6271
    %v6832 = vpack.c.b16 %v6280, %v6272
    %v6833 = vpack.c.b16 %v6281, %v6273
    %v6834 = vpack.c.b16 %v6282, %v6274
    %v6835 = vpack.c.b16 %v6283, %v6275
    %v6836 = vpack.c.b16 %v6284, %v6276
    %v6837 = vpack.c.b16 %v6285, %v6277
    %v6838 = vpack.c.b16 %v6286, %v6278
    %v6839 = vpack.c.b16 %v6295, %v6287
    %v6840 = vpack.c.b16 %v6296, %v6288
    %v6841 = vpack.c.b16 %v6297, %v6289
    %v6842 = vpack.c.b16 %v6298, %v6290
    %v6843 = vpack.c.b16 %v6299, %v6291
    %v6844 = vpack.c.b16 %v6300, %v6292
    %v6845 = vpack.c.b16 %v6301, %v6293
    %v6846 = vpack.c.b16 %v6302, %v6294
    %v6847 = vpack.c.b16 %v6311, %v6303
    %v6848 = vpack.c.b16 %v6312, %v6304
    %v6849 = vpack.c.b16 %v6313, %v6305
    %v6850 = vpack.c.b16 %v6314, %v6306
    %v6851 = vpack.c.b16 %v6315, %v6307
    %v6852 = vpack.c.b16 %v6316, %v6308
    %v6853 = vpack.c.b16 %v6317, %v6309
    %v6854 = vpack.c.b16 %v6318, %v6310
    %v6855 = vpack.c.b16 %v6327, %v6319
    %v6856 = vpack.c.b16 %v6328, %v6320
    %v6857 = vpack.c.b16 %v6329, %v6321
    %v6858 = vpack.c.b16 %v6330, %v6322
    %v6859 = vpack.c.b16 %v6331, %v6323
    %v6860 = vpack.c.b16 %v6332, %v6324
    %v6861 = vpack.c.b16 %v6333, %v6325
    %v6862 = vpack.c.b16 %v6334, %v6326
    %v6863 = vpack.c.b16 %v6343, %v6335
    %v6864 = vpack.c.b16 %v6344, %v6336
    %v6865 = vpack.c.b16 %v6345, %v6337
    %v6866 = vpack.c.b16 %v6346, %v6338
    %v6867 = vpack.c.b16 %v6347, %v6339
    %v6868 = vpack.c.b16 %v6348, %v6340
    %v6869 = vpack.c.b16 %v6349, %v6341
    %v6870 = vpack.c.b16 %v6350, %v6342
    %v6871 = vpack.c.b16 %v6359, %v6351
    %v6872 = vpack.c.b16 %v6360, %v6352
    %v6873 = vpack.c.b16 %v6361, %v6353
    %v6874 = vpack.c.b16 %v6362, %v6354
    %v6875 = vpack.c.b16 %v6363, %v6355
    %v6876 = vpack.c.b16 %v6364, %v6356
    %v6877 = vpack.c.b16 %v6365, %v6357
    %v6878 = vpack.c.b16 %v6366, %v6358
    %7391 = vmatprep.subr.bf16.mxu0 %v6368
    %7392 = vmatpush1.bf16.msra.mxu0 %v6367
    %7393 = vmatprep.subr.bf16.mxu0 %v6376
    %7394 = vmatpush1.bf16.msra.mxu0 %v6375
    %7395 = vmatprep.subr.bf16.mxu0 %v6384
    %7396 = vmatpush1.bf16.msra.mxu0 %v6383
    %7397 = vmatprep.subr.bf16.mxu0 %v6392
    %7398 = vmatpush1.bf16.msra.mxu0 %v6391
    %7399 = vmatprep.subr.bf16.mxu0 %v6400
    %7400 = vmatpush1.bf16.msra.mxu0 %v6399
    %7401 = vmatprep.subr.bf16.mxu0 %v6408
    %7402 = vmatpush1.bf16.msra.mxu0 %v6407
    %7403 = vmatprep.subr.bf16.mxu0 %v6416
    %7404 = vmatpush1.bf16.msra.mxu0 %v6415
    %7405 = vmatprep.subr.bf16.mxu0 %v6424
    %7406 = vmatpush1.bf16.msra.mxu0 %v6423
    %7407 = vmatprep.subr.bf16.mxu0 %v6432
    %7408 = vmatpush1.bf16.msra.mxu0 %v6431
    %7409 = vmatprep.subr.bf16.mxu0 %v6440
    %7410 = vmatpush1.bf16.msra.mxu0 %v6439
    %7411 = vmatprep.subr.bf16.mxu0 %v6448
    %7412 = vmatpush1.bf16.msra.mxu0 %v6447
    %7413 = vmatprep.subr.bf16.mxu0 %v6456
    %7414 = vmatpush1.bf16.msra.mxu0 %v6455
    %7415 = vmatprep.subr.bf16.mxu0 %v6464
    %7416 = vmatpush1.bf16.msra.mxu0 %v6463
    %7417 = vmatprep.subr.bf16.mxu0 %v6472
    %7418 = vmatpush1.bf16.msra.mxu0 %v6471
    %7419 = vmatprep.subr.bf16.mxu0 %v6480
    %7420 = vmatpush1.bf16.msra.mxu0 %v6479
    %7421 = vmatprep.subr.bf16.mxu0 %v6488
    %7422 = vmatpush1.bf16.msra.mxu0 %v6487
    %7423 = vmatprep.mubr.bf16.mxu0 %v4270
    %7424 = vmatmul.mubr.bf16.gmra.mrb[0].mxu0 %v4269
    %v7425 = vpop.f32.mrb[0].mxu0
    %v7426 = vadd.f32 %v4794, %v7425
    %v7427 = vpop.f32.mrb[0].mxu0
    %v7428 = vadd.f32 %v4798, %v7427
    %v7429 = vpop.f32.mrb[0].mxu0
    %v7430 = vpop.f32.mrb[0].mxu0
    %7431 = vdwg.mxu0
    %7432 = vmatprep.subr.bf16.mxu0 %v6496
    %7433 = vmatpush1.bf16.msra.mxu0 %v6495
    %7434 = vmatprep.subr.bf16.mxu0 %v6504
    %7435 = vmatpush1.bf16.msra.mxu0 %v6503
    %7436 = vmatprep.subr.bf16.mxu0 %v6512
    %7437 = vmatpush1.bf16.msra.mxu0 %v6511
    %7438 = vmatprep.subr.bf16.mxu0 %v6520
    %7439 = vmatpush1.bf16.msra.mxu0 %v6519
    %7440 = vmatprep.subr.bf16.mxu0 %v6528
    %7441 = vmatpush1.bf16.msra.mxu0 %v6527
    %7442 = vmatprep.subr.bf16.mxu0 %v6536
    %7443 = vmatpush1.bf16.msra.mxu0 %v6535
    %7444 = vmatprep.subr.bf16.mxu0 %v6544
    %7445 = vmatpush1.bf16.msra.mxu0 %v6543
    %7446 = vmatprep.subr.bf16.mxu0 %v6552
    %7447 = vmatpush1.bf16.msra.mxu0 %v6551
    %7448 = vmatprep.subr.bf16.mxu0 %v6560
    %7449 = vmatpush1.bf16.msra.mxu0 %v6559
    %7450 = vmatprep.subr.bf16.mxu0 %v6568
    %7451 = vmatpush1.bf16.msra.mxu0 %v6567
    %7452 = vmatprep.subr.bf16.mxu0 %v6576
    %7453 = vmatpush1.bf16.msra.mxu0 %v6575
    %7454 = vmatprep.subr.bf16.mxu0 %v6584
    %7455 = vmatpush1.bf16.msra.mxu0 %v6583
    %7456 = vmatprep.subr.bf16.mxu0 %v6592
    %7457 = vmatpush1.bf16.msra.mxu0 %v6591
    %7458 = vmatprep.subr.bf16.mxu0 %v6600
    %7459 = vmatpush1.bf16.msra.mxu0 %v6599
    %7460 = vmatprep.subr.bf16.mxu0 %v6608
    %7461 = vmatpush1.bf16.msra.mxu0 %v6607
    %7462 = vmatprep.subr.bf16.mxu0 %v6616
    %7463 = vmatpush1.bf16.msra.mxu0 %v6615
    %7464 = vmatprep.mubr.bf16.mxu0 %v4272
    %7465 = vmatmul.mubr.bf16.gmra.mrb[0].mxu0 %v4271
    %v7466 = vpop.f32.mrb[0].mxu0
    %v7467 = vadd.f32 %v7426, %v7466
    %v7468 = vpop.f32.mrb[0].mxu0
    %v7469 = vadd.f32 %v7428, %v7468
    %v7470 = vpop.f32.mrb[0].mxu0
    %v7471 = vpop.f32.mrb[0].mxu0
    %7472 = vdwg.mxu0
    %7473 = vmatprep.subr.bf16.mxu0 %v6624
    %7474 = vmatpush1.bf16.msra.mxu0 %v6623
    %7475 = vmatprep.subr.bf16.mxu0 %v6632
    %7476 = vmatpush1.bf16.msra.mxu0 %v6631
    %7477 = vmatprep.subr.bf16.mxu0 %v6640
    %7478 = vmatpush1.bf16.msra.mxu0 %v6639
    %7479 = vmatprep.subr.bf16.mxu0 %v6648
    %7480 = vmatpush1.bf16.msra.mxu0 %v6647
    %7481 = vmatprep.subr.bf16.mxu0 %v6656
    %7482 = vmatpush1.bf16.msra.mxu0 %v6655
    %7483 = vmatprep.subr.bf16.mxu0 %v6664
    %7484 = vmatpush1.bf16.msra.mxu0 %v6663
    %7485 = vmatprep.subr.bf16.mxu0 %v6672
    %7486 = vmatpush1.bf16.msra.mxu0 %v6671
    %7487 = vmatprep.subr.bf16.mxu0 %v6680
    %7488 = vmatpush1.bf16.msra.mxu0 %v6679
    %7489 = vmatprep.subr.bf16.mxu0 %v6688
    %7490 = vmatpush1.bf16.msra.mxu0 %v6687
    %7491 = vmatprep.subr.bf16.mxu0 %v6696
    %7492 = vmatpush1.bf16.msra.mxu0 %v6695
    %7493 = vmatprep.subr.bf16.mxu0 %v6704
    %7494 = vmatpush1.bf16.msra.mxu0 %v6703
    %7495 = vmatprep.subr.bf16.mxu0 %v6712
    %7496 = vmatpush1.bf16.msra.mxu0 %v6711
    %7497 = vmatprep.subr.bf16.mxu0 %v6720
    %7498 = vmatpush1.bf16.msra.mxu0 %v6719
    %7499 = vmatprep.subr.bf16.mxu0 %v6728
    %7500 = vmatpush1.bf16.msra.mxu0 %v6727
    %7501 = vmatprep.subr.bf16.mxu0 %v6736
    %7502 = vmatpush1.bf16.msra.mxu0 %v6735
    %7503 = vmatprep.subr.bf16.mxu0 %v6744
    %7504 = vmatpush1.bf16.msra.mxu0 %v6743
    %7505 = vmatprep.mubr.bf16.mxu0 %v4274
    %7506 = vmatmul.mubr.bf16.gmra.mrb[0].mxu0 %v4273
    %v7507 = vpop.f32.mrb[0].mxu0
    %v7508 = vadd.f32 %v7467, %v7507
    %v7509 = vpop.f32.mrb[0].mxu0
    %v7510 = vadd.f32 %v7469, %v7509
    %v7511 = vpop.f32.mrb[0].mxu0
    %v7512 = vpop.f32.mrb[0].mxu0
    %7513 = vdwg.mxu0
    %7514 = vmatprep.subr.bf16.mxu0 %v6752
    %7515 = vmatpush1.bf16.msra.mxu0 %v6751
    %7516 = vmatprep.subr.bf16.mxu0 %v6760
    %7517 = vmatpush1.bf16.msra.mxu0 %v6759
    %7518 = vmatprep.subr.bf16.mxu0 %v6768
    %7519 = vmatpush1.bf16.msra.mxu0 %v6767
    %7520 = vmatprep.subr.bf16.mxu0 %v6776
    %7521 = vmatpush1.bf16.msra.mxu0 %v6775
    %7522 = vmatprep.subr.bf16.mxu0 %v6784
    %7523 = vmatpush1.bf16.msra.mxu0 %v6783
    %7524 = vmatprep.subr.bf16.mxu0 %v6792
    %7525 = vmatpush1.bf16.msra.mxu0 %v6791
    %7526 = vmatprep.subr.bf16.mxu0 %v6800
    %7527 = vmatpush1.bf16.msra.mxu0 %v6799
    %7528 = vmatprep.subr.bf16.mxu0 %v6808
    %7529 = vmatpush1.bf16.msra.mxu0 %v6807
    %7530 = vmatprep.subr.bf16.mxu0 %v6816
    %7531 = vmatpush1.bf16.msra.mxu0 %v6815
    %7532 = vmatprep.subr.bf16.mxu0 %v6824
    %7533 = vmatpush1.bf16.msra.mxu0 %v6823
    %7534 = vmatprep.subr.bf16.mxu0 %v6832
    %7535 = vmatpush1.bf16.msra.mxu0 %v6831
    %7536 = vmatprep.subr.bf16.mxu0 %v6840
    %7537 = vmatpush1.bf16.msra.mxu0 %v6839
    %7538 = vmatprep.subr.bf16.mxu0 %v6848
    %7539 = vmatpush1.bf16.msra.mxu0 %v6847
    %7540 = vmatprep.subr.bf16.mxu0 %v6856
    %7541 = vmatpush1.bf16.msra.mxu0 %v6855
    %7542 = vmatprep.subr.bf16.mxu0 %v6864
    %7543 = vmatpush1.bf16.msra.mxu0 %v6863
    %7544 = vmatprep.subr.bf16.mxu0 %v6872
    %7545 = vmatpush1.bf16.msra.mxu0 %v6871
    %7546 = vmatprep.mubr.bf16.mxu0 %v4276
    %7547 = vmatmul.mubr.bf16.gmra.mrb[0].mxu0 %v4275
    %v7548 = vpop.f32.mrb[0].mxu0
    %v7549 = vadd.f32 %v7508, %v7548
    %v7550 = vpop.f32.mrb[0].mxu0
    %v7551 = vadd.f32 %v7510, %v7550
    %v7552 = vpop.f32.mrb[0].mxu0
    %v7553 = vpop.f32.mrb[0].mxu0
    %7554 = vdwg.mxu0
    %7555 = vmatprep.subr.bf16.mxu0 %v6370
    %7556 = vmatpush1.bf16.msra.mxu0 %v6369
    %7557 = vmatprep.subr.bf16.mxu0 %v6378
    %7558 = vmatpush1.bf16.msra.mxu0 %v6377
    %7559 = vmatprep.subr.bf16.mxu0 %v6386
    %7560 = vmatpush1.bf16.msra.mxu0 %v6385
    %7561 = vmatprep.subr.bf16.mxu0 %v6394
    %7562 = vmatpush1.bf16.msra.mxu0 %v6393
    %7563 = vmatprep.subr.bf16.mxu0 %v6402
    %7564 = vmatpush1.bf16.msra.mxu0 %v6401
    %7565 = vmatprep.subr.bf16.mxu0 %v6410
    %7566 = vmatpush1.bf16.msra.mxu0 %v6409
    %7567 = vmatprep.subr.bf16.mxu0 %v6418
    %7568 = vmatpush1.bf16.msra.mxu0 %v6417
    %7569 = vmatprep.subr.bf16.mxu0 %v6426
    %7570 = vmatpush1.bf16.msra.mxu0 %v6425
    %7571 = vmatprep.subr.bf16.mxu0 %v6434
    %7572 = vmatpush1.bf16.msra.mxu0 %v6433
    %7573 = vmatprep.subr.bf16.mxu0 %v6442
    %7574 = vmatpush1.bf16.msra.mxu0 %v6441
    %7575 = vmatprep.subr.bf16.mxu0 %v6450
    %7576 = vmatpush1.bf16.msra.mxu0 %v6449
    %7577 = vmatprep.subr.bf16.mxu0 %v6458
    %7578 = vmatpush1.bf16.msra.mxu0 %v6457
    %7579 = vmatprep.subr.bf16.mxu0 %v6466
    %7580 = vmatpush1.bf16.msra.mxu0 %v6465
    %7581 = vmatprep.subr.bf16.mxu0 %v6474
    %7582 = vmatpush1.bf16.msra.mxu0 %v6473
    %7583 = vmatprep.subr.bf16.mxu0 %v6482
    %7584 = vmatpush1.bf16.msra.mxu0 %v6481
    %7585 = vmatprep.subr.bf16.mxu0 %v6490
    %7586 = vmatpush1.bf16.msra.mxu0 %v6489
    %7587 = vmatprep.mubr.bf16.mxu0 %v4270
    %7588 = vmatmul.mubr.bf16.gmra.mrb[0].mxu0 %v4269
    %v7589 = vpop.f32.mrb[0].mxu0
    %v7590 = vadd.f32 %v4802, %v7589
    %v7591 = vpop.f32.mrb[0].mxu0
    %v7592 = vadd.f32 %v4806, %v7591
    %v7593 = vpop.f32.mrb[0].mxu0
    %v7594 = vpop.f32.mrb[0].mxu0
    %7595 = vdwg.mxu0
    %7596 = vmatprep.subr.bf16.mxu0 %v6498
    %7597 = vmatpush1.bf16.msra.mxu0 %v6497
    %7598 = vmatprep.subr.bf16.mxu0 %v6506
    %7599 = vmatpush1.bf16.msra.mxu0 %v6505
    %7600 = vmatprep.subr.bf16.mxu0 %v6514
    %7601 = vmatpush1.bf16.msra.mxu0 %v6513
    %7602 = vmatprep.subr.bf16.mxu0 %v6522
    %7603 = vmatpush1.bf16.msra.mxu0 %v6521
    %7604 = vmatprep.subr.bf16.mxu0 %v6530
    %7605 = vmatpush1.bf16.msra.mxu0 %v6529
    %7606 = vmatprep.subr.bf16.mxu0 %v6538
    %7607 = vmatpush1.bf16.msra.mxu0 %v6537
    %7608 = vmatprep.subr.bf16.mxu0 %v6546
    %7609 = vmatpush1.bf16.msra.mxu0 %v6545
    %7610 = vmatprep.subr.bf16.mxu0 %v6554
    %7611 = vmatpush1.bf16.msra.mxu0 %v6553
    %7612 = vmatprep.subr.bf16.mxu0 %v6562
    %7613 = vmatpush1.bf16.msra.mxu0 %v6561
    %7614 = vmatprep.subr.bf16.mxu0 %v6570
    %7615 = vmatpush1.bf16.msra.mxu0 %v6569
    %7616 = vmatprep.subr.bf16.mxu0 %v6578
    %7617 = vmatpush1.bf16.msra.mxu0 %v6577
    %7618 = vmatprep.subr.bf16.mxu0 %v6586
    %7619 = vmatpush1.bf16.msra.mxu0 %v6585
    %7620 = vmatprep.subr.bf16.mxu0 %v6594
    %7621 = vmatpush1.bf16.msra.mxu0 %v6593
    %7622 = vmatprep.subr.bf16.mxu0 %v6602
    %7623 = vmatpush1.bf16.msra.mxu0 %v6601
    %7624 = vmatprep.subr.bf16.mxu0 %v6610
    %7625 = vmatpush1.bf16.msra.mxu0 %v6609
    %7626 = vmatprep.subr.bf16.mxu0 %v6618
    %7627 = vmatpush1.bf16.msra.mxu0 %v6617
    %7628 = vmatprep.mubr.bf16.mxu0 %v4272
    %7629 = vmatmul.mubr.bf16.gmra.mrb[0].mxu0 %v4271
    %v7630 = vpop.f32.mrb[0].mxu0
    %v7631 = vadd.f32 %v7590, %v7630
    %v7632 = vpop.f32.mrb[0].mxu0
    %v7633 = vadd.f32 %v7592, %v7632
    %v7634 = vpop.f32.mrb[0].mxu0
    %v7635 = vpop.f32.mrb[0].mxu0
    %7636 = vdwg.mxu0
    %7637 = vmatprep.subr.bf16.mxu0 %v6626
    %7638 = vmatpush1.bf16.msra.mxu0 %v6625
    %7639 = vmatprep.subr.bf16.mxu0 %v6634
    %7640 = vmatpush1.bf16.msra.mxu0 %v6633
    %7641 = vmatprep.subr.bf16.mxu0 %v6642
    %7642 = vmatpush1.bf16.msra.mxu0 %v6641
    %7643 = vmatprep.subr.bf16.mxu0 %v6650
    %7644 = vmatpush1.bf16.msra.mxu0 %v6649
    %7645 = vmatprep.subr.bf16.mxu0 %v6658
    %7646 = vmatpush1.bf16.msra.mxu0 %v6657
    %7647 = vmatprep.subr.bf16.mxu0 %v6666
    %7648 = vmatpush1.bf16.msra.mxu0 %v6665
    %7649 = vmatprep.subr.bf16.mxu0 %v6674
    %7650 = vmatpush1.bf16.msra.mxu0 %v6673
    %7651 = vmatprep.subr.bf16.mxu0 %v6682
    %7652 = vmatpush1.bf16.msra.mxu0 %v6681
    %7653 = vmatprep.subr.bf16.mxu0 %v6690
    %7654 = vmatpush1.bf16.msra.mxu0 %v6689
    %7655 = vmatprep.subr.bf16.mxu0 %v6698
    %7656 = vmatpush1.bf16.msra.mxu0 %v6697
    %7657 = vmatprep.subr.bf16.mxu0 %v6706
    %7658 = vmatpush1.bf16.msra.mxu0 %v6705
    %7659 = vmatprep.subr.bf16.mxu0 %v6714
    %7660 = vmatpush1.bf16.msra.mxu0 %v6713
    %7661 = vmatprep.subr.bf16.mxu0 %v6722
    %7662 = vmatpush1.bf16.msra.mxu0 %v6721
    %7663 = vmatprep.subr.bf16.mxu0 %v6730
    %7664 = vmatpush1.bf16.msra.mxu0 %v6729
    %7665 = vmatprep.subr.bf16.mxu0 %v6738
    %7666 = vmatpush1.bf16.msra.mxu0 %v6737
    %7667 = vmatprep.subr.bf16.mxu0 %v6746
    %7668 = vmatpush1.bf16.msra.mxu0 %v6745
    %7669 = vmatprep.mubr.bf16.mxu0 %v4274
    %7670 = vmatmul.mubr.bf16.gmra.mrb[0].mxu0 %v4273
    %v7671 = vpop.f32.mrb[0].mxu0
    %v7672 = vadd.f32 %v7631, %v7671
    %v7673 = vpop.f32.mrb[0].mxu0
    %v7674 = vadd.f32 %v7633, %v7673
    %v7675 = vpop.f32.mrb[0].mxu0
    %v7676 = vpop.f32.mrb[0].mxu0
    %7677 = vdwg.mxu0
    %7678 = vmatprep.subr.bf16.mxu0 %v6754
    %7679 = vmatpush1.bf16.msra.mxu0 %v6753
    %7680 = vmatprep.subr.bf16.mxu0 %v6762
    %7681 = vmatpush1.bf16.msra.mxu0 %v6761
    %7682 = vmatprep.subr.bf16.mxu0 %v6770
    %7683 = vmatpush1.bf16.msra.mxu0 %v6769
    %7684 = vmatprep.subr.bf16.mxu0 %v6778
    %7685 = vmatpush1.bf16.msra.mxu0 %v6777
    %7686 = vmatprep.subr.bf16.mxu0 %v6786
    %7687 = vmatpush1.bf16.msra.mxu0 %v6785
    %7688 = vmatprep.subr.bf16.mxu0 %v6794
    %7689 = vmatpush1.bf16.msra.mxu0 %v6793
    %7690 = vmatprep.subr.bf16.mxu0 %v6802
    %7691 = vmatpush1.bf16.msra.mxu0 %v6801
    %7692 = vmatprep.subr.bf16.mxu0 %v6810
    %7693 = vmatpush1.bf16.msra.mxu0 %v6809
    %7694 = vmatprep.subr.bf16.mxu0 %v6818
    %7695 = vmatpush1.bf16.msra.mxu0 %v6817
    %7696 = vmatprep.subr.bf16.mxu0 %v6826
    %7697 = vmatpush1.bf16.msra.mxu0 %v6825
    %7698 = vmatprep.subr.bf16.mxu0 %v6834
    %7699 = vmatpush1.bf16.msra.mxu0 %v6833
    %7700 = vmatprep.subr.bf16.mxu0 %v6842
    %7701 = vmatpush1.bf16.msra.mxu0 %v6841
    %7702 = vmatprep.subr.bf16.mxu0 %v6850
    %7703 = vmatpush1.bf16.msra.mxu0 %v6849
    %7704 = vmatprep.subr.bf16.mxu0 %v6858
    %7705 = vmatpush1.bf16.msra.mxu0 %v6857
    %7706 = vmatprep.subr.bf16.mxu0 %v6866
    %7707 = vmatpush1.bf16.msra.mxu0 %v6865
    %7708 = vmatprep.subr.bf16.mxu0 %v6874
    %7709 = vmatpush1.bf16.msra.mxu0 %v6873
    %7710 = vmatprep.mubr.bf16.mxu0 %v4276
    %7711 = vmatmul.mubr.bf16.gmra.mrb[0].mxu0 %v4275
    %v7712 = vpop.f32.mrb[0].mxu0
    %v7713 = vadd.f32 %v7672, %v7712
    %v7714 = vpop.f32.mrb[0].mxu0
    %v7715 = vadd.f32 %v7674, %v7714
    %v7716 = vpop.f32.mrb[0].mxu0
    %v7717 = vpop.f32.mrb[0].mxu0
    %7718 = vdwg.mxu0
    %7719 = vmatprep.subr.bf16.mxu0 %v6372
    %7720 = vmatpush1.bf16.msra.mxu0 %v6371
    %7721 = vmatprep.subr.bf16.mxu0 %v6380
    %7722 = vmatpush1.bf16.msra.mxu0 %v6379
    %7723 = vmatprep.subr.bf16.mxu0 %v6388
    %7724 = vmatpush1.bf16.msra.mxu0 %v6387
    %7725 = vmatprep.subr.bf16.mxu0 %v6396
    %7726 = vmatpush1.bf16.msra.mxu0 %v6395
    %7727 = vmatprep.subr.bf16.mxu0 %v6404
    %7728 = vmatpush1.bf16.msra.mxu0 %v6403
    %7729 = vmatprep.subr.bf16.mxu0 %v6412
    %7730 = vmatpush1.bf16.msra.mxu0 %v6411
    %7731 = vmatprep.subr.bf16.mxu0 %v6420
    %7732 = vmatpush1.bf16.msra.mxu0 %v6419
    %7733 = vmatprep.subr.bf16.mxu0 %v6428
    %7734 = vmatpush1.bf16.msra.mxu0 %v6427
    %7735 = vmatprep.subr.bf16.mxu0 %v6436
    %7736 = vmatpush1.bf16.msra.mxu0 %v6435
    %7737 = vmatprep.subr.bf16.mxu0 %v6444
    %7738 = vmatpush1.bf16.msra.mxu0 %v6443
    %7739 = vmatprep.subr.bf16.mxu0 %v6452
    %7740 = vmatpush1.bf16.msra.mxu0 %v6451
    %7741 = vmatprep.subr.bf16.mxu0 %v6460
    %7742 = vmatpush1.bf16.msra.mxu0 %v6459
    %7743 = vmatprep.subr.bf16.mxu0 %v6468
    %7744 = vmatpush1.bf16.msra.mxu0 %v6467
    %7745 = vmatprep.subr.bf16.mxu0 %v6476
    %7746 = vmatpush1.bf16.msra.mxu0 %v6475
    %7747 = vmatprep.subr.bf16.mxu0 %v6484
    %7748 = vmatpush1.bf16.msra.mxu0 %v6483
    %7749 = vmatprep.subr.bf16.mxu0 %v6492
    %7750 = vmatpush1.bf16.msra.mxu0 %v6491
    %7751 = vmatprep.mubr.bf16.mxu0 %v4270
    %7752 = vmatmul.mubr.bf16.gmra.mrb[0].mxu0 %v4269
    %v7753 = vpop.f32.mrb[0].mxu0
    %v7754 = vadd.f32 %v4810, %v7753
    %v7755 = vpop.f32.mrb[0].mxu0
    %v7756 = vadd.f32 %v4814, %v7755
    %v7757 = vpop.f32.mrb[0].mxu0
    %v7758 = vpop.f32.mrb[0].mxu0
    %7759 = vdwg.mxu0
    %7760 = vmatprep.subr.bf16.mxu0 %v6500
    %7761 = vmatpush1.bf16.msra.mxu0 %v6499
    %7762 = vmatprep.subr.bf16.mxu0 %v6508
    %7763 = vmatpush1.bf16.msra.mxu0 %v6507
    %7764 = vmatprep.subr.bf16.mxu0 %v6516
    %7765 = vmatpush1.bf16.msra.mxu0 %v6515
    %7766 = vmatprep.subr.bf16.mxu0 %v6524
    %7767 = vmatpush1.bf16.msra.mxu0 %v6523
    %7768 = vmatprep.subr.bf16.mxu0 %v6532
    %7769 = vmatpush1.bf16.msra.mxu0 %v6531
    %7770 = vmatprep.subr.bf16.mxu0 %v6540
    %7771 = vmatpush1.bf16.msra.mxu0 %v6539
    %7772 = vmatprep.subr.bf16.mxu0 %v6548
    %7773 = vmatpush1.bf16.msra.mxu0 %v6547
    %7774 = vmatprep.subr.bf16.mxu0 %v6556
    %7775 = vmatpush1.bf16.msra.mxu0 %v6555
    %7776 = vmatprep.subr.bf16.mxu0 %v6564
    %7777 = vmatpush1.bf16.msra.mxu0 %v6563
    %7778 = vmatprep.subr.bf16.mxu0 %v6572
    %7779 = vmatpush1.bf16.msra.mxu0 %v6571
    %7780 = vmatprep.subr.bf16.mxu0 %v6580
    %7781 = vmatpush1.bf16.msra.mxu0 %v6579
    %7782 = vmatprep.subr.bf16.mxu0 %v6588
    %7783 = vmatpush1.bf16.msra.mxu0 %v6587
    %7784 = vmatprep.subr.bf16.mxu0 %v6596
    %7785 = vmatpush1.bf16.msra.mxu0 %v6595
    %7786 = vmatprep.subr.bf16.mxu0 %v6604
    %7787 = vmatpush1.bf16.msra.mxu0 %v6603
    %7788 = vmatprep.subr.bf16.mxu0 %v6612
    %7789 = vmatpush1.bf16.msra.mxu0 %v6611
    %7790 = vmatprep.subr.bf16.mxu0 %v6620
    %7791 = vmatpush1.bf16.msra.mxu0 %v6619
    %7792 = vmatprep.mubr.bf16.mxu0 %v4272
    %7793 = vmatmul.mubr.bf16.gmra.mrb[0].mxu0 %v4271
    %v7794 = vpop.f32.mrb[0].mxu0
    %v7795 = vadd.f32 %v7754, %v7794
    %v7796 = vpop.f32.mrb[0].mxu0
    %v7797 = vadd.f32 %v7756, %v7796
    %v7798 = vpop.f32.mrb[0].mxu0
    %v7799 = vpop.f32.mrb[0].mxu0
    %7800 = vdwg.mxu0
    %7801 = vmatprep.subr.bf16.mxu0 %v6628
    %7802 = vmatpush1.bf16.msra.mxu0 %v6627
    %7803 = vmatprep.subr.bf16.mxu0 %v6636
    %7804 = vmatpush1.bf16.msra.mxu0 %v6635
    %7805 = vmatprep.subr.bf16.mxu0 %v6644
    %7806 = vmatpush1.bf16.msra.mxu0 %v6643
    %7807 = vmatprep.subr.bf16.mxu0 %v6652
    %7808 = vmatpush1.bf16.msra.mxu0 %v6651
    %7809 = vmatprep.subr.bf16.mxu0 %v6660
    %7810 = vmatpush1.bf16.msra.mxu0 %v6659
    %7811 = vmatprep.subr.bf16.mxu0 %v6668
    %7812 = vmatpush1.bf16.msra.mxu0 %v6667
    %7813 = vmatprep.subr.bf16.mxu0 %v6676
    %7814 = vmatpush1.bf16.msra.mxu0 %v6675
    %7815 = vmatprep.subr.bf16.mxu0 %v6684
    %7816 = vmatpush1.bf16.msra.mxu0 %v6683
    %7817 = vmatprep.subr.bf16.mxu0 %v6692
    %7818 = vmatpush1.bf16.msra.mxu0 %v6691
    %7819 = vmatprep.subr.bf16.mxu0 %v6700
    %7820 = vmatpush1.bf16.msra.mxu0 %v6699
    %7821 = vmatprep.subr.bf16.mxu0 %v6708
    %7822 = vmatpush1.bf16.msra.mxu0 %v6707
    %7823 = vmatprep.subr.bf16.mxu0 %v6716
    %7824 = vmatpush1.bf16.msra.mxu0 %v6715
    %7825 = vmatprep.subr.bf16.mxu0 %v6724
    %7826 = vmatpush1.bf16.msra.mxu0 %v6723
    %7827 = vmatprep.subr.bf16.mxu0 %v6732
    %7828 = vmatpush1.bf16.msra.mxu0 %v6731
    %7829 = vmatprep.subr.bf16.mxu0 %v6740
    %7830 = vmatpush1.bf16.msra.mxu0 %v6739
    %7831 = vmatprep.subr.bf16.mxu0 %v6748
    %7832 = vmatpush1.bf16.msra.mxu0 %v6747
    %7833 = vmatprep.mubr.bf16.mxu0 %v4274
    %7834 = vmatmul.mubr.bf16.gmra.mrb[0].mxu0 %v4273
    %v7835 = vpop.f32.mrb[0].mxu0
    %v7836 = vadd.f32 %v7795, %v7835
    %v7837 = vpop.f32.mrb[0].mxu0
    %v7838 = vadd.f32 %v7797, %v7837
    %v7839 = vpop.f32.mrb[0].mxu0
    %v7840 = vpop.f32.mrb[0].mxu0
    %7841 = vdwg.mxu0
    %7842 = vmatprep.subr.bf16.mxu0 %v6756
    %7843 = vmatpush1.bf16.msra.mxu0 %v6755
    %7844 = vmatprep.subr.bf16.mxu0 %v6764
    %7845 = vmatpush1.bf16.msra.mxu0 %v6763
    %7846 = vmatprep.subr.bf16.mxu0 %v6772
    %7847 = vmatpush1.bf16.msra.mxu0 %v6771
    %7848 = vmatprep.subr.bf16.mxu0 %v6780
    %7849 = vmatpush1.bf16.msra.mxu0 %v6779
    %7850 = vmatprep.subr.bf16.mxu0 %v6788
    %7851 = vmatpush1.bf16.msra.mxu0 %v6787
    %7852 = vmatprep.subr.bf16.mxu0 %v6796
    %7853 = vmatpush1.bf16.msra.mxu0 %v6795
    %7854 = vmatprep.subr.bf16.mxu0 %v6804
    %7855 = vmatpush1.bf16.msra.mxu0 %v6803
    %7856 = vmatprep.subr.bf16.mxu0 %v6812
    %7857 = vmatpush1.bf16.msra.mxu0 %v6811
    %7858 = vmatprep.subr.bf16.mxu0 %v6820
    %7859 = vmatpush1.bf16.msra.mxu0 %v6819
    %7860 = vmatprep.subr.bf16.mxu0 %v6828
    %7861 = vmatpush1.bf16.msra.mxu0 %v6827
    %7862 = vmatprep.subr.bf16.mxu0 %v6836
    %7863 = vmatpush1.bf16.msra.mxu0 %v6835
    %7864 = vmatprep.subr.bf16.mxu0 %v6844
    %7865 = vmatpush1.bf16.msra.mxu0 %v6843
    %7866 = vmatprep.subr.bf16.mxu0 %v6852
    %7867 = vmatpush1.bf16.msra.mxu0 %v6851
    %7868 = vmatprep.subr.bf16.mxu0 %v6860
    %7869 = vmatpush1.bf16.msra.mxu0 %v6859
    %7870 = vmatprep.subr.bf16.mxu0 %v6868
    %7871 = vmatpush1.bf16.msra.mxu0 %v6867
    %7872 = vmatprep.subr.bf16.mxu0 %v6876
    %7873 = vmatpush1.bf16.msra.mxu0 %v6875
    %7874 = vmatprep.mubr.bf16.mxu0 %v4276
    %7875 = vmatmul.mubr.bf16.gmra.mrb[0].mxu0 %v4275
    %v7876 = vpop.f32.mrb[0].mxu0
    %v7877 = vadd.f32 %v7836, %v7876
    %v7878 = vpop.f32.mrb[0].mxu0
    %v7879 = vadd.f32 %v7838, %v7878
    %v7880 = vpop.f32.mrb[0].mxu0
    %v7881 = vpop.f32.mrb[0].mxu0
    %7882 = vdwg.mxu0
    %7883 = vmatprep.subr.bf16.mxu0 %v6374
    %7884 = vmatpush1.bf16.msra.mxu0 %v6373
    %7885 = vmatprep.subr.bf16.mxu0 %v6382
    %7886 = vmatpush1.bf16.msra.mxu0 %v6381
    %7887 = vmatprep.subr.bf16.mxu0 %v6390
    %7888 = vmatpush1.bf16.msra.mxu0 %v6389
    %7889 = vmatprep.subr.bf16.mxu0 %v6398
    %7890 = vmatpush1.bf16.msra.mxu0 %v6397
    %7891 = vmatprep.subr.bf16.mxu0 %v6406
    %7892 = vmatpush1.bf16.msra.mxu0 %v6405
    %7893 = vmatprep.subr.bf16.mxu0 %v6414
    %7894 = vmatpush1.bf16.msra.mxu0 %v6413
    %7895 = vmatprep.subr.bf16.mxu0 %v6422
    %7896 = vmatpush1.bf16.msra.mxu0 %v6421
    %7897 = vmatprep.subr.bf16.mxu0 %v6430
    %7898 = vmatpush1.bf16.msra.mxu0 %v6429
    %7899 = vmatprep.subr.bf16.mxu0 %v6438
    %7900 = vmatpush1.bf16.msra.mxu0 %v6437
    %7901 = vmatprep.subr.bf16.mxu0 %v6446
    %7902 = vmatpush1.bf16.msra.mxu0 %v6445
    %7903 = vmatprep.subr.bf16.mxu0 %v6454
    %7904 = vmatpush1.bf16.msra.mxu0 %v6453
    %7905 = vmatprep.subr.bf16.mxu0 %v6462
    %7906 = vmatpush1.bf16.msra.mxu0 %v6461
    %7907 = vmatprep.subr.bf16.mxu0 %v6470
    %7908 = vmatpush1.bf16.msra.mxu0 %v6469
    %7909 = vmatprep.subr.bf16.mxu0 %v6478
    %7910 = vmatpush1.bf16.msra.mxu0 %v6477
    %7911 = vmatprep.subr.bf16.mxu0 %v6486
    %7912 = vmatpush1.bf16.msra.mxu0 %v6485
    %7913 = vmatprep.subr.bf16.mxu0 %v6494
    %7914 = vmatpush1.bf16.msra.mxu0 %v6493
    %7915 = vmatprep.mubr.bf16.mxu0 %v4270
    %7916 = vmatmul.mubr.bf16.gmra.mrb[0].mxu0 %v4269
    %v7917 = vpop.f32.mrb[0].mxu0
    %v7918 = vadd.f32 %v4818, %v7917
    %v7919 = vpop.f32.mrb[0].mxu0
    %v7920 = vadd.f32 %v4822, %v7919
    %v7921 = vpop.f32.mrb[0].mxu0
    %v7922 = vpop.f32.mrb[0].mxu0
    %7923 = vdwg.mxu0
    %7924 = vmatprep.subr.bf16.mxu0 %v6502
    %7925 = vmatpush1.bf16.msra.mxu0 %v6501
    %7926 = vmatprep.subr.bf16.mxu0 %v6510
    %7927 = vmatpush1.bf16.msra.mxu0 %v6509
    %7928 = vmatprep.subr.bf16.mxu0 %v6518
    %7929 = vmatpush1.bf16.msra.mxu0 %v6517
    %7930 = vmatprep.subr.bf16.mxu0 %v6526
    %7931 = vmatpush1.bf16.msra.mxu0 %v6525
    %7932 = vmatprep.subr.bf16.mxu0 %v6534
    %7933 = vmatpush1.bf16.msra.mxu0 %v6533
    %7934 = vmatprep.subr.bf16.mxu0 %v6542
    %7935 = vmatpush1.bf16.msra.mxu0 %v6541
    %7936 = vmatprep.subr.bf16.mxu0 %v6550
    %7937 = vmatpush1.bf16.msra.mxu0 %v6549
    %7938 = vmatprep.subr.bf16.mxu0 %v6558
    %7939 = vmatpush1.bf16.msra.mxu0 %v6557
    %7940 = vmatprep.subr.bf16.mxu0 %v6566
    %7941 = vmatpush1.bf16.msra.mxu0 %v6565
    %7942 = vmatprep.subr.bf16.mxu0 %v6574
    %7943 = vmatpush1.bf16.msra.mxu0 %v6573
    %7944 = vmatprep.subr.bf16.mxu0 %v6582
    %7945 = vmatpush1.bf16.msra.mxu0 %v6581
    %7946 = vmatprep.subr.bf16.mxu0 %v6590
    %7947 = vmatpush1.bf16.msra.mxu0 %v6589
    %7948 = vmatprep.subr.bf16.mxu0 %v6598
    %7949 = vmatpush1.bf16.msra.mxu0 %v6597
    %7950 = vmatprep.subr.bf16.mxu0 %v6606
    %7951 = vmatpush1.bf16.msra.mxu0 %v6605
    %7952 = vmatprep.subr.bf16.mxu0 %v6614
    %7953 = vmatpush1.bf16.msra.mxu0 %v6613
    %7954 = vmatprep.subr.bf16.mxu0 %v6622
    %7955 = vmatpush1.bf16.msra.mxu0 %v6621
    %7956 = vmatprep.mubr.bf16.mxu0 %v4272
    %7957 = vmatmul.mubr.bf16.gmra.mrb[0].mxu0 %v4271
    %v7958 = vpop.f32.mrb[0].mxu0
    %v7959 = vadd.f32 %v7918, %v7958
    %v7960 = vpop.f32.mrb[0].mxu0
    %v7961 = vadd.f32 %v7920, %v7960
    %v7962 = vpop.f32.mrb[0].mxu0
    %v7963 = vpop.f32.mrb[0].mxu0
    %7964 = vdwg.mxu0
    %7965 = vmatprep.subr.bf16.mxu0 %v6630
    %7966 = vmatpush1.bf16.msra.mxu0 %v6629
    %7967 = vmatprep.subr.bf16.mxu0 %v6638
    %7968 = vmatpush1.bf16.msra.mxu0 %v6637
    %7969 = vmatprep.subr.bf16.mxu0 %v6646
    %7970 = vmatpush1.bf16.msra.mxu0 %v6645
    %7971 = vmatprep.subr.bf16.mxu0 %v6654
    %7972 = vmatpush1.bf16.msra.mxu0 %v6653
    %7973 = vmatprep.subr.bf16.mxu0 %v6662
    %7974 = vmatpush1.bf16.msra.mxu0 %v6661
    %7975 = vmatprep.subr.bf16.mxu0 %v6670
    %7976 = vmatpush1.bf16.msra.mxu0 %v6669
    %7977 = vmatprep.subr.bf16.mxu0 %v6678
    %7978 = vmatpush1.bf16.msra.mxu0 %v6677
    %7979 = vmatprep.subr.bf16.mxu0 %v6686
    %7980 = vmatpush1.bf16.msra.mxu0 %v6685
    %7981 = vmatprep.subr.bf16.mxu0 %v6694
    %7982 = vmatpush1.bf16.msra.mxu0 %v6693
    %7983 = vmatprep.subr.bf16.mxu0 %v6702
    %7984 = vmatpush1.bf16.msra.mxu0 %v6701
    %7985 = vmatprep.subr.bf16.mxu0 %v6710
    %7986 = vmatpush1.bf16.msra.mxu0 %v6709
    %7987 = vmatprep.subr.bf16.mxu0 %v6718
    %7988 = vmatpush1.bf16.msra.mxu0 %v6717
    %7989 = vmatprep.subr.bf16.mxu0 %v6726
    %7990 = vmatpush1.bf16.msra.mxu0 %v6725
    %7991 = vmatprep.subr.bf16.mxu0 %v6734
    %7992 = vmatpush1.bf16.msra.mxu0 %v6733
    %7993 = vmatprep.subr.bf16.mxu0 %v6742
    %7994 = vmatpush1.bf16.msra.mxu0 %v6741
    %7995 = vmatprep.subr.bf16.mxu0 %v6750
    %7996 = vmatpush1.bf16.msra.mxu0 %v6749
    %7997 = vmatprep.mubr.bf16.mxu0 %v4274
    %7998 = vmatmul.mubr.bf16.gmra.mrb[0].mxu0 %v4273
    %v7999 = vpop.f32.mrb[0].mxu0
    %v8000 = vadd.f32 %v7959, %v7999
    %v8001 = vpop.f32.mrb[0].mxu0
    %v8002 = vadd.f32 %v7961, %v8001
    %v8003 = vpop.f32.mrb[0].mxu0
    %v8004 = vpop.f32.mrb[0].mxu0
    %8005 = vdwg.mxu0
    %8006 = vmatprep.subr.bf16.mxu0 %v6758
    %8007 = vmatpush1.bf16.msra.mxu0 %v6757
    %8008 = vmatprep.subr.bf16.mxu0 %v6766
    %8009 = vmatpush1.bf16.msra.mxu0 %v6765
    %8010 = vmatprep.subr.bf16.mxu0 %v6774
    %8011 = vmatpush1.bf16.msra.mxu0 %v6773
    %8012 = vmatprep.subr.bf16.mxu0 %v6782
    %8013 = vmatpush1.bf16.msra.mxu0 %v6781
    %8014 = vmatprep.subr.bf16.mxu0 %v6790
    %8015 = vmatpush1.bf16.msra.mxu0 %v6789
    %8016 = vmatprep.subr.bf16.mxu0 %v6798
    %8017 = vmatpush1.bf16.msra.mxu0 %v6797
    %8018 = vmatprep.subr.bf16.mxu0 %v6806
    %8019 = vmatpush1.bf16.msra.mxu0 %v6805
    %8020 = vmatprep.subr.bf16.mxu0 %v6814
    %8021 = vmatpush1.bf16.msra.mxu0 %v6813
    %8022 = vmatprep.subr.bf16.mxu0 %v6822
    %8023 = vmatpush1.bf16.msra.mxu0 %v6821
    %8024 = vmatprep.subr.bf16.mxu0 %v6830
    %8025 = vmatpush1.bf16.msra.mxu0 %v6829
    %8026 = vmatprep.subr.bf16.mxu0 %v6838
    %8027 = vmatpush1.bf16.msra.mxu0 %v6837
    %8028 = vmatprep.subr.bf16.mxu0 %v6846
    %8029 = vmatpush1.bf16.msra.mxu0 %v6845
    %8030 = vmatprep.subr.bf16.mxu0 %v6854
    %8031 = vmatpush1.bf16.msra.mxu0 %v6853
    %8032 = vmatprep.subr.bf16.mxu0 %v6862
    %8033 = vmatpush1.bf16.msra.mxu0 %v6861
    %8034 = vmatprep.subr.bf16.mxu0 %v6870
    %8035 = vmatpush1.bf16.msra.mxu0 %v6869
    %8036 = vmatprep.subr.bf16.mxu0 %v6878
    %8037 = vmatpush1.bf16.msra.mxu0 %v6877
    %8038 = vmatprep.mubr.bf16.mxu0 %v4276
    %8039 = vmatmul.mubr.bf16.gmra.mrb[0].mxu0 %v4275
    %v8040 = vpop.f32.mrb[0].mxu0
    %v8041 = vadd.f32 %v8000, %v8040
    %v8042 = vpop.f32.mrb[0].mxu0
    %v8043 = vadd.f32 %v8002, %v8042
    %v8044 = vpop.f32.mrb[0].mxu0
    %v8045 = vpop.f32.mrb[0].mxu0
    %8046 = vdwg.mxu0
    %v8047 = vmul.f32 %v7549, 0.1
    %v8048 = vmul.f32 %v7551, 0.1
    %v8049 = vmul.f32 %v7713, 0.1
    %v8050 = vmul.f32 %v7715, 0.1
    %v8051 = vmul.f32 %v7877, 0.1
    %v8052 = vmul.f32 %v7879, 0.1
    %v8053 = vmul.f32 %v8041, 0.1
    %v8054 = vmul.f32 %v8043, 0.1
    %v8055 = vmax.f32 %v7549, %v8047
    %v8056 = vmax.f32 %v7551, %v8048
    %v8057 = vmax.f32 %v7713, %v8049
    %v8058 = vmax.f32 %v7715, %v8050
    %v8059 = vmax.f32 %v7877, %v8051
    %v8060 = vmax.f32 %v7879, %v8052
    %v8061 = vmax.f32 %v8041, %v8053
    %v8062 = vmax.f32 %v8043, %v8054
    %v8063 = vpack.c.bf16 %v8055, %v8055
    %v8064 = vpack.c.bf16 %v8056, %v8056
    %v8065 = vpack.c.bf16 %v8057, %v8057
    %v8066 = vpack.c.bf16 %v8058, %v8058
    %v8067 = vpack.c.bf16 %v8059, %v8059
    %v8068 = vpack.c.bf16 %v8060, %v8060
    %v8069 = vpack.c.bf16 %v8061, %v8061
    %v8070 = vpack.c.bf16 %v8062, %v8062
    %v8071 = vld [vmem:[#allocation13] sm:$0xff]
    %v8072 = vld [vmem:[#allocation13 + $0x8] sm:$0xff]
    %v8073 = vld [vmem:[#allocation13 + $0x10] sm:$0xff]
    %v8074 = vld [vmem:[#allocation13 + $0x18] sm:$0xff]
    %v8075 = vld [vmem:[#allocation13 + $0x20] sm:$0xff]
    %v8076 = vld [vmem:[#allocation13 + $0x28] sm:$0xff]
    %v8077 = vld [vmem:[#allocation13 + $0x30] sm:$0xff]
    %v8078 = vld [vmem:[#allocation13 + $0x38] sm:$0xff]
    %v8079 = vld [vmem:[#allocation13 + $0x40] sm:$0xff]
    %v8080 = vld [vmem:[#allocation13 + $0x48] sm:$0xff]
    %v8081 = vld [vmem:[#allocation13 + $0x50] sm:$0xff]
    %v8082 = vld [vmem:[#allocation13 + $0x58] sm:$0xff]
    %v8083 = vld [vmem:[#allocation13 + $0x60] sm:$0xff]
    %v8084 = vld [vmem:[#allocation13 + $0x68] sm:$0xff]
    %v8085 = vld [vmem:[#allocation13 + $0x70] sm:$0xff]
    %v8086 = vld [vmem:[#allocation13 + $0x78] sm:$0xff]
    %v8087 = vld [vmem:[#allocation13 + $0x80] sm:$0xff]
    %v8088 = vld [vmem:[#allocation13 + $0x88] sm:$0xff]
    %v8089 = vld [vmem:[#allocation13 + $0x90] sm:$0xff]
    %v8090 = vld [vmem:[#allocation13 + $0x98] sm:$0xff]
    %v8091 = vld [vmem:[#allocation13 + $0xa0] sm:$0xff]
    %v8092 = vld [vmem:[#allocation13 + $0xa8] sm:$0xff]
    %v8093 = vld [vmem:[#allocation13 + $0xb0] sm:$0xff]
    %v8094 = vld [vmem:[#allocation13 + $0xb8] sm:$0xff]
    %v8095 = vld [vmem:[#allocation13 + $0xc0] sm:$0xff]
    %v8096 = vld [vmem:[#allocation13 + $0xc8] sm:$0xff]
    %v8097 = vld [vmem:[#allocation13 + $0xd0] sm:$0xff]
    %v8098 = vld [vmem:[#allocation13 + $0xd8] sm:$0xff]
    %v8099 = vld [vmem:[#allocation13 + $0xe0] sm:$0xff]
    %v8100 = vld [vmem:[#allocation13 + $0xe8] sm:$0xff]
    %v8101 = vld [vmem:[#allocation13 + $0xf0] sm:$0xff]
    %v8102 = vld [vmem:[#allocation13 + $0xf8] sm:$0xff]
    %v8103 = vld [vmem:[#allocation13 + $0x100] sm:$0xff]
    %v8104 = vld [vmem:[#allocation13 + $0x108] sm:$0xff]
    %v8105 = vld [vmem:[#allocation13 + $0x110] sm:$0xff]
    %v8106 = vld [vmem:[#allocation13 + $0x118] sm:$0xff]
    %v8107 = vld [vmem:[#allocation13 + $0x120] sm:$0xff]
    %v8108 = vld [vmem:[#allocation13 + $0x128] sm:$0xff]
    %v8109 = vld [vmem:[#allocation13 + $0x130] sm:$0xff]
    %v8110 = vld [vmem:[#allocation13 + $0x138] sm:$0xff]
    %v8111 = vld [vmem:[#allocation13 + $0x140] sm:$0xff]
    %v8112 = vld [vmem:[#allocation13 + $0x148] sm:$0xff]
    %v8113 = vld [vmem:[#allocation13 + $0x150] sm:$0xff]
    %v8114 = vld [vmem:[#allocation13 + $0x158] sm:$0xff]
    %v8115 = vld [vmem:[#allocation13 + $0x160] sm:$0xff]
    %v8116 = vld [vmem:[#allocation13 + $0x168] sm:$0xff]
    %v8117 = vld [vmem:[#allocation13 + $0x170] sm:$0xff]
    %v8118 = vld [vmem:[#allocation13 + $0x178] sm:$0xff]
    %v8119 = vld [vmem:[#allocation13 + $0x180] sm:$0xff]
    %v8120 = vld [vmem:[#allocation13 + $0x188] sm:$0xff]
    %v8121 = vld [vmem:[#allocation13 + $0x190] sm:$0xff]
    %v8122 = vld [vmem:[#allocation13 + $0x198] sm:$0xff]
    %v8123 = vld [vmem:[#allocation13 + $0x1a0] sm:$0xff]
    %v8124 = vld [vmem:[#allocation13 + $0x1a8] sm:$0xff]
    %v8125 = vld [vmem:[#allocation13 + $0x1b0] sm:$0xff]
    %v8126 = vld [vmem:[#allocation13 + $0x1b8] sm:$0xff]
    %v8127 = vld [vmem:[#allocation13 + $0x1c0] sm:$0xff]
    %v8128 = vld [vmem:[#allocation13 + $0x1c8] sm:$0xff]
    %v8129 = vld [vmem:[#allocation13 + $0x1d0] sm:$0xff]
    %v8130 = vld [vmem:[#allocation13 + $0x1d8] sm:$0xff]
    %v8131 = vld [vmem:[#allocation13 + $0x1e0] sm:$0xff]
    %v8132 = vld [vmem:[#allocation13 + $0x1e8] sm:$0xff]
    %v8133 = vld [vmem:[#allocation13 + $0x1f0] sm:$0xff]
    %v8134 = vld [vmem:[#allocation13 + $0x1f8] sm:$0xff]
    %v8135 = vld [vmem:[#allocation13 + $0x200] sm:$0xff]
    %v8136 = vld [vmem:[#allocation13 + $0x208] sm:$0xff]
    %v8137 = vld [vmem:[#allocation13 + $0x210] sm:$0xff]
    %v8138 = vld [vmem:[#allocation13 + $0x218] sm:$0xff]
    %v8139 = vld [vmem:[#allocation13 + $0x220] sm:$0xff]
    %v8140 = vld [vmem:[#allocation13 + $0x228] sm:$0xff]
    %v8141 = vld [vmem:[#allocation13 + $0x230] sm:$0xff]
    %v8142 = vld [vmem:[#allocation13 + $0x238] sm:$0xff]
    %v8143 = vld [vmem:[#allocation13 + $0x240] sm:$0xff]
    %v8144 = vld [vmem:[#allocation13 + $0x248] sm:$0xff]
    %v8145 = vld [vmem:[#allocation13 + $0x250] sm:$0xff]
    %v8146 = vld [vmem:[#allocation13 + $0x258] sm:$0xff]
    %v8147 = vld [vmem:[#allocation13 + $0x260] sm:$0xff]
    %v8148 = vld [vmem:[#allocation13 + $0x268] sm:$0xff]
    %v8149 = vld [vmem:[#allocation13 + $0x270] sm:$0xff]
    %v8150 = vld [vmem:[#allocation13 + $0x278] sm:$0xff]
    %v8151 = vld [vmem:[#allocation13 + $0x280] sm:$0xff]
    %v8152 = vld [vmem:[#allocation13 + $0x288] sm:$0xff]
    %v8153 = vld [vmem:[#allocation13 + $0x290] sm:$0xff]
    %v8154 = vld [vmem:[#allocation13 + $0x298] sm:$0xff]
    %v8155 = vld [vmem:[#allocation13 + $0x2a0] sm:$0xff]
    %v8156 = vld [vmem:[#allocation13 + $0x2a8] sm:$0xff]
    %v8157 = vld [vmem:[#allocation13 + $0x2b0] sm:$0xff]
    %v8158 = vld [vmem:[#allocation13 + $0x2b8] sm:$0xff]
    %v8159 = vld [vmem:[#allocation13 + $0x2c0] sm:$0xff]
    %v8160 = vld [vmem:[#allocation13 + $0x2c8] sm:$0xff]
    %v8161 = vld [vmem:[#allocation13 + $0x2d0] sm:$0xff]
    %v8162 = vld [vmem:[#allocation13 + $0x2d8] sm:$0xff]
    %v8163 = vld [vmem:[#allocation13 + $0x2e0] sm:$0xff]
    %v8164 = vld [vmem:[#allocation13 + $0x2e8] sm:$0xff]
    %v8165 = vld [vmem:[#allocation13 + $0x2f0] sm:$0xff]
    %v8166 = vld [vmem:[#allocation13 + $0x2f8] sm:$0xff]
    %v8167 = vld [vmem:[#allocation13 + $0x300] sm:$0xff]
    %v8168 = vld [vmem:[#allocation13 + $0x308] sm:$0xff]
    %v8169 = vld [vmem:[#allocation13 + $0x310] sm:$0xff]
    %v8170 = vld [vmem:[#allocation13 + $0x318] sm:$0xff]
    %v8171 = vld [vmem:[#allocation13 + $0x320] sm:$0xff]
    %v8172 = vld [vmem:[#allocation13 + $0x328] sm:$0xff]
    %v8173 = vld [vmem:[#allocation13 + $0x330] sm:$0xff]
    %v8174 = vld [vmem:[#allocation13 + $0x338] sm:$0xff]
    %v8175 = vld [vmem:[#allocation13 + $0x340] sm:$0xff]
    %v8176 = vld [vmem:[#allocation13 + $0x348] sm:$0xff]
    %v8177 = vld [vmem:[#allocation13 + $0x350] sm:$0xff]
    %v8178 = vld [vmem:[#allocation13 + $0x358] sm:$0xff]
    %v8179 = vld [vmem:[#allocation13 + $0x360] sm:$0xff]
    %v8180 = vld [vmem:[#allocation13 + $0x368] sm:$0xff]
    %v8181 = vld [vmem:[#allocation13 + $0x370] sm:$0xff]
    %v8182 = vld [vmem:[#allocation13 + $0x378] sm:$0xff]
    %v8183 = vld [vmem:[#allocation13 + $0x380] sm:$0xff]
    %v8184 = vld [vmem:[#allocation13 + $0x388] sm:$0xff]
    %v8185 = vld [vmem:[#allocation13 + $0x390] sm:$0xff]
    %v8186 = vld [vmem:[#allocation13 + $0x398] sm:$0xff]
    %v8187 = vld [vmem:[#allocation13 + $0x3a0] sm:$0xff]
    %v8188 = vld [vmem:[#allocation13 + $0x3a8] sm:$0xff]
    %v8189 = vld [vmem:[#allocation13 + $0x3b0] sm:$0xff]
    %v8190 = vld [vmem:[#allocation13 + $0x3b8] sm:$0xff]
    %v8191 = vld [vmem:[#allocation13 + $0x3c0] sm:$0xff]
    %v8192 = vld [vmem:[#allocation13 + $0x3c8] sm:$0xff]
    %v8193 = vld [vmem:[#allocation13 + $0x3d0] sm:$0xff]
    %v8194 = vld [vmem:[#allocation13 + $0x3d8] sm:$0xff]
    %v8195 = vld [vmem:[#allocation13 + $0x3e0] sm:$0xff]
    %v8196 = vld [vmem:[#allocation13 + $0x3e8] sm:$0xff]
    %v8197 = vld [vmem:[#allocation13 + $0x3f0] sm:$0xff]
    %v8198 = vld [vmem:[#allocation13 + $0x3f8] sm:$0xff]
    %v8199 = vld [vmem:[#allocation13 + $0x400] sm:$0xff]
    %v8200 = vld [vmem:[#allocation13 + $0x408] sm:$0xff]
    %v8201 = vld [vmem:[#allocation13 + $0x410] sm:$0xff]
    %v8202 = vld [vmem:[#allocation13 + $0x418] sm:$0xff]
    %v8203 = vld [vmem:[#allocation13 + $0x420] sm:$0xff]
    %v8204 = vld [vmem:[#allocation13 + $0x428] sm:$0xff]
    %v8205 = vld [vmem:[#allocation13 + $0x430] sm:$0xff]
    %v8206 = vld [vmem:[#allocation13 + $0x438] sm:$0xff]
    %v8207 = vld [vmem:[#allocation13 + $0x440] sm:$0xff]
    %v8208 = vld [vmem:[#allocation13 + $0x448] sm:$0xff]
    %v8209 = vld [vmem:[#allocation13 + $0x450] sm:$0xff]
    %v8210 = vld [vmem:[#allocation13 + $0x458] sm:$0xff]
    %v8211 = vld [vmem:[#allocation13 + $0x460] sm:$0xff]
    %v8212 = vld [vmem:[#allocation13 + $0x468] sm:$0xff]
    %v8213 = vld [vmem:[#allocation13 + $0x470] sm:$0xff]
    %v8214 = vld [vmem:[#allocation13 + $0x478] sm:$0xff]
    %v8215 = vld [vmem:[#allocation13 + $0x480] sm:$0xff]
    %v8216 = vld [vmem:[#allocation13 + $0x488] sm:$0xff]
    %v8217 = vld [vmem:[#allocation13 + $0x490] sm:$0xff]
    %v8218 = vld [vmem:[#allocation13 + $0x498] sm:$0xff]
    %v8219 = vld [vmem:[#allocation13 + $0x4a0] sm:$0xff]
    %v8220 = vld [vmem:[#allocation13 + $0x4a8] sm:$0xff]
    %v8221 = vld [vmem:[#allocation13 + $0x4b0] sm:$0xff]
    %v8222 = vld [vmem:[#allocation13 + $0x4b8] sm:$0xff]
    %v8223 = vld [vmem:[#allocation13 + $0x4c0] sm:$0xff]
    %v8224 = vld [vmem:[#allocation13 + $0x4c8] sm:$0xff]
    %v8225 = vld [vmem:[#allocation13 + $0x4d0] sm:$0xff]
    %v8226 = vld [vmem:[#allocation13 + $0x4d8] sm:$0xff]
    %v8227 = vld [vmem:[#allocation13 + $0x4e0] sm:$0xff]
    %v8228 = vld [vmem:[#allocation13 + $0x4e8] sm:$0xff]
    %v8229 = vld [vmem:[#allocation13 + $0x4f0] sm:$0xff]
    %v8230 = vld [vmem:[#allocation13 + $0x4f8] sm:$0xff]
    %v8231 = vld [vmem:[#allocation13 + $0x500] sm:$0xff]
    %v8232 = vld [vmem:[#allocation13 + $0x508] sm:$0xff]
    %v8233 = vld [vmem:[#allocation13 + $0x510] sm:$0xff]
    %v8234 = vld [vmem:[#allocation13 + $0x518] sm:$0xff]
    %v8235 = vld [vmem:[#allocation13 + $0x520] sm:$0xff]
    %v8236 = vld [vmem:[#allocation13 + $0x528] sm:$0xff]
    %v8237 = vld [vmem:[#allocation13 + $0x530] sm:$0xff]
    %v8238 = vld [vmem:[#allocation13 + $0x538] sm:$0xff]
    %v8239 = vld [vmem:[#allocation13 + $0x540] sm:$0xff]
    %v8240 = vld [vmem:[#allocation13 + $0x548] sm:$0xff]
    %v8241 = vld [vmem:[#allocation13 + $0x550] sm:$0xff]
    %v8242 = vld [vmem:[#allocation13 + $0x558] sm:$0xff]
    %v8243 = vld [vmem:[#allocation13 + $0x560] sm:$0xff]
    %v8244 = vld [vmem:[#allocation13 + $0x568] sm:$0xff]
    %v8245 = vld [vmem:[#allocation13 + $0x570] sm:$0xff]
    %v8246 = vld [vmem:[#allocation13 + $0x578] sm:$0xff]
    %v8247 = vld [vmem:[#allocation13 + $0x580] sm:$0xff]
    %v8248 = vld [vmem:[#allocation13 + $0x588] sm:$0xff]
    %v8249 = vld [vmem:[#allocation13 + $0x590] sm:$0xff]
    %v8250 = vld [vmem:[#allocation13 + $0x598] sm:$0xff]
    %v8251 = vld [vmem:[#allocation13 + $0x5a0] sm:$0xff]
    %v8252 = vld [vmem:[#allocation13 + $0x5a8] sm:$0xff]
    %v8253 = vld [vmem:[#allocation13 + $0x5b0] sm:$0xff]
    %v8254 = vld [vmem:[#allocation13 + $0x5b8] sm:$0xff]
    %v8255 = vld [vmem:[#allocation13 + $0x5c0] sm:$0xff]
    %v8256 = vld [vmem:[#allocation13 + $0x5c8] sm:$0xff]
    %v8257 = vld [vmem:[#allocation13 + $0x5d0] sm:$0xff]
    %v8258 = vld [vmem:[#allocation13 + $0x5d8] sm:$0xff]
    %v8259 = vld [vmem:[#allocation13 + $0x5e0] sm:$0xff]
    %v8260 = vld [vmem:[#allocation13 + $0x5e8] sm:$0xff]
    %v8261 = vld [vmem:[#allocation13 + $0x5f0] sm:$0xff]
    %v8262 = vld [vmem:[#allocation13 + $0x5f8] sm:$0xff]
    %v8263 = vld [vmem:[#allocation13 + $0x600] sm:$0xff]
    %v8264 = vld [vmem:[#allocation13 + $0x608] sm:$0xff]
    %v8265 = vld [vmem:[#allocation13 + $0x610] sm:$0xff]
    %v8266 = vld [vmem:[#allocation13 + $0x618] sm:$0xff]
    %v8267 = vld [vmem:[#allocation13 + $0x620] sm:$0xff]
    %v8268 = vld [vmem:[#allocation13 + $0x628] sm:$0xff]
    %v8269 = vld [vmem:[#allocation13 + $0x630] sm:$0xff]
    %v8270 = vld [vmem:[#allocation13 + $0x638] sm:$0xff]
    %v8271 = vld [vmem:[#allocation13 + $0x640] sm:$0xff]
    %v8272 = vld [vmem:[#allocation13 + $0x648] sm:$0xff]
    %v8273 = vld [vmem:[#allocation13 + $0x650] sm:$0xff]
    %v8274 = vld [vmem:[#allocation13 + $0x658] sm:$0xff]
    %v8275 = vld [vmem:[#allocation13 + $0x660] sm:$0xff]
    %v8276 = vld [vmem:[#allocation13 + $0x668] sm:$0xff]
    %v8277 = vld [vmem:[#allocation13 + $0x670] sm:$0xff]
    %v8278 = vld [vmem:[#allocation13 + $0x678] sm:$0xff]
    %v8279 = vld [vmem:[#allocation13 + $0x680] sm:$0xff]
    %v8280 = vld [vmem:[#allocation13 + $0x688] sm:$0xff]
    %v8281 = vld [vmem:[#allocation13 + $0x690] sm:$0xff]
    %v8282 = vld [vmem:[#allocation13 + $0x698] sm:$0xff]
    %v8283 = vld [vmem:[#allocation13 + $0x6a0] sm:$0xff]
    %v8284 = vld [vmem:[#allocation13 + $0x6a8] sm:$0xff]
    %v8285 = vld [vmem:[#allocation13 + $0x6b0] sm:$0xff]
    %v8286 = vld [vmem:[#allocation13 + $0x6b8] sm:$0xff]
    %v8287 = vld [vmem:[#allocation13 + $0x6c0] sm:$0xff]
    %v8288 = vld [vmem:[#allocation13 + $0x6c8] sm:$0xff]
    %v8289 = vld [vmem:[#allocation13 + $0x6d0] sm:$0xff]
    %v8290 = vld [vmem:[#allocation13 + $0x6d8] sm:$0xff]
    %v8291 = vld [vmem:[#allocation13 + $0x6e0] sm:$0xff]
    %v8292 = vld [vmem:[#allocation13 + $0x6e8] sm:$0xff]
    %v8293 = vld [vmem:[#allocation13 + $0x6f0] sm:$0xff]
    %v8294 = vld [vmem:[#allocation13 + $0x6f8] sm:$0xff]
    %v8295 = vld [vmem:[#allocation13 + $0x700] sm:$0xff]
    %v8296 = vld [vmem:[#allocation13 + $0x708] sm:$0xff]
    %v8297 = vld [vmem:[#allocation13 + $0x710] sm:$0xff]
    %v8298 = vld [vmem:[#allocation13 + $0x718] sm:$0xff]
    %v8299 = vld [vmem:[#allocation13 + $0x720] sm:$0xff]
    %v8300 = vld [vmem:[#allocation13 + $0x728] sm:$0xff]
    %v8301 = vld [vmem:[#allocation13 + $0x730] sm:$0xff]
    %v8302 = vld [vmem:[#allocation13 + $0x738] sm:$0xff]
    %v8303 = vld [vmem:[#allocation13 + $0x740] sm:$0xff]
    %v8304 = vld [vmem:[#allocation13 + $0x748] sm:$0xff]
    %v8305 = vld [vmem:[#allocation13 + $0x750] sm:$0xff]
    %v8306 = vld [vmem:[#allocation13 + $0x758] sm:$0xff]
    %v8307 = vld [vmem:[#allocation13 + $0x760] sm:$0xff]
    %v8308 = vld [vmem:[#allocation13 + $0x768] sm:$0xff]
    %v8309 = vld [vmem:[#allocation13 + $0x770] sm:$0xff]
    %v8310 = vld [vmem:[#allocation13 + $0x778] sm:$0xff]
    %v8311 = vld [vmem:[#allocation13 + $0x780] sm:$0xff]
    %v8312 = vld [vmem:[#allocation13 + $0x788] sm:$0xff]
    %v8313 = vld [vmem:[#allocation13 + $0x790] sm:$0xff]
    %v8314 = vld [vmem:[#allocation13 + $0x798] sm:$0xff]
    %v8315 = vld [vmem:[#allocation13 + $0x7a0] sm:$0xff]
    %v8316 = vld [vmem:[#allocation13 + $0x7a8] sm:$0xff]
    %v8317 = vld [vmem:[#allocation13 + $0x7b0] sm:$0xff]
    %v8318 = vld [vmem:[#allocation13 + $0x7b8] sm:$0xff]
    %v8319 = vld [vmem:[#allocation13 + $0x7c0] sm:$0xff]
    %v8320 = vld [vmem:[#allocation13 + $0x7c8] sm:$0xff]
    %v8321 = vld [vmem:[#allocation13 + $0x7d0] sm:$0xff]
    %v8322 = vld [vmem:[#allocation13 + $0x7d8] sm:$0xff]
    %v8323 = vld [vmem:[#allocation13 + $0x7e0] sm:$0xff]
    %v8324 = vld [vmem:[#allocation13 + $0x7e8] sm:$0xff]
    %v8325 = vld [vmem:[#allocation13 + $0x7f0] sm:$0xff]
    %v8326 = vld [vmem:[#allocation13 + $0x7f8] sm:$0xff]
    %v8327 = vld [vmem:[#allocation13 + $0x800] sm:$0xff]
    %v8328 = vld [vmem:[#allocation13 + $0x808] sm:$0xff]
    %v8329 = vld [vmem:[#allocation13 + $0x810] sm:$0xff]
    %v8330 = vld [vmem:[#allocation13 + $0x818] sm:$0xff]
    %v8331 = vld [vmem:[#allocation13 + $0x820] sm:$0xff]
    %v8332 = vld [vmem:[#allocation13 + $0x828] sm:$0xff]
    %v8333 = vld [vmem:[#allocation13 + $0x830] sm:$0xff]
    %v8334 = vld [vmem:[#allocation13 + $0x838] sm:$0xff]
    %v8335 = vld [vmem:[#allocation13 + $0x840] sm:$0xff]
    %v8336 = vld [vmem:[#allocation13 + $0x848] sm:$0xff]
    %v8337 = vld [vmem:[#allocation13 + $0x850] sm:$0xff]
    %v8338 = vld [vmem:[#allocation13 + $0x858] sm:$0xff]
    %v8339 = vld [vmem:[#allocation13 + $0x860] sm:$0xff]
    %v8340 = vld [vmem:[#allocation13 + $0x868] sm:$0xff]
    %v8341 = vld [vmem:[#allocation13 + $0x870] sm:$0xff]
    %v8342 = vld [vmem:[#allocation13 + $0x878] sm:$0xff]
    %v8343 = vld [vmem:[#allocation13 + $0x880] sm:$0xff]
    %v8344 = vld [vmem:[#allocation13 + $0x888] sm:$0xff]
    %v8345 = vld [vmem:[#allocation13 + $0x890] sm:$0xff]
    %v8346 = vld [vmem:[#allocation13 + $0x898] sm:$0xff]
    %v8347 = vld [vmem:[#allocation13 + $0x8a0] sm:$0xff]
    %v8348 = vld [vmem:[#allocation13 + $0x8a8] sm:$0xff]
    %v8349 = vld [vmem:[#allocation13 + $0x8b0] sm:$0xff]
    %v8350 = vld [vmem:[#allocation13 + $0x8b8] sm:$0xff]
    %v8351 = vld [vmem:[#allocation13 + $0x8c0] sm:$0xff]
    %v8352 = vld [vmem:[#allocation13 + $0x8c8] sm:$0xff]
    %v8353 = vld [vmem:[#allocation13 + $0x8d0] sm:$0xff]
    %v8354 = vld [vmem:[#allocation13 + $0x8d8] sm:$0xff]
    %v8355 = vld [vmem:[#allocation13 + $0x8e0] sm:$0xff]
    %v8356 = vld [vmem:[#allocation13 + $0x8e8] sm:$0xff]
    %v8357 = vld [vmem:[#allocation13 + $0x8f0] sm:$0xff]
    %v8358 = vld [vmem:[#allocation13 + $0x8f8] sm:$0xff]
    %v8359 = vld [vmem:[#allocation13 + $0x900] sm:$0xff]
    %v8360 = vld [vmem:[#allocation13 + $0x908] sm:$0xff]
    %v8361 = vld [vmem:[#allocation13 + $0x910] sm:$0xff]
    %v8362 = vld [vmem:[#allocation13 + $0x918] sm:$0xff]
    %v8363 = vld [vmem:[#allocation13 + $0x920] sm:$0xff]
    %v8364 = vld [vmem:[#allocation13 + $0x928] sm:$0xff]
    %v8365 = vld [vmem:[#allocation13 + $0x930] sm:$0xff]
    %v8366 = vld [vmem:[#allocation13 + $0x938] sm:$0xff]
    %v8367 = vld [vmem:[#allocation13 + $0x940] sm:$0xff]
    %v8368 = vld [vmem:[#allocation13 + $0x948] sm:$0xff]
    %v8369 = vld [vmem:[#allocation13 + $0x950] sm:$0xff]
    %v8370 = vld [vmem:[#allocation13 + $0x958] sm:$0xff]
    %v8371 = vld [vmem:[#allocation13 + $0x960] sm:$0xff]
    %v8372 = vld [vmem:[#allocation13 + $0x968] sm:$0xff]
    %v8373 = vld [vmem:[#allocation13 + $0x970] sm:$0xff]
    %v8374 = vld [vmem:[#allocation13 + $0x978] sm:$0xff]
    %v8375 = vld [vmem:[#allocation13 + $0x980] sm:$0xff]
    %v8376 = vld [vmem:[#allocation13 + $0x988] sm:$0xff]
    %v8377 = vld [vmem:[#allocation13 + $0x990] sm:$0xff]
    %v8378 = vld [vmem:[#allocation13 + $0x998] sm:$0xff]
    %v8379 = vld [vmem:[#allocation13 + $0x9a0] sm:$0xff]
    %v8380 = vld [vmem:[#allocation13 + $0x9a8] sm:$0xff]
    %v8381 = vld [vmem:[#allocation13 + $0x9b0] sm:$0xff]
    %v8382 = vld [vmem:[#allocation13 + $0x9b8] sm:$0xff]
    %v8383 = vld [vmem:[#allocation13 + $0x9c0] sm:$0xff]
    %v8384 = vld [vmem:[#allocation13 + $0x9c8] sm:$0xff]
    %v8385 = vld [vmem:[#allocation13 + $0x9d0] sm:$0xff]
    %v8386 = vld [vmem:[#allocation13 + $0x9d8] sm:$0xff]
    %v8387 = vld [vmem:[#allocation13 + $0x9e0] sm:$0xff]
    %v8388 = vld [vmem:[#allocation13 + $0x9e8] sm:$0xff]
    %v8389 = vld [vmem:[#allocation13 + $0x9f0] sm:$0xff]
    %v8390 = vld [vmem:[#allocation13 + $0x9f8] sm:$0xff]
    %v8391 = vld [vmem:[#allocation13 + $0xa00] sm:$0xff]
    %v8392 = vld [vmem:[#allocation13 + $0xa08] sm:$0xff]
    %v8393 = vld [vmem:[#allocation13 + $0xa10] sm:$0xff]
    %v8394 = vld [vmem:[#allocation13 + $0xa18] sm:$0xff]
    %v8395 = vld [vmem:[#allocation13 + $0xa20] sm:$0xff]
    %v8396 = vld [vmem:[#allocation13 + $0xa28] sm:$0xff]
    %v8397 = vld [vmem:[#allocation13 + $0xa30] sm:$0xff]
    %v8398 = vld [vmem:[#allocation13 + $0xa38] sm:$0xff]
    %v8399 = vld [vmem:[#allocation13 + $0xa40] sm:$0xff]
    %v8400 = vld [vmem:[#allocation13 + $0xa48] sm:$0xff]
    %v8401 = vld [vmem:[#allocation13 + $0xa50] sm:$0xff]
    %v8402 = vld [vmem:[#allocation13 + $0xa58] sm:$0xff]
    %v8403 = vld [vmem:[#allocation13 + $0xa60] sm:$0xff]
    %v8404 = vld [vmem:[#allocation13 + $0xa68] sm:$0xff]
    %v8405 = vld [vmem:[#allocation13 + $0xa70] sm:$0xff]
    %v8406 = vld [vmem:[#allocation13 + $0xa78] sm:$0xff]
    %v8407 = vld [vmem:[#allocation13 + $0xa80] sm:$0xff]
    %v8408 = vld [vmem:[#allocation13 + $0xa88] sm:$0xff]
    %v8409 = vld [vmem:[#allocation13 + $0xa90] sm:$0xff]
    %v8410 = vld [vmem:[#allocation13 + $0xa98] sm:$0xff]
    %v8411 = vld [vmem:[#allocation13 + $0xaa0] sm:$0xff]
    %v8412 = vld [vmem:[#allocation13 + $0xaa8] sm:$0xff]
    %v8413 = vld [vmem:[#allocation13 + $0xab0] sm:$0xff]
    %v8414 = vld [vmem:[#allocation13 + $0xab8] sm:$0xff]
    %v8415 = vld [vmem:[#allocation13 + $0xac0] sm:$0xff]
    %v8416 = vld [vmem:[#allocation13 + $0xac8] sm:$0xff]
    %v8417 = vld [vmem:[#allocation13 + $0xad0] sm:$0xff]
    %v8418 = vld [vmem:[#allocation13 + $0xad8] sm:$0xff]
    %v8419 = vld [vmem:[#allocation13 + $0xae0] sm:$0xff]
    %v8420 = vld [vmem:[#allocation13 + $0xae8] sm:$0xff]
    %v8421 = vld [vmem:[#allocation13 + $0xaf0] sm:$0xff]
    %v8422 = vld [vmem:[#allocation13 + $0xaf8] sm:$0xff]
    %v8423 = vld [vmem:[#allocation13 + $0xb00] sm:$0xff]
    %v8424 = vld [vmem:[#allocation13 + $0xb08] sm:$0xff]
    %v8425 = vld [vmem:[#allocation13 + $0xb10] sm:$0xff]
    %v8426 = vld [vmem:[#allocation13 + $0xb18] sm:$0xff]
    %v8427 = vld [vmem:[#allocation13 + $0xb20] sm:$0xff]
    %v8428 = vld [vmem:[#allocation13 + $0xb28] sm:$0xff]
    %v8429 = vld [vmem:[#allocation13 + $0xb30] sm:$0xff]
    %v8430 = vld [vmem:[#allocation13 + $0xb38] sm:$0xff]
    %v8431 = vld [vmem:[#allocation13 + $0xb40] sm:$0xff]
    %v8432 = vld [vmem:[#allocation13 + $0xb48] sm:$0xff]
    %v8433 = vld [vmem:[#allocation13 + $0xb50] sm:$0xff]
    %v8434 = vld [vmem:[#allocation13 + $0xb58] sm:$0xff]
    %v8435 = vld [vmem:[#allocation13 + $0xb60] sm:$0xff]
    %v8436 = vld [vmem:[#allocation13 + $0xb68] sm:$0xff]
    %v8437 = vld [vmem:[#allocation13 + $0xb70] sm:$0xff]
    %v8438 = vld [vmem:[#allocation13 + $0xb78] sm:$0xff]
    %v8439 = vld [vmem:[#allocation13 + $0xb80] sm:$0xff]
    %v8440 = vld [vmem:[#allocation13 + $0xb88] sm:$0xff]
    %v8441 = vld [vmem:[#allocation13 + $0xb90] sm:$0xff]
    %v8442 = vld [vmem:[#allocation13 + $0xb98] sm:$0xff]
    %v8443 = vld [vmem:[#allocation13 + $0xba0] sm:$0xff]
    %v8444 = vld [vmem:[#allocation13 + $0xba8] sm:$0xff]
    %v8445 = vld [vmem:[#allocation13 + $0xbb0] sm:$0xff]
    %v8446 = vld [vmem:[#allocation13 + $0xbb8] sm:$0xff]
    %v8447 = vld [vmem:[#allocation13 + $0xbc0] sm:$0xff]
    %v8448 = vld [vmem:[#allocation13 + $0xbc8] sm:$0xff]
    %v8449 = vld [vmem:[#allocation13 + $0xbd0] sm:$0xff]
    %v8450 = vld [vmem:[#allocation13 + $0xbd8] sm:$0xff]
    %v8451 = vld [vmem:[#allocation13 + $0xbe0] sm:$0xff]
    %v8452 = vld [vmem:[#allocation13 + $0xbe8] sm:$0xff]
    %v8453 = vld [vmem:[#allocation13 + $0xbf0] sm:$0xff]
    %v8454 = vld [vmem:[#allocation13 + $0xbf8] sm:$0xff]
    %v8455 = vld [vmem:[#allocation13 + $0xc00] sm:$0xff]
    %v8456 = vld [vmem:[#allocation13 + $0xc08] sm:$0xff]
    %v8457 = vld [vmem:[#allocation13 + $0xc10] sm:$0xff]
    %v8458 = vld [vmem:[#allocation13 + $0xc18] sm:$0xff]
    %v8459 = vld [vmem:[#allocation13 + $0xc20] sm:$0xff]
    %v8460 = vld [vmem:[#allocation13 + $0xc28] sm:$0xff]
    %v8461 = vld [vmem:[#allocation13 + $0xc30] sm:$0xff]
    %v8462 = vld [vmem:[#allocation13 + $0xc38] sm:$0xff]
    %v8463 = vld [vmem:[#allocation13 + $0xc40] sm:$0xff]
    %v8464 = vld [vmem:[#allocation13 + $0xc48] sm:$0xff]
    %v8465 = vld [vmem:[#allocation13 + $0xc50] sm:$0xff]
    %v8466 = vld [vmem:[#allocation13 + $0xc58] sm:$0xff]
    %v8467 = vld [vmem:[#allocation13 + $0xc60] sm:$0xff]
    %v8468 = vld [vmem:[#allocation13 + $0xc68] sm:$0xff]
    %v8469 = vld [vmem:[#allocation13 + $0xc70] sm:$0xff]
    %v8470 = vld [vmem:[#allocation13 + $0xc78] sm:$0xff]
    %v8471 = vld [vmem:[#allocation13 + $0xc80] sm:$0xff]
    %v8472 = vld [vmem:[#allocation13 + $0xc88] sm:$0xff]
    %v8473 = vld [vmem:[#allocation13 + $0xc90] sm:$0xff]
    %v8474 = vld [vmem:[#allocation13 + $0xc98] sm:$0xff]
    %v8475 = vld [vmem:[#allocation13 + $0xca0] sm:$0xff]
    %v8476 = vld [vmem:[#allocation13 + $0xca8] sm:$0xff]
    %v8477 = vld [vmem:[#allocation13 + $0xcb0] sm:$0xff]
    %v8478 = vld [vmem:[#allocation13 + $0xcb8] sm:$0xff]
    %v8479 = vld [vmem:[#allocation13 + $0xcc0] sm:$0xff]
    %v8480 = vld [vmem:[#allocation13 + $0xcc8] sm:$0xff]
    %v8481 = vld [vmem:[#allocation13 + $0xcd0] sm:$0xff]
    %v8482 = vld [vmem:[#allocation13 + $0xcd8] sm:$0xff]
    %v8483 = vld [vmem:[#allocation13 + $0xce0] sm:$0xff]
    %v8484 = vld [vmem:[#allocation13 + $0xce8] sm:$0xff]
    %v8485 = vld [vmem:[#allocation13 + $0xcf0] sm:$0xff]
    %v8486 = vld [vmem:[#allocation13 + $0xcf8] sm:$0xff]
    %v8487 = vld [vmem:[#allocation13 + $0xd00] sm:$0xff]
    %v8488 = vld [vmem:[#allocation13 + $0xd08] sm:$0xff]
    %v8489 = vld [vmem:[#allocation13 + $0xd10] sm:$0xff]
    %v8490 = vld [vmem:[#allocation13 + $0xd18] sm:$0xff]
    %v8491 = vld [vmem:[#allocation13 + $0xd20] sm:$0xff]
    %v8492 = vld [vmem:[#allocation13 + $0xd28] sm:$0xff]
    %v8493 = vld [vmem:[#allocation13 + $0xd30] sm:$0xff]
    %v8494 = vld [vmem:[#allocation13 + $0xd38] sm:$0xff]
    %v8495 = vld [vmem:[#allocation13 + $0xd40] sm:$0xff]
    %v8496 = vld [vmem:[#allocation13 + $0xd48] sm:$0xff]
    %v8497 = vld [vmem:[#allocation13 + $0xd50] sm:$0xff]
    %v8498 = vld [vmem:[#allocation13 + $0xd58] sm:$0xff]
    %v8499 = vld [vmem:[#allocation13 + $0xd60] sm:$0xff]
    %v8500 = vld [vmem:[#allocation13 + $0xd68] sm:$0xff]
    %v8501 = vld [vmem:[#allocation13 + $0xd70] sm:$0xff]
    %v8502 = vld [vmem:[#allocation13 + $0xd78] sm:$0xff]
    %v8503 = vld [vmem:[#allocation13 + $0xd80] sm:$0xff]
    %v8504 = vld [vmem:[#allocation13 + $0xd88] sm:$0xff]
    %v8505 = vld [vmem:[#allocation13 + $0xd90] sm:$0xff]
    %v8506 = vld [vmem:[#allocation13 + $0xd98] sm:$0xff]
    %v8507 = vld [vmem:[#allocation13 + $0xda0] sm:$0xff]
    %v8508 = vld [vmem:[#allocation13 + $0xda8] sm:$0xff]
    %v8509 = vld [vmem:[#allocation13 + $0xdb0] sm:$0xff]
    %v8510 = vld [vmem:[#allocation13 + $0xdb8] sm:$0xff]
    %v8511 = vld [vmem:[#allocation13 + $0xdc0] sm:$0xff]
    %v8512 = vld [vmem:[#allocation13 + $0xdc8] sm:$0xff]
    %v8513 = vld [vmem:[#allocation13 + $0xdd0] sm:$0xff]
    %v8514 = vld [vmem:[#allocation13 + $0xdd8] sm:$0xff]
    %v8515 = vld [vmem:[#allocation13 + $0xde0] sm:$0xff]
    %v8516 = vld [vmem:[#allocation13 + $0xde8] sm:$0xff]
    %v8517 = vld [vmem:[#allocation13 + $0xdf0] sm:$0xff]
    %v8518 = vld [vmem:[#allocation13 + $0xdf8] sm:$0xff]
    %v8519 = vld [vmem:[#allocation13 + $0xe00] sm:$0xff]
    %v8520 = vld [vmem:[#allocation13 + $0xe08] sm:$0xff]
    %v8521 = vld [vmem:[#allocation13 + $0xe10] sm:$0xff]
    %v8522 = vld [vmem:[#allocation13 + $0xe18] sm:$0xff]
    %v8523 = vld [vmem:[#allocation13 + $0xe20] sm:$0xff]
    %v8524 = vld [vmem:[#allocation13 + $0xe28] sm:$0xff]
    %v8525 = vld [vmem:[#allocation13 + $0xe30] sm:$0xff]
    %v8526 = vld [vmem:[#allocation13 + $0xe38] sm:$0xff]
    %v8527 = vld [vmem:[#allocation13 + $0xe40] sm:$0xff]
    %v8528 = vld [vmem:[#allocation13 + $0xe48] sm:$0xff]
    %v8529 = vld [vmem:[#allocation13 + $0xe50] sm:$0xff]
    %v8530 = vld [vmem:[#allocation13 + $0xe58] sm:$0xff]
    %v8531 = vld [vmem:[#allocation13 + $0xe60] sm:$0xff]
    %v8532 = vld [vmem:[#allocation13 + $0xe68] sm:$0xff]
    %v8533 = vld [vmem:[#allocation13 + $0xe70] sm:$0xff]
    %v8534 = vld [vmem:[#allocation13 + $0xe78] sm:$0xff]
    %v8535 = vld [vmem:[#allocation13 + $0xe80] sm:$0xff]
    %v8536 = vld [vmem:[#allocation13 + $0xe88] sm:$0xff]
    %v8537 = vld [vmem:[#allocation13 + $0xe90] sm:$0xff]
    %v8538 = vld [vmem:[#allocation13 + $0xe98] sm:$0xff]
    %v8539 = vld [vmem:[#allocation13 + $0xea0] sm:$0xff]
    %v8540 = vld [vmem:[#allocation13 + $0xea8] sm:$0xff]
    %v8541 = vld [vmem:[#allocation13 + $0xeb0] sm:$0xff]
    %v8542 = vld [vmem:[#allocation13 + $0xeb8] sm:$0xff]
    %v8543 = vld [vmem:[#allocation13 + $0xec0] sm:$0xff]
    %v8544 = vld [vmem:[#allocation13 + $0xec8] sm:$0xff]
    %v8545 = vld [vmem:[#allocation13 + $0xed0] sm:$0xff]
    %v8546 = vld [vmem:[#allocation13 + $0xed8] sm:$0xff]
    %v8547 = vld [vmem:[#allocation13 + $0xee0] sm:$0xff]
    %v8548 = vld [vmem:[#allocation13 + $0xee8] sm:$0xff]
    %v8549 = vld [vmem:[#allocation13 + $0xef0] sm:$0xff]
    %v8550 = vld [vmem:[#allocation13 + $0xef8] sm:$0xff]
    %v8551 = vld [vmem:[#allocation13 + $0xf00] sm:$0xff]
    %v8552 = vld [vmem:[#allocation13 + $0xf08] sm:$0xff]
    %v8553 = vld [vmem:[#allocation13 + $0xf10] sm:$0xff]
    %v8554 = vld [vmem:[#allocation13 + $0xf18] sm:$0xff]
    %v8555 = vld [vmem:[#allocation13 + $0xf20] sm:$0xff]
    %v8556 = vld [vmem:[#allocation13 + $0xf28] sm:$0xff]
    %v8557 = vld [vmem:[#allocation13 + $0xf30] sm:$0xff]
    %v8558 = vld [vmem:[#allocation13 + $0xf38] sm:$0xff]
    %v8559 = vld [vmem:[#allocation13 + $0xf40] sm:$0xff]
    %v8560 = vld [vmem:[#allocation13 + $0xf48] sm:$0xff]
    %v8561 = vld [vmem:[#allocation13 + $0xf50] sm:$0xff]
    %v8562 = vld [vmem:[#allocation13 + $0xf58] sm:$0xff]
    %v8563 = vld [vmem:[#allocation13 + $0xf60] sm:$0xff]
    %v8564 = vld [vmem:[#allocation13 + $0xf68] sm:$0xff]
    %v8565 = vld [vmem:[#allocation13 + $0xf70] sm:$0xff]
    %v8566 = vld [vmem:[#allocation13 + $0xf78] sm:$0xff]
    %v8567 = vld [vmem:[#allocation13 + $0xf80] sm:$0xff]
    %v8568 = vld [vmem:[#allocation13 + $0xf88] sm:$0xff]
    %v8569 = vld [vmem:[#allocation13 + $0xf90] sm:$0xff]
    %v8570 = vld [vmem:[#allocation13 + $0xf98] sm:$0xff]
    %v8571 = vld [vmem:[#allocation13 + $0xfa0] sm:$0xff]
    %v8572 = vld [vmem:[#allocation13 + $0xfa8] sm:$0xff]
    %v8573 = vld [vmem:[#allocation13 + $0xfb0] sm:$0xff]
    %v8574 = vld [vmem:[#allocation13 + $0xfb8] sm:$0xff]
    %v8575 = vld [vmem:[#allocation13 + $0xfc0] sm:$0xff]
    %v8576 = vld [vmem:[#allocation13 + $0xfc8] sm:$0xff]
    %v8577 = vld [vmem:[#allocation13 + $0xfd0] sm:$0xff]
    %v8578 = vld [vmem:[#allocation13 + $0xfd8] sm:$0xff]
    %v8579 = vld [vmem:[#allocation13 + $0xfe0] sm:$0xff]
    %v8580 = vld [vmem:[#allocation13 + $0xfe8] sm:$0xff]
    %v8581 = vld [vmem:[#allocation13 + $0xff0] sm:$0xff]
    %v8582 = vld [vmem:[#allocation13 + $0xff8] sm:$0xff]
    %v8583 = vld [vmem:[#allocation15] sm:$0xff]
    %v8585 = vlaneseq
    %v8586 = vshrl.u32 %v8585, 7
    %v8587 = vsub.s32 0, %v8586
    %v8588 = vrot.slane %v8583, %v8587
    %v8589 = vlaneseq
    %v8590 = vshrl.u32 %v8589, 7
    %v8591 = vsub.s32 1, %v8590
    %v8592 = vrot.slane %v8583, %v8591
    %v8593 = vlaneseq
    %v8594 = vshrl.u32 %v8593, 7
    %v8595 = vsub.s32 2, %v8594
    %v8596 = vrot.slane %v8583, %v8595
    %v8597 = vlaneseq
    %v8598 = vshrl.u32 %v8597, 7
    %v8599 = vsub.s32 3, %v8598
    %v8600 = vrot.slane %v8583, %v8599
    %v8601 = vlaneseq
    %v8602 = vshrl.u32 %v8601, 7
    %v8603 = vsub.s32 4, %v8602
    %v8604 = vrot.slane %v8583, %v8603
    %v8605 = vlaneseq
    %v8606 = vshrl.u32 %v8605, 7
    %v8607 = vsub.s32 5, %v8606
    %v8608 = vrot.slane %v8583, %v8607
    %v8609 = vlaneseq
    %v8610 = vshrl.u32 %v8609, 7
    %v8611 = vsub.s32 6, %v8610
    %v8612 = vrot.slane %v8583, %v8611
    %v8613 = vlaneseq
    %v8614 = vshrl.u32 %v8613, 7
    %v8615 = vsub.s32 7, %v8614
    %v8616 = vrot.slane %v8583, %v8615
    %v9137 = vunpack.c.l.b16 %v8071
    %v9138 = vunpack.c.h.b16 %v8071
    %v9139 = vunpack.c.l.b16 %v8072
    %v9140 = vunpack.c.h.b16 %v8072
    %v9141 = vunpack.c.l.b16 %v8073
    %v9142 = vunpack.c.h.b16 %v8073
    %v9143 = vunpack.c.l.b16 %v8074
    %v9144 = vunpack.c.h.b16 %v8074
    %v9145 = vunpack.c.l.b16 %v8075
    %v9146 = vunpack.c.h.b16 %v8075
    %v9147 = vunpack.c.l.b16 %v8076
    %v9148 = vunpack.c.h.b16 %v8076
    %v9149 = vunpack.c.l.b16 %v8077
    %v9150 = vunpack.c.h.b16 %v8077
    %v9151 = vunpack.c.l.b16 %v8078
    %v9152 = vunpack.c.h.b16 %v8078
    %v9153 = vunpack.c.l.b16 %v8079
    %v9154 = vunpack.c.h.b16 %v8079
    %v9155 = vunpack.c.l.b16 %v8080
    %v9156 = vunpack.c.h.b16 %v8080
    %v9157 = vunpack.c.l.b16 %v8081
    %v9158 = vunpack.c.h.b16 %v8081
    %v9159 = vunpack.c.l.b16 %v8082
    %v9160 = vunpack.c.h.b16 %v8082
    %v9161 = vunpack.c.l.b16 %v8083
    %v9162 = vunpack.c.h.b16 %v8083
    %v9163 = vunpack.c.l.b16 %v8084
    %v9164 = vunpack.c.h.b16 %v8084
    %v9165 = vunpack.c.l.b16 %v8085
    %v9166 = vunpack.c.h.b16 %v8085
    %v9167 = vunpack.c.l.b16 %v8086
    %v9168 = vunpack.c.h.b16 %v8086
    %v9169 = vunpack.c.l.b16 %v8087
    %v9170 = vunpack.c.h.b16 %v8087
    %v9171 = vunpack.c.l.b16 %v8088
    %v9172 = vunpack.c.h.b16 %v8088
    %v9173 = vunpack.c.l.b16 %v8089
    %v9174 = vunpack.c.h.b16 %v8089
    %v9175 = vunpack.c.l.b16 %v8090
    %v9176 = vunpack.c.h.b16 %v8090
    %v9177 = vunpack.c.l.b16 %v8091
    %v9178 = vunpack.c.h.b16 %v8091
    %v9179 = vunpack.c.l.b16 %v8092
    %v9180 = vunpack.c.h.b16 %v8092
    %v9181 = vunpack.c.l.b16 %v8093
    %v9182 = vunpack.c.h.b16 %v8093
    %v9183 = vunpack.c.l.b16 %v8094
    %v9184 = vunpack.c.h.b16 %v8094
    %v9185 = vunpack.c.l.b16 %v8095
    %v9186 = vunpack.c.h.b16 %v8095
    %v9187 = vunpack.c.l.b16 %v8096
    %v9188 = vunpack.c.h.b16 %v8096
    %v9189 = vunpack.c.l.b16 %v8097
    %v9190 = vunpack.c.h.b16 %v8097
    %v9191 = vunpack.c.l.b16 %v8098
    %v9192 = vunpack.c.h.b16 %v8098
    %v9193 = vunpack.c.l.b16 %v8099
    %v9194 = vunpack.c.h.b16 %v8099
    %v9195 = vunpack.c.l.b16 %v8100
    %v9196 = vunpack.c.h.b16 %v8100
    %v9197 = vunpack.c.l.b16 %v8101
    %v9198 = vunpack.c.h.b16 %v8101
    %v9199 = vunpack.c.l.b16 %v8102
    %v9200 = vunpack.c.h.b16 %v8102
    %v9201 = vunpack.c.l.b16 %v8103
    %v9202 = vunpack.c.h.b16 %v8103
    %v9203 = vunpack.c.l.b16 %v8104
    %v9204 = vunpack.c.h.b16 %v8104
    %v9205 = vunpack.c.l.b16 %v8105
    %v9206 = vunpack.c.h.b16 %v8105
    %v9207 = vunpack.c.l.b16 %v8106
    %v9208 = vunpack.c.h.b16 %v8106
    %v9209 = vunpack.c.l.b16 %v8107
    %v9210 = vunpack.c.h.b16 %v8107
    %v9211 = vunpack.c.l.b16 %v8108
    %v9212 = vunpack.c.h.b16 %v8108
    %v9213 = vunpack.c.l.b16 %v8109
    %v9214 = vunpack.c.h.b16 %v8109
    %v9215 = vunpack.c.l.b16 %v8110
    %v9216 = vunpack.c.h.b16 %v8110
    %v9217 = vunpack.c.l.b16 %v8111
    %v9218 = vunpack.c.h.b16 %v8111
    %v9219 = vunpack.c.l.b16 %v8112
    %v9220 = vunpack.c.h.b16 %v8112
    %v9221 = vunpack.c.l.b16 %v8113
    %v9222 = vunpack.c.h.b16 %v8113
    %v9223 = vunpack.c.l.b16 %v8114
    %v9224 = vunpack.c.h.b16 %v8114
    %v9225 = vunpack.c.l.b16 %v8115
    %v9226 = vunpack.c.h.b16 %v8115
    %v9227 = vunpack.c.l.b16 %v8116
    %v9228 = vunpack.c.h.b16 %v8116
    %v9229 = vunpack.c.l.b16 %v8117
    %v9230 = vunpack.c.h.b16 %v8117
    %v9231 = vunpack.c.l.b16 %v8118
    %v9232 = vunpack.c.h.b16 %v8118
    %v9233 = vunpack.c.l.b16 %v8119
    %v9234 = vunpack.c.h.b16 %v8119
    %v9235 = vunpack.c.l.b16 %v8120
    %v9236 = vunpack.c.h.b16 %v8120
    %v9237 = vunpack.c.l.b16 %v8121
    %v9238 = vunpack.c.h.b16 %v8121
    %v9239 = vunpack.c.l.b16 %v8122
    %v9240 = vunpack.c.h.b16 %v8122
    %v9241 = vunpack.c.l.b16 %v8123
    %v9242 = vunpack.c.h.b16 %v8123
    %v9243 = vunpack.c.l.b16 %v8124
    %v9244 = vunpack.c.h.b16 %v8124
    %v9245 = vunpack.c.l.b16 %v8125
    %v9246 = vunpack.c.h.b16 %v8125
    %v9247 = vunpack.c.l.b16 %v8126
    %v9248 = vunpack.c.h.b16 %v8126
    %v9249 = vunpack.c.l.b16 %v8127
    %v9250 = vunpack.c.h.b16 %v8127
    %v9251 = vunpack.c.l.b16 %v8128
    %v9252 = vunpack.c.h.b16 %v8128
    %v9253 = vunpack.c.l.b16 %v8129
    %v9254 = vunpack.c.h.b16 %v8129
    %v9255 = vunpack.c.l.b16 %v8130
    %v9256 = vunpack.c.h.b16 %v8130
    %v9257 = vunpack.c.l.b16 %v8131
    %v9258 = vunpack.c.h.b16 %v8131
    %v9259 = vunpack.c.l.b16 %v8132
    %v9260 = vunpack.c.h.b16 %v8132
    %v9261 = vunpack.c.l.b16 %v8133
    %v9262 = vunpack.c.h.b16 %v8133
    %v9263 = vunpack.c.l.b16 %v8134
    %v9264 = vunpack.c.h.b16 %v8134
    %v9265 = vunpack.c.l.b16 %v8135
    %v9266 = vunpack.c.h.b16 %v8135
    %v9267 = vunpack.c.l.b16 %v8136
    %v9268 = vunpack.c.h.b16 %v8136
    %v9269 = vunpack.c.l.b16 %v8137
    %v9270 = vunpack.c.h.b16 %v8137
    %v9271 = vunpack.c.l.b16 %v8138
    %v9272 = vunpack.c.h.b16 %v8138
    %v9273 = vunpack.c.l.b16 %v8139
    %v9274 = vunpack.c.h.b16 %v8139
    %v9275 = vunpack.c.l.b16 %v8140
    %v9276 = vunpack.c.h.b16 %v8140
    %v9277 = vunpack.c.l.b16 %v8141
    %v9278 = vunpack.c.h.b16 %v8141
    %v9279 = vunpack.c.l.b16 %v8142
    %v9280 = vunpack.c.h.b16 %v8142
    %v9281 = vunpack.c.l.b16 %v8143
    %v9282 = vunpack.c.h.b16 %v8143
    %v9283 = vunpack.c.l.b16 %v8144
    %v9284 = vunpack.c.h.b16 %v8144
    %v9285 = vunpack.c.l.b16 %v8145
    %v9286 = vunpack.c.h.b16 %v8145
    %v9287 = vunpack.c.l.b16 %v8146
    %v9288 = vunpack.c.h.b16 %v8146
    %v9289 = vunpack.c.l.b16 %v8147
    %v9290 = vunpack.c.h.b16 %v8147
    %v9291 = vunpack.c.l.b16 %v8148
    %v9292 = vunpack.c.h.b16 %v8148
    %v9293 = vunpack.c.l.b16 %v8149
    %v9294 = vunpack.c.h.b16 %v8149
    %v9295 = vunpack.c.l.b16 %v8150
    %v9296 = vunpack.c.h.b16 %v8150
    %v9297 = vunpack.c.l.b16 %v8151
    %v9298 = vunpack.c.h.b16 %v8151
    %v9299 = vunpack.c.l.b16 %v8152
    %v9300 = vunpack.c.h.b16 %v8152
    %v9301 = vunpack.c.l.b16 %v8153
    %v9302 = vunpack.c.h.b16 %v8153
    %v9303 = vunpack.c.l.b16 %v8154
    %v9304 = vunpack.c.h.b16 %v8154
    %v9305 = vunpack.c.l.b16 %v8155
    %v9306 = vunpack.c.h.b16 %v8155
    %v9307 = vunpack.c.l.b16 %v8156
    %v9308 = vunpack.c.h.b16 %v8156
    %v9309 = vunpack.c.l.b16 %v8157
    %v9310 = vunpack.c.h.b16 %v8157
    %v9311 = vunpack.c.l.b16 %v8158
    %v9312 = vunpack.c.h.b16 %v8158
    %v9313 = vunpack.c.l.b16 %v8159
    %v9314 = vunpack.c.h.b16 %v8159
    %v9315 = vunpack.c.l.b16 %v8160
    %v9316 = vunpack.c.h.b16 %v8160
    %v9317 = vunpack.c.l.b16 %v8161
    %v9318 = vunpack.c.h.b16 %v8161
    %v9319 = vunpack.c.l.b16 %v8162
    %v9320 = vunpack.c.h.b16 %v8162
    %v9321 = vunpack.c.l.b16 %v8163
    %v9322 = vunpack.c.h.b16 %v8163
    %v9323 = vunpack.c.l.b16 %v8164
    %v9324 = vunpack.c.h.b16 %v8164
    %v9325 = vunpack.c.l.b16 %v8165
    %v9326 = vunpack.c.h.b16 %v8165
    %v9327 = vunpack.c.l.b16 %v8166
    %v9328 = vunpack.c.h.b16 %v8166
    %v9329 = vunpack.c.l.b16 %v8167
    %v9330 = vunpack.c.h.b16 %v8167
    %v9331 = vunpack.c.l.b16 %v8168
    %v9332 = vunpack.c.h.b16 %v8168
    %v9333 = vunpack.c.l.b16 %v8169
    %v9334 = vunpack.c.h.b16 %v8169
    %v9335 = vunpack.c.l.b16 %v8170
    %v9336 = vunpack.c.h.b16 %v8170
    %v9337 = vunpack.c.l.b16 %v8171
    %v9338 = vunpack.c.h.b16 %v8171
    %v9339 = vunpack.c.l.b16 %v8172
    %v9340 = vunpack.c.h.b16 %v8172
    %v9341 = vunpack.c.l.b16 %v8173
    %v9342 = vunpack.c.h.b16 %v8173
    %v9343 = vunpack.c.l.b16 %v8174
    %v9344 = vunpack.c.h.b16 %v8174
    %v9345 = vunpack.c.l.b16 %v8175
    %v9346 = vunpack.c.h.b16 %v8175
    %v9347 = vunpack.c.l.b16 %v8176
    %v9348 = vunpack.c.h.b16 %v8176
    %v9349 = vunpack.c.l.b16 %v8177
    %v9350 = vunpack.c.h.b16 %v8177
    %v9351 = vunpack.c.l.b16 %v8178
    %v9352 = vunpack.c.h.b16 %v8178
    %v9353 = vunpack.c.l.b16 %v8179
    %v9354 = vunpack.c.h.b16 %v8179
    %v9355 = vunpack.c.l.b16 %v8180
    %v9356 = vunpack.c.h.b16 %v8180
    %v9357 = vunpack.c.l.b16 %v8181
    %v9358 = vunpack.c.h.b16 %v8181
    %v9359 = vunpack.c.l.b16 %v8182
    %v9360 = vunpack.c.h.b16 %v8182
    %v9361 = vunpack.c.l.b16 %v8183
    %v9362 = vunpack.c.h.b16 %v8183
    %v9363 = vunpack.c.l.b16 %v8184
    %v9364 = vunpack.c.h.b16 %v8184
    %v9365 = vunpack.c.l.b16 %v8185
    %v9366 = vunpack.c.h.b16 %v8185
    %v9367 = vunpack.c.l.b16 %v8186
    %v9368 = vunpack.c.h.b16 %v8186
    %v9369 = vunpack.c.l.b16 %v8187
    %v9370 = vunpack.c.h.b16 %v8187
    %v9371 = vunpack.c.l.b16 %v8188
    %v9372 = vunpack.c.h.b16 %v8188
    %v9373 = vunpack.c.l.b16 %v8189
    %v9374 = vunpack.c.h.b16 %v8189
    %v9375 = vunpack.c.l.b16 %v8190
    %v9376 = vunpack.c.h.b16 %v8190
    %v9377 = vunpack.c.l.b16 %v8191
    %v9378 = vunpack.c.h.b16 %v8191
    %v9379 = vunpack.c.l.b16 %v8192
    %v9380 = vunpack.c.h.b16 %v8192
    %v9381 = vunpack.c.l.b16 %v8193
    %v9382 = vunpack.c.h.b16 %v8193
    %v9383 = vunpack.c.l.b16 %v8194
    %v9384 = vunpack.c.h.b16 %v8194
    %v9385 = vunpack.c.l.b16 %v8195
    %v9386 = vunpack.c.h.b16 %v8195
    %v9387 = vunpack.c.l.b16 %v8196
    %v9388 = vunpack.c.h.b16 %v8196
    %v9389 = vunpack.c.l.b16 %v8197
    %v9390 = vunpack.c.h.b16 %v8197
    %v9391 = vunpack.c.l.b16 %v8198
    %v9392 = vunpack.c.h.b16 %v8198
    %v9393 = vunpack.c.l.b16 %v8199
    %v9394 = vunpack.c.h.b16 %v8199
    %v9395 = vunpack.c.l.b16 %v8200
    %v9396 = vunpack.c.h.b16 %v8200
    %v9397 = vunpack.c.l.b16 %v8201
    %v9398 = vunpack.c.h.b16 %v8201
    %v9399 = vunpack.c.l.b16 %v8202
    %v9400 = vunpack.c.h.b16 %v8202
    %v9401 = vunpack.c.l.b16 %v8203
    %v9402 = vunpack.c.h.b16 %v8203
    %v9403 = vunpack.c.l.b16 %v8204
    %v9404 = vunpack.c.h.b16 %v8204
    %v9405 = vunpack.c.l.b16 %v8205
    %v9406 = vunpack.c.h.b16 %v8205
    %v9407 = vunpack.c.l.b16 %v8206
    %v9408 = vunpack.c.h.b16 %v8206
    %v9409 = vunpack.c.l.b16 %v8207
    %v9410 = vunpack.c.h.b16 %v8207
    %v9411 = vunpack.c.l.b16 %v8208
    %v9412 = vunpack.c.h.b16 %v8208
    %v9413 = vunpack.c.l.b16 %v8209
    %v9414 = vunpack.c.h.b16 %v8209
    %v9415 = vunpack.c.l.b16 %v8210
    %v9416 = vunpack.c.h.b16 %v8210
    %v9417 = vunpack.c.l.b16 %v8211
    %v9418 = vunpack.c.h.b16 %v8211
    %v9419 = vunpack.c.l.b16 %v8212
    %v9420 = vunpack.c.h.b16 %v8212
    %v9421 = vunpack.c.l.b16 %v8213
    %v9422 = vunpack.c.h.b16 %v8213
    %v9423 = vunpack.c.l.b16 %v8214
    %v9424 = vunpack.c.h.b16 %v8214
    %v9425 = vunpack.c.l.b16 %v8215
    %v9426 = vunpack.c.h.b16 %v8215
    %v9427 = vunpack.c.l.b16 %v8216
    %v9428 = vunpack.c.h.b16 %v8216
    %v9429 = vunpack.c.l.b16 %v8217
    %v9430 = vunpack.c.h.b16 %v8217
    %v9431 = vunpack.c.l.b16 %v8218
    %v9432 = vunpack.c.h.b16 %v8218
    %v9433 = vunpack.c.l.b16 %v8219
    %v9434 = vunpack.c.h.b16 %v8219
    %v9435 = vunpack.c.l.b16 %v8220
    %v9436 = vunpack.c.h.b16 %v8220
    %v9437 = vunpack.c.l.b16 %v8221
    %v9438 = vunpack.c.h.b16 %v8221
    %v9439 = vunpack.c.l.b16 %v8222
    %v9440 = vunpack.c.h.b16 %v8222
    %v9441 = vunpack.c.l.b16 %v8223
    %v9442 = vunpack.c.h.b16 %v8223
    %v9443 = vunpack.c.l.b16 %v8224
    %v9444 = vunpack.c.h.b16 %v8224
    %v9445 = vunpack.c.l.b16 %v8225
    %v9446 = vunpack.c.h.b16 %v8225
    %v9447 = vunpack.c.l.b16 %v8226
    %v9448 = vunpack.c.h.b16 %v8226
    %v9449 = vunpack.c.l.b16 %v8227
    %v9450 = vunpack.c.h.b16 %v8227
    %v9451 = vunpack.c.l.b16 %v8228
    %v9452 = vunpack.c.h.b16 %v8228
    %v9453 = vunpack.c.l.b16 %v8229
    %v9454 = vunpack.c.h.b16 %v8229
    %v9455 = vunpack.c.l.b16 %v8230
    %v9456 = vunpack.c.h.b16 %v8230
    %v9457 = vunpack.c.l.b16 %v8231
    %v9458 = vunpack.c.h.b16 %v8231
    %v9459 = vunpack.c.l.b16 %v8232
    %v9460 = vunpack.c.h.b16 %v8232
    %v9461 = vunpack.c.l.b16 %v8233
    %v9462 = vunpack.c.h.b16 %v8233
    %v9463 = vunpack.c.l.b16 %v8234
    %v9464 = vunpack.c.h.b16 %v8234
    %v9465 = vunpack.c.l.b16 %v8235
    %v9466 = vunpack.c.h.b16 %v8235
    %v9467 = vunpack.c.l.b16 %v8236
    %v9468 = vunpack.c.h.b16 %v8236
    %v9469 = vunpack.c.l.b16 %v8237
    %v9470 = vunpack.c.h.b16 %v8237
    %v9471 = vunpack.c.l.b16 %v8238
    %v9472 = vunpack.c.h.b16 %v8238
    %v9473 = vunpack.c.l.b16 %v8239
    %v9474 = vunpack.c.h.b16 %v8239
    %v9475 = vunpack.c.l.b16 %v8240
    %v9476 = vunpack.c.h.b16 %v8240
    %v9477 = vunpack.c.l.b16 %v8241
    %v9478 = vunpack.c.h.b16 %v8241
    %v9479 = vunpack.c.l.b16 %v8242
    %v9480 = vunpack.c.h.b16 %v8242
    %v9481 = vunpack.c.l.b16 %v8243
    %v9482 = vunpack.c.h.b16 %v8243
    %v9483 = vunpack.c.l.b16 %v8244
    %v9484 = vunpack.c.h.b16 %v8244
    %v9485 = vunpack.c.l.b16 %v8245
    %v9486 = vunpack.c.h.b16 %v8245
    %v9487 = vunpack.c.l.b16 %v8246
    %v9488 = vunpack.c.h.b16 %v8246
    %v9489 = vunpack.c.l.b16 %v8247
    %v9490 = vunpack.c.h.b16 %v8247
    %v9491 = vunpack.c.l.b16 %v8248
    %v9492 = vunpack.c.h.b16 %v8248
    %v9493 = vunpack.c.l.b16 %v8249
    %v9494 = vunpack.c.h.b16 %v8249
    %v9495 = vunpack.c.l.b16 %v8250
    %v9496 = vunpack.c.h.b16 %v8250
    %v9497 = vunpack.c.l.b16 %v8251
    %v9498 = vunpack.c.h.b16 %v8251
    %v9499 = vunpack.c.l.b16 %v8252
    %v9500 = vunpack.c.h.b16 %v8252
    %v9501 = vunpack.c.l.b16 %v8253
    %v9502 = vunpack.c.h.b16 %v8253
    %v9503 = vunpack.c.l.b16 %v8254
    %v9504 = vunpack.c.h.b16 %v8254
    %v9505 = vunpack.c.l.b16 %v8255
    %v9506 = vunpack.c.h.b16 %v8255
    %v9507 = vunpack.c.l.b16 %v8256
    %v9508 = vunpack.c.h.b16 %v8256
    %v9509 = vunpack.c.l.b16 %v8257
    %v9510 = vunpack.c.h.b16 %v8257
    %v9511 = vunpack.c.l.b16 %v8258
    %v9512 = vunpack.c.h.b16 %v8258
    %v9513 = vunpack.c.l.b16 %v8259
    %v9514 = vunpack.c.h.b16 %v8259
    %v9515 = vunpack.c.l.b16 %v8260
    %v9516 = vunpack.c.h.b16 %v8260
    %v9517 = vunpack.c.l.b16 %v8261
    %v9518 = vunpack.c.h.b16 %v8261
    %v9519 = vunpack.c.l.b16 %v8262
    %v9520 = vunpack.c.h.b16 %v8262
    %v9521 = vunpack.c.l.b16 %v8263
    %v9522 = vunpack.c.h.b16 %v8263
    %v9523 = vunpack.c.l.b16 %v8264
    %v9524 = vunpack.c.h.b16 %v8264
    %v9525 = vunpack.c.l.b16 %v8265
    %v9526 = vunpack.c.h.b16 %v8265
    %v9527 = vunpack.c.l.b16 %v8266
    %v9528 = vunpack.c.h.b16 %v8266
    %v9529 = vunpack.c.l.b16 %v8267
    %v9530 = vunpack.c.h.b16 %v8267
    %v9531 = vunpack.c.l.b16 %v8268
    %v9532 = vunpack.c.h.b16 %v8268
    %v9533 = vunpack.c.l.b16 %v8269
    %v9534 = vunpack.c.h.b16 %v8269
    %v9535 = vunpack.c.l.b16 %v8270
    %v9536 = vunpack.c.h.b16 %v8270
    %v9537 = vunpack.c.l.b16 %v8271
    %v9538 = vunpack.c.h.b16 %v8271
    %v9539 = vunpack.c.l.b16 %v8272
    %v9540 = vunpack.c.h.b16 %v8272
    %v9541 = vunpack.c.l.b16 %v8273
    %v9542 = vunpack.c.h.b16 %v8273
    %v9543 = vunpack.c.l.b16 %v8274
    %v9544 = vunpack.c.h.b16 %v8274
    %v9545 = vunpack.c.l.b16 %v8275
    %v9546 = vunpack.c.h.b16 %v8275
    %v9547 = vunpack.c.l.b16 %v8276
    %v9548 = vunpack.c.h.b16 %v8276
    %v9549 = vunpack.c.l.b16 %v8277
    %v9550 = vunpack.c.h.b16 %v8277
    %v9551 = vunpack.c.l.b16 %v8278
    %v9552 = vunpack.c.h.b16 %v8278
    %v9553 = vunpack.c.l.b16 %v8279
    %v9554 = vunpack.c.h.b16 %v8279
    %v9555 = vunpack.c.l.b16 %v8280
    %v9556 = vunpack.c.h.b16 %v8280
    %v9557 = vunpack.c.l.b16 %v8281
    %v9558 = vunpack.c.h.b16 %v8281
    %v9559 = vunpack.c.l.b16 %v8282
    %v9560 = vunpack.c.h.b16 %v8282
    %v9561 = vunpack.c.l.b16 %v8283
    %v9562 = vunpack.c.h.b16 %v8283
    %v9563 = vunpack.c.l.b16 %v8284
    %v9564 = vunpack.c.h.b16 %v8284
    %v9565 = vunpack.c.l.b16 %v8285
    %v9566 = vunpack.c.h.b16 %v8285
    %v9567 = vunpack.c.l.b16 %v8286
    %v9568 = vunpack.c.h.b16 %v8286
    %v9569 = vunpack.c.l.b16 %v8287
    %v9570 = vunpack.c.h.b16 %v8287
    %v9571 = vunpack.c.l.b16 %v8288
    %v9572 = vunpack.c.h.b16 %v8288
    %v9573 = vunpack.c.l.b16 %v8289
    %v9574 = vunpack.c.h.b16 %v8289
    %v9575 = vunpack.c.l.b16 %v8290
    %v9576 = vunpack.c.h.b16 %v8290
    %v9577 = vunpack.c.l.b16 %v8291
    %v9578 = vunpack.c.h.b16 %v8291
    %v9579 = vunpack.c.l.b16 %v8292
    %v9580 = vunpack.c.h.b16 %v8292
    %v9581 = vunpack.c.l.b16 %v8293
    %v9582 = vunpack.c.h.b16 %v8293
    %v9583 = vunpack.c.l.b16 %v8294
    %v9584 = vunpack.c.h.b16 %v8294
    %v9585 = vunpack.c.l.b16 %v8295
    %v9586 = vunpack.c.h.b16 %v8295
    %v9587 = vunpack.c.l.b16 %v8296
    %v9588 = vunpack.c.h.b16 %v8296
    %v9589 = vunpack.c.l.b16 %v8297
    %v9590 = vunpack.c.h.b16 %v8297
    %v9591 = vunpack.c.l.b16 %v8298
    %v9592 = vunpack.c.h.b16 %v8298
    %v9593 = vunpack.c.l.b16 %v8299
    %v9594 = vunpack.c.h.b16 %v8299
    %v9595 = vunpack.c.l.b16 %v8300
    %v9596 = vunpack.c.h.b16 %v8300
    %v9597 = vunpack.c.l.b16 %v8301
    %v9598 = vunpack.c.h.b16 %v8301
    %v9599 = vunpack.c.l.b16 %v8302
    %v9600 = vunpack.c.h.b16 %v8302
    %v9601 = vunpack.c.l.b16 %v8303
    %v9602 = vunpack.c.h.b16 %v8303
    %v9603 = vunpack.c.l.b16 %v8304
    %v9604 = vunpack.c.h.b16 %v8304
    %v9605 = vunpack.c.l.b16 %v8305
    %v9606 = vunpack.c.h.b16 %v8305
    %v9607 = vunpack.c.l.b16 %v8306
    %v9608 = vunpack.c.h.b16 %v8306
    %v9609 = vunpack.c.l.b16 %v8307
    %v9610 = vunpack.c.h.b16 %v8307
    %v9611 = vunpack.c.l.b16 %v8308
    %v9612 = vunpack.c.h.b16 %v8308
    %v9613 = vunpack.c.l.b16 %v8309
    %v9614 = vunpack.c.h.b16 %v8309
    %v9615 = vunpack.c.l.b16 %v8310
    %v9616 = vunpack.c.h.b16 %v8310
    %v9617 = vunpack.c.l.b16 %v8311
    %v9618 = vunpack.c.h.b16 %v8311
    %v9619 = vunpack.c.l.b16 %v8312
    %v9620 = vunpack.c.h.b16 %v8312
    %v9621 = vunpack.c.l.b16 %v8313
    %v9622 = vunpack.c.h.b16 %v8313
    %v9623 = vunpack.c.l.b16 %v8314
    %v9624 = vunpack.c.h.b16 %v8314
    %v9625 = vunpack.c.l.b16 %v8315
    %v9626 = vunpack.c.h.b16 %v8315
    %v9627 = vunpack.c.l.b16 %v8316
    %v9628 = vunpack.c.h.b16 %v8316
    %v9629 = vunpack.c.l.b16 %v8317
    %v9630 = vunpack.c.h.b16 %v8317
    %v9631 = vunpack.c.l.b16 %v8318
    %v9632 = vunpack.c.h.b16 %v8318
    %v9633 = vunpack.c.l.b16 %v8319
    %v9634 = vunpack.c.h.b16 %v8319
    %v9635 = vunpack.c.l.b16 %v8320
    %v9636 = vunpack.c.h.b16 %v8320
    %v9637 = vunpack.c.l.b16 %v8321
    %v9638 = vunpack.c.h.b16 %v8321
    %v9639 = vunpack.c.l.b16 %v8322
    %v9640 = vunpack.c.h.b16 %v8322
    %v9641 = vunpack.c.l.b16 %v8323
    %v9642 = vunpack.c.h.b16 %v8323
    %v9643 = vunpack.c.l.b16 %v8324
    %v9644 = vunpack.c.h.b16 %v8324
    %v9645 = vunpack.c.l.b16 %v8325
    %v9646 = vunpack.c.h.b16 %v8325
    %v9647 = vunpack.c.l.b16 %v8326
    %v9648 = vunpack.c.h.b16 %v8326
    %v9649 = vunpack.c.l.b16 %v8327
    %v9650 = vunpack.c.h.b16 %v8327
    %v9651 = vunpack.c.l.b16 %v8328
    %v9652 = vunpack.c.h.b16 %v8328
    %v9653 = vunpack.c.l.b16 %v8329
    %v9654 = vunpack.c.h.b16 %v8329
    %v9655 = vunpack.c.l.b16 %v8330
    %v9656 = vunpack.c.h.b16 %v8330
    %v9657 = vunpack.c.l.b16 %v8331
    %v9658 = vunpack.c.h.b16 %v8331
    %v9659 = vunpack.c.l.b16 %v8332
    %v9660 = vunpack.c.h.b16 %v8332
    %v9661 = vunpack.c.l.b16 %v8333
    %v9662 = vunpack.c.h.b16 %v8333
    %v9663 = vunpack.c.l.b16 %v8334
    %v9664 = vunpack.c.h.b16 %v8334
    %v9665 = vunpack.c.l.b16 %v8335
    %v9666 = vunpack.c.h.b16 %v8335
    %v9667 = vunpack.c.l.b16 %v8336
    %v9668 = vunpack.c.h.b16 %v8336
    %v9669 = vunpack.c.l.b16 %v8337
    %v9670 = vunpack.c.h.b16 %v8337
    %v9671 = vunpack.c.l.b16 %v8338
    %v9672 = vunpack.c.h.b16 %v8338
    %v9673 = vunpack.c.l.b16 %v8339
    %v9674 = vunpack.c.h.b16 %v8339
    %v9675 = vunpack.c.l.b16 %v8340
    %v9676 = vunpack.c.h.b16 %v8340
    %v9677 = vunpack.c.l.b16 %v8341
    %v9678 = vunpack.c.h.b16 %v8341
    %v9679 = vunpack.c.l.b16 %v8342
    %v9680 = vunpack.c.h.b16 %v8342
    %v9681 = vunpack.c.l.b16 %v8343
    %v9682 = vunpack.c.h.b16 %v8343
    %v9683 = vunpack.c.l.b16 %v8344
    %v9684 = vunpack.c.h.b16 %v8344
    %v9685 = vunpack.c.l.b16 %v8345
    %v9686 = vunpack.c.h.b16 %v8345
    %v9687 = vunpack.c.l.b16 %v8346
    %v9688 = vunpack.c.h.b16 %v8346
    %v9689 = vunpack.c.l.b16 %v8347
    %v9690 = vunpack.c.h.b16 %v8347
    %v9691 = vunpack.c.l.b16 %v8348
    %v9692 = vunpack.c.h.b16 %v8348
    %v9693 = vunpack.c.l.b16 %v8349
    %v9694 = vunpack.c.h.b16 %v8349
    %v9695 = vunpack.c.l.b16 %v8350
    %v9696 = vunpack.c.h.b16 %v8350
    %v9697 = vunpack.c.l.b16 %v8351
    %v9698 = vunpack.c.h.b16 %v8351
    %v9699 = vunpack.c.l.b16 %v8352
    %v9700 = vunpack.c.h.b16 %v8352
    %v9701 = vunpack.c.l.b16 %v8353
    %v9702 = vunpack.c.h.b16 %v8353
    %v9703 = vunpack.c.l.b16 %v8354
    %v9704 = vunpack.c.h.b16 %v8354
    %v9705 = vunpack.c.l.b16 %v8355
    %v9706 = vunpack.c.h.b16 %v8355
    %v9707 = vunpack.c.l.b16 %v8356
    %v9708 = vunpack.c.h.b16 %v8356
    %v9709 = vunpack.c.l.b16 %v8357
    %v9710 = vunpack.c.h.b16 %v8357
    %v9711 = vunpack.c.l.b16 %v8358
    %v9712 = vunpack.c.h.b16 %v8358
    %v9713 = vunpack.c.l.b16 %v8359
    %v9714 = vunpack.c.h.b16 %v8359
    %v9715 = vunpack.c.l.b16 %v8360
    %v9716 = vunpack.c.h.b16 %v8360
    %v9717 = vunpack.c.l.b16 %v8361
    %v9718 = vunpack.c.h.b16 %v8361
    %v9719 = vunpack.c.l.b16 %v8362
    %v9720 = vunpack.c.h.b16 %v8362
    %v9721 = vunpack.c.l.b16 %v8363
    %v9722 = vunpack.c.h.b16 %v8363
    %v9723 = vunpack.c.l.b16 %v8364
    %v9724 = vunpack.c.h.b16 %v8364
    %v9725 = vunpack.c.l.b16 %v8365
    %v9726 = vunpack.c.h.b16 %v8365
    %v9727 = vunpack.c.l.b16 %v8366
    %v9728 = vunpack.c.h.b16 %v8366
    %v9729 = vunpack.c.l.b16 %v8367
    %v9730 = vunpack.c.h.b16 %v8367
    %v9731 = vunpack.c.l.b16 %v8368
    %v9732 = vunpack.c.h.b16 %v8368
    %v9733 = vunpack.c.l.b16 %v8369
    %v9734 = vunpack.c.h.b16 %v8369
    %v9735 = vunpack.c.l.b16 %v8370
    %v9736 = vunpack.c.h.b16 %v8370
    %v9737 = vunpack.c.l.b16 %v8371
    %v9738 = vunpack.c.h.b16 %v8371
    %v9739 = vunpack.c.l.b16 %v8372
    %v9740 = vunpack.c.h.b16 %v8372
    %v9741 = vunpack.c.l.b16 %v8373
    %v9742 = vunpack.c.h.b16 %v8373
    %v9743 = vunpack.c.l.b16 %v8374
    %v9744 = vunpack.c.h.b16 %v8374
    %v9745 = vunpack.c.l.b16 %v8375
    %v9746 = vunpack.c.h.b16 %v8375
    %v9747 = vunpack.c.l.b16 %v8376
    %v9748 = vunpack.c.h.b16 %v8376
    %v9749 = vunpack.c.l.b16 %v8377
    %v9750 = vunpack.c.h.b16 %v8377
    %v9751 = vunpack.c.l.b16 %v8378
    %v9752 = vunpack.c.h.b16 %v8378
    %v9753 = vunpack.c.l.b16 %v8379
    %v9754 = vunpack.c.h.b16 %v8379
    %v9755 = vunpack.c.l.b16 %v8380
    %v9756 = vunpack.c.h.b16 %v8380
    %v9757 = vunpack.c.l.b16 %v8381
    %v9758 = vunpack.c.h.b16 %v8381
    %v9759 = vunpack.c.l.b16 %v8382
    %v9760 = vunpack.c.h.b16 %v8382
    %v9761 = vunpack.c.l.b16 %v8383
    %v9762 = vunpack.c.h.b16 %v8383
    %v9763 = vunpack.c.l.b16 %v8384
    %v9764 = vunpack.c.h.b16 %v8384
    %v9765 = vunpack.c.l.b16 %v8385
    %v9766 = vunpack.c.h.b16 %v8385
    %v9767 = vunpack.c.l.b16 %v8386
    %v9768 = vunpack.c.h.b16 %v8386
    %v9769 = vunpack.c.l.b16 %v8387
    %v9770 = vunpack.c.h.b16 %v8387
    %v9771 = vunpack.c.l.b16 %v8388
    %v9772 = vunpack.c.h.b16 %v8388
    %v9773 = vunpack.c.l.b16 %v8389
    %v9774 = vunpack.c.h.b16 %v8389
    %v9775 = vunpack.c.l.b16 %v8390
    %v9776 = vunpack.c.h.b16 %v8390
    %v9777 = vunpack.c.l.b16 %v8391
    %v9778 = vunpack.c.h.b16 %v8391
    %v9779 = vunpack.c.l.b16 %v8392
    %v9780 = vunpack.c.h.b16 %v8392
    %v9781 = vunpack.c.l.b16 %v8393
    %v9782 = vunpack.c.h.b16 %v8393
    %v9783 = vunpack.c.l.b16 %v8394
    %v9784 = vunpack.c.h.b16 %v8394
    %v9785 = vunpack.c.l.b16 %v8395
    %v9786 = vunpack.c.h.b16 %v8395
    %v9787 = vunpack.c.l.b16 %v8396
    %v9788 = vunpack.c.h.b16 %v8396
    %v9789 = vunpack.c.l.b16 %v8397
    %v9790 = vunpack.c.h.b16 %v8397
    %v9791 = vunpack.c.l.b16 %v8398
    %v9792 = vunpack.c.h.b16 %v8398
    %v9793 = vunpack.c.l.b16 %v8399
    %v9794 = vunpack.c.h.b16 %v8399
    %v9795 = vunpack.c.l.b16 %v8400
    %v9796 = vunpack.c.h.b16 %v8400
    %v9797 = vunpack.c.l.b16 %v8401
    %v9798 = vunpack.c.h.b16 %v8401
    %v9799 = vunpack.c.l.b16 %v8402
    %v9800 = vunpack.c.h.b16 %v8402
    %v9801 = vunpack.c.l.b16 %v8403
    %v9802 = vunpack.c.h.b16 %v8403
    %v9803 = vunpack.c.l.b16 %v8404
    %v9804 = vunpack.c.h.b16 %v8404
    %v9805 = vunpack.c.l.b16 %v8405
    %v9806 = vunpack.c.h.b16 %v8405
    %v9807 = vunpack.c.l.b16 %v8406
    %v9808 = vunpack.c.h.b16 %v8406
    %v9809 = vunpack.c.l.b16 %v8407
    %v9810 = vunpack.c.h.b16 %v8407
    %v9811 = vunpack.c.l.b16 %v8408
    %v9812 = vunpack.c.h.b16 %v8408
    %v9813 = vunpack.c.l.b16 %v8409
    %v9814 = vunpack.c.h.b16 %v8409
    %v9815 = vunpack.c.l.b16 %v8410
    %v9816 = vunpack.c.h.b16 %v8410
    %v9817 = vunpack.c.l.b16 %v8411
    %v9818 = vunpack.c.h.b16 %v8411
    %v9819 = vunpack.c.l.b16 %v8412
    %v9820 = vunpack.c.h.b16 %v8412
    %v9821 = vunpack.c.l.b16 %v8413
    %v9822 = vunpack.c.h.b16 %v8413
    %v9823 = vunpack.c.l.b16 %v8414
    %v9824 = vunpack.c.h.b16 %v8414
    %v9825 = vunpack.c.l.b16 %v8415
    %v9826 = vunpack.c.h.b16 %v8415
    %v9827 = vunpack.c.l.b16 %v8416
    %v9828 = vunpack.c.h.b16 %v8416
    %v9829 = vunpack.c.l.b16 %v8417
    %v9830 = vunpack.c.h.b16 %v8417
    %v9831 = vunpack.c.l.b16 %v8418
    %v9832 = vunpack.c.h.b16 %v8418
    %v9833 = vunpack.c.l.b16 %v8419
    %v9834 = vunpack.c.h.b16 %v8419
    %v9835 = vunpack.c.l.b16 %v8420
    %v9836 = vunpack.c.h.b16 %v8420
    %v9837 = vunpack.c.l.b16 %v8421
    %v9838 = vunpack.c.h.b16 %v8421
    %v9839 = vunpack.c.l.b16 %v8422
    %v9840 = vunpack.c.h.b16 %v8422
    %v9841 = vunpack.c.l.b16 %v8423
    %v9842 = vunpack.c.h.b16 %v8423
    %v9843 = vunpack.c.l.b16 %v8424
    %v9844 = vunpack.c.h.b16 %v8424
    %v9845 = vunpack.c.l.b16 %v8425
    %v9846 = vunpack.c.h.b16 %v8425
    %v9847 = vunpack.c.l.b16 %v8426
    %v9848 = vunpack.c.h.b16 %v8426
    %v9849 = vunpack.c.l.b16 %v8427
    %v9850 = vunpack.c.h.b16 %v8427
    %v9851 = vunpack.c.l.b16 %v8428
    %v9852 = vunpack.c.h.b16 %v8428
    %v9853 = vunpack.c.l.b16 %v8429
    %v9854 = vunpack.c.h.b16 %v8429
    %v9855 = vunpack.c.l.b16 %v8430
    %v9856 = vunpack.c.h.b16 %v8430
    %v9857 = vunpack.c.l.b16 %v8431
    %v9858 = vunpack.c.h.b16 %v8431
    %v9859 = vunpack.c.l.b16 %v8432
    %v9860 = vunpack.c.h.b16 %v8432
    %v9861 = vunpack.c.l.b16 %v8433
    %v9862 = vunpack.c.h.b16 %v8433
    %v9863 = vunpack.c.l.b16 %v8434
    %v9864 = vunpack.c.h.b16 %v8434
    %v9865 = vunpack.c.l.b16 %v8435
    %v9866 = vunpack.c.h.b16 %v8435
    %v9867 = vunpack.c.l.b16 %v8436
    %v9868 = vunpack.c.h.b16 %v8436
    %v9869 = vunpack.c.l.b16 %v8437
    %v9870 = vunpack.c.h.b16 %v8437
    %v9871 = vunpack.c.l.b16 %v8438
    %v9872 = vunpack.c.h.b16 %v8438
    %v9873 = vunpack.c.l.b16 %v8439
    %v9874 = vunpack.c.h.b16 %v8439
    %v9875 = vunpack.c.l.b16 %v8440
    %v9876 = vunpack.c.h.b16 %v8440
    %v9877 = vunpack.c.l.b16 %v8441
    %v9878 = vunpack.c.h.b16 %v8441
    %v9879 = vunpack.c.l.b16 %v8442
    %v9880 = vunpack.c.h.b16 %v8442
    %v9881 = vunpack.c.l.b16 %v8443
    %v9882 = vunpack.c.h.b16 %v8443
    %v9883 = vunpack.c.l.b16 %v8444
    %v9884 = vunpack.c.h.b16 %v8444
    %v9885 = vunpack.c.l.b16 %v8445
    %v9886 = vunpack.c.h.b16 %v8445
    %v9887 = vunpack.c.l.b16 %v8446
    %v9888 = vunpack.c.h.b16 %v8446
    %v9889 = vunpack.c.l.b16 %v8447
    %v9890 = vunpack.c.h.b16 %v8447
    %v9891 = vunpack.c.l.b16 %v8448
    %v9892 = vunpack.c.h.b16 %v8448
    %v9893 = vunpack.c.l.b16 %v8449
    %v9894 = vunpack.c.h.b16 %v8449
    %v9895 = vunpack.c.l.b16 %v8450
    %v9896 = vunpack.c.h.b16 %v8450
    %v9897 = vunpack.c.l.b16 %v8451
    %v9898 = vunpack.c.h.b16 %v8451
    %v9899 = vunpack.c.l.b16 %v8452
    %v9900 = vunpack.c.h.b16 %v8452
    %v9901 = vunpack.c.l.b16 %v8453
    %v9902 = vunpack.c.h.b16 %v8453
    %v9903 = vunpack.c.l.b16 %v8454
    %v9904 = vunpack.c.h.b16 %v8454
    %v9905 = vunpack.c.l.b16 %v8455
    %v9906 = vunpack.c.h.b16 %v8455
    %v9907 = vunpack.c.l.b16 %v8456
    %v9908 = vunpack.c.h.b16 %v8456
    %v9909 = vunpack.c.l.b16 %v8457
    %v9910 = vunpack.c.h.b16 %v8457
    %v9911 = vunpack.c.l.b16 %v8458
    %v9912 = vunpack.c.h.b16 %v8458
    %v9913 = vunpack.c.l.b16 %v8459
    %v9914 = vunpack.c.h.b16 %v8459
    %v9915 = vunpack.c.l.b16 %v8460
    %v9916 = vunpack.c.h.b16 %v8460
    %v9917 = vunpack.c.l.b16 %v8461
    %v9918 = vunpack.c.h.b16 %v8461
    %v9919 = vunpack.c.l.b16 %v8462
    %v9920 = vunpack.c.h.b16 %v8462
    %v9921 = vunpack.c.l.b16 %v8463
    %v9922 = vunpack.c.h.b16 %v8463
    %v9923 = vunpack.c.l.b16 %v8464
    %v9924 = vunpack.c.h.b16 %v8464
    %v9925 = vunpack.c.l.b16 %v8465
    %v9926 = vunpack.c.h.b16 %v8465
    %v9927 = vunpack.c.l.b16 %v8466
    %v9928 = vunpack.c.h.b16 %v8466
    %v9929 = vunpack.c.l.b16 %v8467
    %v9930 = vunpack.c.h.b16 %v8467
    %v9931 = vunpack.c.l.b16 %v8468
    %v9932 = vunpack.c.h.b16 %v8468
    %v9933 = vunpack.c.l.b16 %v8469
    %v9934 = vunpack.c.h.b16 %v8469
    %v9935 = vunpack.c.l.b16 %v8470
    %v9936 = vunpack.c.h.b16 %v8470
    %v9937 = vunpack.c.l.b16 %v8471
    %v9938 = vunpack.c.h.b16 %v8471
    %v9939 = vunpack.c.l.b16 %v8472
    %v9940 = vunpack.c.h.b16 %v8472
    %v9941 = vunpack.c.l.b16 %v8473
    %v9942 = vunpack.c.h.b16 %v8473
    %v9943 = vunpack.c.l.b16 %v8474
    %v9944 = vunpack.c.h.b16 %v8474
    %v9945 = vunpack.c.l.b16 %v8475
    %v9946 = vunpack.c.h.b16 %v8475
    %v9947 = vunpack.c.l.b16 %v8476
    %v9948 = vunpack.c.h.b16 %v8476
    %v9949 = vunpack.c.l.b16 %v8477
    %v9950 = vunpack.c.h.b16 %v8477
    %v9951 = vunpack.c.l.b16 %v8478
    %v9952 = vunpack.c.h.b16 %v8478
    %v9953 = vunpack.c.l.b16 %v8479
    %v9954 = vunpack.c.h.b16 %v8479
    %v9955 = vunpack.c.l.b16 %v8480
    %v9956 = vunpack.c.h.b16 %v8480
    %v9957 = vunpack.c.l.b16 %v8481
    %v9958 = vunpack.c.h.b16 %v8481
    %v9959 = vunpack.c.l.b16 %v8482
    %v9960 = vunpack.c.h.b16 %v8482
    %v9961 = vunpack.c.l.b16 %v8483
    %v9962 = vunpack.c.h.b16 %v8483
    %v9963 = vunpack.c.l.b16 %v8484
    %v9964 = vunpack.c.h.b16 %v8484
    %v9965 = vunpack.c.l.b16 %v8485
    %v9966 = vunpack.c.h.b16 %v8485
    %v9967 = vunpack.c.l.b16 %v8486
    %v9968 = vunpack.c.h.b16 %v8486
    %v9969 = vunpack.c.l.b16 %v8487
    %v9970 = vunpack.c.h.b16 %v8487
    %v9971 = vunpack.c.l.b16 %v8488
    %v9972 = vunpack.c.h.b16 %v8488
    %v9973 = vunpack.c.l.b16 %v8489
    %v9974 = vunpack.c.h.b16 %v8489
    %v9975 = vunpack.c.l.b16 %v8490
    %v9976 = vunpack.c.h.b16 %v8490
    %v9977 = vunpack.c.l.b16 %v8491
    %v9978 = vunpack.c.h.b16 %v8491
    %v9979 = vunpack.c.l.b16 %v8492
    %v9980 = vunpack.c.h.b16 %v8492
    %v9981 = vunpack.c.l.b16 %v8493
    %v9982 = vunpack.c.h.b16 %v8493
    %v9983 = vunpack.c.l.b16 %v8494
    %v9984 = vunpack.c.h.b16 %v8494
    %v9985 = vunpack.c.l.b16 %v8495
    %v9986 = vunpack.c.h.b16 %v8495
    %v9987 = vunpack.c.l.b16 %v8496
    %v9988 = vunpack.c.h.b16 %v8496
    %v9989 = vunpack.c.l.b16 %v8497
    %v9990 = vunpack.c.h.b16 %v8497
    %v9991 = vunpack.c.l.b16 %v8498
    %v9992 = vunpack.c.h.b16 %v8498
    %v9993 = vunpack.c.l.b16 %v8499
    %v9994 = vunpack.c.h.b16 %v8499
    %v9995 = vunpack.c.l.b16 %v8500
    %v9996 = vunpack.c.h.b16 %v8500
    %v9997 = vunpack.c.l.b16 %v8501
    %v9998 = vunpack.c.h.b16 %v8501
    %v9999 = vunpack.c.l.b16 %v8502
    %v10000 = vunpack.c.h.b16 %v8502
    %v10001 = vunpack.c.l.b16 %v8503
    %v10002 = vunpack.c.h.b16 %v8503
    %v10003 = vunpack.c.l.b16 %v8504
    %v10004 = vunpack.c.h.b16 %v8504
    %v10005 = vunpack.c.l.b16 %v8505
    %v10006 = vunpack.c.h.b16 %v8505
    %v10007 = vunpack.c.l.b16 %v8506
    %v10008 = vunpack.c.h.b16 %v8506
    %v10009 = vunpack.c.l.b16 %v8507
    %v10010 = vunpack.c.h.b16 %v8507
    %v10011 = vunpack.c.l.b16 %v8508
    %v10012 = vunpack.c.h.b16 %v8508
    %v10013 = vunpack.c.l.b16 %v8509
    %v10014 = vunpack.c.h.b16 %v8509
    %v10015 = vunpack.c.l.b16 %v8510
    %v10016 = vunpack.c.h.b16 %v8510
    %v10017 = vunpack.c.l.b16 %v8511
    %v10018 = vunpack.c.h.b16 %v8511
    %v10019 = vunpack.c.l.b16 %v8512
    %v10020 = vunpack.c.h.b16 %v8512
    %v10021 = vunpack.c.l.b16 %v8513
    %v10022 = vunpack.c.h.b16 %v8513
    %v10023 = vunpack.c.l.b16 %v8514
    %v10024 = vunpack.c.h.b16 %v8514
    %v10025 = vunpack.c.l.b16 %v8515
    %v10026 = vunpack.c.h.b16 %v8515
    %v10027 = vunpack.c.l.b16 %v8516
    %v10028 = vunpack.c.h.b16 %v8516
    %v10029 = vunpack.c.l.b16 %v8517
    %v10030 = vunpack.c.h.b16 %v8517
    %v10031 = vunpack.c.l.b16 %v8518
    %v10032 = vunpack.c.h.b16 %v8518
    %v10033 = vunpack.c.l.b16 %v8519
    %v10034 = vunpack.c.h.b16 %v8519
    %v10035 = vunpack.c.l.b16 %v8520
    %v10036 = vunpack.c.h.b16 %v8520
    %v10037 = vunpack.c.l.b16 %v8521
    %v10038 = vunpack.c.h.b16 %v8521
    %v10039 = vunpack.c.l.b16 %v8522
    %v10040 = vunpack.c.h.b16 %v8522
    %v10041 = vunpack.c.l.b16 %v8523
    %v10042 = vunpack.c.h.b16 %v8523
    %v10043 = vunpack.c.l.b16 %v8524
    %v10044 = vunpack.c.h.b16 %v8524
    %v10045 = vunpack.c.l.b16 %v8525
    %v10046 = vunpack.c.h.b16 %v8525
    %v10047 = vunpack.c.l.b16 %v8526
    %v10048 = vunpack.c.h.b16 %v8526
    %v10049 = vunpack.c.l.b16 %v8527
    %v10050 = vunpack.c.h.b16 %v8527
    %v10051 = vunpack.c.l.b16 %v8528
    %v10052 = vunpack.c.h.b16 %v8528
    %v10053 = vunpack.c.l.b16 %v8529
    %v10054 = vunpack.c.h.b16 %v8529
    %v10055 = vunpack.c.l.b16 %v8530
    %v10056 = vunpack.c.h.b16 %v8530
    %v10057 = vunpack.c.l.b16 %v8531
    %v10058 = vunpack.c.h.b16 %v8531
    %v10059 = vunpack.c.l.b16 %v8532
    %v10060 = vunpack.c.h.b16 %v8532
    %v10061 = vunpack.c.l.b16 %v8533
    %v10062 = vunpack.c.h.b16 %v8533
    %v10063 = vunpack.c.l.b16 %v8534
    %v10064 = vunpack.c.h.b16 %v8534
    %v10065 = vunpack.c.l.b16 %v8535
    %v10066 = vunpack.c.h.b16 %v8535
    %v10067 = vunpack.c.l.b16 %v8536
    %v10068 = vunpack.c.h.b16 %v8536
    %v10069 = vunpack.c.l.b16 %v8537
    %v10070 = vunpack.c.h.b16 %v8537
    %v10071 = vunpack.c.l.b16 %v8538
    %v10072 = vunpack.c.h.b16 %v8538
    %v10073 = vunpack.c.l.b16 %v8539
    %v10074 = vunpack.c.h.b16 %v8539
    %v10075 = vunpack.c.l.b16 %v8540
    %v10076 = vunpack.c.h.b16 %v8540
    %v10077 = vunpack.c.l.b16 %v8541
    %v10078 = vunpack.c.h.b16 %v8541
    %v10079 = vunpack.c.l.b16 %v8542
    %v10080 = vunpack.c.h.b16 %v8542
    %v10081 = vunpack.c.l.b16 %v8543
    %v10082 = vunpack.c.h.b16 %v8543
    %v10083 = vunpack.c.l.b16 %v8544
    %v10084 = vunpack.c.h.b16 %v8544
    %v10085 = vunpack.c.l.b16 %v8545
    %v10086 = vunpack.c.h.b16 %v8545
    %v10087 = vunpack.c.l.b16 %v8546
    %v10088 = vunpack.c.h.b16 %v8546
    %v10089 = vunpack.c.l.b16 %v8547
    %v10090 = vunpack.c.h.b16 %v8547
    %v10091 = vunpack.c.l.b16 %v8548
    %v10092 = vunpack.c.h.b16 %v8548
    %v10093 = vunpack.c.l.b16 %v8549
    %v10094 = vunpack.c.h.b16 %v8549
    %v10095 = vunpack.c.l.b16 %v8550
    %v10096 = vunpack.c.h.b16 %v8550
    %v10097 = vunpack.c.l.b16 %v8551
    %v10098 = vunpack.c.h.b16 %v8551
    %v10099 = vunpack.c.l.b16 %v8552
    %v10100 = vunpack.c.h.b16 %v8552
    %v10101 = vunpack.c.l.b16 %v8553
    %v10102 = vunpack.c.h.b16 %v8553
    %v10103 = vunpack.c.l.b16 %v8554
    %v10104 = vunpack.c.h.b16 %v8554
    %v10105 = vunpack.c.l.b16 %v8555
    %v10106 = vunpack.c.h.b16 %v8555
    %v10107 = vunpack.c.l.b16 %v8556
    %v10108 = vunpack.c.h.b16 %v8556
    %v10109 = vunpack.c.l.b16 %v8557
    %v10110 = vunpack.c.h.b16 %v8557
    %v10111 = vunpack.c.l.b16 %v8558
    %v10112 = vunpack.c.h.b16 %v8558
    %v10113 = vunpack.c.l.b16 %v8559
    %v10114 = vunpack.c.h.b16 %v8559
    %v10115 = vunpack.c.l.b16 %v8560
    %v10116 = vunpack.c.h.b16 %v8560
    %v10117 = vunpack.c.l.b16 %v8561
    %v10118 = vunpack.c.h.b16 %v8561
    %v10119 = vunpack.c.l.b16 %v8562
    %v10120 = vunpack.c.h.b16 %v8562
    %v10121 = vunpack.c.l.b16 %v8563
    %v10122 = vunpack.c.h.b16 %v8563
    %v10123 = vunpack.c.l.b16 %v8564
    %v10124 = vunpack.c.h.b16 %v8564
    %v10125 = vunpack.c.l.b16 %v8565
    %v10126 = vunpack.c.h.b16 %v8565
    %v10127 = vunpack.c.l.b16 %v8566
    %v10128 = vunpack.c.h.b16 %v8566
    %v10129 = vunpack.c.l.b16 %v8567
    %v10130 = vunpack.c.h.b16 %v8567
    %v10131 = vunpack.c.l.b16 %v8568
    %v10132 = vunpack.c.h.b16 %v8568
    %v10133 = vunpack.c.l.b16 %v8569
    %v10134 = vunpack.c.h.b16 %v8569
    %v10135 = vunpack.c.l.b16 %v8570
    %v10136 = vunpack.c.h.b16 %v8570
    %v10137 = vunpack.c.l.b16 %v8571
    %v10138 = vunpack.c.h.b16 %v8571
    %v10139 = vunpack.c.l.b16 %v8572
    %v10140 = vunpack.c.h.b16 %v8572
    %v10141 = vunpack.c.l.b16 %v8573
    %v10142 = vunpack.c.h.b16 %v8573
    %v10143 = vunpack.c.l.b16 %v8574
    %v10144 = vunpack.c.h.b16 %v8574
    %v10145 = vunpack.c.l.b16 %v8575
    %v10146 = vunpack.c.h.b16 %v8575
    %v10147 = vunpack.c.l.b16 %v8576
    %v10148 = vunpack.c.h.b16 %v8576
    %v10149 = vunpack.c.l.b16 %v8577
    %v10150 = vunpack.c.h.b16 %v8577
    %v10151 = vunpack.c.l.b16 %v8578
    %v10152 = vunpack.c.h.b16 %v8578
    %v10153 = vunpack.c.l.b16 %v8579
    %v10154 = vunpack.c.h.b16 %v8579
    %v10155 = vunpack.c.l.b16 %v8580
    %v10156 = vunpack.c.h.b16 %v8580
    %v10157 = vunpack.c.l.b16 %v8581
    %v10158 = vunpack.c.h.b16 %v8581
    %v10159 = vunpack.c.l.b16 %v8582
    %v10160 = vunpack.c.h.b16 %v8582
    %v10161 = vpack.c.b16 %v9145, %v9137
    %v10162 = vpack.c.b16 %v9146, %v9138
    %v10163 = vpack.c.b16 %v9147, %v9139
    %v10164 = vpack.c.b16 %v9148, %v9140
    %v10165 = vpack.c.b16 %v9149, %v9141
    %v10166 = vpack.c.b16 %v9150, %v9142
    %v10167 = vpack.c.b16 %v9151, %v9143
    %v10168 = vpack.c.b16 %v9152, %v9144
    %v10169 = vpack.c.b16 %v9161, %v9153
    %v10170 = vpack.c.b16 %v9162, %v9154
    %v10171 = vpack.c.b16 %v9163, %v9155
    %v10172 = vpack.c.b16 %v9164, %v9156
    %v10173 = vpack.c.b16 %v9165, %v9157
    %v10174 = vpack.c.b16 %v9166, %v9158
    %v10175 = vpack.c.b16 %v9167, %v9159
    %v10176 = vpack.c.b16 %v9168, %v9160
    %v10177 = vpack.c.b16 %v9177, %v9169
    %v10178 = vpack.c.b16 %v9178, %v9170
    %v10179 = vpack.c.b16 %v9179, %v9171
    %v10180 = vpack.c.b16 %v9180, %v9172
    %v10181 = vpack.c.b16 %v9181, %v9173
    %v10182 = vpack.c.b16 %v9182, %v9174
    %v10183 = vpack.c.b16 %v9183, %v9175
    %v10184 = vpack.c.b16 %v9184, %v9176
    %v10185 = vpack.c.b16 %v9193, %v9185
    %v10186 = vpack.c.b16 %v9194, %v9186
    %v10187 = vpack.c.b16 %v9195, %v9187
    %v10188 = vpack.c.b16 %v9196, %v9188
    %v10189 = vpack.c.b16 %v9197, %v9189
    %v10190 = vpack.c.b16 %v9198, %v9190
    %v10191 = vpack.c.b16 %v9199, %v9191
    %v10192 = vpack.c.b16 %v9200, %v9192
    %v10193 = vpack.c.b16 %v9209, %v9201
    %v10194 = vpack.c.b16 %v9210, %v9202
    %v10195 = vpack.c.b16 %v9211, %v9203
    %v10196 = vpack.c.b16 %v9212, %v9204
    %v10197 = vpack.c.b16 %v9213, %v9205
    %v10198 = vpack.c.b16 %v9214, %v9206
    %v10199 = vpack.c.b16 %v9215, %v9207
    %v10200 = vpack.c.b16 %v9216, %v9208
    %v10201 = vpack.c.b16 %v9225, %v9217
    %v10202 = vpack.c.b16 %v9226, %v9218
    %v10203 = vpack.c.b16 %v9227, %v9219
    %v10204 = vpack.c.b16 %v9228, %v9220
    %v10205 = vpack.c.b16 %v9229, %v9221
    %v10206 = vpack.c.b16 %v9230, %v9222
    %v10207 = vpack.c.b16 %v9231, %v9223
    %v10208 = vpack.c.b16 %v9232, %v9224
    %v10209 = vpack.c.b16 %v9241, %v9233
    %v10210 = vpack.c.b16 %v9242, %v9234
    %v10211 = vpack.c.b16 %v9243, %v9235
    %v10212 = vpack.c.b16 %v9244, %v9236
    %v10213 = vpack.c.b16 %v9245, %v9237
    %v10214 = vpack.c.b16 %v9246, %v9238
    %v10215 = vpack.c.b16 %v9247, %v9239
    %v10216 = vpack.c.b16 %v9248, %v9240
    %v10217 = vpack.c.b16 %v9257, %v9249
    %v10218 = vpack.c.b16 %v9258, %v9250
    %v10219 = vpack.c.b16 %v9259, %v9251
    %v10220 = vpack.c.b16 %v9260, %v9252
    %v10221 = vpack.c.b16 %v9261, %v9253
    %v10222 = vpack.c.b16 %v9262, %v9254
    %v10223 = vpack.c.b16 %v9263, %v9255
    %v10224 = vpack.c.b16 %v9264, %v9256
    %v10225 = vpack.c.b16 %v9273, %v9265
    %v10226 = vpack.c.b16 %v9274, %v9266
    %v10227 = vpack.c.b16 %v9275, %v9267
    %v10228 = vpack.c.b16 %v9276, %v9268
    %v10229 = vpack.c.b16 %v9277, %v9269
    %v10230 = vpack.c.b16 %v9278, %v9270
    %v10231 = vpack.c.b16 %v9279, %v9271
    %v10232 = vpack.c.b16 %v9280, %v9272
    %v10233 = vpack.c.b16 %v9289, %v9281
    %v10234 = vpack.c.b16 %v9290, %v9282
    %v10235 = vpack.c.b16 %v9291, %v9283
    %v10236 = vpack.c.b16 %v9292, %v9284
    %v10237 = vpack.c.b16 %v9293, %v9285
    %v10238 = vpack.c.b16 %v9294, %v9286
    %v10239 = vpack.c.b16 %v9295, %v9287
    %v10240 = vpack.c.b16 %v9296, %v9288
    %v10241 = vpack.c.b16 %v9305, %v9297
    %v10242 = vpack.c.b16 %v9306, %v9298
    %v10243 = vpack.c.b16 %v9307, %v9299
    %v10244 = vpack.c.b16 %v9308, %v9300
    %v10245 = vpack.c.b16 %v9309, %v9301
    %v10246 = vpack.c.b16 %v9310, %v9302
    %v10247 = vpack.c.b16 %v9311, %v9303
    %v10248 = vpack.c.b16 %v9312, %v9304
    %v10249 = vpack.c.b16 %v9321, %v9313
    %v10250 = vpack.c.b16 %v9322, %v9314
    %v10251 = vpack.c.b16 %v9323, %v9315
    %v10252 = vpack.c.b16 %v9324, %v9316
    %v10253 = vpack.c.b16 %v9325, %v9317
    %v10254 = vpack.c.b16 %v9326, %v9318
    %v10255 = vpack.c.b16 %v9327, %v9319
    %v10256 = vpack.c.b16 %v9328, %v9320
    %v10257 = vpack.c.b16 %v9337, %v9329
    %v10258 = vpack.c.b16 %v9338, %v9330
    %v10259 = vpack.c.b16 %v9339, %v9331
    %v10260 = vpack.c.b16 %v9340, %v9332
    %v10261 = vpack.c.b16 %v9341, %v9333
    %v10262 = vpack.c.b16 %v9342, %v9334
    %v10263 = vpack.c.b16 %v9343, %v9335
    %v10264 = vpack.c.b16 %v9344, %v9336
    %v10265 = vpack.c.b16 %v9353, %v9345
    %v10266 = vpack.c.b16 %v9354, %v9346
    %v10267 = vpack.c.b16 %v9355, %v9347
    %v10268 = vpack.c.b16 %v9356, %v9348
    %v10269 = vpack.c.b16 %v9357, %v9349
    %v10270 = vpack.c.b16 %v9358, %v9350
    %v10271 = vpack.c.b16 %v9359, %v9351
    %v10272 = vpack.c.b16 %v9360, %v9352
    %v10273 = vpack.c.b16 %v9369, %v9361
    %v10274 = vpack.c.b16 %v9370, %v9362
    %v10275 = vpack.c.b16 %v9371, %v9363
    %v10276 = vpack.c.b16 %v9372, %v9364
    %v10277 = vpack.c.b16 %v9373, %v9365
    %v10278 = vpack.c.b16 %v9374, %v9366
    %v10279 = vpack.c.b16 %v9375, %v9367
    %v10280 = vpack.c.b16 %v9376, %v9368
    %v10281 = vpack.c.b16 %v9385, %v9377
    %v10282 = vpack.c.b16 %v9386, %v9378
    %v10283 = vpack.c.b16 %v9387, %v9379
    %v10284 = vpack.c.b16 %v9388, %v9380
    %v10285 = vpack.c.b16 %v9389, %v9381
    %v10286 = vpack.c.b16 %v9390, %v9382
    %v10287 = vpack.c.b16 %v9391, %v9383
    %v10288 = vpack.c.b16 %v9392, %v9384
    %v10289 = vpack.c.b16 %v9401, %v9393
    %v10290 = vpack.c.b16 %v9402, %v9394
    %v10291 = vpack.c.b16 %v9403, %v9395
    %v10292 = vpack.c.b16 %v9404, %v9396
    %v10293 = vpack.c.b16 %v9405, %v9397
    %v10294 = vpack.c.b16 %v9406, %v9398
    %v10295 = vpack.c.b16 %v9407, %v9399
    %v10296 = vpack.c.b16 %v9408, %v9400
    %v10297 = vpack.c.b16 %v9417, %v9409
    %v10298 = vpack.c.b16 %v9418, %v9410
    %v10299 = vpack.c.b16 %v9419, %v9411
    %v10300 = vpack.c.b16 %v9420, %v9412
    %v10301 = vpack.c.b16 %v9421, %v9413
    %v10302 = vpack.c.b16 %v9422, %v9414
    %v10303 = vpack.c.b16 %v9423, %v9415
    %v10304 = vpack.c.b16 %v9424, %v9416
    %v10305 = vpack.c.b16 %v9433, %v9425
    %v10306 = vpack.c.b16 %v9434, %v9426
    %v10307 = vpack.c.b16 %v9435, %v9427
    %v10308 = vpack.c.b16 %v9436, %v9428
    %v10309 = vpack.c.b16 %v9437, %v9429
    %v10310 = vpack.c.b16 %v9438, %v9430
    %v10311 = vpack.c.b16 %v9439, %v9431
    %v10312 = vpack.c.b16 %v9440, %v9432
    %v10313 = vpack.c.b16 %v9449, %v9441
    %v10314 = vpack.c.b16 %v9450, %v9442
    %v10315 = vpack.c.b16 %v9451, %v9443
    %v10316 = vpack.c.b16 %v9452, %v9444
    %v10317 = vpack.c.b16 %v9453, %v9445
    %v10318 = vpack.c.b16 %v9454, %v9446
    %v10319 = vpack.c.b16 %v9455, %v9447
    %v10320 = vpack.c.b16 %v9456, %v9448
    %v10321 = vpack.c.b16 %v9465, %v9457
    %v10322 = vpack.c.b16 %v9466, %v9458
    %v10323 = vpack.c.b16 %v9467, %v9459
    %v10324 = vpack.c.b16 %v9468, %v9460
    %v10325 = vpack.c.b16 %v9469, %v9461
    %v10326 = vpack.c.b16 %v9470, %v9462
    %v10327 = vpack.c.b16 %v9471, %v9463
    %v10328 = vpack.c.b16 %v9472, %v9464
    %v10329 = vpack.c.b16 %v9481, %v9473
    %v10330 = vpack.c.b16 %v9482, %v9474
    %v10331 = vpack.c.b16 %v9483, %v9475
    %v10332 = vpack.c.b16 %v9484, %v9476
    %v10333 = vpack.c.b16 %v9485, %v9477
    %v10334 = vpack.c.b16 %v9486, %v9478
    %v10335 = vpack.c.b16 %v9487, %v9479
    %v10336 = vpack.c.b16 %v9488, %v9480
    %v10337 = vpack.c.b16 %v9497, %v9489
    %v10338 = vpack.c.b16 %v9498, %v9490
    %v10339 = vpack.c.b16 %v9499, %v9491
    %v10340 = vpack.c.b16 %v9500, %v9492
    %v10341 = vpack.c.b16 %v9501, %v9493
    %v10342 = vpack.c.b16 %v9502, %v9494
    %v10343 = vpack.c.b16 %v9503, %v9495
    %v10344 = vpack.c.b16 %v9504, %v9496
    %v10345 = vpack.c.b16 %v9513, %v9505
    %v10346 = vpack.c.b16 %v9514, %v9506
    %v10347 = vpack.c.b16 %v9515, %v9507
    %v10348 = vpack.c.b16 %v9516, %v9508
    %v10349 = vpack.c.b16 %v9517, %v9509
    %v10350 = vpack.c.b16 %v9518, %v9510
    %v10351 = vpack.c.b16 %v9519, %v9511
    %v10352 = vpack.c.b16 %v9520, %v9512
    %v10353 = vpack.c.b16 %v9529, %v9521
    %v10354 = vpack.c.b16 %v9530, %v9522
    %v10355 = vpack.c.b16 %v9531, %v9523
    %v10356 = vpack.c.b16 %v9532, %v9524
    %v10357 = vpack.c.b16 %v9533, %v9525
    %v10358 = vpack.c.b16 %v9534, %v9526
    %v10359 = vpack.c.b16 %v9535, %v9527
    %v10360 = vpack.c.b16 %v9536, %v9528
    %v10361 = vpack.c.b16 %v9545, %v9537
    %v10362 = vpack.c.b16 %v9546, %v9538
    %v10363 = vpack.c.b16 %v9547, %v9539
    %v10364 = vpack.c.b16 %v9548, %v9540
    %v10365 = vpack.c.b16 %v9549, %v9541
    %v10366 = vpack.c.b16 %v9550, %v9542
    %v10367 = vpack.c.b16 %v9551, %v9543
    %v10368 = vpack.c.b16 %v9552, %v9544
    %v10369 = vpack.c.b16 %v9561, %v9553
    %v10370 = vpack.c.b16 %v9562, %v9554
    %v10371 = vpack.c.b16 %v9563, %v9555
    %v10372 = vpack.c.b16 %v9564, %v9556
    %v10373 = vpack.c.b16 %v9565, %v9557
    %v10374 = vpack.c.b16 %v9566, %v9558
    %v10375 = vpack.c.b16 %v9567, %v9559
    %v10376 = vpack.c.b16 %v9568, %v9560
    %v10377 = vpack.c.b16 %v9577, %v9569
    %v10378 = vpack.c.b16 %v9578, %v9570
    %v10379 = vpack.c.b16 %v9579, %v9571
    %v10380 = vpack.c.b16 %v9580, %v9572
    %v10381 = vpack.c.b16 %v9581, %v9573
    %v10382 = vpack.c.b16 %v9582, %v9574
    %v10383 = vpack.c.b16 %v9583, %v9575
    %v10384 = vpack.c.b16 %v9584, %v9576
    %v10385 = vpack.c.b16 %v9593, %v9585
    %v10386 = vpack.c.b16 %v9594, %v9586
    %v10387 = vpack.c.b16 %v9595, %v9587
    %v10388 = vpack.c.b16 %v9596, %v9588
    %v10389 = vpack.c.b16 %v9597, %v9589
    %v10390 = vpack.c.b16 %v9598, %v9590
    %v10391 = vpack.c.b16 %v9599, %v9591
    %v10392 = vpack.c.b16 %v9600, %v9592
    %v10393 = vpack.c.b16 %v9609, %v9601
    %v10394 = vpack.c.b16 %v9610, %v9602
    %v10395 = vpack.c.b16 %v9611, %v9603
    %v10396 = vpack.c.b16 %v9612, %v9604
    %v10397 = vpack.c.b16 %v9613, %v9605
    %v10398 = vpack.c.b16 %v9614, %v9606
    %v10399 = vpack.c.b16 %v9615, %v9607
    %v10400 = vpack.c.b16 %v9616, %v9608
    %v10401 = vpack.c.b16 %v9625, %v9617
    %v10402 = vpack.c.b16 %v9626, %v9618
    %v10403 = vpack.c.b16 %v9627, %v9619
    %v10404 = vpack.c.b16 %v9628, %v9620
    %v10405 = vpack.c.b16 %v9629, %v9621
    %v10406 = vpack.c.b16 %v9630, %v9622
    %v10407 = vpack.c.b16 %v9631, %v9623
    %v10408 = vpack.c.b16 %v9632, %v9624
    %v10409 = vpack.c.b16 %v9641, %v9633
    %v10410 = vpack.c.b16 %v9642, %v9634
    %v10411 = vpack.c.b16 %v9643, %v9635
    %v10412 = vpack.c.b16 %v9644, %v9636
    %v10413 = vpack.c.b16 %v9645, %v9637
    %v10414 = vpack.c.b16 %v9646, %v9638
    %v10415 = vpack.c.b16 %v9647, %v9639
    %v10416 = vpack.c.b16 %v9648, %v9640
    %v10417 = vpack.c.b16 %v9657, %v9649
    %v10418 = vpack.c.b16 %v9658, %v9650
    %v10419 = vpack.c.b16 %v9659, %v9651
    %v10420 = vpack.c.b16 %v9660, %v9652
    %v10421 = vpack.c.b16 %v9661, %v9653
    %v10422 = vpack.c.b16 %v9662, %v9654
    %v10423 = vpack.c.b16 %v9663, %v9655
    %v10424 = vpack.c.b16 %v9664, %v9656
    %v10425 = vpack.c.b16 %v9673, %v9665
    %v10426 = vpack.c.b16 %v9674, %v9666
    %v10427 = vpack.c.b16 %v9675, %v9667
    %v10428 = vpack.c.b16 %v9676, %v9668
    %v10429 = vpack.c.b16 %v9677, %v9669
    %v10430 = vpack.c.b16 %v9678, %v9670
    %v10431 = vpack.c.b16 %v9679, %v9671
    %v10432 = vpack.c.b16 %v9680, %v9672
    %v10433 = vpack.c.b16 %v9689, %v9681
    %v10434 = vpack.c.b16 %v9690, %v9682
    %v10435 = vpack.c.b16 %v9691, %v9683
    %v10436 = vpack.c.b16 %v9692, %v9684
    %v10437 = vpack.c.b16 %v9693, %v9685
    %v10438 = vpack.c.b16 %v9694, %v9686
    %v10439 = vpack.c.b16 %v9695, %v9687
    %v10440 = vpack.c.b16 %v9696, %v9688
    %v10441 = vpack.c.b16 %v9705, %v9697
    %v10442 = vpack.c.b16 %v9706, %v9698
    %v10443 = vpack.c.b16 %v9707, %v9699
    %v10444 = vpack.c.b16 %v9708, %v9700
    %v10445 = vpack.c.b16 %v9709, %v9701
    %v10446 = vpack.c.b16 %v9710, %v9702
    %v10447 = vpack.c.b16 %v9711, %v9703
    %v10448 = vpack.c.b16 %v9712, %v9704
    %v10449 = vpack.c.b16 %v9721, %v9713
    %v10450 = vpack.c.b16 %v9722, %v9714
    %v10451 = vpack.c.b16 %v9723, %v9715
    %v10452 = vpack.c.b16 %v9724, %v9716
    %v10453 = vpack.c.b16 %v9725, %v9717
    %v10454 = vpack.c.b16 %v9726, %v9718
    %v10455 = vpack.c.b16 %v9727, %v9719
    %v10456 = vpack.c.b16 %v9728, %v9720
    %v10457 = vpack.c.b16 %v9737, %v9729
    %v10458 = vpack.c.b16 %v9738, %v9730
    %v10459 = vpack.c.b16 %v9739, %v9731
    %v10460 = vpack.c.b16 %v9740, %v9732
    %v10461 = vpack.c.b16 %v9741, %v9733
    %v10462 = vpack.c.b16 %v9742, %v9734
    %v10463 = vpack.c.b16 %v9743, %v9735
    %v10464 = vpack.c.b16 %v9744, %v9736
    %v10465 = vpack.c.b16 %v9753, %v9745
    %v10466 = vpack.c.b16 %v9754, %v9746
    %v10467 = vpack.c.b16 %v9755, %v9747
    %v10468 = vpack.c.b16 %v9756, %v9748
    %v10469 = vpack.c.b16 %v9757, %v9749
    %v10470 = vpack.c.b16 %v9758, %v9750
    %v10471 = vpack.c.b16 %v9759, %v9751
    %v10472 = vpack.c.b16 %v9760, %v9752
    %v10473 = vpack.c.b16 %v9769, %v9761
    %v10474 = vpack.c.b16 %v9770, %v9762
    %v10475 = vpack.c.b16 %v9771, %v9763
    %v10476 = vpack.c.b16 %v9772, %v9764
    %v10477 = vpack.c.b16 %v9773, %v9765
    %v10478 = vpack.c.b16 %v9774, %v9766
    %v10479 = vpack.c.b16 %v9775, %v9767
    %v10480 = vpack.c.b16 %v9776, %v9768
    %v10481 = vpack.c.b16 %v9785, %v9777
    %v10482 = vpack.c.b16 %v9786, %v9778
    %v10483 = vpack.c.b16 %v9787, %v9779
    %v10484 = vpack.c.b16 %v9788, %v9780
    %v10485 = vpack.c.b16 %v9789, %v9781
    %v10486 = vpack.c.b16 %v9790, %v9782
    %v10487 = vpack.c.b16 %v9791, %v9783
    %v10488 = vpack.c.b16 %v9792, %v9784
    %v10489 = vpack.c.b16 %v9801, %v9793
    %v10490 = vpack.c.b16 %v9802, %v9794
    %v10491 = vpack.c.b16 %v9803, %v9795
    %v10492 = vpack.c.b16 %v9804, %v9796
    %v10493 = vpack.c.b16 %v9805, %v9797
    %v10494 = vpack.c.b16 %v9806, %v9798
    %v10495 = vpack.c.b16 %v9807, %v9799
    %v10496 = vpack.c.b16 %v9808, %v9800
    %v10497 = vpack.c.b16 %v9817, %v9809
    %v10498 = vpack.c.b16 %v9818, %v9810
    %v10499 = vpack.c.b16 %v9819, %v9811
    %v10500 = vpack.c.b16 %v9820, %v9812
    %v10501 = vpack.c.b16 %v9821, %v9813
    %v10502 = vpack.c.b16 %v9822, %v9814
    %v10503 = vpack.c.b16 %v9823, %v9815
    %v10504 = vpack.c.b16 %v9824, %v9816
    %v10505 = vpack.c.b16 %v9833, %v9825
    %v10506 = vpack.c.b16 %v9834, %v9826
    %v10507 = vpack.c.b16 %v9835, %v9827
    %v10508 = vpack.c.b16 %v9836, %v9828
    %v10509 = vpack.c.b16 %v9837, %v9829
    %v10510 = vpack.c.b16 %v9838, %v9830
    %v10511 = vpack.c.b16 %v9839, %v9831
    %v10512 = vpack.c.b16 %v9840, %v9832
    %v10513 = vpack.c.b16 %v9849, %v9841
    %v10514 = vpack.c.b16 %v9850, %v9842
    %v10515 = vpack.c.b16 %v9851, %v9843
    %v10516 = vpack.c.b16 %v9852, %v9844
    %v10517 = vpack.c.b16 %v9853, %v9845
    %v10518 = vpack.c.b16 %v9854, %v9846
    %v10519 = vpack.c.b16 %v9855, %v9847
    %v10520 = vpack.c.b16 %v9856, %v9848
    %v10521 = vpack.c.b16 %v9865, %v9857
    %v10522 = vpack.c.b16 %v9866, %v9858
    %v10523 = vpack.c.b16 %v9867, %v9859
    %v10524 = vpack.c.b16 %v9868, %v9860
    %v10525 = vpack.c.b16 %v9869, %v9861
    %v10526 = vpack.c.b16 %v9870, %v9862
    %v10527 = vpack.c.b16 %v9871, %v9863
    %v10528 = vpack.c.b16 %v9872, %v9864
    %v10529 = vpack.c.b16 %v9881, %v9873
    %v10530 = vpack.c.b16 %v9882, %v9874
    %v10531 = vpack.c.b16 %v9883, %v9875
    %v10532 = vpack.c.b16 %v9884, %v9876
    %v10533 = vpack.c.b16 %v9885, %v9877
    %v10534 = vpack.c.b16 %v9886, %v9878
    %v10535 = vpack.c.b16 %v9887, %v9879
    %v10536 = vpack.c.b16 %v9888, %v9880
    %v10537 = vpack.c.b16 %v9897, %v9889
    %v10538 = vpack.c.b16 %v9898, %v9890
    %v10539 = vpack.c.b16 %v9899, %v9891
    %v10540 = vpack.c.b16 %v9900, %v9892
    %v10541 = vpack.c.b16 %v9901, %v9893
    %v10542 = vpack.c.b16 %v9902, %v9894
    %v10543 = vpack.c.b16 %v9903, %v9895
    %v10544 = vpack.c.b16 %v9904, %v9896
    %v10545 = vpack.c.b16 %v9913, %v9905
    %v10546 = vpack.c.b16 %v9914, %v9906
    %v10547 = vpack.c.b16 %v9915, %v9907
    %v10548 = vpack.c.b16 %v9916, %v9908
    %v10549 = vpack.c.b16 %v9917, %v9909
    %v10550 = vpack.c.b16 %v9918, %v9910
    %v10551 = vpack.c.b16 %v9919, %v9911
    %v10552 = vpack.c.b16 %v9920, %v9912
    %v10553 = vpack.c.b16 %v9929, %v9921
    %v10554 = vpack.c.b16 %v9930, %v9922
    %v10555 = vpack.c.b16 %v9931, %v9923
    %v10556 = vpack.c.b16 %v9932, %v9924
    %v10557 = vpack.c.b16 %v9933, %v9925
    %v10558 = vpack.c.b16 %v9934, %v9926
    %v10559 = vpack.c.b16 %v9935, %v9927
    %v10560 = vpack.c.b16 %v9936, %v9928
    %v10561 = vpack.c.b16 %v9945, %v9937
    %v10562 = vpack.c.b16 %v9946, %v9938
    %v10563 = vpack.c.b16 %v9947, %v9939
    %v10564 = vpack.c.b16 %v9948, %v9940
    %v10565 = vpack.c.b16 %v9949, %v9941
    %v10566 = vpack.c.b16 %v9950, %v9942
    %v10567 = vpack.c.b16 %v9951, %v9943
    %v10568 = vpack.c.b16 %v9952, %v9944
    %v10569 = vpack.c.b16 %v9961, %v9953
    %v10570 = vpack.c.b16 %v9962, %v9954
    %v10571 = vpack.c.b16 %v9963, %v9955
    %v10572 = vpack.c.b16 %v9964, %v9956
    %v10573 = vpack.c.b16 %v9965, %v9957
    %v10574 = vpack.c.b16 %v9966, %v9958
    %v10575 = vpack.c.b16 %v9967, %v9959
    %v10576 = vpack.c.b16 %v9968, %v9960
    %v10577 = vpack.c.b16 %v9977, %v9969
    %v10578 = vpack.c.b16 %v9978, %v9970
    %v10579 = vpack.c.b16 %v9979, %v9971
    %v10580 = vpack.c.b16 %v9980, %v9972
    %v10581 = vpack.c.b16 %v9981, %v9973
    %v10582 = vpack.c.b16 %v9982, %v9974
    %v10583 = vpack.c.b16 %v9983, %v9975
    %v10584 = vpack.c.b16 %v9984, %v9976
    %v10585 = vpack.c.b16 %v9993, %v9985
    %v10586 = vpack.c.b16 %v9994, %v9986
    %v10587 = vpack.c.b16 %v9995, %v9987
    %v10588 = vpack.c.b16 %v9996, %v9988
    %v10589 = vpack.c.b16 %v9997, %v9989
    %v10590 = vpack.c.b16 %v9998, %v9990
    %v10591 = vpack.c.b16 %v9999, %v9991
    %v10592 = vpack.c.b16 %v10000, %v9992
    %v10593 = vpack.c.b16 %v10009, %v10001
    %v10594 = vpack.c.b16 %v10010, %v10002
    %v10595 = vpack.c.b16 %v10011, %v10003
    %v10596 = vpack.c.b16 %v10012, %v10004
    %v10597 = vpack.c.b16 %v10013, %v10005
    %v10598 = vpack.c.b16 %v10014, %v10006
    %v10599 = vpack.c.b16 %v10015, %v10007
    %v10600 = vpack.c.b16 %v10016, %v10008
    %v10601 = vpack.c.b16 %v10025, %v10017
    %v10602 = vpack.c.b16 %v10026, %v10018
    %v10603 = vpack.c.b16 %v10027, %v10019
    %v10604 = vpack.c.b16 %v10028, %v10020
    %v10605 = vpack.c.b16 %v10029, %v10021
    %v10606 = vpack.c.b16 %v10030, %v10022
    %v10607 = vpack.c.b16 %v10031, %v10023
    %v10608 = vpack.c.b16 %v10032, %v10024
    %v10609 = vpack.c.b16 %v10041, %v10033
    %v10610 = vpack.c.b16 %v10042, %v10034
    %v10611 = vpack.c.b16 %v10043, %v10035
    %v10612 = vpack.c.b16 %v10044, %v10036
    %v10613 = vpack.c.b16 %v10045, %v10037
    %v10614 = vpack.c.b16 %v10046, %v10038
    %v10615 = vpack.c.b16 %v10047, %v10039
    %v10616 = vpack.c.b16 %v10048, %v10040
    %v10617 = vpack.c.b16 %v10057, %v10049
    %v10618 = vpack.c.b16 %v10058, %v10050
    %v10619 = vpack.c.b16 %v10059, %v10051
    %v10620 = vpack.c.b16 %v10060, %v10052
    %v10621 = vpack.c.b16 %v10061, %v10053
    %v10622 = vpack.c.b16 %v10062, %v10054
    %v10623 = vpack.c.b16 %v10063, %v10055
    %v10624 = vpack.c.b16 %v10064, %v10056
    %v10625 = vpack.c.b16 %v10073, %v10065
    %v10626 = vpack.c.b16 %v10074, %v10066
    %v10627 = vpack.c.b16 %v10075, %v10067
    %v10628 = vpack.c.b16 %v10076, %v10068
    %v10629 = vpack.c.b16 %v10077, %v10069
    %v10630 = vpack.c.b16 %v10078, %v10070
    %v10631 = vpack.c.b16 %v10079, %v10071
    %v10632 = vpack.c.b16 %v10080, %v10072
    %v10633 = vpack.c.b16 %v10089, %v10081
    %v10634 = vpack.c.b16 %v10090, %v10082
    %v10635 = vpack.c.b16 %v10091, %v10083
    %v10636 = vpack.c.b16 %v10092, %v10084
    %v10637 = vpack.c.b16 %v10093, %v10085
    %v10638 = vpack.c.b16 %v10094, %v10086
    %v10639 = vpack.c.b16 %v10095, %v10087
    %v10640 = vpack.c.b16 %v10096, %v10088
    %v10641 = vpack.c.b16 %v10105, %v10097
    %v10642 = vpack.c.b16 %v10106, %v10098
    %v10643 = vpack.c.b16 %v10107, %v10099
    %v10644 = vpack.c.b16 %v10108, %v10100
    %v10645 = vpack.c.b16 %v10109, %v10101
    %v10646 = vpack.c.b16 %v10110, %v10102
    %v10647 = vpack.c.b16 %v10111, %v10103
    %v10648 = vpack.c.b16 %v10112, %v10104
    %v10649 = vpack.c.b16 %v10121, %v10113
    %v10650 = vpack.c.b16 %v10122, %v10114
    %v10651 = vpack.c.b16 %v10123, %v10115
    %v10652 = vpack.c.b16 %v10124, %v10116
    %v10653 = vpack.c.b16 %v10125, %v10117
    %v10654 = vpack.c.b16 %v10126, %v10118
    %v10655 = vpack.c.b16 %v10127, %v10119
    %v10656 = vpack.c.b16 %v10128, %v10120
    %v10657 = vpack.c.b16 %v10137, %v10129
    %v10658 = vpack.c.b16 %v10138, %v10130
    %v10659 = vpack.c.b16 %v10139, %v10131
    %v10660 = vpack.c.b16 %v10140, %v10132
    %v10661 = vpack.c.b16 %v10141, %v10133
    %v10662 = vpack.c.b16 %v10142, %v10134
    %v10663 = vpack.c.b16 %v10143, %v10135
    %v10664 = vpack.c.b16 %v10144, %v10136
    %v10665 = vpack.c.b16 %v10153, %v10145
    %v10666 = vpack.c.b16 %v10154, %v10146
    %v10667 = vpack.c.b16 %v10155, %v10147
    %v10668 = vpack.c.b16 %v10156, %v10148
    %v10669 = vpack.c.b16 %v10157, %v10149
    %v10670 = vpack.c.b16 %v10158, %v10150
    %v10671 = vpack.c.b16 %v10159, %v10151
    %v10672 = vpack.c.b16 %v10160, %v10152
    %11185 = vmatprep.subr.bf16.mxu0 %v10162
    %11186 = vmatpush1.bf16.msra.mxu0 %v10161
    %11187 = vmatprep.subr.bf16.mxu0 %v10170
    %11188 = vmatpush1.bf16.msra.mxu0 %v10169
    %11189 = vmatprep.subr.bf16.mxu0 %v10178
    %11190 = vmatpush1.bf16.msra.mxu0 %v10177
    %11191 = vmatprep.subr.bf16.mxu0 %v10186
    %11192 = vmatpush1.bf16.msra.mxu0 %v10185
    %11193 = vmatprep.subr.bf16.mxu0 %v10194
    %11194 = vmatpush1.bf16.msra.mxu0 %v10193
    %11195 = vmatprep.subr.bf16.mxu0 %v10202
    %11196 = vmatpush1.bf16.msra.mxu0 %v10201
    %11197 = vmatprep.subr.bf16.mxu0 %v10210
    %11198 = vmatpush1.bf16.msra.mxu0 %v10209
    %11199 = vmatprep.subr.bf16.mxu0 %v10218
    %11200 = vmatpush1.bf16.msra.mxu0 %v10217
    %11201 = vmatprep.subr.bf16.mxu0 %v10226
    %11202 = vmatpush1.bf16.msra.mxu0 %v10225
    %11203 = vmatprep.subr.bf16.mxu0 %v10234
    %11204 = vmatpush1.bf16.msra.mxu0 %v10233
    %11205 = vmatprep.subr.bf16.mxu0 %v10242
    %11206 = vmatpush1.bf16.msra.mxu0 %v10241
    %11207 = vmatprep.subr.bf16.mxu0 %v10250
    %11208 = vmatpush1.bf16.msra.mxu0 %v10249
    %11209 = vmatprep.subr.bf16.mxu0 %v10258
    %11210 = vmatpush1.bf16.msra.mxu0 %v10257
    %11211 = vmatprep.subr.bf16.mxu0 %v10266
    %11212 = vmatpush1.bf16.msra.mxu0 %v10265
    %11213 = vmatprep.subr.bf16.mxu0 %v10274
    %11214 = vmatpush1.bf16.msra.mxu0 %v10273
    %11215 = vmatprep.subr.bf16.mxu0 %v10282
    %11216 = vmatpush1.bf16.msra.mxu0 %v10281
    %11217 = vmatprep.mubr.bf16.mxu0 %v8064
    %11218 = vmatmul.mubr.bf16.gmra.mrb[0].mxu0 %v8063
    %v11219 = vpop.f32.mrb[0].mxu0
    %v11220 = vadd.f32 %v8588, %v11219
    %v11221 = vpop.f32.mrb[0].mxu0
    %v11222 = vadd.f32 %v8592, %v11221
    %v11223 = vpop.f32.mrb[0].mxu0
    %v11224 = vpop.f32.mrb[0].mxu0
    %11225 = vdwg.mxu0
    %11226 = vmatprep.subr.bf16.mxu0 %v10290
    %11227 = vmatpush1.bf16.msra.mxu0 %v10289
    %11228 = vmatprep.subr.bf16.mxu0 %v10298
    %11229 = vmatpush1.bf16.msra.mxu0 %v10297
    %11230 = vmatprep.subr.bf16.mxu0 %v10306
    %11231 = vmatpush1.bf16.msra.mxu0 %v10305
    %11232 = vmatprep.subr.bf16.mxu0 %v10314
    %11233 = vmatpush1.bf16.msra.mxu0 %v10313
    %11234 = vmatprep.subr.bf16.mxu0 %v10322
    %11235 = vmatpush1.bf16.msra.mxu0 %v10321
    %11236 = vmatprep.subr.bf16.mxu0 %v10330
    %11237 = vmatpush1.bf16.msra.mxu0 %v10329
    %11238 = vmatprep.subr.bf16.mxu0 %v10338
    %11239 = vmatpush1.bf16.msra.mxu0 %v10337
    %11240 = vmatprep.subr.bf16.mxu0 %v10346
    %11241 = vmatpush1.bf16.msra.mxu0 %v10345
    %11242 = vmatprep.subr.bf16.mxu0 %v10354
    %11243 = vmatpush1.bf16.msra.mxu0 %v10353
    %11244 = vmatprep.subr.bf16.mxu0 %v10362
    %11245 = vmatpush1.bf16.msra.mxu0 %v10361
    %11246 = vmatprep.subr.bf16.mxu0 %v10370
    %11247 = vmatpush1.bf16.msra.mxu0 %v10369
    %11248 = vmatprep.subr.bf16.mxu0 %v10378
    %11249 = vmatpush1.bf16.msra.mxu0 %v10377
    %11250 = vmatprep.subr.bf16.mxu0 %v10386
    %11251 = vmatpush1.bf16.msra.mxu0 %v10385
    %11252 = vmatprep.subr.bf16.mxu0 %v10394
    %11253 = vmatpush1.bf16.msra.mxu0 %v10393
    %11254 = vmatprep.subr.bf16.mxu0 %v10402
    %11255 = vmatpush1.bf16.msra.mxu0 %v10401
    %11256 = vmatprep.subr.bf16.mxu0 %v10410
    %11257 = vmatpush1.bf16.msra.mxu0 %v10409
    %11258 = vmatprep.mubr.bf16.mxu0 %v8066
    %11259 = vmatmul.mubr.bf16.gmra.mrb[0].mxu0 %v8065
    %v11260 = vpop.f32.mrb[0].mxu0
    %v11261 = vadd.f32 %v11220, %v11260
    %v11262 = vpop.f32.mrb[0].mxu0
    %v11263 = vadd.f32 %v11222, %v11262
    %v11264 = vpop.f32.mrb[0].mxu0
    %v11265 = vpop.f32.mrb[0].mxu0
    %11266 = vdwg.mxu0
    %11267 = vmatprep.subr.bf16.mxu0 %v10418
    %11268 = vmatpush1.bf16.msra.mxu0 %v10417
    %11269 = vmatprep.subr.bf16.mxu0 %v10426
    %11270 = vmatpush1.bf16.msra.mxu0 %v10425
    %11271 = vmatprep.subr.bf16.mxu0 %v10434
    %11272 = vmatpush1.bf16.msra.mxu0 %v10433
    %11273 = vmatprep.subr.bf16.mxu0 %v10442
    %11274 = vmatpush1.bf16.msra.mxu0 %v10441
    %11275 = vmatprep.subr.bf16.mxu0 %v10450
    %11276 = vmatpush1.bf16.msra.mxu0 %v10449
    %11277 = vmatprep.subr.bf16.mxu0 %v10458
    %11278 = vmatpush1.bf16.msra.mxu0 %v10457
    %11279 = vmatprep.subr.bf16.mxu0 %v10466
    %11280 = vmatpush1.bf16.msra.mxu0 %v10465
    %11281 = vmatprep.subr.bf16.mxu0 %v10474
    %11282 = vmatpush1.bf16.msra.mxu0 %v10473
    %11283 = vmatprep.subr.bf16.mxu0 %v10482
    %11284 = vmatpush1.bf16.msra.mxu0 %v10481
    %11285 = vmatprep.subr.bf16.mxu0 %v10490
    %11286 = vmatpush1.bf16.msra.mxu0 %v10489
    %11287 = vmatprep.subr.bf16.mxu0 %v10498
    %11288 = vmatpush1.bf16.msra.mxu0 %v10497
    %11289 = vmatprep.subr.bf16.mxu0 %v10506
    %11290 = vmatpush1.bf16.msra.mxu0 %v10505
    %11291 = vmatprep.subr.bf16.mxu0 %v10514
    %11292 = vmatpush1.bf16.msra.mxu0 %v10513
    %11293 = vmatprep.subr.bf16.mxu0 %v10522
    %11294 = vmatpush1.bf16.msra.mxu0 %v10521
    %11295 = vmatprep.subr.bf16.mxu0 %v10530
    %11296 = vmatpush1.bf16.msra.mxu0 %v10529
    %11297 = vmatprep.subr.bf16.mxu0 %v10538
    %11298 = vmatpush1.bf16.msra.mxu0 %v10537
    %11299 = vmatprep.mubr.bf16.mxu0 %v8068
    %11300 = vmatmul.mubr.bf16.gmra.mrb[0].mxu0 %v8067
    %v11301 = vpop.f32.mrb[0].mxu0
    %v11302 = vadd.f32 %v11261, %v11301
    %v11303 = vpop.f32.mrb[0].mxu0
    %v11304 = vadd.f32 %v11263, %v11303
    %v11305 = vpop.f32.mrb[0].mxu0
    %v11306 = vpop.f32.mrb[0].mxu0
    %11307 = vdwg.mxu0
    %11308 = vmatprep.subr.bf16.mxu0 %v10546
    %11309 = vmatpush1.bf16.msra.mxu0 %v10545
    %11310 = vmatprep.subr.bf16.mxu0 %v10554
    %11311 = vmatpush1.bf16.msra.mxu0 %v10553
    %11312 = vmatprep.subr.bf16.mxu0 %v10562
    %11313 = vmatpush1.bf16.msra.mxu0 %v10561
    %11314 = vmatprep.subr.bf16.mxu0 %v10570
    %11315 = vmatpush1.bf16.msra.mxu0 %v10569
    %11316 = vmatprep.subr.bf16.mxu0 %v10578
    %11317 = vmatpush1.bf16.msra.mxu0 %v10577
    %11318 = vmatprep.subr.bf16.mxu0 %v10586
    %11319 = vmatpush1.bf16.msra.mxu0 %v10585
    %11320 = vmatprep.subr.bf16.mxu0 %v10594
    %11321 = vmatpush1.bf16.msra.mxu0 %v10593
    %11322 = vmatprep.subr.bf16.mxu0 %v10602
    %11323 = vmatpush1.bf16.msra.mxu0 %v10601
    %11324 = vmatprep.subr.bf16.mxu0 %v10610
    %11325 = vmatpush1.bf16.msra.mxu0 %v10609
    %11326 = vmatprep.subr.bf16.mxu0 %v10618
    %11327 = vmatpush1.bf16.msra.mxu0 %v10617
    %11328 = vmatprep.subr.bf16.mxu0 %v10626
    %11329 = vmatpush1.bf16.msra.mxu0 %v10625
    %11330 = vmatprep.subr.bf16.mxu0 %v10634
    %11331 = vmatpush1.bf16.msra.mxu0 %v10633
    %11332 = vmatprep.subr.bf16.mxu0 %v10642
    %11333 = vmatpush1.bf16.msra.mxu0 %v10641
    %11334 = vmatprep.subr.bf16.mxu0 %v10650
    %11335 = vmatpush1.bf16.msra.mxu0 %v10649
    %11336 = vmatprep.subr.bf16.mxu0 %v10658
    %11337 = vmatpush1.bf16.msra.mxu0 %v10657
    %11338 = vmatprep.subr.bf16.mxu0 %v10666
    %11339 = vmatpush1.bf16.msra.mxu0 %v10665
    %11340 = vmatprep.mubr.bf16.mxu0 %v8070
    %11341 = vmatmul.mubr.bf16.gmra.mrb[0].mxu0 %v8069
    %v11342 = vpop.f32.mrb[0].mxu0
    %v11343 = vadd.f32 %v11302, %v11342
    %v11344 = vpop.f32.mrb[0].mxu0
    %v11345 = vadd.f32 %v11304, %v11344
    %v11346 = vpop.f32.mrb[0].mxu0
    %v11347 = vpop.f32.mrb[0].mxu0
    %11348 = vdwg.mxu0
    %11349 = vmatprep.subr.bf16.mxu0 %v10164
    %11350 = vmatpush1.bf16.msra.mxu0 %v10163
    %11351 = vmatprep.subr.bf16.mxu0 %v10172
    %11352 = vmatpush1.bf16.msra.mxu0 %v10171
    %11353 = vmatprep.subr.bf16.mxu0 %v10180
    %11354 = vmatpush1.bf16.msra.mxu0 %v10179
    %11355 = vmatprep.subr.bf16.mxu0 %v10188
    %11356 = vmatpush1.bf16.msra.mxu0 %v10187
    %11357 = vmatprep.subr.bf16.mxu0 %v10196
    %11358 = vmatpush1.bf16.msra.mxu0 %v10195
    %11359 = vmatprep.subr.bf16.mxu0 %v10204
    %11360 = vmatpush1.bf16.msra.mxu0 %v10203
    %11361 = vmatprep.subr.bf16.mxu0 %v10212
    %11362 = vmatpush1.bf16.msra.mxu0 %v10211
    %11363 = vmatprep.subr.bf16.mxu0 %v10220
    %11364 = vmatpush1.bf16.msra.mxu0 %v10219
    %11365 = vmatprep.subr.bf16.mxu0 %v10228
    %11366 = vmatpush1.bf16.msra.mxu0 %v10227
    %11367 = vmatprep.subr.bf16.mxu0 %v10236
    %11368 = vmatpush1.bf16.msra.mxu0 %v10235
    %11369 = vmatprep.subr.bf16.mxu0 %v10244
    %11370 = vmatpush1.bf16.msra.mxu0 %v10243
    %11371 = vmatprep.subr.bf16.mxu0 %v10252
    %11372 = vmatpush1.bf16.msra.mxu0 %v10251
    %11373 = vmatprep.subr.bf16.mxu0 %v10260
    %11374 = vmatpush1.bf16.msra.mxu0 %v10259
    %11375 = vmatprep.subr.bf16.mxu0 %v10268
    %11376 = vmatpush1.bf16.msra.mxu0 %v10267
    %11377 = vmatprep.subr.bf16.mxu0 %v10276
    %11378 = vmatpush1.bf16.msra.mxu0 %v10275
    %11379 = vmatprep.subr.bf16.mxu0 %v10284
    %11380 = vmatpush1.bf16.msra.mxu0 %v10283
    %11381 = vmatprep.mubr.bf16.mxu0 %v8064
    %11382 = vmatmul.mubr.bf16.gmra.mrb[0].mxu0 %v8063
    %v11383 = vpop.f32.mrb[0].mxu0
    %v11384 = vadd.f32 %v8596, %v11383
    %v11385 = vpop.f32.mrb[0].mxu0
    %v11386 = vadd.f32 %v8600, %v11385
    %v11387 = vpop.f32.mrb[0].mxu0
    %v11388 = vpop.f32.mrb[0].mxu0
    %11389 = vdwg.mxu0
    %11390 = vmatprep.subr.bf16.mxu0 %v10292
    %11391 = vmatpush1.bf16.msra.mxu0 %v10291
    %11392 = vmatprep.subr.bf16.mxu0 %v10300
    %11393 = vmatpush1.bf16.msra.mxu0 %v10299
    %11394 = vmatprep.subr.bf16.mxu0 %v10308
    %11395 = vmatpush1.bf16.msra.mxu0 %v10307
    %11396 = vmatprep.subr.bf16.mxu0 %v10316
    %11397 = vmatpush1.bf16.msra.mxu0 %v10315
    %11398 = vmatprep.subr.bf16.mxu0 %v10324
    %11399 = vmatpush1.bf16.msra.mxu0 %v10323
    %11400 = vmatprep.subr.bf16.mxu0 %v10332
    %11401 = vmatpush1.bf16.msra.mxu0 %v10331
    %11402 = vmatprep.subr.bf16.mxu0 %v10340
    %11403 = vmatpush1.bf16.msra.mxu0 %v10339
    %11404 = vmatprep.subr.bf16.mxu0 %v10348
    %11405 = vmatpush1.bf16.msra.mxu0 %v10347
    %11406 = vmatprep.subr.bf16.mxu0 %v10356
    %11407 = vmatpush1.bf16.msra.mxu0 %v10355
    %11408 = vmatprep.subr.bf16.mxu0 %v10364
    %11409 = vmatpush1.bf16.msra.mxu0 %v10363
    %11410 = vmatprep.subr.bf16.mxu0 %v10372
    %11411 = vmatpush1.bf16.msra.mxu0 %v10371
    %11412 = vmatprep.subr.bf16.mxu0 %v10380
    %11413 = vmatpush1.bf16.msra.mxu0 %v10379
    %11414 = vmatprep.subr.bf16.mxu0 %v10388
    %11415 = vmatpush1.bf16.msra.mxu0 %v10387
    %11416 = vmatprep.subr.bf16.mxu0 %v10396
    %11417 = vmatpush1.bf16.msra.mxu0 %v10395
    %11418 = vmatprep.subr.bf16.mxu0 %v10404
    %11419 = vmatpush1.bf16.msra.mxu0 %v10403
    %11420 = vmatprep.subr.bf16.mxu0 %v10412
    %11421 = vmatpush1.bf16.msra.mxu0 %v10411
    %11422 = vmatprep.mubr.bf16.mxu0 %v8066
    %11423 = vmatmul.mubr.bf16.gmra.mrb[0].mxu0 %v8065
    %v11424 = vpop.f32.mrb[0].mxu0
    %v11425 = vadd.f32 %v11384, %v11424
    %v11426 = vpop.f32.mrb[0].mxu0
    %v11427 = vadd.f32 %v11386, %v11426
    %v11428 = vpop.f32.mrb[0].mxu0
    %v11429 = vpop.f32.mrb[0].mxu0
    %11430 = vdwg.mxu0
    %11431 = vmatprep.subr.bf16.mxu0 %v10420
    %11432 = vmatpush1.bf16.msra.mxu0 %v10419
    %11433 = vmatprep.subr.bf16.mxu0 %v10428
    %11434 = vmatpush1.bf16.msra.mxu0 %v10427
    %11435 = vmatprep.subr.bf16.mxu0 %v10436
    %11436 = vmatpush1.bf16.msra.mxu0 %v10435
    %11437 = vmatprep.subr.bf16.mxu0 %v10444
    %11438 = vmatpush1.bf16.msra.mxu0 %v10443
    %11439 = vmatprep.subr.bf16.mxu0 %v10452
    %11440 = vmatpush1.bf16.msra.mxu0 %v10451
    %11441 = vmatprep.subr.bf16.mxu0 %v10460
    %11442 = vmatpush1.bf16.msra.mxu0 %v10459
    %11443 = vmatprep.subr.bf16.mxu0 %v10468
    %11444 = vmatpush1.bf16.msra.mxu0 %v10467
    %11445 = vmatprep.subr.bf16.mxu0 %v10476
    %11446 = vmatpush1.bf16.msra.mxu0 %v10475
    %11447 = vmatprep.subr.bf16.mxu0 %v10484
    %11448 = vmatpush1.bf16.msra.mxu0 %v10483
    %11449 = vmatprep.subr.bf16.mxu0 %v10492
    %11450 = vmatpush1.bf16.msra.mxu0 %v10491
    %11451 = vmatprep.subr.bf16.mxu0 %v10500
    %11452 = vmatpush1.bf16.msra.mxu0 %v10499
    %11453 = vmatprep.subr.bf16.mxu0 %v10508
    %11454 = vmatpush1.bf16.msra.mxu0 %v10507
    %11455 = vmatprep.subr.bf16.mxu0 %v10516
    %11456 = vmatpush1.bf16.msra.mxu0 %v10515
    %11457 = vmatprep.subr.bf16.mxu0 %v10524
    %11458 = vmatpush1.bf16.msra.mxu0 %v10523
    %11459 = vmatprep.subr.bf16.mxu0 %v10532
    %11460 = vmatpush1.bf16.msra.mxu0 %v10531
    %11461 = vmatprep.subr.bf16.mxu0 %v10540
    %11462 = vmatpush1.bf16.msra.mxu0 %v10539
    %11463 = vmatprep.mubr.bf16.mxu0 %v8068
    %11464 = vmatmul.mubr.bf16.gmra.mrb[0].mxu0 %v8067
    %v11465 = vpop.f32.mrb[0].mxu0
    %v11466 = vadd.f32 %v11425, %v11465
    %v11467 = vpop.f32.mrb[0].mxu0
    %v11468 = vadd.f32 %v11427, %v11467
    %v11469 = vpop.f32.mrb[0].mxu0
    %v11470 = vpop.f32.mrb[0].mxu0
    %11471 = vdwg.mxu0
    %11472 = vmatprep.subr.bf16.mxu0 %v10548
    %11473 = vmatpush1.bf16.msra.mxu0 %v10547
    %11474 = vmatprep.subr.bf16.mxu0 %v10556
    %11475 = vmatpush1.bf16.msra.mxu0 %v10555
    %11476 = vmatprep.subr.bf16.mxu0 %v10564
    %11477 = vmatpush1.bf16.msra.mxu0 %v10563
    %11478 = vmatprep.subr.bf16.mxu0 %v10572
    %11479 = vmatpush1.bf16.msra.mxu0 %v10571
    %11480 = vmatprep.subr.bf16.mxu0 %v10580
    %11481 = vmatpush1.bf16.msra.mxu0 %v10579
    %11482 = vmatprep.subr.bf16.mxu0 %v10588
    %11483 = vmatpush1.bf16.msra.mxu0 %v10587
    %11484 = vmatprep.subr.bf16.mxu0 %v10596
    %11485 = vmatpush1.bf16.msra.mxu0 %v10595
    %11486 = vmatprep.subr.bf16.mxu0 %v10604
    %11487 = vmatpush1.bf16.msra.mxu0 %v10603
    %11488 = vmatprep.subr.bf16.mxu0 %v10612
    %11489 = vmatpush1.bf16.msra.mxu0 %v10611
    %11490 = vmatprep.subr.bf16.mxu0 %v10620
    %11491 = vmatpush1.bf16.msra.mxu0 %v10619
    %11492 = vmatprep.subr.bf16.mxu0 %v10628
    %11493 = vmatpush1.bf16.msra.mxu0 %v10627
    %11494 = vmatprep.subr.bf16.mxu0 %v10636
    %11495 = vmatpush1.bf16.msra.mxu0 %v10635
    %11496 = vmatprep.subr.bf16.mxu0 %v10644
    %11497 = vmatpush1.bf16.msra.mxu0 %v10643
    %11498 = vmatprep.subr.bf16.mxu0 %v10652
    %11499 = vmatpush1.bf16.msra.mxu0 %v10651
    %11500 = vmatprep.subr.bf16.mxu0 %v10660
    %11501 = vmatpush1.bf16.msra.mxu0 %v10659
    %11502 = vmatprep.subr.bf16.mxu0 %v10668
    %11503 = vmatpush1.bf16.msra.mxu0 %v10667
    %11504 = vmatprep.mubr.bf16.mxu0 %v8070
    %11505 = vmatmul.mubr.bf16.gmra.mrb[0].mxu0 %v8069
    %v11506 = vpop.f32.mrb[0].mxu0
    %v11507 = vadd.f32 %v11466, %v11506
    %v11508 = vpop.f32.mrb[0].mxu0
    %v11509 = vadd.f32 %v11468, %v11508
    %v11510 = vpop.f32.mrb[0].mxu0
    %v11511 = vpop.f32.mrb[0].mxu0
    %11512 = vdwg.mxu0
    %11513 = vmatprep.subr.bf16.mxu0 %v10166
    %11514 = vmatpush1.bf16.msra.mxu0 %v10165
    %11515 = vmatprep.subr.bf16.mxu0 %v10174
    %11516 = vmatpush1.bf16.msra.mxu0 %v10173
    %11517 = vmatprep.subr.bf16.mxu0 %v10182
    %11518 = vmatpush1.bf16.msra.mxu0 %v10181
    %11519 = vmatprep.subr.bf16.mxu0 %v10190
    %11520 = vmatpush1.bf16.msra.mxu0 %v10189
    %11521 = vmatprep.subr.bf16.mxu0 %v10198
    %11522 = vmatpush1.bf16.msra.mxu0 %v10197
    %11523 = vmatprep.subr.bf16.mxu0 %v10206
    %11524 = vmatpush1.bf16.msra.mxu0 %v10205
    %11525 = vmatprep.subr.bf16.mxu0 %v10214
    %11526 = vmatpush1.bf16.msra.mxu0 %v10213
    %11527 = vmatprep.subr.bf16.mxu0 %v10222
    %11528 = vmatpush1.bf16.msra.mxu0 %v10221
    %11529 = vmatprep.subr.bf16.mxu0 %v10230
    %11530 = vmatpush1.bf16.msra.mxu0 %v10229
    %11531 = vmatprep.subr.bf16.mxu0 %v10238
    %11532 = vmatpush1.bf16.msra.mxu0 %v10237
    %11533 = vmatprep.subr.bf16.mxu0 %v10246
    %11534 = vmatpush1.bf16.msra.mxu0 %v10245
    %11535 = vmatprep.subr.bf16.mxu0 %v10254
    %11536 = vmatpush1.bf16.msra.mxu0 %v10253
    %11537 = vmatprep.subr.bf16.mxu0 %v10262
    %11538 = vmatpush1.bf16.msra.mxu0 %v10261
    %11539 = vmatprep.subr.bf16.mxu0 %v10270
    %11540 = vmatpush1.bf16.msra.mxu0 %v10269
    %11541 = vmatprep.subr.bf16.mxu0 %v10278
    %11542 = vmatpush1.bf16.msra.mxu0 %v10277
    %11543 = vmatprep.subr.bf16.mxu0 %v10286
    %11544 = vmatpush1.bf16.msra.mxu0 %v10285
    %11545 = vmatprep.mubr.bf16.mxu0 %v8064
    %11546 = vmatmul.mubr.bf16.gmra.mrb[0].mxu0 %v8063
    %v11547 = vpop.f32.mrb[0].mxu0
    %v11548 = vadd.f32 %v8604, %v11547
    %v11549 = vpop.f32.mrb[0].mxu0
    %v11550 = vadd.f32 %v8608, %v11549
    %v11551 = vpop.f32.mrb[0].mxu0
    %v11552 = vpop.f32.mrb[0].mxu0
    %11553 = vdwg.mxu0
    %11554 = vmatprep.subr.bf16.mxu0 %v10294
    %11555 = vmatpush1.bf16.msra.mxu0 %v10293
    %11556 = vmatprep.subr.bf16.mxu0 %v10302
    %11557 = vmatpush1.bf16.msra.mxu0 %v10301
    %11558 = vmatprep.subr.bf16.mxu0 %v10310
    %11559 = vmatpush1.bf16.msra.mxu0 %v10309
    %11560 = vmatprep.subr.bf16.mxu0 %v10318
    %11561 = vmatpush1.bf16.msra.mxu0 %v10317
    %11562 = vmatprep.subr.bf16.mxu0 %v10326
    %11563 = vmatpush1.bf16.msra.mxu0 %v10325
    %11564 = vmatprep.subr.bf16.mxu0 %v10334
    %11565 = vmatpush1.bf16.msra.mxu0 %v10333
    %11566 = vmatprep.subr.bf16.mxu0 %v10342
    %11567 = vmatpush1.bf16.msra.mxu0 %v10341
    %11568 = vmatprep.subr.bf16.mxu0 %v10350
    %11569 = vmatpush1.bf16.msra.mxu0 %v10349
    %11570 = vmatprep.subr.bf16.mxu0 %v10358
    %11571 = vmatpush1.bf16.msra.mxu0 %v10357
    %11572 = vmatprep.subr.bf16.mxu0 %v10366
    %11573 = vmatpush1.bf16.msra.mxu0 %v10365
    %11574 = vmatprep.subr.bf16.mxu0 %v10374
    %11575 = vmatpush1.bf16.msra.mxu0 %v10373
    %11576 = vmatprep.subr.bf16.mxu0 %v10382
    %11577 = vmatpush1.bf16.msra.mxu0 %v10381
    %11578 = vmatprep.subr.bf16.mxu0 %v10390
    %11579 = vmatpush1.bf16.msra.mxu0 %v10389
    %11580 = vmatprep.subr.bf16.mxu0 %v10398
    %11581 = vmatpush1.bf16.msra.mxu0 %v10397
    %11582 = vmatprep.subr.bf16.mxu0 %v10406
    %11583 = vmatpush1.bf16.msra.mxu0 %v10405
    %11584 = vmatprep.subr.bf16.mxu0 %v10414
    %11585 = vmatpush1.bf16.msra.mxu0 %v10413
    %11586 = vmatprep.mubr.bf16.mxu0 %v8066
    %11587 = vmatmul.mubr.bf16.gmra.mrb[0].mxu0 %v8065
    %v11588 = vpop.f32.mrb[0].mxu0
    %v11589 = vadd.f32 %v11548, %v11588
    %v11590 = vpop.f32.mrb[0].mxu0
    %v11591 = vadd.f32 %v11550, %v11590
    %v11592 = vpop.f32.mrb[0].mxu0
    %v11593 = vpop.f32.mrb[0].mxu0
    %11594 = vdwg.mxu0
    %11595 = vmatprep.subr.bf16.mxu0 %v10422
    %11596 = vmatpush1.bf16.msra.mxu0 %v10421
    %11597 = vmatprep.subr.bf16.mxu0 %v10430
    %11598 = vmatpush1.bf16.msra.mxu0 %v10429
    %11599 = vmatprep.subr.bf16.mxu0 %v10438
    %11600 = vmatpush1.bf16.msra.mxu0 %v10437
    %11601 = vmatprep.subr.bf16.mxu0 %v10446
    %11602 = vmatpush1.bf16.msra.mxu0 %v10445
    %11603 = vmatprep.subr.bf16.mxu0 %v10454
    %11604 = vmatpush1.bf16.msra.mxu0 %v10453
    %11605 = vmatprep.subr.bf16.mxu0 %v10462
    %11606 = vmatpush1.bf16.msra.mxu0 %v10461
    %11607 = vmatprep.subr.bf16.mxu0 %v10470
    %11608 = vmatpush1.bf16.msra.mxu0 %v10469
    %11609 = vmatprep.subr.bf16.mxu0 %v10478
    %11610 = vmatpush1.bf16.msra.mxu0 %v10477
    %11611 = vmatprep.subr.bf16.mxu0 %v10486
    %11612 = vmatpush1.bf16.msra.mxu0 %v10485
    %11613 = vmatprep.subr.bf16.mxu0 %v10494
    %11614 = vmatpush1.bf16.msra.mxu0 %v10493
    %11615 = vmatprep.subr.bf16.mxu0 %v10502
    %11616 = vmatpush1.bf16.msra.mxu0 %v10501
    %11617 = vmatprep.subr.bf16.mxu0 %v10510
    %11618 = vmatpush1.bf16.msra.mxu0 %v10509
    %11619 = vmatprep.subr.bf16.mxu0 %v10518
    %11620 = vmatpush1.bf16.msra.mxu0 %v10517
    %11621 = vmatprep.subr.bf16.mxu0 %v10526
    %11622 = vmatpush1.bf16.msra.mxu0 %v10525
    %11623 = vmatprep.subr.bf16.mxu0 %v10534
    %11624 = vmatpush1.bf16.msra.mxu0 %v10533
    %11625 = vmatprep.subr.bf16.mxu0 %v10542
    %11626 = vmatpush1.bf16.msra.mxu0 %v10541
    %11627 = vmatprep.mubr.bf16.mxu0 %v8068
    %11628 = vmatmul.mubr.bf16.gmra.mrb[0].mxu0 %v8067
    %v11629 = vpop.f32.mrb[0].mxu0
    %v11630 = vadd.f32 %v11589, %v11629
    %v11631 = vpop.f32.mrb[0].mxu0
    %v11632 = vadd.f32 %v11591, %v11631
    %v11633 = vpop.f32.mrb[0].mxu0
    %v11634 = vpop.f32.mrb[0].mxu0
    %11635 = vdwg.mxu0
    %11636 = vmatprep.subr.bf16.mxu0 %v10550
    %11637 = vmatpush1.bf16.msra.mxu0 %v10549
    %11638 = vmatprep.subr.bf16.mxu0 %v10558
    %11639 = vmatpush1.bf16.msra.mxu0 %v10557
    %11640 = vmatprep.subr.bf16.mxu0 %v10566
    %11641 = vmatpush1.bf16.msra.mxu0 %v10565
    %11642 = vmatprep.subr.bf16.mxu0 %v10574
    %11643 = vmatpush1.bf16.msra.mxu0 %v10573
    %11644 = vmatprep.subr.bf16.mxu0 %v10582
    %11645 = vmatpush1.bf16.msra.mxu0 %v10581
    %11646 = vmatprep.subr.bf16.mxu0 %v10590
    %11647 = vmatpush1.bf16.msra.mxu0 %v10589
    %11648 = vmatprep.subr.bf16.mxu0 %v10598
    %11649 = vmatpush1.bf16.msra.mxu0 %v10597
    %11650 = vmatprep.subr.bf16.mxu0 %v10606
    %11651 = vmatpush1.bf16.msra.mxu0 %v10605
    %11652 = vmatprep.subr.bf16.mxu0 %v10614
    %11653 = vmatpush1.bf16.msra.mxu0 %v10613
    %11654 = vmatprep.subr.bf16.mxu0 %v10622
    %11655 = vmatpush1.bf16.msra.mxu0 %v10621
    %11656 = vmatprep.subr.bf16.mxu0 %v10630
    %11657 = vmatpush1.bf16.msra.mxu0 %v10629
    %11658 = vmatprep.subr.bf16.mxu0 %v10638
    %11659 = vmatpush1.bf16.msra.mxu0 %v10637
    %11660 = vmatprep.subr.bf16.mxu0 %v10646
    %11661 = vmatpush1.bf16.msra.mxu0 %v10645
    %11662 = vmatprep.subr.bf16.mxu0 %v10654
    %11663 = vmatpush1.bf16.msra.mxu0 %v10653
    %11664 = vmatprep.subr.bf16.mxu0 %v10662
    %11665 = vmatpush1.bf16.msra.mxu0 %v10661
    %11666 = vmatprep.subr.bf16.mxu0 %v10670
    %11667 = vmatpush1.bf16.msra.mxu0 %v10669
    %11668 = vmatprep.mubr.bf16.mxu0 %v8070
    %11669 = vmatmul.mubr.bf16.gmra.mrb[0].mxu0 %v8069
    %v11670 = vpop.f32.mrb[0].mxu0
    %v11671 = vadd.f32 %v11630, %v11670
    %v11672 = vpop.f32.mrb[0].mxu0
    %v11673 = vadd.f32 %v11632, %v11672
    %v11674 = vpop.f32.mrb[0].mxu0
    %v11675 = vpop.f32.mrb[0].mxu0
    %11676 = vdwg.mxu0
    %11677 = vmatprep.subr.bf16.mxu0 %v10168
    %11678 = vmatpush1.bf16.msra.mxu0 %v10167
    %11679 = vmatprep.subr.bf16.mxu0 %v10176
    %11680 = vmatpush1.bf16.msra.mxu0 %v10175
    %11681 = vmatprep.subr.bf16.mxu0 %v10184
    %11682 = vmatpush1.bf16.msra.mxu0 %v10183
    %11683 = vmatprep.subr.bf16.mxu0 %v10192
    %11684 = vmatpush1.bf16.msra.mxu0 %v10191
    %11685 = vmatprep.subr.bf16.mxu0 %v10200
    %11686 = vmatpush1.bf16.msra.mxu0 %v10199
    %11687 = vmatprep.subr.bf16.mxu0 %v10208
    %11688 = vmatpush1.bf16.msra.mxu0 %v10207
    %11689 = vmatprep.subr.bf16.mxu0 %v10216
    %11690 = vmatpush1.bf16.msra.mxu0 %v10215
    %11691 = vmatprep.subr.bf16.mxu0 %v10224
    %11692 = vmatpush1.bf16.msra.mxu0 %v10223
    %11693 = vmatprep.subr.bf16.mxu0 %v10232
    %11694 = vmatpush1.bf16.msra.mxu0 %v10231
    %11695 = vmatprep.subr.bf16.mxu0 %v10240
    %11696 = vmatpush1.bf16.msra.mxu0 %v10239
    %11697 = vmatprep.subr.bf16.mxu0 %v10248
    %11698 = vmatpush1.bf16.msra.mxu0 %v10247
    %11699 = vmatprep.subr.bf16.mxu0 %v10256
    %11700 = vmatpush1.bf16.msra.mxu0 %v10255
    %11701 = vmatprep.subr.bf16.mxu0 %v10264
    %11702 = vmatpush1.bf16.msra.mxu0 %v10263
    %11703 = vmatprep.subr.bf16.mxu0 %v10272
    %11704 = vmatpush1.bf16.msra.mxu0 %v10271
    %11705 = vmatprep.subr.bf16.mxu0 %v10280
    %11706 = vmatpush1.bf16.msra.mxu0 %v10279
    %11707 = vmatprep.subr.bf16.mxu0 %v10288
    %11708 = vmatpush1.bf16.msra.mxu0 %v10287
    %11709 = vmatprep.mubr.bf16.mxu0 %v8064
    %11710 = vmatmul.mubr.bf16.gmra.mrb[0].mxu0 %v8063
    %v11711 = vpop.f32.mrb[0].mxu0
    %v11712 = vadd.f32 %v8612, %v11711
    %v11713 = vpop.f32.mrb[0].mxu0
    %v11714 = vadd.f32 %v8616, %v11713
    %v11715 = vpop.f32.mrb[0].mxu0
    %v11716 = vpop.f32.mrb[0].mxu0
    %11717 = vdwg.mxu0
    %11718 = vmatprep.subr.bf16.mxu0 %v10296
    %11719 = vmatpush1.bf16.msra.mxu0 %v10295
    %11720 = vmatprep.subr.bf16.mxu0 %v10304
    %11721 = vmatpush1.bf16.msra.mxu0 %v10303
    %11722 = vmatprep.subr.bf16.mxu0 %v10312
    %11723 = vmatpush1.bf16.msra.mxu0 %v10311
    %11724 = vmatprep.subr.bf16.mxu0 %v10320
    %11725 = vmatpush1.bf16.msra.mxu0 %v10319
    %11726 = vmatprep.subr.bf16.mxu0 %v10328
    %11727 = vmatpush1.bf16.msra.mxu0 %v10327
    %11728 = vmatprep.subr.bf16.mxu0 %v10336
    %11729 = vmatpush1.bf16.msra.mxu0 %v10335
    %11730 = vmatprep.subr.bf16.mxu0 %v10344
    %11731 = vmatpush1.bf16.msra.mxu0 %v10343
    %11732 = vmatprep.subr.bf16.mxu0 %v10352
    %11733 = vmatpush1.bf16.msra.mxu0 %v10351
    %11734 = vmatprep.subr.bf16.mxu0 %v10360
    %11735 = vmatpush1.bf16.msra.mxu0 %v10359
    %11736 = vmatprep.subr.bf16.mxu0 %v10368
    %11737 = vmatpush1.bf16.msra.mxu0 %v10367
    %11738 = vmatprep.subr.bf16.mxu0 %v10376
    %11739 = vmatpush1.bf16.msra.mxu0 %v10375
    %11740 = vmatprep.subr.bf16.mxu0 %v10384
    %11741 = vmatpush1.bf16.msra.mxu0 %v10383
    %11742 = vmatprep.subr.bf16.mxu0 %v10392
    %11743 = vmatpush1.bf16.msra.mxu0 %v10391
    %11744 = vmatprep.subr.bf16.mxu0 %v10400
    %11745 = vmatpush1.bf16.msra.mxu0 %v10399
    %11746 = vmatprep.subr.bf16.mxu0 %v10408
    %11747 = vmatpush1.bf16.msra.mxu0 %v10407
    %11748 = vmatprep.subr.bf16.mxu0 %v10416
    %11749 = vmatpush1.bf16.msra.mxu0 %v10415
    %11750 = vmatprep.mubr.bf16.mxu0 %v8066
    %11751 = vmatmul.mubr.bf16.gmra.mrb[0].mxu0 %v8065
    %v11752 = vpop.f32.mrb[0].mxu0
    %v11753 = vadd.f32 %v11712, %v11752
    %v11754 = vpop.f32.mrb[0].mxu0
    %v11755 = vadd.f32 %v11714, %v11754
    %v11756 = vpop.f32.mrb[0].mxu0
    %v11757 = vpop.f32.mrb[0].mxu0
    %11758 = vdwg.mxu0
    %11759 = vmatprep.subr.bf16.mxu0 %v10424
    %11760 = vmatpush1.bf16.msra.mxu0 %v10423
    %11761 = vmatprep.subr.bf16.mxu0 %v10432
    %11762 = vmatpush1.bf16.msra.mxu0 %v10431
    %11763 = vmatprep.subr.bf16.mxu0 %v10440
    %11764 = vmatpush1.bf16.msra.mxu0 %v10439
    %11765 = vmatprep.subr.bf16.mxu0 %v10448
    %11766 = vmatpush1.bf16.msra.mxu0 %v10447
    %11767 = vmatprep.subr.bf16.mxu0 %v10456
    %11768 = vmatpush1.bf16.msra.mxu0 %v10455
    %11769 = vmatprep.subr.bf16.mxu0 %v10464
    %11770 = vmatpush1.bf16.msra.mxu0 %v10463
    %11771 = vmatprep.subr.bf16.mxu0 %v10472
    %11772 = vmatpush1.bf16.msra.mxu0 %v10471
    %11773 = vmatprep.subr.bf16.mxu0 %v10480
    %11774 = vmatpush1.bf16.msra.mxu0 %v10479
    %11775 = vmatprep.subr.bf16.mxu0 %v10488
    %11776 = vmatpush1.bf16.msra.mxu0 %v10487
    %11777 = vmatprep.subr.bf16.mxu0 %v10496
    %11778 = vmatpush1.bf16.msra.mxu0 %v10495
    %11779 = vmatprep.subr.bf16.mxu0 %v10504
    %11780 = vmatpush1.bf16.msra.mxu0 %v10503
    %11781 = vmatprep.subr.bf16.mxu0 %v10512
    %11782 = vmatpush1.bf16.msra.mxu0 %v10511
    %11783 = vmatprep.subr.bf16.mxu0 %v10520
    %11784 = vmatpush1.bf16.msra.mxu0 %v10519
    %11785 = vmatprep.subr.bf16.mxu0 %v10528
    %11786 = vmatpush1.bf16.msra.mxu0 %v10527
    %11787 = vmatprep.subr.bf16.mxu0 %v10536
    %11788 = vmatpush1.bf16.msra.mxu0 %v10535
    %11789 = vmatprep.subr.bf16.mxu0 %v10544
    %11790 = vmatpush1.bf16.msra.mxu0 %v10543
    %11791 = vmatprep.mubr.bf16.mxu0 %v8068
    %11792 = vmatmul.mubr.bf16.gmra.mrb[0].mxu0 %v8067
    %v11793 = vpop.f32.mrb[0].mxu0
    %v11794 = vadd.f32 %v11753, %v11793
    %v11795 = vpop.f32.mrb[0].mxu0
    %v11796 = vadd.f32 %v11755, %v11795
    %v11797 = vpop.f32.mrb[0].mxu0
    %v11798 = vpop.f32.mrb[0].mxu0
    %11799 = vdwg.mxu0
    %11800 = vmatprep.subr.bf16.mxu0 %v10552
    %11801 = vmatpush1.bf16.msra.mxu0 %v10551
    %11802 = vmatprep.subr.bf16.mxu0 %v10560
    %11803 = vmatpush1.bf16.msra.mxu0 %v10559
    %11804 = vmatprep.subr.bf16.mxu0 %v10568
    %11805 = vmatpush1.bf16.msra.mxu0 %v10567
    %11806 = vmatprep.subr.bf16.mxu0 %v10576
    %11807 = vmatpush1.bf16.msra.mxu0 %v10575
    %11808 = vmatprep.subr.bf16.mxu0 %v10584
    %11809 = vmatpush1.bf16.msra.mxu0 %v10583
    %11810 = vmatprep.subr.bf16.mxu0 %v10592
    %11811 = vmatpush1.bf16.msra.mxu0 %v10591
    %11812 = vmatprep.subr.bf16.mxu0 %v10600
    %11813 = vmatpush1.bf16.msra.mxu0 %v10599
    %11814 = vmatprep.subr.bf16.mxu0 %v10608
    %11815 = vmatpush1.bf16.msra.mxu0 %v10607
    %11816 = vmatprep.subr.bf16.mxu0 %v10616
    %11817 = vmatpush1.bf16.msra.mxu0 %v10615
    %11818 = vmatprep.subr.bf16.mxu0 %v10624
    %11819 = vmatpush1.bf16.msra.mxu0 %v10623
    %11820 = vmatprep.subr.bf16.mxu0 %v10632
    %11821 = vmatpush1.bf16.msra.mxu0 %v10631
    %11822 = vmatprep.subr.bf16.mxu0 %v10640
    %11823 = vmatpush1.bf16.msra.mxu0 %v10639
    %11824 = vmatprep.subr.bf16.mxu0 %v10648
    %11825 = vmatpush1.bf16.msra.mxu0 %v10647
    %11826 = vmatprep.subr.bf16.mxu0 %v10656
    %11827 = vmatpush1.bf16.msra.mxu0 %v10655
    %11828 = vmatprep.subr.bf16.mxu0 %v10664
    %11829 = vmatpush1.bf16.msra.mxu0 %v10663
    %11830 = vmatprep.subr.bf16.mxu0 %v10672
    %11831 = vmatpush1.bf16.msra.mxu0 %v10671
    %11832 = vmatprep.mubr.bf16.mxu0 %v8070
    %11833 = vmatmul.mubr.bf16.gmra.mrb[0].mxu0 %v8069
    %v11834 = vpop.f32.mrb[0].mxu0
    %v11835 = vadd.f32 %v11794, %v11834
    %v11836 = vpop.f32.mrb[0].mxu0
    %v11837 = vadd.f32 %v11796, %v11836
    %v11838 = vpop.f32.mrb[0].mxu0
    %v11839 = vpop.f32.mrb[0].mxu0
    %11840 = vdwg.mxu0
    %v11841 = vmul.f32 %v11343, 0.1
    %v11842 = vmul.f32 %v11345, 0.1
    %v11843 = vmul.f32 %v11507, 0.1
    %v11844 = vmul.f32 %v11509, 0.1
    %v11845 = vmul.f32 %v11671, 0.1
    %v11846 = vmul.f32 %v11673, 0.1
    %v11847 = vmul.f32 %v11835, 0.1
    %v11848 = vmul.f32 %v11837, 0.1
    %v11849 = vmax.f32 %v11343, %v11841
    %v11850 = vmax.f32 %v11345, %v11842
    %v11851 = vmax.f32 %v11507, %v11843
    %v11852 = vmax.f32 %v11509, %v11844
    %v11853 = vmax.f32 %v11671, %v11845
    %v11854 = vmax.f32 %v11673, %v11846
    %v11855 = vmax.f32 %v11835, %v11847
    %v11856 = vmax.f32 %v11837, %v11848
    %v11857 = vpack.c.bf16 %v11849, %v11849
    %v11858 = vpack.c.bf16 %v11850, %v11850
    %v11859 = vpack.c.bf16 %v11851, %v11851
    %v11860 = vpack.c.bf16 %v11852, %v11852
    %v11861 = vpack.c.bf16 %v11853, %v11853
    %v11862 = vpack.c.bf16 %v11854, %v11854
    %v11863 = vpack.c.bf16 %v11855, %v11855
    %v11864 = vpack.c.bf16 %v11856, %v11856
    %v11865 = vld [vmem:[%s9] sm:$0xf]
    %v11866 = vld [vmem:[%s9 + $0x4] sm:$0xf]
    %v11867 = vld [vmem:[%s9 + $0x8] sm:$0xf]
    %v11868 = vld [vmem:[%s9 + $0xc] sm:$0xf]
    %v11869 = vld [vmem:[%s9 + $0x10] sm:$0xf]
    %v11870 = vld [vmem:[%s9 + $0x14] sm:$0xf]
    %v11871 = vld [vmem:[%s9 + $0x18] sm:$0xf]
    %v11872 = vld [vmem:[%s9 + $0x1c] sm:$0xf]
    %v11873 = vld [vmem:[%s9 + $0x20] sm:$0xf]
    %v11874 = vld [vmem:[%s9 + $0x24] sm:$0xf]
    %v11875 = vld [vmem:[%s9 + $0x28] sm:$0xf]
    %v11876 = vld [vmem:[%s9 + $0x2c] sm:$0xf]
    %v11877 = vld [vmem:[%s9 + $0x30] sm:$0xf]
    %v11878 = vld [vmem:[%s9 + $0x34] sm:$0xf]
    %v11879 = vld [vmem:[%s9 + $0x38] sm:$0xf]
    %v11880 = vld [vmem:[%s9 + $0x3c] sm:$0xf]
    %v11881 = vld [vmem:[%s9 + $0x40] sm:$0xf]
    %v11882 = vld [vmem:[%s9 + $0x44] sm:$0xf]
    %v11883 = vld [vmem:[%s9 + $0x48] sm:$0xf]
    %v11884 = vld [vmem:[%s9 + $0x4c] sm:$0xf]
    %v11885 = vld [vmem:[%s9 + $0x50] sm:$0xf]
    %v11886 = vld [vmem:[%s9 + $0x54] sm:$0xf]
    %v11887 = vld [vmem:[%s9 + $0x58] sm:$0xf]
    %v11888 = vld [vmem:[%s9 + $0x5c] sm:$0xf]
    %v11889 = vld [vmem:[%s9 + $0x60] sm:$0xf]
    %v11890 = vld [vmem:[%s9 + $0x64] sm:$0xf]
    %v11891 = vld [vmem:[%s9 + $0x68] sm:$0xf]
    %v11892 = vld [vmem:[%s9 + $0x6c] sm:$0xf]
    %v11893 = vld [vmem:[%s9 + $0x70] sm:$0xf]
    %v11894 = vld [vmem:[%s9 + $0x74] sm:$0xf]
    %v11895 = vld [vmem:[%s9 + $0x78] sm:$0xf]
    %v11896 = vld [vmem:[%s9 + $0x7c] sm:$0xf]
    %v11897 = vld [vmem:[%s9 + $0x80] sm:$0xf]
    %v11898 = vld [vmem:[%s9 + $0x84] sm:$0xf]
    %v11899 = vld [vmem:[%s9 + $0x88] sm:$0xf]
    %v11900 = vld [vmem:[%s9 + $0x8c] sm:$0xf]
    %v11901 = vld [vmem:[%s9 + $0x90] sm:$0xf]
    %v11902 = vld [vmem:[%s9 + $0x94] sm:$0xf]
    %v11903 = vld [vmem:[%s9 + $0x98] sm:$0xf]
    %v11904 = vld [vmem:[%s9 + $0x9c] sm:$0xf]
    %v11905 = vld [vmem:[%s9 + $0xa0] sm:$0xf]
    %v11906 = vld [vmem:[%s9 + $0xa4] sm:$0xf]
    %v11907 = vld [vmem:[%s9 + $0xa8] sm:$0xf]
    %v11908 = vld [vmem:[%s9 + $0xac] sm:$0xf]
    %v11909 = vld [vmem:[%s9 + $0xb0] sm:$0xf]
    %v11910 = vld [vmem:[%s9 + $0xb4] sm:$0xf]
    %v11911 = vld [vmem:[%s9 + $0xb8] sm:$0xf]
    %v11912 = vld [vmem:[%s9 + $0xbc] sm:$0xf]
    %v11913 = vld [vmem:[%s9 + $0xc0] sm:$0xf]
    %v11914 = vld [vmem:[%s9 + $0xc4] sm:$0xf]
    %v11915 = vld [vmem:[%s9 + $0xc8] sm:$0xf]
    %v11916 = vld [vmem:[%s9 + $0xcc] sm:$0xf]
    %v11917 = vld [vmem:[%s9 + $0xd0] sm:$0xf]
    %v11918 = vld [vmem:[%s9 + $0xd4] sm:$0xf]
    %v11919 = vld [vmem:[%s9 + $0xd8] sm:$0xf]
    %v11920 = vld [vmem:[%s9 + $0xdc] sm:$0xf]
    %v11921 = vld [vmem:[%s9 + $0xe0] sm:$0xf]
    %v11922 = vld [vmem:[%s9 + $0xe4] sm:$0xf]
    %v11923 = vld [vmem:[%s9 + $0xe8] sm:$0xf]
    %v11924 = vld [vmem:[%s9 + $0xec] sm:$0xf]
    %v11925 = vld [vmem:[%s9 + $0xf0] sm:$0xf]
    %v11926 = vld [vmem:[%s9 + $0xf4] sm:$0xf]
    %v11927 = vld [vmem:[%s9 + $0xf8] sm:$0xf]
    %v11928 = vld [vmem:[%s9 + $0xfc] sm:$0xf]
    %v11929 = vld [vmem:[%s9 + $0x100] sm:$0xf]
    %v11930 = vld [vmem:[%s9 + $0x104] sm:$0xf]
    %v11931 = vld [vmem:[%s9 + $0x108] sm:$0xf]
    %v11932 = vld [vmem:[%s9 + $0x10c] sm:$0xf]
    %v11933 = vld [vmem:[%s9 + $0x110] sm:$0xf]
    %v11934 = vld [vmem:[%s9 + $0x114] sm:$0xf]
    %v11935 = vld [vmem:[%s9 + $0x118] sm:$0xf]
    %v11936 = vld [vmem:[%s9 + $0x11c] sm:$0xf]
    %v11937 = vld [vmem:[%s9 + $0x120] sm:$0xf]
    %v11938 = vld [vmem:[%s9 + $0x124] sm:$0xf]
    %v11939 = vld [vmem:[%s9 + $0x128] sm:$0xf]
    %v11940 = vld [vmem:[%s9 + $0x12c] sm:$0xf]
    %v11941 = vld [vmem:[%s9 + $0x130] sm:$0xf]
    %v11942 = vld [vmem:[%s9 + $0x134] sm:$0xf]
    %v11943 = vld [vmem:[%s9 + $0x138] sm:$0xf]
    %v11944 = vld [vmem:[%s9 + $0x13c] sm:$0xf]
    %v11945 = vld [vmem:[%s9 + $0x140] sm:$0xf]
    %v11946 = vld [vmem:[%s9 + $0x144] sm:$0xf]
    %v11947 = vld [vmem:[%s9 + $0x148] sm:$0xf]
    %v11948 = vld [vmem:[%s9 + $0x14c] sm:$0xf]
    %v11949 = vld [vmem:[%s9 + $0x150] sm:$0xf]
    %v11950 = vld [vmem:[%s9 + $0x154] sm:$0xf]
    %v11951 = vld [vmem:[%s9 + $0x158] sm:$0xf]
    %v11952 = vld [vmem:[%s9 + $0x15c] sm:$0xf]
    %v11953 = vld [vmem:[%s9 + $0x160] sm:$0xf]
    %v11954 = vld [vmem:[%s9 + $0x164] sm:$0xf]
    %v11955 = vld [vmem:[%s9 + $0x168] sm:$0xf]
    %v11956 = vld [vmem:[%s9 + $0x16c] sm:$0xf]
    %v11957 = vld [vmem:[%s9 + $0x170] sm:$0xf]
    %v11958 = vld [vmem:[%s9 + $0x174] sm:$0xf]
    %v11959 = vld [vmem:[%s9 + $0x178] sm:$0xf]
    %v11960 = vld [vmem:[%s9 + $0x17c] sm:$0xf]
    %v11961 = vld [vmem:[%s9 + $0x180] sm:$0xf]
    %v11962 = vld [vmem:[%s9 + $0x184] sm:$0xf]
    %v11963 = vld [vmem:[%s9 + $0x188] sm:$0xf]
    %v11964 = vld [vmem:[%s9 + $0x18c] sm:$0xf]
    %v11965 = vld [vmem:[%s9 + $0x190] sm:$0xf]
    %v11966 = vld [vmem:[%s9 + $0x194] sm:$0xf]
    %v11967 = vld [vmem:[%s9 + $0x198] sm:$0xf]
    %v11968 = vld [vmem:[%s9 + $0x19c] sm:$0xf]
    %v11969 = vld [vmem:[%s9 + $0x1a0] sm:$0xf]
    %v11970 = vld [vmem:[%s9 + $0x1a4] sm:$0xf]
    %v11971 = vld [vmem:[%s9 + $0x1a8] sm:$0xf]
    %v11972 = vld [vmem:[%s9 + $0x1ac] sm:$0xf]
    %v11973 = vld [vmem:[%s9 + $0x1b0] sm:$0xf]
    %v11974 = vld [vmem:[%s9 + $0x1b4] sm:$0xf]
    %v11975 = vld [vmem:[%s9 + $0x1b8] sm:$0xf]
    %v11976 = vld [vmem:[%s9 + $0x1bc] sm:$0xf]
    %v11977 = vld [vmem:[%s9 + $0x1c0] sm:$0xf]
    %v11978 = vld [vmem:[%s9 + $0x1c4] sm:$0xf]
    %v11979 = vld [vmem:[%s9 + $0x1c8] sm:$0xf]
    %v11980 = vld [vmem:[%s9 + $0x1cc] sm:$0xf]
    %v11981 = vld [vmem:[%s9 + $0x1d0] sm:$0xf]
    %v11982 = vld [vmem:[%s9 + $0x1d4] sm:$0xf]
    %v11983 = vld [vmem:[%s9 + $0x1d8] sm:$0xf]
    %v11984 = vld [vmem:[%s9 + $0x1dc] sm:$0xf]
    %v11985 = vld [vmem:[%s9 + $0x1e0] sm:$0xf]
    %v11986 = vld [vmem:[%s9 + $0x1e4] sm:$0xf]
    %v11987 = vld [vmem:[%s9 + $0x1e8] sm:$0xf]
    %v11988 = vld [vmem:[%s9 + $0x1ec] sm:$0xf]
    %v11989 = vld [vmem:[%s9 + $0x1f0] sm:$0xf]
    %v11990 = vld [vmem:[%s9 + $0x1f4] sm:$0xf]
    %v11991 = vld [vmem:[%s9 + $0x1f8] sm:$0xf]
    %v11992 = vld [vmem:[%s9 + $0x1fc] sm:$0xf]
    %v11993 = vld [vmem:[%s10] sm:$0x1]
    %v11995 = vlaneseq
    %v11996 = vshrl.u32 %v11995, 7
    %v11997 = vsub.s32 0, %v11996
    %v11998 = vrot.slane %v11993, %v11997
    %v12128 = vunpack.c.l.b16 %v11865
    %v12129 = vunpack.c.l.b16 %v11866
    %v12130 = vunpack.c.l.b16 %v11867
    %v12131 = vunpack.c.l.b16 %v11868
    %v12132 = vunpack.c.l.b16 %v11869
    %v12133 = vunpack.c.l.b16 %v11870
    %v12134 = vunpack.c.l.b16 %v11871
    %v12135 = vunpack.c.l.b16 %v11872
    %v12136 = vunpack.c.l.b16 %v11873
    %v12137 = vunpack.c.l.b16 %v11874
    %v12138 = vunpack.c.l.b16 %v11875
    %v12139 = vunpack.c.l.b16 %v11876
    %v12140 = vunpack.c.l.b16 %v11877
    %v12141 = vunpack.c.l.b16 %v11878
    %v12142 = vunpack.c.l.b16 %v11879
    %v12143 = vunpack.c.l.b16 %v11880
    %v12144 = vunpack.c.l.b16 %v11881
    %v12145 = vunpack.c.l.b16 %v11882
    %v12146 = vunpack.c.l.b16 %v11883
    %v12147 = vunpack.c.l.b16 %v11884
    %v12148 = vunpack.c.l.b16 %v11885
    %v12149 = vunpack.c.l.b16 %v11886
    %v12150 = vunpack.c.l.b16 %v11887
    %v12151 = vunpack.c.l.b16 %v11888
    %v12152 = vunpack.c.l.b16 %v11889
    %v12153 = vunpack.c.l.b16 %v11890
    %v12154 = vunpack.c.l.b16 %v11891
    %v12155 = vunpack.c.l.b16 %v11892
    %v12156 = vunpack.c.l.b16 %v11893
    %v12157 = vunpack.c.l.b16 %v11894
    %v12158 = vunpack.c.l.b16 %v11895
    %v12159 = vunpack.c.l.b16 %v11896
    %v12160 = vunpack.c.l.b16 %v11897
    %v12161 = vunpack.c.l.b16 %v11898
    %v12162 = vunpack.c.l.b16 %v11899
    %v12163 = vunpack.c.l.b16 %v11900
    %v12164 = vunpack.c.l.b16 %v11901
    %v12165 = vunpack.c.l.b16 %v11902
    %v12166 = vunpack.c.l.b16 %v11903
    %v12167 = vunpack.c.l.b16 %v11904
    %v12168 = vunpack.c.l.b16 %v11905
    %v12169 = vunpack.c.l.b16 %v11906
    %v12170 = vunpack.c.l.b16 %v11907
    %v12171 = vunpack.c.l.b16 %v11908
    %v12172 = vunpack.c.l.b16 %v11909
    %v12173 = vunpack.c.l.b16 %v11910
    %v12174 = vunpack.c.l.b16 %v11911
    %v12175 = vunpack.c.l.b16 %v11912
    %v12176 = vunpack.c.l.b16 %v11913
    %v12177 = vunpack.c.l.b16 %v11914
    %v12178 = vunpack.c.l.b16 %v11915
    %v12179 = vunpack.c.l.b16 %v11916
    %v12180 = vunpack.c.l.b16 %v11917
    %v12181 = vunpack.c.l.b16 %v11918
    %v12182 = vunpack.c.l.b16 %v11919
    %v12183 = vunpack.c.l.b16 %v11920
    %v12184 = vunpack.c.l.b16 %v11921
    %v12185 = vunpack.c.l.b16 %v11922
    %v12186 = vunpack.c.l.b16 %v11923
    %v12187 = vunpack.c.l.b16 %v11924
    %v12188 = vunpack.c.l.b16 %v11925
    %v12189 = vunpack.c.l.b16 %v11926
    %v12190 = vunpack.c.l.b16 %v11927
    %v12191 = vunpack.c.l.b16 %v11928
    %v12192 = vunpack.c.l.b16 %v11929
    %v12193 = vunpack.c.l.b16 %v11930
    %v12194 = vunpack.c.l.b16 %v11931
    %v12195 = vunpack.c.l.b16 %v11932
    %v12196 = vunpack.c.l.b16 %v11933
    %v12197 = vunpack.c.l.b16 %v11934
    %v12198 = vunpack.c.l.b16 %v11935
    %v12199 = vunpack.c.l.b16 %v11936
    %v12200 = vunpack.c.l.b16 %v11937
    %v12201 = vunpack.c.l.b16 %v11938
    %v12202 = vunpack.c.l.b16 %v11939
    %v12203 = vunpack.c.l.b16 %v11940
    %v12204 = vunpack.c.l.b16 %v11941
    %v12205 = vunpack.c.l.b16 %v11942
    %v12206 = vunpack.c.l.b16 %v11943
    %v12207 = vunpack.c.l.b16 %v11944
    %v12208 = vunpack.c.l.b16 %v11945
    %v12209 = vunpack.c.l.b16 %v11946
    %v12210 = vunpack.c.l.b16 %v11947
    %v12211 = vunpack.c.l.b16 %v11948
    %v12212 = vunpack.c.l.b16 %v11949
    %v12213 = vunpack.c.l.b16 %v11950
    %v12214 = vunpack.c.l.b16 %v11951
    %v12215 = vunpack.c.l.b16 %v11952
    %v12216 = vunpack.c.l.b16 %v11953
    %v12217 = vunpack.c.l.b16 %v11954
    %v12218 = vunpack.c.l.b16 %v11955
    %v12219 = vunpack.c.l.b16 %v11956
    %v12220 = vunpack.c.l.b16 %v11957
    %v12221 = vunpack.c.l.b16 %v11958
    %v12222 = vunpack.c.l.b16 %v11959
    %v12223 = vunpack.c.l.b16 %v11960
    %v12224 = vunpack.c.l.b16 %v11961
    %v12225 = vunpack.c.l.b16 %v11962
    %v12226 = vunpack.c.l.b16 %v11963
    %v12227 = vunpack.c.l.b16 %v11964
    %v12228 = vunpack.c.l.b16 %v11965
    %v12229 = vunpack.c.l.b16 %v11966
    %v12230 = vunpack.c.l.b16 %v11967
    %v12231 = vunpack.c.l.b16 %v11968
    %v12232 = vunpack.c.l.b16 %v11969
    %v12233 = vunpack.c.l.b16 %v11970
    %v12234 = vunpack.c.l.b16 %v11971
    %v12235 = vunpack.c.l.b16 %v11972
    %v12236 = vunpack.c.l.b16 %v11973
    %v12237 = vunpack.c.l.b16 %v11974
    %v12238 = vunpack.c.l.b16 %v11975
    %v12239 = vunpack.c.l.b16 %v11976
    %v12240 = vunpack.c.l.b16 %v11977
    %v12241 = vunpack.c.l.b16 %v11978
    %v12242 = vunpack.c.l.b16 %v11979
    %v12243 = vunpack.c.l.b16 %v11980
    %v12244 = vunpack.c.l.b16 %v11981
    %v12245 = vunpack.c.l.b16 %v11982
    %v12246 = vunpack.c.l.b16 %v11983
    %v12247 = vunpack.c.l.b16 %v11984
    %v12248 = vunpack.c.l.b16 %v11985
    %v12249 = vunpack.c.l.b16 %v11986
    %v12250 = vunpack.c.l.b16 %v11987
    %v12251 = vunpack.c.l.b16 %v11988
    %v12252 = vunpack.c.l.b16 %v11989
    %v12253 = vunpack.c.l.b16 %v11990
    %v12254 = vunpack.c.l.b16 %v11991
    %v12255 = vunpack.c.l.b16 %v11992
    %v12256 = vpack.c.b16 %v12129, %v12128
    %v12257 = vpack.c.b16 %v12131, %v12130
    %v12258 = vpack.c.b16 %v12133, %v12132
    %v12259 = vpack.c.b16 %v12135, %v12134
    %v12260 = vpack.c.b16 %v12137, %v12136
    %v12261 = vpack.c.b16 %v12139, %v12138
    %v12262 = vpack.c.b16 %v12141, %v12140
    %v12263 = vpack.c.b16 %v12143, %v12142
    %v12264 = vpack.c.b16 %v12145, %v12144
    %v12265 = vpack.c.b16 %v12147, %v12146
    %v12266 = vpack.c.b16 %v12149, %v12148
    %v12267 = vpack.c.b16 %v12151, %v12150
    %v12268 = vpack.c.b16 %v12153, %v12152
    %v12269 = vpack.c.b16 %v12155, %v12154
    %v12270 = vpack.c.b16 %v12157, %v12156
    %v12271 = vpack.c.b16 %v12159, %v12158
    %v12272 = vpack.c.b16 %v12161, %v12160
    %v12273 = vpack.c.b16 %v12163, %v12162
    %v12274 = vpack.c.b16 %v12165, %v12164
    %v12275 = vpack.c.b16 %v12167, %v12166
    %v12276 = vpack.c.b16 %v12169, %v12168
    %v12277 = vpack.c.b16 %v12171, %v12170
    %v12278 = vpack.c.b16 %v12173, %v12172
    %v12279 = vpack.c.b16 %v12175, %v12174
    %v12280 = vpack.c.b16 %v12177, %v12176
    %v12281 = vpack.c.b16 %v12179, %v12178
    %v12282 = vpack.c.b16 %v12181, %v12180
    %v12283 = vpack.c.b16 %v12183, %v12182
    %v12284 = vpack.c.b16 %v12185, %v12184
    %v12285 = vpack.c.b16 %v12187, %v12186
    %v12286 = vpack.c.b16 %v12189, %v12188
    %v12287 = vpack.c.b16 %v12191, %v12190
    %v12288 = vpack.c.b16 %v12193, %v12192
    %v12289 = vpack.c.b16 %v12195, %v12194
    %v12290 = vpack.c.b16 %v12197, %v12196
    %v12291 = vpack.c.b16 %v12199, %v12198
    %v12292 = vpack.c.b16 %v12201, %v12200
    %v12293 = vpack.c.b16 %v12203, %v12202
    %v12294 = vpack.c.b16 %v12205, %v12204
    %v12295 = vpack.c.b16 %v12207, %v12206
    %v12296 = vpack.c.b16 %v12209, %v12208
    %v12297 = vpack.c.b16 %v12211, %v12210
    %v12298 = vpack.c.b16 %v12213, %v12212
    %v12299 = vpack.c.b16 %v12215, %v12214
    %v12300 = vpack.c.b16 %v12217, %v12216
    %v12301 = vpack.c.b16 %v12219, %v12218
    %v12302 = vpack.c.b16 %v12221, %v12220
    %v12303 = vpack.c.b16 %v12223, %v12222
    %v12304 = vpack.c.b16 %v12225, %v12224
    %v12305 = vpack.c.b16 %v12227, %v12226
    %v12306 = vpack.c.b16 %v12229, %v12228
    %v12307 = vpack.c.b16 %v12231, %v12230
    %v12308 = vpack.c.b16 %v12233, %v12232
    %v12309 = vpack.c.b16 %v12235, %v12234
    %v12310 = vpack.c.b16 %v12237, %v12236
    %v12311 = vpack.c.b16 %v12239, %v12238
    %v12312 = vpack.c.b16 %v12241, %v12240
    %v12313 = vpack.c.b16 %v12243, %v12242
    %v12314 = vpack.c.b16 %v12245, %v12244
    %v12315 = vpack.c.b16 %v12247, %v12246
    %v12316 = vpack.c.b16 %v12249, %v12248
    %v12317 = vpack.c.b16 %v12251, %v12250
    %v12318 = vpack.c.b16 %v12253, %v12252
    %v12319 = vpack.c.b16 %v12255, %v12254
    %12384 = vmatprep.subr.bf16.mxu0 0
    %12385 = vmatpush1.bf16.msra.mxu0 %v12256
    %12386 = vmatprep.subr.bf16.mxu0 0
    %12387 = vmatpush1.bf16.msra.mxu0 %v12257
    %12388 = vmatprep.subr.bf16.mxu0 0
    %12389 = vmatpush1.bf16.msra.mxu0 %v12258
    %12390 = vmatprep.subr.bf16.mxu0 0
    %12391 = vmatpush1.bf16.msra.mxu0 %v12259
    %12392 = vmatprep.subr.bf16.mxu0 0
    %12393 = vmatpush1.bf16.msra.mxu0 %v12260
    %12394 = vmatprep.subr.bf16.mxu0 0
    %12395 = vmatpush1.bf16.msra.mxu0 %v12261
    %12396 = vmatprep.subr.bf16.mxu0 0
    %12397 = vmatpush1.bf16.msra.mxu0 %v12262
    %12398 = vmatprep.subr.bf16.mxu0 0
    %12399 = vmatpush1.bf16.msra.mxu0 %v12263
    %12400 = vmatprep.subr.bf16.mxu0 0
    %12401 = vmatpush1.bf16.msra.mxu0 %v12264
    %12402 = vmatprep.subr.bf16.mxu0 0
    %12403 = vmatpush1.bf16.msra.mxu0 %v12265
    %12404 = vmatprep.subr.bf16.mxu0 0
    %12405 = vmatpush1.bf16.msra.mxu0 %v12266
    %12406 = vmatprep.subr.bf16.mxu0 0
    %12407 = vmatpush1.bf16.msra.mxu0 %v12267
    %12408 = vmatprep.subr.bf16.mxu0 0
    %12409 = vmatpush1.bf16.msra.mxu0 %v12268
    %12410 = vmatprep.subr.bf16.mxu0 0
    %12411 = vmatpush1.bf16.msra.mxu0 %v12269
    %12412 = vmatprep.subr.bf16.mxu0 0
    %12413 = vmatpush1.bf16.msra.mxu0 %v12270
    %12414 = vmatprep.subr.bf16.mxu0 0
    %12415 = vmatpush1.bf16.msra.mxu0 %v12271
    %12416 = vmatprep.mubr.bf16.mxu0 %v11858
    %12417 = vmatmul.mubr.bf16.gmra.mrb[0].mxu0 %v11857
    %v12418 = vpop.f32.mrb[0].mxu0
    %v12419 = vadd.f32 %v11998, %v12418
    %v12420 = vpop.f32.mrb[0].mxu0
    %v12421 = vpop.f32.mrb[0].mxu0
    %v12422 = vpop.f32.mrb[0].mxu0
    %12423 = vdwg.mxu0
    %12424 = vmatprep.subr.bf16.mxu0 0
    %12425 = vmatpush1.bf16.msra.mxu0 %v12272
    %12426 = vmatprep.subr.bf16.mxu0 0
    %12427 = vmatpush1.bf16.msra.mxu0 %v12273
    %12428 = vmatprep.subr.bf16.mxu0 0
    %12429 = vmatpush1.bf16.msra.mxu0 %v12274
    %12430 = vmatprep.subr.bf16.mxu0 0
    %12431 = vmatpush1.bf16.msra.mxu0 %v12275
    %12432 = vmatprep.subr.bf16.mxu0 0
    %12433 = vmatpush1.bf16.msra.mxu0 %v12276
    %12434 = vmatprep.subr.bf16.mxu0 0
    %12435 = vmatpush1.bf16.msra.mxu0 %v12277
    %12436 = vmatprep.subr.bf16.mxu0 0
    %12437 = vmatpush1.bf16.msra.mxu0 %v12278
    %12438 = vmatprep.subr.bf16.mxu0 0
    %12439 = vmatpush1.bf16.msra.mxu0 %v12279
    %12440 = vmatprep.subr.bf16.mxu0 0
    %12441 = vmatpush1.bf16.msra.mxu0 %v12280
    %12442 = vmatprep.subr.bf16.mxu0 0
    %12443 = vmatpush1.bf16.msra.mxu0 %v12281
    %12444 = vmatprep.subr.bf16.mxu0 0
    %12445 = vmatpush1.bf16.msra.mxu0 %v12282
    %12446 = vmatprep.subr.bf16.mxu0 0
    %12447 = vmatpush1.bf16.msra.mxu0 %v12283
    %12448 = vmatprep.subr.bf16.mxu0 0
    %12449 = vmatpush1.bf16.msra.mxu0 %v12284
    %12450 = vmatprep.subr.bf16.mxu0 0
    %12451 = vmatpush1.bf16.msra.mxu0 %v12285
    %12452 = vmatprep.subr.bf16.mxu0 0
    %12453 = vmatpush1.bf16.msra.mxu0 %v12286
    %12454 = vmatprep.subr.bf16.mxu0 0
    %12455 = vmatpush1.bf16.msra.mxu0 %v12287
    %12456 = vmatprep.mubr.bf16.mxu0 %v11860
    %12457 = vmatmul.mubr.bf16.gmra.mrb[0].mxu0 %v11859
    %v12458 = vpop.f32.mrb[0].mxu0
    %v12459 = vadd.f32 %v12419, %v12458
    %v12460 = vpop.f32.mrb[0].mxu0
    %v12461 = vpop.f32.mrb[0].mxu0
    %v12462 = vpop.f32.mrb[0].mxu0
    %12463 = vdwg.mxu0
    %12464 = vmatprep.subr.bf16.mxu0 0
    %12465 = vmatpush1.bf16.msra.mxu0 %v12288
    %12466 = vmatprep.subr.bf16.mxu0 0
    %12467 = vmatpush1.bf16.msra.mxu0 %v12289
    %12468 = vmatprep.subr.bf16.mxu0 0
    %12469 = vmatpush1.bf16.msra.mxu0 %v12290
    %12470 = vmatprep.subr.bf16.mxu0 0
    %12471 = vmatpush1.bf16.msra.mxu0 %v12291
    %12472 = vmatprep.subr.bf16.mxu0 0
    %12473 = vmatpush1.bf16.msra.mxu0 %v12292
    %12474 = vmatprep.subr.bf16.mxu0 0
    %12475 = vmatpush1.bf16.msra.mxu0 %v12293
    %12476 = vmatprep.subr.bf16.mxu0 0
    %12477 = vmatpush1.bf16.msra.mxu0 %v12294
    %12478 = vmatprep.subr.bf16.mxu0 0
    %12479 = vmatpush1.bf16.msra.mxu0 %v12295
    %12480 = vmatprep.subr.bf16.mxu0 0
    %12481 = vmatpush1.bf16.msra.mxu0 %v12296
    %12482 = vmatprep.subr.bf16.mxu0 0
    %12483 = vmatpush1.bf16.msra.mxu0 %v12297
    %12484 = vmatprep.subr.bf16.mxu0 0
    %12485 = vmatpush1.bf16.msra.mxu0 %v12298
    %12486 = vmatprep.subr.bf16.mxu0 0
    %12487 = vmatpush1.bf16.msra.mxu0 %v12299
    %12488 = vmatprep.subr.bf16.mxu0 0
    %12489 = vmatpush1.bf16.msra.mxu0 %v12300
    %12490 = vmatprep.subr.bf16.mxu0 0
    %12491 = vmatpush1.bf16.msra.mxu0 %v12301
    %12492 = vmatprep.subr.bf16.mxu0 0
    %12493 = vmatpush1.bf16.msra.mxu0 %v12302
    %12494 = vmatprep.subr.bf16.mxu0 0
    %12495 = vmatpush1.bf16.msra.mxu0 %v12303
    %12496 = vmatprep.mubr.bf16.mxu0 %v11862
    %12497 = vmatmul.mubr.bf16.gmra.mrb[0].mxu0 %v11861
    %v12498 = vpop.f32.mrb[0].mxu0
    %v12499 = vadd.f32 %v12459, %v12498
    %v12500 = vpop.f32.mrb[0].mxu0
    %v12501 = vpop.f32.mrb[0].mxu0
    %v12502 = vpop.f32.mrb[0].mxu0
    %12503 = vdwg.mxu0
    %12504 = vmatprep.subr.bf16.mxu0 0
    %12505 = vmatpush1.bf16.msra.mxu0 %v12304
    %12506 = vmatprep.subr.bf16.mxu0 0
    %12507 = vmatpush1.bf16.msra.mxu0 %v12305
    %12508 = vmatprep.subr.bf16.mxu0 0
    %12509 = vmatpush1.bf16.msra.mxu0 %v12306
    %12510 = vmatprep.subr.bf16.mxu0 0
    %12511 = vmatpush1.bf16.msra.mxu0 %v12307
    %12512 = vmatprep.subr.bf16.mxu0 0
    %12513 = vmatpush1.bf16.msra.mxu0 %v12308
    %12514 = vmatprep.subr.bf16.mxu0 0
    %12515 = vmatpush1.bf16.msra.mxu0 %v12309
    %12516 = vmatprep.subr.bf16.mxu0 0
    %12517 = vmatpush1.bf16.msra.mxu0 %v12310
    %12518 = vmatprep.subr.bf16.mxu0 0
    %12519 = vmatpush1.bf16.msra.mxu0 %v12311
    %12520 = vmatprep.subr.bf16.mxu0 0
    %12521 = vmatpush1.bf16.msra.mxu0 %v12312
    %12522 = vmatprep.subr.bf16.mxu0 0
    %12523 = vmatpush1.bf16.msra.mxu0 %v12313
    %12524 = vmatprep.subr.bf16.mxu0 0
    %12525 = vmatpush1.bf16.msra.mxu0 %v12314
    %12526 = vmatprep.subr.bf16.mxu0 0
    %12527 = vmatpush1.bf16.msra.mxu0 %v12315
    %12528 = vmatprep.subr.bf16.mxu0 0
    %12529 = vmatpush1.bf16.msra.mxu0 %v12316
    %12530 = vmatprep.subr.bf16.mxu0 0
    %12531 = vmatpush1.bf16.msra.mxu0 %v12317
    %12532 = vmatprep.subr.bf16.mxu0 0
    %12533 = vmatpush1.bf16.msra.mxu0 %v12318
    %12534 = vmatprep.subr.bf16.mxu0 0
    %12535 = vmatpush1.bf16.msra.mxu0 %v12319
    %12536 = vmatprep.mubr.bf16.mxu0 %v11864
    %12537 = vmatmul.mubr.bf16.gmra.mrb[0].mxu0 %v11863
    %v12538 = vpop.f32.mrb[0].mxu0
    %v12539 = vadd.f32 %v12499, %v12538
    %v12540 = vpop.f32.mrb[0].mxu0
    %v12541 = vpop.f32.mrb[0].mxu0
    %v12542 = vpop.f32.mrb[0].mxu0
    %12543 = vdwg.mxu0
    %12544 = vst [vmem:[%s11] sm:$0xff] %v12539
    // Predicated region
    $region82: #{classifier_forward.1} parent=1 // pred_check
      _
    $region83: #{classifier_forward.1} parent=1 // pred_check_branch
      %12546 = sbr.rel (0) target = $region85
    $region84: #{classifier_forward.1} parent=1 // pred_region
      _
    $region85: #{classifier_forward.1} parent=1 // pred_fallthru
      _
    // Predicated region
    $region86: #{classifier_forward.1} parent=1 // pred_check
      _
    $region87: #{classifier_forward.1} parent=1 // pred_check_branch
      %12548 = sbr.rel (0) target = $region89
    $region88: #{classifier_forward.1} parent=1 // pred_region
      _
    $region89: #{classifier_forward.1} parent=1 // pred_fallthru
      _
    %12549 = vsyncpa [#allocation3], 1
    %12550 = vsyncpa [#allocation5], 1
    %12551 = vsyncpa [#allocation8], 1
    %12552 = vsyncpa [#allocation11], 1
    %12553 = vsyncpa [#allocation14], 1

</llo_original>
